<compile_context>
chip_gen: v7x
topology: tpu7x:2x2x1
jax: 0.10.0
libtpu: 0.0.40
codegen_flags: <defaults>
</compile_context>

<pallas_src>
import numpy as np

import jax
import jax.numpy as jnp
from jax import lax
from jax.experimental import pallas as pl
from jax.experimental.pallas import tpu as pltpu


# ---------------------------------------------------------------------------
# Model dimensions (from the PyTorch Net: input_dim=[3,3,3], output_dim=9)
# ---------------------------------------------------------------------------
H = W = 3
P = H * W                    # 9 spatial positions
C_IN, C1, C2, C3 = 3, 128, 128, 64
HIDDEN = 243
N_ACT = 9

# padded, lane-dense dims used inside the fused kernel
D0 = 128                     # flattened input 27 -> 128
D1 = C1 * P                  # 1152 (already 9*128)
D2 = C2 * P                  # 1152
D3_RAW = C3 * P              # 576
D3 = 640                     # 576 -> 640 (5*128)
DH = 512                     # [val1 243 | pad][adv1 243 | pad] = 2*256
DOUT = 128                   # [value | adv(9) | pad] -> 128
VAL_OFF, ADV_OFF = 0, 256


# ---------------------------------------------------------------------------
# Fused Pallas kernel: 5 MXU matmuls + bias/ReLU + dueling combine
# ---------------------------------------------------------------------------
def _dueling_dqn_kernel(x_ref, w1_ref, b1_ref, w2_ref, b2_ref, w3_ref, b3_ref,
                        wh_ref, bh_ref, wo_ref, bo_ref, o_ref):
    def dense(act_f32, w_ref, b_ref, relu):
        # bf16 operands on the MXU, f32 accumulation, f32 epilogue.
        acc = jnp.dot(act_f32.astype(w_ref.dtype), w_ref[...],
                      preferred_element_type=jnp.float32)
        acc = acc + b_ref[...]                       # [1, N] broadcasts over rows
        if relu:
            acc = jnp.maximum(acc, 0.0)
        return acc

    h = dense(x_ref[...], w1_ref, b1_ref, True)      # conv1 (as dense)  [B, 1152]
    h = dense(h, w2_ref, b2_ref, True)               # conv2             [B, 1152]
    h = dense(h, w3_ref, b3_ref, True)               # conv3             [B, 640]
    h = dense(h, wh_ref, bh_ref, True)               # val1 | adv1       [B, 512]
    out = dense(h, wo_ref, bo_ref, False)            # val2 | adv2       [B, 128]

    # Dueling combine. Column 0 = value, columns 1..9 = advantages.
    # PyTorch semantics: qvals = values + (advantages - advantages.mean())
    # with a GLOBAL mean over the whole [B, 9] advantage tensor.
    col = lax.broadcasted_iota(jnp.int32, out.shape, 1)
    adv_mask = (col >= 1) & (col <= N_ACT)
    mean_adv = jnp.sum(jnp.where(adv_mask, out, 0.0)) / (out.shape[0] * N_ACT)
    value = jnp.sum(jnp.where(col == 0, out, 0.0), axis=1, keepdims=True)  # [B,1]
    # Full lane-dense store; wrapper slices columns 1..9.
    o_ref[...] = (value + (out - mean_adv)).astype(o_ref.dtype)


@jax.jit
def net_forward(packed, x_nchw):
    """x_nchw: [B, 3, 3, 3] float32 -> qvals [B, 9] float32."""
    B = x_nchw.shape[0]
    x_flat = x_nchw.astype(jnp.float32).reshape(B, C_IN * P)   # NCHW flatten (c,h,w)
    x_pad = jnp.pad(x_flat, ((0, 0), (0, D0 - C_IN * P)))      # lane-dense [B, 128]

    operands = (x_pad,
                packed["w1"], packed["b1"],
                packed["w2"], packed["b2"],
                packed["w3"], packed["b3"],
                packed["wh"], packed["bh"],
                packed["wo"], packed["bo"])

    in_specs = [pl.BlockSpec(op.shape, lambda i: (0, 0)) for op in operands]

    out = pl.pallas_call(
        _dueling_dqn_kernel,
        out_shape=jax.ShapeDtypeStruct((B, DOUT), jnp.float32),
        grid=(1,),
        in_specs=in_specs,
        out_specs=pl.BlockSpec((B, DOUT), lambda i: (0, 0)),
        compiler_params=pltpu.CompilerParams(
            dimension_semantics=("arbitrary",),
            vmem_limit_bytes=32 * 1024 * 1024),
    )(*operands)

    return out[:, 1:1 + N_ACT]                                 # [B, 9]


# ---------------------------------------------------------------------------
# One-time (init) parameter construction and re-layout
# ---------------------------------------------------------------------------
def init_params(key):
    """Synthetic params with PyTorch default-init shapes (Conv OIHW, Linear [out,in])."""
    def conv_init(k, cout, cin, ks=3):
        k1, k2 = jax.random.split(k)
        bound = 1.0 / np.sqrt(cin * ks * ks)
        w = jax.random.uniform(k1, (cout, cin, ks, ks), jnp.float32, -bound, bound)
        b = jax.random.uniform(k2, (cout,), jnp.float32, -bound, bound)
        return np.asarray(w), np.asarray(b)

    def lin_init(k, out_f, in_f):
        k1, k2 = jax.random.split(k)
        bound = 1.0 / np.sqrt(in_f)
        w = jax.random.uniform(k1, (out_f, in_f), jnp.float32, -bound, bound)
        b = jax.random.uniform(k2, (out_f,), jnp.float32, -bound, bound)
        return np.asarray(w), np.asarray(b)

    keys = jax.random.split(key, 7)
    fc_in = C3 * P   # 576 == Net.feature_size()
    return {
        "conv1": conv_init(keys[0], C1, C_IN),
        "conv2": conv_init(keys[1], C2, C1),
        "conv3": conv_init(keys[2], C3, C2),
        "val1": lin_init(keys[3], HIDDEN, fc_in),
        "val2": lin_init(keys[4], 1, HIDDEN),
        "adv1": lin_init(keys[5], HIDDEN, fc_in),
        "adv2": lin_init(keys[6], N_ACT, HIDDEN),
    }


def conv_as_dense(w_oihw, b):
    """3x3 'same' conv on a fixed 3x3 grid == dense [Cin*9, Cout*9] matmul
    in NCHW-flatten order (row = cin*9 + h*3 + w, col = cout*9 + h*3 + w)."""
    cout, cin, kh, kw = w_oihw.shape
    w_big = np.zeros((cin * P, cout * P), np.float32)
    for ho in range(H):
        for wo in range(W):
            p_out = ho * W + wo
            for ky in range(kh):
                for kx in range(kw):
                    hi, wi = ho + ky - 1, wo + kx - 1
                    if 0 <= hi < H and 0 <= wi < W:
                        p_in = hi * W + wi
                        rows = p_in + P * np.arange(cin)
                        cols = p_out + P * np.arange(cout)
                        w_big[np.ix_(rows, cols)] = w_oihw[:, :, ky, kx].T
    b_big = np.repeat(b, P)   # bias per output channel at every position
    return w_big, b_big


def pack_params(raw, mat_dtype=jnp.bfloat16):
    """Fold convs to dense, fuse heads, pad to lane-dense widths, cast to bf16."""
    w1, b1 = conv_as_dense(*raw["conv1"])   # [27, 1152]
    w2, b2 = conv_as_dense(*raw["conv2"])   # [1152, 1152]
    w3, b3 = conv_as_dense(*raw["conv3"])   # [1152, 576]

    w1p = np.zeros((D0, D1), np.float32); w1p[:w1.shape[0]] = w1
    w3p = np.zeros((D2, D3), np.float32); w3p[:, :w3.shape[1]] = w3
    b3p = np.zeros((D3,), np.float32);    b3p[:b3.shape[0]] = b3

    wv1, bv1 = raw["val1"]; wa1, ba1 = raw["adv1"]
    wh = np.zeros((D3, DH), np.float32)
    wh[:D3_RAW, VAL_OFF:VAL_OFF + HIDDEN] = wv1.T
    wh[:D3_RAW, ADV_OFF:ADV_OFF + HIDDEN] = wa1.T
    bh = np.zeros((DH,), np.float32)
    bh[VAL_OFF:VAL_OFF + HIDDEN] = bv1
    bh[ADV_OFF:ADV_OFF + HIDDEN] = ba1

    wv2, bv2 = raw["val2"]; wa2, ba2 = raw["adv2"]
    wo = np.zeros((DH, DOUT), np.float32)
    wo[VAL_OFF:VAL_OFF + HIDDEN, 0] = wv2[0]
    wo[ADV_OFF:ADV_OFF + HIDDEN, 1:1 + N_ACT] = wa2.T
    bo = np.zeros((DOUT,), np.float32)
    bo[0] = bv2[0]
    bo[1:1 + N_ACT] = ba2

    as_mat = lambda a: jnp.asarray(a, mat_dtype)
    as_bias = lambda a: jnp.asarray(a, jnp.float32).reshape(1, -1)
    return {
        "w1": as_mat(w1p), "b1": as_bias(b1),
        "w2": as_mat(w2),  "b2": as_bias(b2),
        "w3": as_mat(w3p), "b3": as_bias(b3p),
        "wh": as_mat(wh),  "bh": as_bias(bh),
        "wo": as_mat(wo),  "bo": as_bias(bo),
    }


# ---------------------------------------------------------------------------
# Pure-JAX f32 reference (mirrors the PyTorch module) for a sanity check
# ---------------------------------------------------------------------------
def reference_forward(raw, x_nchw):
    with jax.default_matmul_precision("highest"):
        y = x_nchw.astype(jnp.float32)
        for name in ("conv1", "conv2", "conv3"):
            w, b = raw[name]
            y = lax.conv_general_dilated(
                y, jnp.asarray(w), (1, 1), "SAME",
                dimension_numbers=("NCHW", "OIHW", "NCHW"))
            y = jax.nn.relu(y + jnp.asarray(b)[None, :, None, None])
        feats = y.reshape(y.shape[0], -1)
        wv1, bv1 = raw["val1"]; wv2, bv2 = raw["val2"]
        wa1, ba1 = raw["adv1"]; wa2, ba2 = raw["adv2"]
        v = jax.nn.relu(feats @ jnp.asarray(wv1).T + bv1) @ jnp.asarray(wv2).T + bv2
        a = jax.nn.relu(feats @ jnp.asarray(wa1).T + ba1) @ jnp.asarray(wa2).T + ba2
        return v + (a - a.mean())


# ---------------------------------------------------------------------------
# Main
# ---------------------------------------------------------------------------
if __name__ == "__main__":
    root = jax.random.PRNGKey(0)
    k_params, k_input = jax.random.split(root)

    raw = init_params(k_params)
    packed = pack_params(raw)

    x = jax.random.normal(k_input, (2, C_IN, H, W), dtype=jnp.float32)  # NCHW, B=2

    q = net_forward(packed, x)
    q = jax.block_until_ready(q)
    assert q.shape == (2, N_ACT) and q.dtype == jnp.float32

    # Loose tolerance: kernel uses bf16 matmul operands (f32 accumulation).
    q_ref = jax.block_until_ready(reference_forward(raw, x))
    assert np.allclose(np.asarray(q), np.asarray(q_ref), rtol=5e-2, atol=5e-2), (
        float(np.max(np.abs(np.asarray(q) - np.asarray(q_ref)))))

    print("KERNEL_OK")
</pallas_src>

<mosaic_0001>
module attributes {stable_mosaic.version = 11 : i64} {
  func.func @_dueling_dqn_kernel(%arg0: i32, %arg1: memref<2x128xf32, #tpu.memory_space<vmem>>, %arg2: memref<128x1152xbf16, #tpu.memory_space<vmem>>, %arg3: memref<1x1152xf32, #tpu.memory_space<vmem>>, %arg4: memref<1152x1152xbf16, #tpu.memory_space<vmem>>, %arg5: memref<1x1152xf32, #tpu.memory_space<vmem>>, %arg6: memref<1152x640xbf16, #tpu.memory_space<vmem>>, %arg7: memref<1x640xf32, #tpu.memory_space<vmem>>, %arg8: memref<640x512xbf16, #tpu.memory_space<vmem>>, %arg9: memref<1x512xf32, #tpu.memory_space<vmem>>, %arg10: memref<512x128xbf16, #tpu.memory_space<vmem>>, %arg11: memref<1x128xf32, #tpu.memory_space<vmem>>, %arg12: memref<2x128xf32, #tpu.memory_space<vmem>>) attributes {dimension_semantics = [#tpu.dimension_semantics<arbitrary>], iteration_bounds = array<i64: 1>, scalar_prefetch = 0 : i64, scratch_operands = 0 : i64, tpu.core_type = #tpu.core_type<tc>, window_params = [{pipeline_mode = #tpu.pipeline_mode<synchronous>, transform_indices = @transform_0, window_bounds = array<i64: 2, 128>}, {pipeline_mode = #tpu.pipeline_mode<synchronous>, transform_indices = @transform_1, window_bounds = array<i64: 128, 1152>}, {pipeline_mode = #tpu.pipeline_mode<synchronous>, transform_indices = @transform_2, window_bounds = array<i64: 1, 1152>}, {pipeline_mode = #tpu.pipeline_mode<synchronous>, transform_indices = @transform_3, window_bounds = array<i64: 1152, 1152>}, {pipeline_mode = #tpu.pipeline_mode<synchronous>, transform_indices = @transform_4, window_bounds = array<i64: 1, 1152>}, {pipeline_mode = #tpu.pipeline_mode<synchronous>, transform_indices = @transform_5, window_bounds = array<i64: 1152, 640>}, {pipeline_mode = #tpu.pipeline_mode<synchronous>, transform_indices = @transform_6, window_bounds = array<i64: 1, 640>}, {pipeline_mode = #tpu.pipeline_mode<synchronous>, transform_indices = @transform_7, window_bounds = array<i64: 640, 512>}, {pipeline_mode = #tpu.pipeline_mode<synchronous>, transform_indices = @transform_8, window_bounds = array<i64: 1, 512>}, {pipeline_mode = #tpu.pipeline_mode<synchronous>, transform_indices = @transform_9, window_bounds = array<i64: 512, 128>}, {pipeline_mode = #tpu.pipeline_mode<synchronous>, transform_indices = @transform_10, window_bounds = array<i64: 1, 128>}, {pipeline_mode = #tpu.pipeline_mode<synchronous>, transform_indices = @transform_11, window_bounds = array<i64: 2, 128>}]} {
    %c0 = arith.constant 0 : index
    %c0_0 = arith.constant 0 : index
    %0 = vector.load %arg1[%c0, %c0_0] : memref<2x128xf32, #tpu.memory_space<vmem>>, vector<2x128xf32>
    %1 = arith.truncf %0 : vector<2x128xf32> to vector<2x128xbf16>
    %c0_1 = arith.constant 0 : index
    %c0_2 = arith.constant 0 : index
    %2 = vector.load %arg2[%c0_1, %c0_2] : memref<128x1152xbf16, #tpu.memory_space<vmem>>, vector<128x1152xbf16>
    %cst = arith.constant dense<0.000000e+00> : vector<2x1152xf32>
    %3 = tpu.matmul %1, %2, %cst {dimension_numbers = #tpu.dot_dimension_numbers<[1], [0], [0], [1], [0, 0, 1, 1], [], []>} : vector<2x128xbf16>, vector<128x1152xbf16>, vector<2x1152xf32> -> vector<2x1152xf32>
    %c0_3 = arith.constant 0 : index
    %c0_4 = arith.constant 0 : index
    %4 = vector.load %arg3[%c0_3, %c0_4] : memref<1x1152xf32, #tpu.memory_space<vmem>>, vector<1x1152xf32>
    %5 = vector.broadcast %4 : vector<1x1152xf32> to vector<2x1152xf32>
    %6 = arith.addf %3, %5 : vector<2x1152xf32>
    %cst_5 = arith.constant 0.000000e+00 : f32
    %7 = vector.broadcast %cst_5 : f32 to vector<2x1152xf32>
    %8 = arith.maximumf %6, %7 : vector<2x1152xf32>
    %9 = arith.truncf %8 : vector<2x1152xf32> to vector<2x1152xbf16>
    %c0_6 = arith.constant 0 : index
    %c0_7 = arith.constant 0 : index
    %10 = vector.load %arg4[%c0_6, %c0_7] : memref<1152x1152xbf16, #tpu.memory_space<vmem>>, vector<1152x1152xbf16>
    %cst_8 = arith.constant dense<0.000000e+00> : vector<2x1152xf32>
    %11 = tpu.matmul %9, %10, %cst_8 {dimension_numbers = #tpu.dot_dimension_numbers<[1], [0], [0], [1], [0, 0, 1, 1], [], []>} : vector<2x1152xbf16>, vector<1152x1152xbf16>, vector<2x1152xf32> -> vector<2x1152xf32>
    %c0_9 = arith.constant 0 : index
    %c0_10 = arith.constant 0 : index
    %12 = vector.load %arg5[%c0_9, %c0_10] : memref<1x1152xf32, #tpu.memory_space<vmem>>, vector<1x1152xf32>
    %13 = vector.broadcast %12 : vector<1x1152xf32> to vector<2x1152xf32>
    %14 = arith.addf %11, %13 : vector<2x1152xf32>
    %cst_11 = arith.constant 0.000000e+00 : f32
    %15 = vector.broadcast %cst_11 : f32 to vector<2x1152xf32>
    %16 = arith.maximumf %14, %15 : vector<2x1152xf32>
    %17 = arith.truncf %16 : vector<2x1152xf32> to vector<2x1152xbf16>
    %c0_12 = arith.constant 0 : index
    %c0_13 = arith.constant 0 : index
    %18 = vector.load %arg6[%c0_12, %c0_13] : memref<1152x640xbf16, #tpu.memory_space<vmem>>, vector<1152x640xbf16>
    %cst_14 = arith.constant dense<0.000000e+00> : vector<2x640xf32>
    %19 = tpu.matmul %17, %18, %cst_14 {dimension_numbers = #tpu.dot_dimension_numbers<[1], [0], [0], [1], [0, 0, 1, 1], [], []>} : vector<2x1152xbf16>, vector<1152x640xbf16>, vector<2x640xf32> -> vector<2x640xf32>
    %c0_15 = arith.constant 0 : index
    %c0_16 = arith.constant 0 : index
    %20 = vector.load %arg7[%c0_15, %c0_16] : memref<1x640xf32, #tpu.memory_space<vmem>>, vector<1x640xf32>
    %21 = vector.broadcast %20 : vector<1x640xf32> to vector<2x640xf32>
    %22 = arith.addf %19, %21 : vector<2x640xf32>
    %cst_17 = arith.constant 0.000000e+00 : f32
    %23 = vector.broadcast %cst_17 : f32 to vector<2x640xf32>
    %24 = arith.maximumf %22, %23 : vector<2x640xf32>
    %25 = arith.truncf %24 : vector<2x640xf32> to vector<2x640xbf16>
    %c0_18 = arith.constant 0 : index
    %c0_19 = arith.constant 0 : index
    %26 = vector.load %arg8[%c0_18, %c0_19] : memref<640x512xbf16, #tpu.memory_space<vmem>>, vector<640x512xbf16>
    %cst_20 = arith.constant dense<0.000000e+00> : vector<2x512xf32>
    %27 = tpu.matmul %25, %26, %cst_20 {dimension_numbers = #tpu.dot_dimension_numbers<[1], [0], [0], [1], [0, 0, 1, 1], [], []>} : vector<2x640xbf16>, vector<640x512xbf16>, vector<2x512xf32> -> vector<2x512xf32>
    %c0_21 = arith.constant 0 : index
    %c0_22 = arith.constant 0 : index
    %28 = vector.load %arg9[%c0_21, %c0_22] : memref<1x512xf32, #tpu.memory_space<vmem>>, vector<1x512xf32>
    %29 = vector.broadcast %28 : vector<1x512xf32> to vector<2x512xf32>
    %30 = arith.addf %27, %29 : vector<2x512xf32>
    %cst_23 = arith.constant 0.000000e+00 : f32
    %31 = vector.broadcast %cst_23 : f32 to vector<2x512xf32>
    %32 = arith.maximumf %30, %31 : vector<2x512xf32>
    %33 = arith.truncf %32 : vector<2x512xf32> to vector<2x512xbf16>
    %c0_24 = arith.constant 0 : index
    %c0_25 = arith.constant 0 : index
    %34 = vector.load %arg10[%c0_24, %c0_25] : memref<512x128xbf16, #tpu.memory_space<vmem>>, vector<512x128xbf16>
    %cst_26 = arith.constant dense<0.000000e+00> : vector<2x128xf32>
    %35 = tpu.matmul %33, %34, %cst_26 {dimension_numbers = #tpu.dot_dimension_numbers<[1], [0], [0], [1], [0, 0, 1, 1], [], []>} : vector<2x512xbf16>, vector<512x128xbf16>, vector<2x128xf32> -> vector<2x128xf32>
    %c0_27 = arith.constant 0 : index
    %c0_28 = arith.constant 0 : index
    %36 = vector.load %arg11[%c0_27, %c0_28] : memref<1x128xf32, #tpu.memory_space<vmem>>, vector<1x128xf32>
    %37 = vector.broadcast %36 : vector<1x128xf32> to vector<2x128xf32>
    %38 = arith.addf %35, %37 : vector<2x128xf32>
    %39 = tpu.iota {dimensions = array<i32: 1>} : vector<2x128xi32>
    %c1_i32 = arith.constant 1 : i32
    %40 = vector.broadcast %c1_i32 : i32 to vector<2x128xi32>
    %41 = arith.cmpi sge, %39, %40 : vector<2x128xi32>
    %c9_i32 = arith.constant 9 : i32
    %42 = vector.broadcast %c9_i32 : i32 to vector<2x128xi32>
    %43 = arith.cmpi sle, %39, %42 : vector<2x128xi32>
    %44 = arith.andi %41, %43 : vector<2x128xi1>
    %cst_29 = arith.constant 0.000000e+00 : f32
    %45 = vector.broadcast %cst_29 : f32 to vector<2x128xf32>
    %46 = arith.select %44, %38, %45 : vector<2x128xi1>, vector<2x128xf32>
    %47 = vector.shape_cast %46 : vector<2x128xf32> to vector<1x2x128xf32>
    %cst_30 = arith.constant dense<0.000000e+00> : vector<1xf32>
    %48 = vector.multi_reduction <add>, %47, %cst_30 [1, 2] : vector<1x2x128xf32> to vector<1xf32>
    %49 = vector.shape_cast %48 : vector<1xf32> to vector<1x1x1xf32>
    %50 = vector.extract %49[0, 0, 0] : f32 from vector<1x1x1xf32>
    %cst_31 = arith.constant 1.800000e+01 : f32
    %51 = arith.divf %50, %cst_31 : f32
    %c0_i32 = arith.constant 0 : i32
    %52 = vector.broadcast %c0_i32 : i32 to vector<2x128xi32>
    %53 = arith.cmpi eq, %39, %52 : vector<2x128xi32>
    %cst_32 = arith.constant 0.000000e+00 : f32
    %54 = vector.broadcast %cst_32 : f32 to vector<2x128xf32>
    %55 = arith.select %53, %38, %54 : vector<2x128xi1>, vector<2x128xf32>
    %cst_33 = arith.constant dense<0.000000e+00> : vector<2xf32>
    %56 = vector.multi_reduction <add>, %55, %cst_33 [1] : vector<2x128xf32> to vector<2xf32>
    %57 = vector.shape_cast %56 : vector<2xf32> to vector<2x1xf32>
    %58 = vector.broadcast %51 : f32 to vector<2x128xf32>
    %59 = arith.subf %38, %58 : vector<2x128xf32>
    %60 = vector.broadcast %57 : vector<2x1xf32> to vector<2x128xf32>
    %61 = arith.addf %60, %59 : vector<2x128xf32>
    %c0_34 = arith.constant 0 : index
    %c0_35 = arith.constant 0 : index
    %62 = vector.load %arg12[%c0_34, %c0_35] : memref<2x128xf32, #tpu.memory_space<vmem>>, vector<2x128xf32>
    tpu.vector_store %arg12[%c0_34, %c0_35], %61 {strides = array<i32>} : memref<2x128xf32, #tpu.memory_space<vmem>>, vector<2x128xf32>,
    return
  }
  func.func @transform_0(%arg0: i32) -> (i32, i32) {
    %c0_i32 = arith.constant 0 : i32
    %c0_i32_0 = arith.constant 0 : i32
    %c0_i32_1 = arith.constant 0 : i32
    return %c0_i32, %c0_i32_0 : i32, i32
  }
  func.func @transform_1(%arg0: i32) -> (i32, i32) {
    %c0_i32 = arith.constant 0 : i32
    %c0_i32_0 = arith.constant 0 : i32
    %c0_i32_1 = arith.constant 0 : i32
    return %c0_i32, %c0_i32_0 : i32, i32
  }
  func.func @transform_2(%arg0: i32) -> (i32, i32) {
    %c0_i32 = arith.constant 0 : i32
    %c0_i32_0 = arith.constant 0 : i32
    %c0_i32_1 = arith.constant 0 : i32
    return %c0_i32, %c0_i32_0 : i32, i32
  }
  func.func @transform_3(%arg0: i32) -> (i32, i32) {
    %c0_i32 = arith.constant 0 : i32
    %c0_i32_0 = arith.constant 0 : i32
    %c0_i32_1 = arith.constant 0 : i32
    return %c0_i32, %c0_i32_0 : i32, i32
  }
  func.func @transform_4(%arg0: i32) -> (i32, i32) {
    %c0_i32 = arith.constant 0 : i32
    %c0_i32_0 = arith.constant 0 : i32
    %c0_i32_1 = arith.constant 0 : i32
    return %c0_i32, %c0_i32_0 : i32, i32
  }
  func.func @transform_5(%arg0: i32) -> (i32, i32) {
    %c0_i32 = arith.constant 0 : i32
    %c0_i32_0 = arith.constant 0 : i32
    %c0_i32_1 = arith.constant 0 : i32
    return %c0_i32, %c0_i32_0 : i32, i32
  }
  func.func @transform_6(%arg0: i32) -> (i32, i32) {
    %c0_i32 = arith.constant 0 : i32
    %c0_i32_0 = arith.constant 0 : i32
    %c0_i32_1 = arith.constant 0 : i32
    return %c0_i32, %c0_i32_0 : i32, i32
  }
  func.func @transform_7(%arg0: i32) -> (i32, i32) {
    %c0_i32 = arith.constant 0 : i32
    %c0_i32_0 = arith.constant 0 : i32
    %c0_i32_1 = arith.constant 0 : i32
    return %c0_i32, %c0_i32_0 : i32, i32
  }
  func.func @transform_8(%arg0: i32) -> (i32, i32) {
    %c0_i32 = arith.constant 0 : i32
    %c0_i32_0 = arith.constant 0 : i32
    %c0_i32_1 = arith.constant 0 : i32
    return %c0_i32, %c0_i32_0 : i32, i32
  }
  func.func @transform_9(%arg0: i32) -> (i32, i32) {
    %c0_i32 = arith.constant 0 : i32
    %c0_i32_0 = arith.constant 0 : i32
    %c0_i32_1 = arith.constant 0 : i32
    return %c0_i32, %c0_i32_0 : i32, i32
  }
  func.func @transform_10(%arg0: i32) -> (i32, i32) {
    %c0_i32 = arith.constant 0 : i32
    %c0_i32_0 = arith.constant 0 : i32
    %c0_i32_1 = arith.constant 0 : i32
    return %c0_i32, %c0_i32_0 : i32, i32
  }
  func.func @transform_11(%arg0: i32) -> (i32, i32) {
    %c0_i32 = arith.constant 0 : i32
    %c0_i32_0 = arith.constant 0 : i32
    %c0_i32_1 = arith.constant 0 : i32
    return %c0_i32, %c0_i32_0 : i32, i32
  }
}

</mosaic_0001>

<llo_original>
// kernel: net_forward.1
$region0: #{net_forward.1}
  #allocation0 [shape = 'u32[]', space=smem, size = 0x4, offset = 0x4, fixed_abs, tag = 'smem constant byte address 0x4 - core index']
  #allocation1 [shape = 'u32[144,128]{1,0:T(1,128)}', space=vmem, size = 0x12000, scoped, tag = 'internal scratch']
  %s0 = inlined_call_operand.vmem [shape: f32[2,128], index: 0, kind: input, shape index: {}]
  %s1 = inlined_call_operand.hbm [shape: bf16[128,1152], index: 1, kind: input, shape index: {}]
  %s2 = inlined_call_operand.hbm [shape: f32[1,1152], index: 2, kind: input, shape index: {}]
  %s3 = inlined_call_operand.hbm [shape: bf16[1152,1152], index: 3, kind: input, shape index: {}]
  %s4 = inlined_call_operand.hbm [shape: f32[1,1152], index: 4, kind: input, shape index: {}]
  %s5 = inlined_call_operand.hbm [shape: bf16[1152,640], index: 5, kind: input, shape index: {}]
  %s6 = inlined_call_operand.hbm [shape: f32[1,640], index: 6, kind: input, shape index: {}]
  %s7 = inlined_call_operand.hbm [shape: bf16[640,512], index: 7, kind: input, shape index: {}]
  %s8 = inlined_call_operand.hbm [shape: f32[1,512], index: 8, kind: input, shape index: {}]
  %s9 = inlined_call_operand.hbm [shape: bf16[512,128], index: 9, kind: input, shape index: {}]
  %s10 = inlined_call_operand.hbm [shape: f32[1,128], index: 10, kind: input, shape index: {}]
  %s11 = inlined_call_operand.vmem [shape: f32[2,128], index: 11, kind: output, shape index: {}]
  %s12 = sld [smem:[#allocation0]]
  $region94: #{net_forward.1} parent=0
    _
  %s14 = ssub.s32 1, %s12
  %s15 = scalar_select 0, %s14, %s12
  $region1: #{net_forward.1} parent=0
    #allocation2 [shape = 'u8[294912]{0}', space=vmem, size = 0x48000, scoped, tag = 'input window, operand 1, single buffered']
    #allocation3 [shape = 's32[1]{0}', space=sflag, size = 0x4, scoped, tag = 'scoped memory for net_forward.1']
    #allocation4 [shape = 'u8[4608]{0}', space=vmem, size = 0x1400, scoped, tag = 'input window, operand 2, single buffered']
    #allocation5 [shape = 's32[1]{0}', space=sflag, size = 0x4, scoped, tag = 'scoped memory for net_forward.1']
    #allocation6 [shape = 'u8[2654208]{0}', space=vmem, size = 0x288000, scoped, tag = 'input window, operand 3, single buffered']
    #allocation7 [shape = 'u8[4608]{0}', space=vmem, size = 0x1400, scoped, tag = 'input window, operand 4, single buffered']
    #allocation8 [shape = 's32[1]{0}', space=sflag, size = 0x4, scoped, tag = 'scoped memory for net_forward.1']
    #allocation9 [shape = 'u8[1474560]{0}', space=vmem, size = 0x168000, scoped, tag = 'input window, operand 5, single buffered']
    #allocation10 [shape = 'u8[2560]{0}', space=vmem, size = 0xc00, scoped, tag = 'input window, operand 6, single buffered']
    #allocation11 [shape = 's32[1]{0}', space=sflag, size = 0x4, scoped, tag = 'scoped memory for net_forward.1']
    #allocation12 [shape = 'u8[655360]{0}', space=vmem, size = 0xa0000, scoped, tag = 'input window, operand 7, single buffered']
    #allocation13 [shape = 'u8[2048]{0}', space=vmem, size = 0x800, scoped, tag = 'input window, operand 8, single buffered']
    #allocation14 [shape = 's32[1]{0}', space=sflag, size = 0x4, scoped, tag = 'scoped memory for net_forward.1']
    #allocation15 [shape = 'u8[131072]{0}', space=vmem, size = 0x20000, scoped, tag = 'input window, operand 9, single buffered']
    #allocation16 [shape = 'u8[512]{0}', space=vmem, size = 0x400, scoped, tag = 'input window, operand 10, single buffered']
    #allocation17 [shape = 's32[1]{0}', space=sflag, size = 0x4, scoped, tag = 'scoped memory for net_forward.1']
    %16 = vsyncpa [#allocation3], 0
    %17 = vsyncpa [#allocation5], 0
    %18 = vsyncpa [#allocation8], 0
    %19 = vsyncpa [#allocation11], 0
    %20 = vsyncpa [#allocation14], 0
    %21 = vsyncpa [#allocation17], 0
    // Predicated region
    $region2: #{net_forward.1} parent=1 // pred_check
      _
    $region3: #{net_forward.1} parent=1 // pred_check_branch
      %23 = sbr.rel (0) target = $region5
    $region4: #{net_forward.1} parent=1 // pred_region
      _
    $region5: #{net_forward.1} parent=1 // pred_fallthru
      _
    // Predicated region
    $region6: #{net_forward.1} parent=1 // pred_check
      _
    $region7: #{net_forward.1} parent=1 // pred_check_branch
      %25 = sbr.rel (0) target = $region9
    $region8: #{net_forward.1} parent=1 // pred_region
      %s27 = ssub.s32 9216, 9216
      %28 = vsyncadd [#allocation3], %s27
      %s29 = sshll.u32 [#allocation2], 4
      %s30 = int_to_ptr.vmem [resolvable:$true] %s29
      %35 = dma.hbm_to_vmem [thread:$0]  %s1, 9216, %s30, [#allocation3], 576, 576, 36
    $region9: #{net_forward.1} parent=1 // pred_fallthru
      _
    // Predicated region
    $region10: #{net_forward.1} parent=1 // pred_check
      _
    $region11: #{net_forward.1} parent=1 // pred_check_branch
      %37 = sbr.rel (0) target = $region13
    $region12: #{net_forward.1} parent=1 // pred_region
      %s39 = ssub.s32 144, 144
      %40 = vsyncadd [#allocation5], %s39
      %s42 = sshll.u32 [#allocation4], 4
      %s43 = int_to_ptr.vmem [resolvable:$true] %s42
      %45 = dma.hbm_to_vmem [thread:$0]  %s2, 144, %s43, [#allocation5]
    $region13: #{net_forward.1} parent=1 // pred_fallthru
      _
    // Predicated region
    $region14: #{net_forward.1} parent=1 // pred_check
      _
    $region15: #{net_forward.1} parent=1 // pred_check_branch
      %47 = sbr.rel (0) target = $region17
    $region16: #{net_forward.1} parent=1 // pred_region
      %s49 = ssub.s32 82944, 82944
      %50 = vsyncadd [#allocation5], %s49
      %s51 = sshll.u32 [#allocation6], 4
      %s52 = int_to_ptr.vmem [resolvable:$true] %s51
      %57 = dma.hbm_to_vmem [thread:$0]  %s3, 82944, %s52, [#allocation5], 576, 576, 36
    $region17: #{net_forward.1} parent=1 // pred_fallthru
      _
    // Predicated region
    $region18: #{net_forward.1} parent=1 // pred_check
      _
    $region19: #{net_forward.1} parent=1 // pred_check_branch
      %59 = sbr.rel (0) target = $region21
    $region20: #{net_forward.1} parent=1 // pred_region
      %s61 = ssub.s32 144, 144
      %62 = vsyncadd [#allocation8], %s61
      %s64 = sshll.u32 [#allocation7], 4
      %s65 = int_to_ptr.vmem [resolvable:$true] %s64
      %67 = dma.hbm_to_vmem [thread:$0]  %s4, 144, %s65, [#allocation8]
    $region21: #{net_forward.1} parent=1 // pred_fallthru
      _
    // Predicated region
    $region22: #{net_forward.1} parent=1 // pred_check
      _
    $region23: #{net_forward.1} parent=1 // pred_check_branch
      %69 = sbr.rel (0) target = $region25
    $region24: #{net_forward.1} parent=1 // pred_region
      %s71 = ssub.s32 46080, 46080
      %72 = vsyncadd [#allocation8], %s71
      %s73 = sshll.u32 [#allocation9], 4
      %s74 = int_to_ptr.vmem [resolvable:$true] %s73
      %79 = dma.hbm_to_vmem [thread:$0]  %s5, 46080, %s74, [#allocation8], 320, 320, 20
    $region25: #{net_forward.1} parent=1 // pred_fallthru
      _
    // Predicated region
    $region26: #{net_forward.1} parent=1 // pred_check
      _
    $region27: #{net_forward.1} parent=1 // pred_check_branch
      %81 = sbr.rel (0) target = $region29
    $region28: #{net_forward.1} parent=1 // pred_region
      %s83 = ssub.s32 80, 80
      %84 = vsyncadd [#allocation11], %s83
      %s86 = sshll.u32 [#allocation10], 4
      %s87 = int_to_ptr.vmem [resolvable:$true] %s86
      %89 = dma.hbm_to_vmem [thread:$0]  %s6, 80, %s87, [#allocation11]
    $region29: #{net_forward.1} parent=1 // pred_fallthru
      _
    // Predicated region
    $region30: #{net_forward.1} parent=1 // pred_check
      _
    $region31: #{net_forward.1} parent=1 // pred_check_branch
      %91 = sbr.rel (0) target = $region33
    $region32: #{net_forward.1} parent=1 // pred_region
      %s93 = ssub.s32 20480, 20480
      %94 = vsyncadd [#allocation11], %s93
      %s95 = sshll.u32 [#allocation12], 4
      %s96 = int_to_ptr.vmem [resolvable:$true] %s95
      %101 = dma.hbm_to_vmem [thread:$0]  %s7, 20480, %s96, [#allocation11], 256, 256, 16
    $region33: #{net_forward.1} parent=1 // pred_fallthru
      _
    // Predicated region
    $region34: #{net_forward.1} parent=1 // pred_check
      _
    $region35: #{net_forward.1} parent=1 // pred_check_branch
      %103 = sbr.rel (0) target = $region37
    $region36: #{net_forward.1} parent=1 // pred_region
      %s105 = ssub.s32 64, 64
      %106 = vsyncadd [#allocation14], %s105
      %s108 = sshll.u32 [#allocation13], 4
      %s109 = int_to_ptr.vmem [resolvable:$true] %s108
      %111 = dma.hbm_to_vmem [thread:$0]  %s8, 64, %s109, [#allocation14]
    $region37: #{net_forward.1} parent=1 // pred_fallthru
      _
    // Predicated region
    $region38: #{net_forward.1} parent=1 // pred_check
      _
    $region39: #{net_forward.1} parent=1 // pred_check_branch
      %113 = sbr.rel (0) target = $region41
    $region40: #{net_forward.1} parent=1 // pred_region
      %s115 = ssub.s32 4096, 4096
      %116 = vsyncadd [#allocation14], %s115
      %s117 = sshll.u32 [#allocation15], 4
      %s118 = int_to_ptr.vmem [resolvable:$true] %s117
      %123 = dma.hbm_to_vmem [thread:$0]  %s9, 4096, %s118, [#allocation14], 64, 64, 4
    $region41: #{net_forward.1} parent=1 // pred_fallthru
      _
    // Predicated region
    $region42: #{net_forward.1} parent=1 // pred_check
      _
    $region43: #{net_forward.1} parent=1 // pred_check_branch
      %125 = sbr.rel (0) target = $region45
    $region44: #{net_forward.1} parent=1 // pred_region
      %s127 = ssub.s32 16, 16
      %128 = vsyncadd [#allocation17], %s127
      %s130 = sshll.u32 [#allocation16], 4
      %s131 = int_to_ptr.vmem [resolvable:$true] %s130
      %133 = dma.hbm_to_vmem [thread:$0]  %s10, 16, %s131, [#allocation17]
    $region45: #{net_forward.1} parent=1 // pred_fallthru
      _
    // Predicated region
    $region46: #{net_forward.1} parent=1 // pred_check
      _
    $region47: #{net_forward.1} parent=1 // pred_check_branch
      %135 = sbr.rel (0) target = $region49
    $region48: #{net_forward.1} parent=1 // pred_region
      %136 = dma.done [#allocation3], 9216
    $region49: #{net_forward.1} parent=1 // pred_fallthru
      _
    // Predicated region
    $region50: #{net_forward.1} parent=1 // pred_check
      _
    $region51: #{net_forward.1} parent=1 // pred_check_branch
      %138 = sbr.rel (0) target = $region53
    $region52: #{net_forward.1} parent=1 // pred_region
      %139 = dma.done [#allocation5], 144
    $region53: #{net_forward.1} parent=1 // pred_fallthru
      _
    // Predicated region
    $region54: #{net_forward.1} parent=1 // pred_check
      _
    $region55: #{net_forward.1} parent=1 // pred_check_branch
      %141 = sbr.rel (0) target = $region57
    $region56: #{net_forward.1} parent=1 // pred_region
      %142 = dma.done [#allocation5], 82944
    $region57: #{net_forward.1} parent=1 // pred_fallthru
      _
    // Predicated region
    $region58: #{net_forward.1} parent=1 // pred_check
      _
    $region59: #{net_forward.1} parent=1 // pred_check_branch
      %144 = sbr.rel (0) target = $region61
    $region60: #{net_forward.1} parent=1 // pred_region
      %145 = dma.done [#allocation8], 144
    $region61: #{net_forward.1} parent=1 // pred_fallthru
      _
    // Predicated region
    $region62: #{net_forward.1} parent=1 // pred_check
      _
    $region63: #{net_forward.1} parent=1 // pred_check_branch
      %147 = sbr.rel (0) target = $region65
    $region64: #{net_forward.1} parent=1 // pred_region
      %148 = dma.done [#allocation8], 46080
    $region65: #{net_forward.1} parent=1 // pred_fallthru
      _
    // Predicated region
    $region66: #{net_forward.1} parent=1 // pred_check
      _
    $region67: #{net_forward.1} parent=1 // pred_check_branch
      %150 = sbr.rel (0) target = $region69
    $region68: #{net_forward.1} parent=1 // pred_region
      %151 = dma.done [#allocation11], 80
    $region69: #{net_forward.1} parent=1 // pred_fallthru
      _
    // Predicated region
    $region70: #{net_forward.1} parent=1 // pred_check
      _
    $region71: #{net_forward.1} parent=1 // pred_check_branch
      %153 = sbr.rel (0) target = $region73
    $region72: #{net_forward.1} parent=1 // pred_region
      %154 = dma.done [#allocation11], 20480
    $region73: #{net_forward.1} parent=1 // pred_fallthru
      _
    // Predicated region
    $region74: #{net_forward.1} parent=1 // pred_check
      _
    $region75: #{net_forward.1} parent=1 // pred_check_branch
      %156 = sbr.rel (0) target = $region77
    $region76: #{net_forward.1} parent=1 // pred_region
      %157 = dma.done [#allocation14], 64
    $region77: #{net_forward.1} parent=1 // pred_fallthru
      _
    // Predicated region
    $region78: #{net_forward.1} parent=1 // pred_check
      _
    $region79: #{net_forward.1} parent=1 // pred_check_branch
      %159 = sbr.rel (0) target = $region81
    $region80: #{net_forward.1} parent=1 // pred_region
      %160 = dma.done [#allocation14], 4096
    $region81: #{net_forward.1} parent=1 // pred_fallthru
      _
    // Predicated region
    $region82: #{net_forward.1} parent=1 // pred_check
      _
    $region83: #{net_forward.1} parent=1 // pred_check_branch
      %162 = sbr.rel (0) target = $region85
    $region84: #{net_forward.1} parent=1 // pred_region
      %163 = dma.done [#allocation17], 16
    $region85: #{net_forward.1} parent=1 // pred_fallthru
      _
    %v165 = vld [vmem:[%s0] sm:$0x3]
    %v166 = vpack.c.bf16 %v165, %v165
    %v167 = vld [vmem:[#allocation2] sm:$0xff]
    %v168 = vld [vmem:[#allocation2 + $0x8] sm:$0xff]
    %v169 = vld [vmem:[#allocation2 + $0x10] sm:$0xff]
    %v170 = vld [vmem:[#allocation2 + $0x18] sm:$0xff]
    %v171 = vld [vmem:[#allocation2 + $0x20] sm:$0xf]
    %v172 = vld [vmem:[#allocation2 + $0x24] sm:$0xff]
    %v173 = vld [vmem:[#allocation2 + $0x2c] sm:$0xff]
    %v174 = vld [vmem:[#allocation2 + $0x34] sm:$0xff]
    %v175 = vld [vmem:[#allocation2 + $0x3c] sm:$0xff]
    %v176 = vld [vmem:[#allocation2 + $0x44] sm:$0xf]
    %v177 = vld [vmem:[#allocation2 + $0x48] sm:$0xff]
    %v178 = vld [vmem:[#allocation2 + $0x50] sm:$0xff]
    %v179 = vld [vmem:[#allocation2 + $0x58] sm:$0xff]
    %v180 = vld [vmem:[#allocation2 + $0x60] sm:$0xff]
    %v181 = vld [vmem:[#allocation2 + $0x68] sm:$0xf]
    %v182 = vld [vmem:[#allocation2 + $0x6c] sm:$0xff]
    %v183 = vld [vmem:[#allocation2 + $0x74] sm:$0xff]
    %v184 = vld [vmem:[#allocation2 + $0x7c] sm:$0xff]
    %v185 = vld [vmem:[#allocation2 + $0x84] sm:$0xff]
    %v186 = vld [vmem:[#allocation2 + $0x8c] sm:$0xf]
    %v187 = vld [vmem:[#allocation2 + $0x90] sm:$0xff]
    %v188 = vld [vmem:[#allocation2 + $0x98] sm:$0xff]
    %v189 = vld [vmem:[#allocation2 + $0xa0] sm:$0xff]
    %v190 = vld [vmem:[#allocation2 + $0xa8] sm:$0xff]
    %v191 = vld [vmem:[#allocation2 + $0xb0] sm:$0xf]
    %v192 = vld [vmem:[#allocation2 + $0xb4] sm:$0xff]
    %v193 = vld [vmem:[#allocation2 + $0xbc] sm:$0xff]
    %v194 = vld [vmem:[#allocation2 + $0xc4] sm:$0xff]
    %v195 = vld [vmem:[#allocation2 + $0xcc] sm:$0xff]
    %v196 = vld [vmem:[#allocation2 + $0xd4] sm:$0xf]
    %v197 = vld [vmem:[#allocation2 + $0xd8] sm:$0xff]
    %v198 = vld [vmem:[#allocation2 + $0xe0] sm:$0xff]
    %v199 = vld [vmem:[#allocation2 + $0xe8] sm:$0xff]
    %v200 = vld [vmem:[#allocation2 + $0xf0] sm:$0xff]
    %v201 = vld [vmem:[#allocation2 + $0xf8] sm:$0xf]
    %v202 = vld [vmem:[#allocation2 + $0xfc] sm:$0xff]
    %v203 = vld [vmem:[#allocation2 + $0x104] sm:$0xff]
    %v204 = vld [vmem:[#allocation2 + $0x10c] sm:$0xff]
    %v205 = vld [vmem:[#allocation2 + $0x114] sm:$0xff]
    %v206 = vld [vmem:[#allocation2 + $0x11c] sm:$0xf]
    %v207 = vld [vmem:[#allocation2 + $0x120] sm:$0xff]
    %v208 = vld [vmem:[#allocation2 + $0x128] sm:$0xff]
    %v209 = vld [vmem:[#allocation2 + $0x130] sm:$0xff]
    %v210 = vld [vmem:[#allocation2 + $0x138] sm:$0xff]
    %v211 = vld [vmem:[#allocation2 + $0x140] sm:$0xf]
    %v212 = vld [vmem:[#allocation2 + $0x144] sm:$0xff]
    %v213 = vld [vmem:[#allocation2 + $0x14c] sm:$0xff]
    %v214 = vld [vmem:[#allocation2 + $0x154] sm:$0xff]
    %v215 = vld [vmem:[#allocation2 + $0x15c] sm:$0xff]
    %v216 = vld [vmem:[#allocation2 + $0x164] sm:$0xf]
    %v217 = vld [vmem:[#allocation2 + $0x168] sm:$0xff]
    %v218 = vld [vmem:[#allocation2 + $0x170] sm:$0xff]
    %v219 = vld [vmem:[#allocation2 + $0x178] sm:$0xff]
    %v220 = vld [vmem:[#allocation2 + $0x180] sm:$0xff]
    %v221 = vld [vmem:[#allocation2 + $0x188] sm:$0xf]
    %v222 = vld [vmem:[#allocation2 + $0x18c] sm:$0xff]
    %v223 = vld [vmem:[#allocation2 + $0x194] sm:$0xff]
    %v224 = vld [vmem:[#allocation2 + $0x19c] sm:$0xff]
    %v225 = vld [vmem:[#allocation2 + $0x1a4] sm:$0xff]
    %v226 = vld [vmem:[#allocation2 + $0x1ac] sm:$0xf]
    %v227 = vld [vmem:[#allocation2 + $0x1b0] sm:$0xff]
    %v228 = vld [vmem:[#allocation2 + $0x1b8] sm:$0xff]
    %v229 = vld [vmem:[#allocation2 + $0x1c0] sm:$0xff]
    %v230 = vld [vmem:[#allocation2 + $0x1c8] sm:$0xff]
    %v231 = vld [vmem:[#allocation2 + $0x1d0] sm:$0xf]
    %v232 = vld [vmem:[#allocation2 + $0x1d4] sm:$0xff]
    %v233 = vld [vmem:[#allocation2 + $0x1dc] sm:$0xff]
    %v234 = vld [vmem:[#allocation2 + $0x1e4] sm:$0xff]
    %v235 = vld [vmem:[#allocation2 + $0x1ec] sm:$0xff]
    %v236 = vld [vmem:[#allocation2 + $0x1f4] sm:$0xf]
    %v237 = vld [vmem:[#allocation2 + $0x1f8] sm:$0xff]
    %v238 = vld [vmem:[#allocation2 + $0x200] sm:$0xff]
    %v239 = vld [vmem:[#allocation2 + $0x208] sm:$0xff]
    %v240 = vld [vmem:[#allocation2 + $0x210] sm:$0xff]
    %v241 = vld [vmem:[#allocation2 + $0x218] sm:$0xf]
    %v242 = vld [vmem:[#allocation2 + $0x21c] sm:$0xff]
    %v243 = vld [vmem:[#allocation2 + $0x224] sm:$0xff]
    %v244 = vld [vmem:[#allocation2 + $0x22c] sm:$0xff]
    %v245 = vld [vmem:[#allocation2 + $0x234] sm:$0xff]
    %v246 = vld [vmem:[#allocation2 + $0x23c] sm:$0xf]
    %v247 = vld [vmem:[#allocation4] sm:$0xff]
    %v248 = vld [vmem:[#allocation4 + $0x8] sm:$0x1]
    %v251 = vlaneseq
    %v252 = vshrl.u32 %v251, 7
    %v253 = vsub.s32 0, %v252
    %v254 = vrot.slane %v247, %v253
    %v255 = vlaneseq
    %v256 = vshrl.u32 %v255, 7
    %v257 = vsub.s32 1, %v256
    %v258 = vrot.slane %v247, %v257
    %v259 = vlaneseq
    %v260 = vshrl.u32 %v259, 7
    %v261 = vsub.s32 2, %v260
    %v262 = vrot.slane %v247, %v261
    %v263 = vlaneseq
    %v264 = vshrl.u32 %v263, 7
    %v265 = vsub.s32 3, %v264
    %v266 = vrot.slane %v247, %v265
    %v267 = vlaneseq
    %v268 = vshrl.u32 %v267, 7
    %v269 = vsub.s32 4, %v268
    %v270 = vrot.slane %v247, %v269
    %v271 = vlaneseq
    %v272 = vshrl.u32 %v271, 7
    %v273 = vsub.s32 5, %v272
    %v274 = vrot.slane %v247, %v273
    %v275 = vlaneseq
    %v276 = vshrl.u32 %v275, 7
    %v277 = vsub.s32 6, %v276
    %v278 = vrot.slane %v247, %v277
    %v279 = vlaneseq
    %v280 = vshrl.u32 %v279, 7
    %v281 = vsub.s32 7, %v280
    %v282 = vrot.slane %v247, %v281
    %v283 = vlaneseq
    %v284 = vshrl.u32 %v283, 7
    %v285 = vsub.s32 0, %v284
    %v286 = vrot.slane %v248, %v285
    %v376 = vunpack.c.l.b16 %v167
    %v377 = vunpack.c.h.b16 %v167
    %v378 = vunpack.c.l.b16 %v168
    %v379 = vunpack.c.h.b16 %v168
    %v380 = vunpack.c.l.b16 %v169
    %v381 = vunpack.c.h.b16 %v169
    %v382 = vunpack.c.l.b16 %v170
    %v383 = vunpack.c.h.b16 %v170
    %v384 = vunpack.c.l.b16 %v171
    %v385 = vunpack.c.l.b16 %v172
    %v386 = vunpack.c.h.b16 %v172
    %v387 = vunpack.c.l.b16 %v173
    %v388 = vunpack.c.h.b16 %v173
    %v389 = vunpack.c.l.b16 %v174
    %v390 = vunpack.c.h.b16 %v174
    %v391 = vunpack.c.l.b16 %v175
    %v392 = vunpack.c.h.b16 %v175
    %v393 = vunpack.c.l.b16 %v176
    %v394 = vunpack.c.l.b16 %v177
    %v395 = vunpack.c.h.b16 %v177
    %v396 = vunpack.c.l.b16 %v178
    %v397 = vunpack.c.h.b16 %v178
    %v398 = vunpack.c.l.b16 %v179
    %v399 = vunpack.c.h.b16 %v179
    %v400 = vunpack.c.l.b16 %v180
    %v401 = vunpack.c.h.b16 %v180
    %v402 = vunpack.c.l.b16 %v181
    %v403 = vunpack.c.l.b16 %v182
    %v404 = vunpack.c.h.b16 %v182
    %v405 = vunpack.c.l.b16 %v183
    %v406 = vunpack.c.h.b16 %v183
    %v407 = vunpack.c.l.b16 %v184
    %v408 = vunpack.c.h.b16 %v184
    %v409 = vunpack.c.l.b16 %v185
    %v410 = vunpack.c.h.b16 %v185
    %v411 = vunpack.c.l.b16 %v186
    %v412 = vunpack.c.l.b16 %v187
    %v413 = vunpack.c.h.b16 %v187
    %v414 = vunpack.c.l.b16 %v188
    %v415 = vunpack.c.h.b16 %v188
    %v416 = vunpack.c.l.b16 %v189
    %v417 = vunpack.c.h.b16 %v189
    %v418 = vunpack.c.l.b16 %v190
    %v419 = vunpack.c.h.b16 %v190
    %v420 = vunpack.c.l.b16 %v191
    %v421 = vunpack.c.l.b16 %v192
    %v422 = vunpack.c.h.b16 %v192
    %v423 = vunpack.c.l.b16 %v193
    %v424 = vunpack.c.h.b16 %v193
    %v425 = vunpack.c.l.b16 %v194
    %v426 = vunpack.c.h.b16 %v194
    %v427 = vunpack.c.l.b16 %v195
    %v428 = vunpack.c.h.b16 %v195
    %v429 = vunpack.c.l.b16 %v196
    %v430 = vunpack.c.l.b16 %v197
    %v431 = vunpack.c.h.b16 %v197
    %v432 = vunpack.c.l.b16 %v198
    %v433 = vunpack.c.h.b16 %v198
    %v434 = vunpack.c.l.b16 %v199
    %v435 = vunpack.c.h.b16 %v199
    %v436 = vunpack.c.l.b16 %v200
    %v437 = vunpack.c.h.b16 %v200
    %v438 = vunpack.c.l.b16 %v201
    %v439 = vunpack.c.l.b16 %v202
    %v440 = vunpack.c.h.b16 %v202
    %v441 = vunpack.c.l.b16 %v203
    %v442 = vunpack.c.h.b16 %v203
    %v443 = vunpack.c.l.b16 %v204
    %v444 = vunpack.c.h.b16 %v204
    %v445 = vunpack.c.l.b16 %v205
    %v446 = vunpack.c.h.b16 %v205
    %v447 = vunpack.c.l.b16 %v206
    %v448 = vunpack.c.l.b16 %v207
    %v449 = vunpack.c.h.b16 %v207
    %v450 = vunpack.c.l.b16 %v208
    %v451 = vunpack.c.h.b16 %v208
    %v452 = vunpack.c.l.b16 %v209
    %v453 = vunpack.c.h.b16 %v209
    %v454 = vunpack.c.l.b16 %v210
    %v455 = vunpack.c.h.b16 %v210
    %v456 = vunpack.c.l.b16 %v211
    %v457 = vunpack.c.l.b16 %v212
    %v458 = vunpack.c.h.b16 %v212
    %v459 = vunpack.c.l.b16 %v213
    %v460 = vunpack.c.h.b16 %v213
    %v461 = vunpack.c.l.b16 %v214
    %v462 = vunpack.c.h.b16 %v214
    %v463 = vunpack.c.l.b16 %v215
    %v464 = vunpack.c.h.b16 %v215
    %v465 = vunpack.c.l.b16 %v216
    %v466 = vunpack.c.l.b16 %v217
    %v467 = vunpack.c.h.b16 %v217
    %v468 = vunpack.c.l.b16 %v218
    %v469 = vunpack.c.h.b16 %v218
    %v470 = vunpack.c.l.b16 %v219
    %v471 = vunpack.c.h.b16 %v219
    %v472 = vunpack.c.l.b16 %v220
    %v473 = vunpack.c.h.b16 %v220
    %v474 = vunpack.c.l.b16 %v221
    %v475 = vunpack.c.l.b16 %v222
    %v476 = vunpack.c.h.b16 %v222
    %v477 = vunpack.c.l.b16 %v223
    %v478 = vunpack.c.h.b16 %v223
    %v479 = vunpack.c.l.b16 %v224
    %v480 = vunpack.c.h.b16 %v224
    %v481 = vunpack.c.l.b16 %v225
    %v482 = vunpack.c.h.b16 %v225
    %v483 = vunpack.c.l.b16 %v226
    %v484 = vunpack.c.l.b16 %v227
    %v485 = vunpack.c.h.b16 %v227
    %v486 = vunpack.c.l.b16 %v228
    %v487 = vunpack.c.h.b16 %v228
    %v488 = vunpack.c.l.b16 %v229
    %v489 = vunpack.c.h.b16 %v229
    %v490 = vunpack.c.l.b16 %v230
    %v491 = vunpack.c.h.b16 %v230
    %v492 = vunpack.c.l.b16 %v231
    %v493 = vunpack.c.l.b16 %v232
    %v494 = vunpack.c.h.b16 %v232
    %v495 = vunpack.c.l.b16 %v233
    %v496 = vunpack.c.h.b16 %v233
    %v497 = vunpack.c.l.b16 %v234
    %v498 = vunpack.c.h.b16 %v234
    %v499 = vunpack.c.l.b16 %v235
    %v500 = vunpack.c.h.b16 %v235
    %v501 = vunpack.c.l.b16 %v236
    %v502 = vunpack.c.l.b16 %v237
    %v503 = vunpack.c.h.b16 %v237
    %v504 = vunpack.c.l.b16 %v238
    %v505 = vunpack.c.h.b16 %v238
    %v506 = vunpack.c.l.b16 %v239
    %v507 = vunpack.c.h.b16 %v239
    %v508 = vunpack.c.l.b16 %v240
    %v509 = vunpack.c.h.b16 %v240
    %v510 = vunpack.c.l.b16 %v241
    %v511 = vunpack.c.l.b16 %v242
    %v512 = vunpack.c.h.b16 %v242
    %v513 = vunpack.c.l.b16 %v243
    %v514 = vunpack.c.h.b16 %v243
    %v515 = vunpack.c.l.b16 %v244
    %v516 = vunpack.c.h.b16 %v244
    %v517 = vunpack.c.l.b16 %v245
    %v518 = vunpack.c.h.b16 %v245
    %v519 = vunpack.c.l.b16 %v246
    %v520 = vpack.c.b16 %v385, %v376
    %v521 = vpack.c.b16 %v386, %v377
    %v522 = vpack.c.b16 %v387, %v378
    %v523 = vpack.c.b16 %v388, %v379
    %v524 = vpack.c.b16 %v389, %v380
    %v525 = vpack.c.b16 %v390, %v381
    %v526 = vpack.c.b16 %v391, %v382
    %v527 = vpack.c.b16 %v392, %v383
    %v528 = vpack.c.b16 %v393, %v384
    %v529 = vpack.c.b16 %v403, %v394
    %v530 = vpack.c.b16 %v404, %v395
    %v531 = vpack.c.b16 %v405, %v396
    %v532 = vpack.c.b16 %v406, %v397
    %v533 = vpack.c.b16 %v407, %v398
    %v534 = vpack.c.b16 %v408, %v399
    %v535 = vpack.c.b16 %v409, %v400
    %v536 = vpack.c.b16 %v410, %v401
    %v537 = vpack.c.b16 %v411, %v402
    %v538 = vpack.c.b16 %v421, %v412
    %v539 = vpack.c.b16 %v422, %v413
    %v540 = vpack.c.b16 %v423, %v414
    %v541 = vpack.c.b16 %v424, %v415
    %v542 = vpack.c.b16 %v425, %v416
    %v543 = vpack.c.b16 %v426, %v417
    %v544 = vpack.c.b16 %v427, %v418
    %v545 = vpack.c.b16 %v428, %v419
    %v546 = vpack.c.b16 %v429, %v420
    %v547 = vpack.c.b16 %v439, %v430
    %v548 = vpack.c.b16 %v440, %v431
    %v549 = vpack.c.b16 %v441, %v432
    %v550 = vpack.c.b16 %v442, %v433
    %v551 = vpack.c.b16 %v443, %v434
    %v552 = vpack.c.b16 %v444, %v435
    %v553 = vpack.c.b16 %v445, %v436
    %v554 = vpack.c.b16 %v446, %v437
    %v555 = vpack.c.b16 %v447, %v438
    %v556 = vpack.c.b16 %v457, %v448
    %v557 = vpack.c.b16 %v458, %v449
    %v558 = vpack.c.b16 %v459, %v450
    %v559 = vpack.c.b16 %v460, %v451
    %v560 = vpack.c.b16 %v461, %v452
    %v561 = vpack.c.b16 %v462, %v453
    %v562 = vpack.c.b16 %v463, %v454
    %v563 = vpack.c.b16 %v464, %v455
    %v564 = vpack.c.b16 %v465, %v456
    %v565 = vpack.c.b16 %v475, %v466
    %v566 = vpack.c.b16 %v476, %v467
    %v567 = vpack.c.b16 %v477, %v468
    %v568 = vpack.c.b16 %v478, %v469
    %v569 = vpack.c.b16 %v479, %v470
    %v570 = vpack.c.b16 %v480, %v471
    %v571 = vpack.c.b16 %v481, %v472
    %v572 = vpack.c.b16 %v482, %v473
    %v573 = vpack.c.b16 %v483, %v474
    %v574 = vpack.c.b16 %v493, %v484
    %v575 = vpack.c.b16 %v494, %v485
    %v576 = vpack.c.b16 %v495, %v486
    %v577 = vpack.c.b16 %v496, %v487
    %v578 = vpack.c.b16 %v497, %v488
    %v579 = vpack.c.b16 %v498, %v489
    %v580 = vpack.c.b16 %v499, %v490
    %v581 = vpack.c.b16 %v500, %v491
    %v582 = vpack.c.b16 %v501, %v492
    %v583 = vpack.c.b16 %v511, %v502
    %v584 = vpack.c.b16 %v512, %v503
    %v585 = vpack.c.b16 %v513, %v504
    %v586 = vpack.c.b16 %v514, %v505
    %v587 = vpack.c.b16 %v515, %v506
    %v588 = vpack.c.b16 %v516, %v507
    %v589 = vpack.c.b16 %v517, %v508
    %v590 = vpack.c.b16 %v518, %v509
    %v591 = vpack.c.b16 %v519, %v510
    %664 = vmatprep.subr.bf16.mxu0 %v521
    %665 = vmatpush1.bf16.msra.mxu0 %v520
    %666 = vmatprep.subr.bf16.mxu0 %v530
    %667 = vmatpush1.bf16.msra.mxu0 %v529
    %668 = vmatprep.subr.bf16.mxu0 %v539
    %669 = vmatpush1.bf16.msra.mxu0 %v538
    %670 = vmatprep.subr.bf16.mxu0 %v548
    %671 = vmatpush1.bf16.msra.mxu0 %v547
    %672 = vmatprep.subr.bf16.mxu0 %v557
    %673 = vmatpush1.bf16.msra.mxu0 %v556
    %674 = vmatprep.subr.bf16.mxu0 %v566
    %675 = vmatpush1.bf16.msra.mxu0 %v565
    %676 = vmatprep.subr.bf16.mxu0 %v575
    %677 = vmatpush1.bf16.msra.mxu0 %v574
    %678 = vmatprep.subr.bf16.mxu0 %v584
    %679 = vmatpush1.bf16.msra.mxu0 %v583
    %680 = vmatprep.subr.bf16.mxu0 0
    %681 = vmatpush1.bf16.msra.mxu0 0
    %682 = vmatprep.subr.bf16.mxu0 0
    %683 = vmatpush1.bf16.msra.mxu0 0
    %684 = vmatprep.subr.bf16.mxu0 0
    %685 = vmatpush1.bf16.msra.mxu0 0
    %686 = vmatprep.subr.bf16.mxu0 0
    %687 = vmatpush1.bf16.msra.mxu0 0
    %688 = vmatprep.subr.bf16.mxu0 0
    %689 = vmatpush1.bf16.msra.mxu0 0
    %690 = vmatprep.subr.bf16.mxu0 0
    %691 = vmatpush1.bf16.msra.mxu0 0
    %692 = vmatprep.subr.bf16.mxu0 0
    %693 = vmatpush1.bf16.msra.mxu0 0
    %694 = vmatprep.subr.bf16.mxu0 0
    %695 = vmatpush1.bf16.msra.mxu0 0
    %696 = vmatprep.mubr.bf16.mxu0 0
    %697 = vmatmul.mubr.bf16.gmra.mrb[0].mxu0 %v166
    %v698 = vpop.f32.mrb[0].mxu0
    %v699 = vadd.f32 %v254, %v698
    %v700 = vpop.f32.mrb[0].mxu0
    %v701 = vadd.f32 %v258, %v700
    %v702 = vpop.f32.mrb[0].mxu0
    %v703 = vpop.f32.mrb[0].mxu0
    %704 = vdwg.mxu0
    %705 = vmatprep.subr.bf16.mxu0 %v523
    %706 = vmatpush1.bf16.msra.mxu0 %v522
    %707 = vmatprep.subr.bf16.mxu0 %v532
    %708 = vmatpush1.bf16.msra.mxu0 %v531
    %709 = vmatprep.subr.bf16.mxu0 %v541
    %710 = vmatpush1.bf16.msra.mxu0 %v540
    %711 = vmatprep.subr.bf16.mxu0 %v550
    %712 = vmatpush1.bf16.msra.mxu0 %v549
    %713 = vmatprep.subr.bf16.mxu0 %v559
    %714 = vmatpush1.bf16.msra.mxu0 %v558
    %715 = vmatprep.subr.bf16.mxu0 %v568
    %716 = vmatpush1.bf16.msra.mxu0 %v567
    %717 = vmatprep.subr.bf16.mxu0 %v577
    %718 = vmatpush1.bf16.msra.mxu0 %v576
    %719 = vmatprep.subr.bf16.mxu0 %v586
    %720 = vmatpush1.bf16.msra.mxu0 %v585
    %721 = vmatprep.subr.bf16.mxu0 0
    %722 = vmatpush1.bf16.msra.mxu0 0
    %723 = vmatprep.subr.bf16.mxu0 0
    %724 = vmatpush1.bf16.msra.mxu0 0
    %725 = vmatprep.subr.bf16.mxu0 0
    %726 = vmatpush1.bf16.msra.mxu0 0
    %727 = vmatprep.subr.bf16.mxu0 0
    %728 = vmatpush1.bf16.msra.mxu0 0
    %729 = vmatprep.subr.bf16.mxu0 0
    %730 = vmatpush1.bf16.msra.mxu0 0
    %731 = vmatprep.subr.bf16.mxu0 0
    %732 = vmatpush1.bf16.msra.mxu0 0
    %733 = vmatprep.subr.bf16.mxu0 0
    %734 = vmatpush1.bf16.msra.mxu0 0
    %735 = vmatprep.subr.bf16.mxu0 0
    %736 = vmatpush1.bf16.msra.mxu0 0
    %737 = vmatprep.mubr.bf16.mxu0 0
    %738 = vmatmul.mubr.bf16.gmra.mrb[0].mxu0 %v166
    %v739 = vpop.f32.mrb[0].mxu0
    %v740 = vadd.f32 %v262, %v739
    %v741 = vpop.f32.mrb[0].mxu0
    %v742 = vadd.f32 %v266, %v741
    %v743 = vpop.f32.mrb[0].mxu0
    %v744 = vpop.f32.mrb[0].mxu0
    %745 = vdwg.mxu0
    %746 = vmatprep.subr.bf16.mxu0 %v525
    %747 = vmatpush1.bf16.msra.mxu0 %v524
    %748 = vmatprep.subr.bf16.mxu0 %v534
    %749 = vmatpush1.bf16.msra.mxu0 %v533
    %750 = vmatprep.subr.bf16.mxu0 %v543
    %751 = vmatpush1.bf16.msra.mxu0 %v542
    %752 = vmatprep.subr.bf16.mxu0 %v552
    %753 = vmatpush1.bf16.msra.mxu0 %v551
    %754 = vmatprep.subr.bf16.mxu0 %v561
    %755 = vmatpush1.bf16.msra.mxu0 %v560
    %756 = vmatprep.subr.bf16.mxu0 %v570
    %757 = vmatpush1.bf16.msra.mxu0 %v569
    %758 = vmatprep.subr.bf16.mxu0 %v579
    %759 = vmatpush1.bf16.msra.mxu0 %v578
    %760 = vmatprep.subr.bf16.mxu0 %v588
    %761 = vmatpush1.bf16.msra.mxu0 %v587
    %762 = vmatprep.subr.bf16.mxu0 0
    %763 = vmatpush1.bf16.msra.mxu0 0
    %764 = vmatprep.subr.bf16.mxu0 0
    %765 = vmatpush1.bf16.msra.mxu0 0
    %766 = vmatprep.subr.bf16.mxu0 0
    %767 = vmatpush1.bf16.msra.mxu0 0
    %768 = vmatprep.subr.bf16.mxu0 0
    %769 = vmatpush1.bf16.msra.mxu0 0
    %770 = vmatprep.subr.bf16.mxu0 0
    %771 = vmatpush1.bf16.msra.mxu0 0
    %772 = vmatprep.subr.bf16.mxu0 0
    %773 = vmatpush1.bf16.msra.mxu0 0
    %774 = vmatprep.subr.bf16.mxu0 0
    %775 = vmatpush1.bf16.msra.mxu0 0
    %776 = vmatprep.subr.bf16.mxu0 0
    %777 = vmatpush1.bf16.msra.mxu0 0
    %778 = vmatprep.mubr.bf16.mxu0 0
    %779 = vmatmul.mubr.bf16.gmra.mrb[0].mxu0 %v166
    %v780 = vpop.f32.mrb[0].mxu0
    %v781 = vadd.f32 %v270, %v780
    %v782 = vpop.f32.mrb[0].mxu0
    %v783 = vadd.f32 %v274, %v782
    %v784 = vpop.f32.mrb[0].mxu0
    %v785 = vpop.f32.mrb[0].mxu0
    %786 = vdwg.mxu0
    %787 = vmatprep.subr.bf16.mxu0 %v527
    %788 = vmatpush1.bf16.msra.mxu0 %v526
    %789 = vmatprep.subr.bf16.mxu0 %v536
    %790 = vmatpush1.bf16.msra.mxu0 %v535
    %791 = vmatprep.subr.bf16.mxu0 %v545
    %792 = vmatpush1.bf16.msra.mxu0 %v544
    %793 = vmatprep.subr.bf16.mxu0 %v554
    %794 = vmatpush1.bf16.msra.mxu0 %v553
    %795 = vmatprep.subr.bf16.mxu0 %v563
    %796 = vmatpush1.bf16.msra.mxu0 %v562
    %797 = vmatprep.subr.bf16.mxu0 %v572
    %798 = vmatpush1.bf16.msra.mxu0 %v571
    %799 = vmatprep.subr.bf16.mxu0 %v581
    %800 = vmatpush1.bf16.msra.mxu0 %v580
    %801 = vmatprep.subr.bf16.mxu0 %v590
    %802 = vmatpush1.bf16.msra.mxu0 %v589
    %803 = vmatprep.subr.bf16.mxu0 0
    %804 = vmatpush1.bf16.msra.mxu0 0
    %805 = vmatprep.subr.bf16.mxu0 0
    %806 = vmatpush1.bf16.msra.mxu0 0
    %807 = vmatprep.subr.bf16.mxu0 0
    %808 = vmatpush1.bf16.msra.mxu0 0
    %809 = vmatprep.subr.bf16.mxu0 0
    %810 = vmatpush1.bf16.msra.mxu0 0
    %811 = vmatprep.subr.bf16.mxu0 0
    %812 = vmatpush1.bf16.msra.mxu0 0
    %813 = vmatprep.subr.bf16.mxu0 0
    %814 = vmatpush1.bf16.msra.mxu0 0
    %815 = vmatprep.subr.bf16.mxu0 0
    %816 = vmatpush1.bf16.msra.mxu0 0
    %817 = vmatprep.subr.bf16.mxu0 0
    %818 = vmatpush1.bf16.msra.mxu0 0
    %819 = vmatprep.mubr.bf16.mxu0 0
    %820 = vmatmul.mubr.bf16.gmra.mrb[0].mxu0 %v166
    %v821 = vpop.f32.mrb[0].mxu0
    %v822 = vadd.f32 %v278, %v821
    %v823 = vpop.f32.mrb[0].mxu0
    %v824 = vadd.f32 %v282, %v823
    %v825 = vpop.f32.mrb[0].mxu0
    %v826 = vpop.f32.mrb[0].mxu0
    %827 = vdwg.mxu0
    %828 = vmatprep.subr.bf16.mxu0 0
    %829 = vmatpush1.bf16.msra.mxu0 %v528
    %830 = vmatprep.subr.bf16.mxu0 0
    %831 = vmatpush1.bf16.msra.mxu0 %v537
    %832 = vmatprep.subr.bf16.mxu0 0
    %833 = vmatpush1.bf16.msra.mxu0 %v546
    %834 = vmatprep.subr.bf16.mxu0 0
    %835 = vmatpush1.bf16.msra.mxu0 %v555
    %836 = vmatprep.subr.bf16.mxu0 0
    %837 = vmatpush1.bf16.msra.mxu0 %v564
    %838 = vmatprep.subr.bf16.mxu0 0
    %839 = vmatpush1.bf16.msra.mxu0 %v573
    %840 = vmatprep.subr.bf16.mxu0 0
    %841 = vmatpush1.bf16.msra.mxu0 %v582
    %842 = vmatprep.subr.bf16.mxu0 0
    %843 = vmatpush1.bf16.msra.mxu0 %v591
    %844 = vmatprep.subr.bf16.mxu0 0
    %845 = vmatpush1.bf16.msra.mxu0 0
    %846 = vmatprep.subr.bf16.mxu0 0
    %847 = vmatpush1.bf16.msra.mxu0 0
    %848 = vmatprep.subr.bf16.mxu0 0
    %849 = vmatpush1.bf16.msra.mxu0 0
    %850 = vmatprep.subr.bf16.mxu0 0
    %851 = vmatpush1.bf16.msra.mxu0 0
    %852 = vmatprep.subr.bf16.mxu0 0
    %853 = vmatpush1.bf16.msra.mxu0 0
    %854 = vmatprep.subr.bf16.mxu0 0
    %855 = vmatpush1.bf16.msra.mxu0 0
    %856 = vmatprep.subr.bf16.mxu0 0
    %857 = vmatpush1.bf16.msra.mxu0 0
    %858 = vmatprep.subr.bf16.mxu0 0
    %859 = vmatpush1.bf16.msra.mxu0 0
    %860 = vmatprep.mubr.bf16.mxu0 0
    %861 = vmatmul.mubr.bf16.gmra.mrb[0].mxu0 %v166
    %v862 = vpop.f32.mrb[0].mxu0
    %v863 = vadd.f32 %v286, %v862
    %v864 = vpop.f32.mrb[0].mxu0
    %v865 = vpop.f32.mrb[0].mxu0
    %v866 = vpop.f32.mrb[0].mxu0
    %867 = vdwg.mxu0
    %v868 = vmax.f32 %v699, 0.0
    %v869 = vmax.f32 %v701, 0.0
    %v870 = vmax.f32 %v740, 0.0
    %v871 = vmax.f32 %v742, 0.0
    %v872 = vmax.f32 %v781, 0.0
    %v873 = vmax.f32 %v783, 0.0
    %v874 = vmax.f32 %v822, 0.0
    %v875 = vmax.f32 %v824, 0.0
    %v876 = vmax.f32 %v863, 0.0
    %v877 = vpack.c.bf16 %v868, %v868
    %v878 = vpack.c.bf16 %v869, %v869
    %v879 = vpack.c.bf16 %v870, %v870
    %v880 = vpack.c.bf16 %v871, %v871
    %v881 = vpack.c.bf16 %v872, %v872
    %v882 = vpack.c.bf16 %v873, %v873
    %v883 = vpack.c.bf16 %v874, %v874
    %v884 = vpack.c.bf16 %v875, %v875
    %v885 = vpack.c.bf16 %v876, %v876
    %v886 = vld [vmem:[#allocation6] sm:$0xff]
    %v887 = vld [vmem:[#allocation6 + $0x8] sm:$0xff]
    %v888 = vld [vmem:[#allocation6 + $0x10] sm:$0xff]
    %v889 = vld [vmem:[#allocation6 + $0x18] sm:$0xff]
    %v890 = vld [vmem:[#allocation6 + $0x20] sm:$0xf]
    %v891 = vld [vmem:[#allocation6 + $0x24] sm:$0xff]
    %v892 = vld [vmem:[#allocation6 + $0x2c] sm:$0xff]
    %v893 = vld [vmem:[#allocation6 + $0x34] sm:$0xff]
    %v894 = vld [vmem:[#allocation6 + $0x3c] sm:$0xff]
    %v895 = vld [vmem:[#allocation6 + $0x44] sm:$0xf]
    %v896 = vld [vmem:[#allocation6 + $0x48] sm:$0xff]
    %v897 = vld [vmem:[#allocation6 + $0x50] sm:$0xff]
    %v898 = vld [vmem:[#allocation6 + $0x58] sm:$0xff]
    %v899 = vld [vmem:[#allocation6 + $0x60] sm:$0xff]
    %v900 = vld [vmem:[#allocation6 + $0x68] sm:$0xf]
    %v901 = vld [vmem:[#allocation6 + $0x6c] sm:$0xff]
    %v902 = vld [vmem:[#allocation6 + $0x74] sm:$0xff]
    %v903 = vld [vmem:[#allocation6 + $0x7c] sm:$0xff]
    %v904 = vld [vmem:[#allocation6 + $0x84] sm:$0xff]
    %v905 = vld [vmem:[#allocation6 + $0x8c] sm:$0xf]
    %v906 = vld [vmem:[#allocation6 + $0x90] sm:$0xff]
    %v907 = vld [vmem:[#allocation6 + $0x98] sm:$0xff]
    %v908 = vld [vmem:[#allocation6 + $0xa0] sm:$0xff]
    %v909 = vld [vmem:[#allocation6 + $0xa8] sm:$0xff]
    %v910 = vld [vmem:[#allocation6 + $0xb0] sm:$0xf]
    %v911 = vld [vmem:[#allocation6 + $0xb4] sm:$0xff]
    %v912 = vld [vmem:[#allocation6 + $0xbc] sm:$0xff]
    %v913 = vld [vmem:[#allocation6 + $0xc4] sm:$0xff]
    %v914 = vld [vmem:[#allocation6 + $0xcc] sm:$0xff]
    %v915 = vld [vmem:[#allocation6 + $0xd4] sm:$0xf]
    %v916 = vld [vmem:[#allocation6 + $0xd8] sm:$0xff]
    %v917 = vld [vmem:[#allocation6 + $0xe0] sm:$0xff]
    %v918 = vld [vmem:[#allocation6 + $0xe8] sm:$0xff]
    %v919 = vld [vmem:[#allocation6 + $0xf0] sm:$0xff]
    %v920 = vld [vmem:[#allocation6 + $0xf8] sm:$0xf]
    %v921 = vld [vmem:[#allocation6 + $0xfc] sm:$0xff]
    %v922 = vld [vmem:[#allocation6 + $0x104] sm:$0xff]
    %v923 = vld [vmem:[#allocation6 + $0x10c] sm:$0xff]
    %v924 = vld [vmem:[#allocation6 + $0x114] sm:$0xff]
    %v925 = vld [vmem:[#allocation6 + $0x11c] sm:$0xf]
    %v926 = vld [vmem:[#allocation6 + $0x120] sm:$0xff]
    %v927 = vld [vmem:[#allocation6 + $0x128] sm:$0xff]
    %v928 = vld [vmem:[#allocation6 + $0x130] sm:$0xff]
    %v929 = vld [vmem:[#allocation6 + $0x138] sm:$0xff]
    %v930 = vld [vmem:[#allocation6 + $0x140] sm:$0xf]
    %v931 = vld [vmem:[#allocation6 + $0x144] sm:$0xff]
    %v932 = vld [vmem:[#allocation6 + $0x14c] sm:$0xff]
    %v933 = vld [vmem:[#allocation6 + $0x154] sm:$0xff]
    %v934 = vld [vmem:[#allocation6 + $0x15c] sm:$0xff]
    %v935 = vld [vmem:[#allocation6 + $0x164] sm:$0xf]
    %v936 = vld [vmem:[#allocation6 + $0x168] sm:$0xff]
    %v937 = vld [vmem:[#allocation6 + $0x170] sm:$0xff]
    %v938 = vld [vmem:[#allocation6 + $0x178] sm:$0xff]
    %v939 = vld [vmem:[#allocation6 + $0x180] sm:$0xff]
    %v940 = vld [vmem:[#allocation6 + $0x188] sm:$0xf]
    %v941 = vld [vmem:[#allocation6 + $0x18c] sm:$0xff]
    %v942 = vld [vmem:[#allocation6 + $0x194] sm:$0xff]
    %v943 = vld [vmem:[#allocation6 + $0x19c] sm:$0xff]
    %v944 = vld [vmem:[#allocation6 + $0x1a4] sm:$0xff]
    %v945 = vld [vmem:[#allocation6 + $0x1ac] sm:$0xf]
    %v946 = vld [vmem:[#allocation6 + $0x1b0] sm:$0xff]
    %v947 = vld [vmem:[#allocation6 + $0x1b8] sm:$0xff]
    %v948 = vld [vmem:[#allocation6 + $0x1c0] sm:$0xff]
    %v949 = vld [vmem:[#allocation6 + $0x1c8] sm:$0xff]
    %v950 = vld [vmem:[#allocation6 + $0x1d0] sm:$0xf]
    %v951 = vld [vmem:[#allocation6 + $0x1d4] sm:$0xff]
    %v952 = vld [vmem:[#allocation6 + $0x1dc] sm:$0xff]
    %v953 = vld [vmem:[#allocation6 + $0x1e4] sm:$0xff]
    %v954 = vld [vmem:[#allocation6 + $0x1ec] sm:$0xff]
    %v955 = vld [vmem:[#allocation6 + $0x1f4] sm:$0xf]
    %v956 = vld [vmem:[#allocation6 + $0x1f8] sm:$0xff]
    %v957 = vld [vmem:[#allocation6 + $0x200] sm:$0xff]
    %v958 = vld [vmem:[#allocation6 + $0x208] sm:$0xff]
    %v959 = vld [vmem:[#allocation6 + $0x210] sm:$0xff]
    %v960 = vld [vmem:[#allocation6 + $0x218] sm:$0xf]
    %v961 = vld [vmem:[#allocation6 + $0x21c] sm:$0xff]
    %v962 = vld [vmem:[#allocation6 + $0x224] sm:$0xff]
    %v963 = vld [vmem:[#allocation6 + $0x22c] sm:$0xff]
    %v964 = vld [vmem:[#allocation6 + $0x234] sm:$0xff]
    %v965 = vld [vmem:[#allocation6 + $0x23c] sm:$0xf]
    %v966 = vld [vmem:[#allocation6 + $0x240] sm:$0xff]
    %v967 = vld [vmem:[#allocation6 + $0x248] sm:$0xff]
    %v968 = vld [vmem:[#allocation6 + $0x250] sm:$0xff]
    %v969 = vld [vmem:[#allocation6 + $0x258] sm:$0xff]
    %v970 = vld [vmem:[#allocation6 + $0x260] sm:$0xf]
    %v971 = vld [vmem:[#allocation6 + $0x264] sm:$0xff]
    %v972 = vld [vmem:[#allocation6 + $0x26c] sm:$0xff]
    %v973 = vld [vmem:[#allocation6 + $0x274] sm:$0xff]
    %v974 = vld [vmem:[#allocation6 + $0x27c] sm:$0xff]
    %v975 = vld [vmem:[#allocation6 + $0x284] sm:$0xf]
    %v976 = vld [vmem:[#allocation6 + $0x288] sm:$0xff]
    %v977 = vld [vmem:[#allocation6 + $0x290] sm:$0xff]
    %v978 = vld [vmem:[#allocation6 + $0x298] sm:$0xff]
    %v979 = vld [vmem:[#allocation6 + $0x2a0] sm:$0xff]
    %v980 = vld [vmem:[#allocation6 + $0x2a8] sm:$0xf]
    %v981 = vld [vmem:[#allocation6 + $0x2ac] sm:$0xff]
    %v982 = vld [vmem:[#allocation6 + $0x2b4] sm:$0xff]
    %v983 = vld [vmem:[#allocation6 + $0x2bc] sm:$0xff]
    %v984 = vld [vmem:[#allocation6 + $0x2c4] sm:$0xff]
    %v985 = vld [vmem:[#allocation6 + $0x2cc] sm:$0xf]
    %v986 = vld [vmem:[#allocation6 + $0x2d0] sm:$0xff]
    %v987 = vld [vmem:[#allocation6 + $0x2d8] sm:$0xff]
    %v988 = vld [vmem:[#allocation6 + $0x2e0] sm:$0xff]
    %v989 = vld [vmem:[#allocation6 + $0x2e8] sm:$0xff]
    %v990 = vld [vmem:[#allocation6 + $0x2f0] sm:$0xf]
    %v991 = vld [vmem:[#allocation6 + $0x2f4] sm:$0xff]
    %v992 = vld [vmem:[#allocation6 + $0x2fc] sm:$0xff]
    %v993 = vld [vmem:[#allocation6 + $0x304] sm:$0xff]
    %v994 = vld [vmem:[#allocation6 + $0x30c] sm:$0xff]
    %v995 = vld [vmem:[#allocation6 + $0x314] sm:$0xf]
    %v996 = vld [vmem:[#allocation6 + $0x318] sm:$0xff]
    %v997 = vld [vmem:[#allocation6 + $0x320] sm:$0xff]
    %v998 = vld [vmem:[#allocation6 + $0x328] sm:$0xff]
    %v999 = vld [vmem:[#allocation6 + $0x330] sm:$0xff]
    %v1000 = vld [vmem:[#allocation6 + $0x338] sm:$0xf]
    %v1001 = vld [vmem:[#allocation6 + $0x33c] sm:$0xff]
    %v1002 = vld [vmem:[#allocation6 + $0x344] sm:$0xff]
    %v1003 = vld [vmem:[#allocation6 + $0x34c] sm:$0xff]
    %v1004 = vld [vmem:[#allocation6 + $0x354] sm:$0xff]
    %v1005 = vld [vmem:[#allocation6 + $0x35c] sm:$0xf]
    %v1006 = vld [vmem:[#allocation6 + $0x360] sm:$0xff]
    %v1007 = vld [vmem:[#allocation6 + $0x368] sm:$0xff]
    %v1008 = vld [vmem:[#allocation6 + $0x370] sm:$0xff]
    %v1009 = vld [vmem:[#allocation6 + $0x378] sm:$0xff]
    %v1010 = vld [vmem:[#allocation6 + $0x380] sm:$0xf]
    %v1011 = vld [vmem:[#allocation6 + $0x384] sm:$0xff]
    %v1012 = vld [vmem:[#allocation6 + $0x38c] sm:$0xff]
    %v1013 = vld [vmem:[#allocation6 + $0x394] sm:$0xff]
    %v1014 = vld [vmem:[#allocation6 + $0x39c] sm:$0xff]
    %v1015 = vld [vmem:[#allocation6 + $0x3a4] sm:$0xf]
    %v1016 = vld [vmem:[#allocation6 + $0x3a8] sm:$0xff]
    %v1017 = vld [vmem:[#allocation6 + $0x3b0] sm:$0xff]
    %v1018 = vld [vmem:[#allocation6 + $0x3b8] sm:$0xff]
    %v1019 = vld [vmem:[#allocation6 + $0x3c0] sm:$0xff]
    %v1020 = vld [vmem:[#allocation6 + $0x3c8] sm:$0xf]
    %v1021 = vld [vmem:[#allocation6 + $0x3cc] sm:$0xff]
    %v1022 = vld [vmem:[#allocation6 + $0x3d4] sm:$0xff]
    %v1023 = vld [vmem:[#allocation6 + $0x3dc] sm:$0xff]
    %v1024 = vld [vmem:[#allocation6 + $0x3e4] sm:$0xff]
    %v1025 = vld [vmem:[#allocation6 + $0x3ec] sm:$0xf]
    %v1026 = vld [vmem:[#allocation6 + $0x3f0] sm:$0xff]
    %v1027 = vld [vmem:[#allocation6 + $0x3f8] sm:$0xff]
    %v1028 = vld [vmem:[#allocation6 + $0x400] sm:$0xff]
    %v1029 = vld [vmem:[#allocation6 + $0x408] sm:$0xff]
    %v1030 = vld [vmem:[#allocation6 + $0x410] sm:$0xf]
    %v1031 = vld [vmem:[#allocation6 + $0x414] sm:$0xff]
    %v1032 = vld [vmem:[#allocation6 + $0x41c] sm:$0xff]
    %v1033 = vld [vmem:[#allocation6 + $0x424] sm:$0xff]
    %v1034 = vld [vmem:[#allocation6 + $0x42c] sm:$0xff]
    %v1035 = vld [vmem:[#allocation6 + $0x434] sm:$0xf]
    %v1036 = vld [vmem:[#allocation6 + $0x438] sm:$0xff]
    %v1037 = vld [vmem:[#allocation6 + $0x440] sm:$0xff]
    %v1038 = vld [vmem:[#allocation6 + $0x448] sm:$0xff]
    %v1039 = vld [vmem:[#allocation6 + $0x450] sm:$0xff]
    %v1040 = vld [vmem:[#allocation6 + $0x458] sm:$0xf]
    %v1041 = vld [vmem:[#allocation6 + $0x45c] sm:$0xff]
    %v1042 = vld [vmem:[#allocation6 + $0x464] sm:$0xff]
    %v1043 = vld [vmem:[#allocation6 + $0x46c] sm:$0xff]
    %v1044 = vld [vmem:[#allocation6 + $0x474] sm:$0xff]
    %v1045 = vld [vmem:[#allocation6 + $0x47c] sm:$0xf]
    %v1046 = vld [vmem:[#allocation6 + $0x480] sm:$0xff]
    %v1047 = vld [vmem:[#allocation6 + $0x488] sm:$0xff]
    %v1048 = vld [vmem:[#allocation6 + $0x490] sm:$0xff]
    %v1049 = vld [vmem:[#allocation6 + $0x498] sm:$0xff]
    %v1050 = vld [vmem:[#allocation6 + $0x4a0] sm:$0xf]
    %v1051 = vld [vmem:[#allocation6 + $0x4a4] sm:$0xff]
    %v1052 = vld [vmem:[#allocation6 + $0x4ac] sm:$0xff]
    %v1053 = vld [vmem:[#allocation6 + $0x4b4] sm:$0xff]
    %v1054 = vld [vmem:[#allocation6 + $0x4bc] sm:$0xff]
    %v1055 = vld [vmem:[#allocation6 + $0x4c4] sm:$0xf]
    %v1056 = vld [vmem:[#allocation6 + $0x4c8] sm:$0xff]
    %v1057 = vld [vmem:[#allocation6 + $0x4d0] sm:$0xff]
    %v1058 = vld [vmem:[#allocation6 + $0x4d8] sm:$0xff]
    %v1059 = vld [vmem:[#allocation6 + $0x4e0] sm:$0xff]
    %v1060 = vld [vmem:[#allocation6 + $0x4e8] sm:$0xf]
    %v1061 = vld [vmem:[#allocation6 + $0x4ec] sm:$0xff]
    %v1062 = vld [vmem:[#allocation6 + $0x4f4] sm:$0xff]
    %v1063 = vld [vmem:[#allocation6 + $0x4fc] sm:$0xff]
    %v1064 = vld [vmem:[#allocation6 + $0x504] sm:$0xff]
    %v1065 = vld [vmem:[#allocation6 + $0x50c] sm:$0xf]
    %v1066 = vld [vmem:[#allocation6 + $0x510] sm:$0xff]
    %v1067 = vld [vmem:[#allocation6 + $0x518] sm:$0xff]
    %v1068 = vld [vmem:[#allocation6 + $0x520] sm:$0xff]
    %v1069 = vld [vmem:[#allocation6 + $0x528] sm:$0xff]
    %v1070 = vld [vmem:[#allocation6 + $0x530] sm:$0xf]
    %v1071 = vld [vmem:[#allocation6 + $0x534] sm:$0xff]
    %v1072 = vld [vmem:[#allocation6 + $0x53c] sm:$0xff]
    %v1073 = vld [vmem:[#allocation6 + $0x544] sm:$0xff]
    %v1074 = vld [vmem:[#allocation6 + $0x54c] sm:$0xff]
    %v1075 = vld [vmem:[#allocation6 + $0x554] sm:$0xf]
    %v1076 = vld [vmem:[#allocation6 + $0x558] sm:$0xff]
    %v1077 = vld [vmem:[#allocation6 + $0x560] sm:$0xff]
    %v1078 = vld [vmem:[#allocation6 + $0x568] sm:$0xff]
    %v1079 = vld [vmem:[#allocation6 + $0x570] sm:$0xff]
    %v1080 = vld [vmem:[#allocation6 + $0x578] sm:$0xf]
    %v1081 = vld [vmem:[#allocation6 + $0x57c] sm:$0xff]
    %v1082 = vld [vmem:[#allocation6 + $0x584] sm:$0xff]
    %v1083 = vld [vmem:[#allocation6 + $0x58c] sm:$0xff]
    %v1084 = vld [vmem:[#allocation6 + $0x594] sm:$0xff]
    %v1085 = vld [vmem:[#allocation6 + $0x59c] sm:$0xf]
    %v1086 = vld [vmem:[#allocation6 + $0x5a0] sm:$0xff]
    %v1087 = vld [vmem:[#allocation6 + $0x5a8] sm:$0xff]
    %v1088 = vld [vmem:[#allocation6 + $0x5b0] sm:$0xff]
    %v1089 = vld [vmem:[#allocation6 + $0x5b8] sm:$0xff]
    %v1090 = vld [vmem:[#allocation6 + $0x5c0] sm:$0xf]
    %v1091 = vld [vmem:[#allocation6 + $0x5c4] sm:$0xff]
    %v1092 = vld [vmem:[#allocation6 + $0x5cc] sm:$0xff]
    %v1093 = vld [vmem:[#allocation6 + $0x5d4] sm:$0xff]
    %v1094 = vld [vmem:[#allocation6 + $0x5dc] sm:$0xff]
    %v1095 = vld [vmem:[#allocation6 + $0x5e4] sm:$0xf]
    %v1096 = vld [vmem:[#allocation6 + $0x5e8] sm:$0xff]
    %v1097 = vld [vmem:[#allocation6 + $0x5f0] sm:$0xff]
    %v1098 = vld [vmem:[#allocation6 + $0x5f8] sm:$0xff]
    %v1099 = vld [vmem:[#allocation6 + $0x600] sm:$0xff]
    %v1100 = vld [vmem:[#allocation6 + $0x608] sm:$0xf]
    %v1101 = vld [vmem:[#allocation6 + $0x60c] sm:$0xff]
    %v1102 = vld [vmem:[#allocation6 + $0x614] sm:$0xff]
    %v1103 = vld [vmem:[#allocation6 + $0x61c] sm:$0xff]
    %v1104 = vld [vmem:[#allocation6 + $0x624] sm:$0xff]
    %v1105 = vld [vmem:[#allocation6 + $0x62c] sm:$0xf]
    %v1106 = vld [vmem:[#allocation6 + $0x630] sm:$0xff]
    %v1107 = vld [vmem:[#allocation6 + $0x638] sm:$0xff]
    %v1108 = vld [vmem:[#allocation6 + $0x640] sm:$0xff]
    %v1109 = vld [vmem:[#allocation6 + $0x648] sm:$0xff]
    %v1110 = vld [vmem:[#allocation6 + $0x650] sm:$0xf]
    %v1111 = vld [vmem:[#allocation6 + $0x654] sm:$0xff]
    %v1112 = vld [vmem:[#allocation6 + $0x65c] sm:$0xff]
    %v1113 = vld [vmem:[#allocation6 + $0x664] sm:$0xff]
    %v1114 = vld [vmem:[#allocation6 + $0x66c] sm:$0xff]
    %v1115 = vld [vmem:[#allocation6 + $0x674] sm:$0xf]
    %v1116 = vld [vmem:[#allocation6 + $0x678] sm:$0xff]
    %v1117 = vld [vmem:[#allocation6 + $0x680] sm:$0xff]
    %v1118 = vld [vmem:[#allocation6 + $0x688] sm:$0xff]
    %v1119 = vld [vmem:[#allocation6 + $0x690] sm:$0xff]
    %v1120 = vld [vmem:[#allocation6 + $0x698] sm:$0xf]
    %v1121 = vld [vmem:[#allocation6 + $0x69c] sm:$0xff]
    %v1122 = vld [vmem:[#allocation6 + $0x6a4] sm:$0xff]
    %v1123 = vld [vmem:[#allocation6 + $0x6ac] sm:$0xff]
    %v1124 = vld [vmem:[#allocation6 + $0x6b4] sm:$0xff]
    %v1125 = vld [vmem:[#allocation6 + $0x6bc] sm:$0xf]
    %v1126 = vld [vmem:[#allocation6 + $0x6c0] sm:$0xff]
    %v1127 = vld [vmem:[#allocation6 + $0x6c8] sm:$0xff]
    %v1128 = vld [vmem:[#allocation6 + $0x6d0] sm:$0xff]
    %v1129 = vld [vmem:[#allocation6 + $0x6d8] sm:$0xff]
    %v1130 = vld [vmem:[#allocation6 + $0x6e0] sm:$0xf]
    %v1131 = vld [vmem:[#allocation6 + $0x6e4] sm:$0xff]
    %v1132 = vld [vmem:[#allocation6 + $0x6ec] sm:$0xff]
    %v1133 = vld [vmem:[#allocation6 + $0x6f4] sm:$0xff]
    %v1134 = vld [vmem:[#allocation6 + $0x6fc] sm:$0xff]
    %v1135 = vld [vmem:[#allocation6 + $0x704] sm:$0xf]
    %v1136 = vld [vmem:[#allocation6 + $0x708] sm:$0xff]
    %v1137 = vld [vmem:[#allocation6 + $0x710] sm:$0xff]
    %v1138 = vld [vmem:[#allocation6 + $0x718] sm:$0xff]
    %v1139 = vld [vmem:[#allocation6 + $0x720] sm:$0xff]
    %v1140 = vld [vmem:[#allocation6 + $0x728] sm:$0xf]
    %v1141 = vld [vmem:[#allocation6 + $0x72c] sm:$0xff]
    %v1142 = vld [vmem:[#allocation6 + $0x734] sm:$0xff]
    %v1143 = vld [vmem:[#allocation6 + $0x73c] sm:$0xff]
    %v1144 = vld [vmem:[#allocation6 + $0x744] sm:$0xff]
    %v1145 = vld [vmem:[#allocation6 + $0x74c] sm:$0xf]
    %v1146 = vld [vmem:[#allocation6 + $0x750] sm:$0xff]
    %v1147 = vld [vmem:[#allocation6 + $0x758] sm:$0xff]
    %v1148 = vld [vmem:[#allocation6 + $0x760] sm:$0xff]
    %v1149 = vld [vmem:[#allocation6 + $0x768] sm:$0xff]
    %v1150 = vld [vmem:[#allocation6 + $0x770] sm:$0xf]
    %v1151 = vld [vmem:[#allocation6 + $0x774] sm:$0xff]
    %v1152 = vld [vmem:[#allocation6 + $0x77c] sm:$0xff]
    %v1153 = vld [vmem:[#allocation6 + $0x784] sm:$0xff]
    %v1154 = vld [vmem:[#allocation6 + $0x78c] sm:$0xff]
    %v1155 = vld [vmem:[#allocation6 + $0x794] sm:$0xf]
    %v1156 = vld [vmem:[#allocation6 + $0x798] sm:$0xff]
    %v1157 = vld [vmem:[#allocation6 + $0x7a0] sm:$0xff]
    %v1158 = vld [vmem:[#allocation6 + $0x7a8] sm:$0xff]
    %v1159 = vld [vmem:[#allocation6 + $0x7b0] sm:$0xff]
    %v1160 = vld [vmem:[#allocation6 + $0x7b8] sm:$0xf]
    %v1161 = vld [vmem:[#allocation6 + $0x7bc] sm:$0xff]
    %v1162 = vld [vmem:[#allocation6 + $0x7c4] sm:$0xff]
    %v1163 = vld [vmem:[#allocation6 + $0x7cc] sm:$0xff]
    %v1164 = vld [vmem:[#allocation6 + $0x7d4] sm:$0xff]
    %v1165 = vld [vmem:[#allocation6 + $0x7dc] sm:$0xf]
    %v1166 = vld [vmem:[#allocation6 + $0x7e0] sm:$0xff]
    %v1167 = vld [vmem:[#allocation6 + $0x7e8] sm:$0xff]
    %v1168 = vld [vmem:[#allocation6 + $0x7f0] sm:$0xff]
    %v1169 = vld [vmem:[#allocation6 + $0x7f8] sm:$0xff]
    %v1170 = vld [vmem:[#allocation6 + $0x800] sm:$0xf]
    %v1171 = vld [vmem:[#allocation6 + $0x804] sm:$0xff]
    %v1172 = vld [vmem:[#allocation6 + $0x80c] sm:$0xff]
    %v1173 = vld [vmem:[#allocation6 + $0x814] sm:$0xff]
    %v1174 = vld [vmem:[#allocation6 + $0x81c] sm:$0xff]
    %v1175 = vld [vmem:[#allocation6 + $0x824] sm:$0xf]
    %v1176 = vld [vmem:[#allocation6 + $0x828] sm:$0xff]
    %v1177 = vld [vmem:[#allocation6 + $0x830] sm:$0xff]
    %v1178 = vld [vmem:[#allocation6 + $0x838] sm:$0xff]
    %v1179 = vld [vmem:[#allocation6 + $0x840] sm:$0xff]
    %v1180 = vld [vmem:[#allocation6 + $0x848] sm:$0xf]
    %v1181 = vld [vmem:[#allocation6 + $0x84c] sm:$0xff]
    %v1182 = vld [vmem:[#allocation6 + $0x854] sm:$0xff]
    %v1183 = vld [vmem:[#allocation6 + $0x85c] sm:$0xff]
    %v1184 = vld [vmem:[#allocation6 + $0x864] sm:$0xff]
    %v1185 = vld [vmem:[#allocation6 + $0x86c] sm:$0xf]
    %v1186 = vld [vmem:[#allocation6 + $0x870] sm:$0xff]
    %v1187 = vld [vmem:[#allocation6 + $0x878] sm:$0xff]
    %v1188 = vld [vmem:[#allocation6 + $0x880] sm:$0xff]
    %v1189 = vld [vmem:[#allocation6 + $0x888] sm:$0xff]
    %v1190 = vld [vmem:[#allocation6 + $0x890] sm:$0xf]
    %v1191 = vld [vmem:[#allocation6 + $0x894] sm:$0xff]
    %v1192 = vld [vmem:[#allocation6 + $0x89c] sm:$0xff]
    %v1193 = vld [vmem:[#allocation6 + $0x8a4] sm:$0xff]
    %v1194 = vld [vmem:[#allocation6 + $0x8ac] sm:$0xff]
    %v1195 = vld [vmem:[#allocation6 + $0x8b4] sm:$0xf]
    %v1196 = vld [vmem:[#allocation6 + $0x8b8] sm:$0xff]
    %v1197 = vld [vmem:[#allocation6 + $0x8c0] sm:$0xff]
    %v1198 = vld [vmem:[#allocation6 + $0x8c8] sm:$0xff]
    %v1199 = vld [vmem:[#allocation6 + $0x8d0] sm:$0xff]
    %v1200 = vld [vmem:[#allocation6 + $0x8d8] sm:$0xf]
    %v1201 = vld [vmem:[#allocation6 + $0x8dc] sm:$0xff]
    %v1202 = vld [vmem:[#allocation6 + $0x8e4] sm:$0xff]
    %v1203 = vld [vmem:[#allocation6 + $0x8ec] sm:$0xff]
    %v1204 = vld [vmem:[#allocation6 + $0x8f4] sm:$0xff]
    %v1205 = vld [vmem:[#allocation6 + $0x8fc] sm:$0xf]
    %v1206 = vld [vmem:[#allocation6 + $0x900] sm:$0xff]
    %v1207 = vld [vmem:[#allocation6 + $0x908] sm:$0xff]
    %v1208 = vld [vmem:[#allocation6 + $0x910] sm:$0xff]
    %v1209 = vld [vmem:[#allocation6 + $0x918] sm:$0xff]
    %v1210 = vld [vmem:[#allocation6 + $0x920] sm:$0xf]
    %v1211 = vld [vmem:[#allocation6 + $0x924] sm:$0xff]
    %v1212 = vld [vmem:[#allocation6 + $0x92c] sm:$0xff]
    %v1213 = vld [vmem:[#allocation6 + $0x934] sm:$0xff]
    %v1214 = vld [vmem:[#allocation6 + $0x93c] sm:$0xff]
    %v1215 = vld [vmem:[#allocation6 + $0x944] sm:$0xf]
    %v1216 = vld [vmem:[#allocation6 + $0x948] sm:$0xff]
    %v1217 = vld [vmem:[#allocation6 + $0x950] sm:$0xff]
    %v1218 = vld [vmem:[#allocation6 + $0x958] sm:$0xff]
    %v1219 = vld [vmem:[#allocation6 + $0x960] sm:$0xff]
    %v1220 = vld [vmem:[#allocation6 + $0x968] sm:$0xf]
    %v1221 = vld [vmem:[#allocation6 + $0x96c] sm:$0xff]
    %v1222 = vld [vmem:[#allocation6 + $0x974] sm:$0xff]
    %v1223 = vld [vmem:[#allocation6 + $0x97c] sm:$0xff]
    %v1224 = vld [vmem:[#allocation6 + $0x984] sm:$0xff]
    %v1225 = vld [vmem:[#allocation6 + $0x98c] sm:$0xf]
    %v1226 = vld [vmem:[#allocation6 + $0x990] sm:$0xff]
    %v1227 = vld [vmem:[#allocation6 + $0x998] sm:$0xff]
    %v1228 = vld [vmem:[#allocation6 + $0x9a0] sm:$0xff]
    %v1229 = vld [vmem:[#allocation6 + $0x9a8] sm:$0xff]
    %v1230 = vld [vmem:[#allocation6 + $0x9b0] sm:$0xf]
    %v1231 = vld [vmem:[#allocation6 + $0x9b4] sm:$0xff]
    %v1232 = vld [vmem:[#allocation6 + $0x9bc] sm:$0xff]
    %v1233 = vld [vmem:[#allocation6 + $0x9c4] sm:$0xff]
    %v1234 = vld [vmem:[#allocation6 + $0x9cc] sm:$0xff]
    %v1235 = vld [vmem:[#allocation6 + $0x9d4] sm:$0xf]
    %v1236 = vld [vmem:[#allocation6 + $0x9d8] sm:$0xff]
    %v1237 = vld [vmem:[#allocation6 + $0x9e0] sm:$0xff]
    %v1238 = vld [vmem:[#allocation6 + $0x9e8] sm:$0xff]
    %v1239 = vld [vmem:[#allocation6 + $0x9f0] sm:$0xff]
    %v1240 = vld [vmem:[#allocation6 + $0x9f8] sm:$0xf]
    %v1241 = vld [vmem:[#allocation6 + $0x9fc] sm:$0xff]
    %v1242 = vld [vmem:[#allocation6 + $0xa04] sm:$0xff]
    %v1243 = vld [vmem:[#allocation6 + $0xa0c] sm:$0xff]
    %v1244 = vld [vmem:[#allocation6 + $0xa14] sm:$0xff]
    %v1245 = vld [vmem:[#allocation6 + $0xa1c] sm:$0xf]
    %v1246 = vld [vmem:[#allocation6 + $0xa20] sm:$0xff]
    %v1247 = vld [vmem:[#allocation6 + $0xa28] sm:$0xff]
    %v1248 = vld [vmem:[#allocation6 + $0xa30] sm:$0xff]
    %v1249 = vld [vmem:[#allocation6 + $0xa38] sm:$0xff]
    %v1250 = vld [vmem:[#allocation6 + $0xa40] sm:$0xf]
    %v1251 = vld [vmem:[#allocation6 + $0xa44] sm:$0xff]
    %v1252 = vld [vmem:[#allocation6 + $0xa4c] sm:$0xff]
    %v1253 = vld [vmem:[#allocation6 + $0xa54] sm:$0xff]
    %v1254 = vld [vmem:[#allocation6 + $0xa5c] sm:$0xff]
    %v1255 = vld [vmem:[#allocation6 + $0xa64] sm:$0xf]
    %v1256 = vld [vmem:[#allocation6 + $0xa68] sm:$0xff]
    %v1257 = vld [vmem:[#allocation6 + $0xa70] sm:$0xff]
    %v1258 = vld [vmem:[#allocation6 + $0xa78] sm:$0xff]
    %v1259 = vld [vmem:[#allocation6 + $0xa80] sm:$0xff]
    %v1260 = vld [vmem:[#allocation6 + $0xa88] sm:$0xf]
    %v1261 = vld [vmem:[#allocation6 + $0xa8c] sm:$0xff]
    %v1262 = vld [vmem:[#allocation6 + $0xa94] sm:$0xff]
    %v1263 = vld [vmem:[#allocation6 + $0xa9c] sm:$0xff]
    %v1264 = vld [vmem:[#allocation6 + $0xaa4] sm:$0xff]
    %v1265 = vld [vmem:[#allocation6 + $0xaac] sm:$0xf]
    %v1266 = vld [vmem:[#allocation6 + $0xab0] sm:$0xff]
    %v1267 = vld [vmem:[#allocation6 + $0xab8] sm:$0xff]
    %v1268 = vld [vmem:[#allocation6 + $0xac0] sm:$0xff]
    %v1269 = vld [vmem:[#allocation6 + $0xac8] sm:$0xff]
    %v1270 = vld [vmem:[#allocation6 + $0xad0] sm:$0xf]
    %v1271 = vld [vmem:[#allocation6 + $0xad4] sm:$0xff]
    %v1272 = vld [vmem:[#allocation6 + $0xadc] sm:$0xff]
    %v1273 = vld [vmem:[#allocation6 + $0xae4] sm:$0xff]
    %v1274 = vld [vmem:[#allocation6 + $0xaec] sm:$0xff]
    %v1275 = vld [vmem:[#allocation6 + $0xaf4] sm:$0xf]
    %v1276 = vld [vmem:[#allocation6 + $0xaf8] sm:$0xff]
    %v1277 = vld [vmem:[#allocation6 + $0xb00] sm:$0xff]
    %v1278 = vld [vmem:[#allocation6 + $0xb08] sm:$0xff]
    %v1279 = vld [vmem:[#allocation6 + $0xb10] sm:$0xff]
    %v1280 = vld [vmem:[#allocation6 + $0xb18] sm:$0xf]
    %v1281 = vld [vmem:[#allocation6 + $0xb1c] sm:$0xff]
    %v1282 = vld [vmem:[#allocation6 + $0xb24] sm:$0xff]
    %v1283 = vld [vmem:[#allocation6 + $0xb2c] sm:$0xff]
    %v1284 = vld [vmem:[#allocation6 + $0xb34] sm:$0xff]
    %v1285 = vld [vmem:[#allocation6 + $0xb3c] sm:$0xf]
    %v1286 = vld [vmem:[#allocation6 + $0xb40] sm:$0xff]
    %v1287 = vld [vmem:[#allocation6 + $0xb48] sm:$0xff]
    %v1288 = vld [vmem:[#allocation6 + $0xb50] sm:$0xff]
    %v1289 = vld [vmem:[#allocation6 + $0xb58] sm:$0xff]
    %v1290 = vld [vmem:[#allocation6 + $0xb60] sm:$0xf]
    %v1291 = vld [vmem:[#allocation6 + $0xb64] sm:$0xff]
    %v1292 = vld [vmem:[#allocation6 + $0xb6c] sm:$0xff]
    %v1293 = vld [vmem:[#allocation6 + $0xb74] sm:$0xff]
    %v1294 = vld [vmem:[#allocation6 + $0xb7c] sm:$0xff]
    %v1295 = vld [vmem:[#allocation6 + $0xb84] sm:$0xf]
    %v1296 = vld [vmem:[#allocation6 + $0xb88] sm:$0xff]
    %v1297 = vld [vmem:[#allocation6 + $0xb90] sm:$0xff]
    %v1298 = vld [vmem:[#allocation6 + $0xb98] sm:$0xff]
    %v1299 = vld [vmem:[#allocation6 + $0xba0] sm:$0xff]
    %v1300 = vld [vmem:[#allocation6 + $0xba8] sm:$0xf]
    %v1301 = vld [vmem:[#allocation6 + $0xbac] sm:$0xff]
    %v1302 = vld [vmem:[#allocation6 + $0xbb4] sm:$0xff]
    %v1303 = vld [vmem:[#allocation6 + $0xbbc] sm:$0xff]
    %v1304 = vld [vmem:[#allocation6 + $0xbc4] sm:$0xff]
    %v1305 = vld [vmem:[#allocation6 + $0xbcc] sm:$0xf]
    %v1306 = vld [vmem:[#allocation6 + $0xbd0] sm:$0xff]
    %v1307 = vld [vmem:[#allocation6 + $0xbd8] sm:$0xff]
    %v1308 = vld [vmem:[#allocation6 + $0xbe0] sm:$0xff]
    %v1309 = vld [vmem:[#allocation6 + $0xbe8] sm:$0xff]
    %v1310 = vld [vmem:[#allocation6 + $0xbf0] sm:$0xf]
    %v1311 = vld [vmem:[#allocation6 + $0xbf4] sm:$0xff]
    %v1312 = vld [vmem:[#allocation6 + $0xbfc] sm:$0xff]
    %v1313 = vld [vmem:[#allocation6 + $0xc04] sm:$0xff]
    %v1314 = vld [vmem:[#allocation6 + $0xc0c] sm:$0xff]
    %v1315 = vld [vmem:[#allocation6 + $0xc14] sm:$0xf]
    %v1316 = vld [vmem:[#allocation6 + $0xc18] sm:$0xff]
    %v1317 = vld [vmem:[#allocation6 + $0xc20] sm:$0xff]
    %v1318 = vld [vmem:[#allocation6 + $0xc28] sm:$0xff]
    %v1319 = vld [vmem:[#allocation6 + $0xc30] sm:$0xff]
    %v1320 = vld [vmem:[#allocation6 + $0xc38] sm:$0xf]
    %v1321 = vld [vmem:[#allocation6 + $0xc3c] sm:$0xff]
    %v1322 = vld [vmem:[#allocation6 + $0xc44] sm:$0xff]
    %v1323 = vld [vmem:[#allocation6 + $0xc4c] sm:$0xff]
    %v1324 = vld [vmem:[#allocation6 + $0xc54] sm:$0xff]
    %v1325 = vld [vmem:[#allocation6 + $0xc5c] sm:$0xf]
    %v1326 = vld [vmem:[#allocation6 + $0xc60] sm:$0xff]
    %v1327 = vld [vmem:[#allocation6 + $0xc68] sm:$0xff]
    %v1328 = vld [vmem:[#allocation6 + $0xc70] sm:$0xff]
    %v1329 = vld [vmem:[#allocation6 + $0xc78] sm:$0xff]
    %v1330 = vld [vmem:[#allocation6 + $0xc80] sm:$0xf]
    %v1331 = vld [vmem:[#allocation6 + $0xc84] sm:$0xff]
    %v1332 = vld [vmem:[#allocation6 + $0xc8c] sm:$0xff]
    %v1333 = vld [vmem:[#allocation6 + $0xc94] sm:$0xff]
    %v1334 = vld [vmem:[#allocation6 + $0xc9c] sm:$0xff]
    %v1335 = vld [vmem:[#allocation6 + $0xca4] sm:$0xf]
    %v1336 = vld [vmem:[#allocation6 + $0xca8] sm:$0xff]
    %v1337 = vld [vmem:[#allocation6 + $0xcb0] sm:$0xff]
    %v1338 = vld [vmem:[#allocation6 + $0xcb8] sm:$0xff]
    %v1339 = vld [vmem:[#allocation6 + $0xcc0] sm:$0xff]
    %v1340 = vld [vmem:[#allocation6 + $0xcc8] sm:$0xf]
    %v1341 = vld [vmem:[#allocation6 + $0xccc] sm:$0xff]
    %v1342 = vld [vmem:[#allocation6 + $0xcd4] sm:$0xff]
    %v1343 = vld [vmem:[#allocation6 + $0xcdc] sm:$0xff]
    %v1344 = vld [vmem:[#allocation6 + $0xce4] sm:$0xff]
    %v1345 = vld [vmem:[#allocation6 + $0xcec] sm:$0xf]
    %v1346 = vld [vmem:[#allocation6 + $0xcf0] sm:$0xff]
    %v1347 = vld [vmem:[#allocation6 + $0xcf8] sm:$0xff]
    %v1348 = vld [vmem:[#allocation6 + $0xd00] sm:$0xff]
    %v1349 = vld [vmem:[#allocation6 + $0xd08] sm:$0xff]
    %v1350 = vld [vmem:[#allocation6 + $0xd10] sm:$0xf]
    %v1351 = vld [vmem:[#allocation6 + $0xd14] sm:$0xff]
    %v1352 = vld [vmem:[#allocation6 + $0xd1c] sm:$0xff]
    %v1353 = vld [vmem:[#allocation6 + $0xd24] sm:$0xff]
    %v1354 = vld [vmem:[#allocation6 + $0xd2c] sm:$0xff]
    %v1355 = vld [vmem:[#allocation6 + $0xd34] sm:$0xf]
    %v1356 = vld [vmem:[#allocation6 + $0xd38] sm:$0xff]
    %v1357 = vld [vmem:[#allocation6 + $0xd40] sm:$0xff]
    %v1358 = vld [vmem:[#allocation6 + $0xd48] sm:$0xff]
    %v1359 = vld [vmem:[#allocation6 + $0xd50] sm:$0xff]
    %v1360 = vld [vmem:[#allocation6 + $0xd58] sm:$0xf]
    %v1361 = vld [vmem:[#allocation6 + $0xd5c] sm:$0xff]
    %v1362 = vld [vmem:[#allocation6 + $0xd64] sm:$0xff]
    %v1363 = vld [vmem:[#allocation6 + $0xd6c] sm:$0xff]
    %v1364 = vld [vmem:[#allocation6 + $0xd74] sm:$0xff]
    %v1365 = vld [vmem:[#allocation6 + $0xd7c] sm:$0xf]
    %v1366 = vld [vmem:[#allocation6 + $0xd80] sm:$0xff]
    %v1367 = vld [vmem:[#allocation6 + $0xd88] sm:$0xff]
    %v1368 = vld [vmem:[#allocation6 + $0xd90] sm:$0xff]
    %v1369 = vld [vmem:[#allocation6 + $0xd98] sm:$0xff]
    %v1370 = vld [vmem:[#allocation6 + $0xda0] sm:$0xf]
    %v1371 = vld [vmem:[#allocation6 + $0xda4] sm:$0xff]
    %v1372 = vld [vmem:[#allocation6 + $0xdac] sm:$0xff]
    %v1373 = vld [vmem:[#allocation6 + $0xdb4] sm:$0xff]
    %v1374 = vld [vmem:[#allocation6 + $0xdbc] sm:$0xff]
    %v1375 = vld [vmem:[#allocation6 + $0xdc4] sm:$0xf]
    %v1376 = vld [vmem:[#allocation6 + $0xdc8] sm:$0xff]
    %v1377 = vld [vmem:[#allocation6 + $0xdd0] sm:$0xff]
    %v1378 = vld [vmem:[#allocation6 + $0xdd8] sm:$0xff]
    %v1379 = vld [vmem:[#allocation6 + $0xde0] sm:$0xff]
    %v1380 = vld [vmem:[#allocation6 + $0xde8] sm:$0xf]
    %v1381 = vld [vmem:[#allocation6 + $0xdec] sm:$0xff]
    %v1382 = vld [vmem:[#allocation6 + $0xdf4] sm:$0xff]
    %v1383 = vld [vmem:[#allocation6 + $0xdfc] sm:$0xff]
    %v1384 = vld [vmem:[#allocation6 + $0xe04] sm:$0xff]
    %v1385 = vld [vmem:[#allocation6 + $0xe0c] sm:$0xf]
    %v1386 = vld [vmem:[#allocation6 + $0xe10] sm:$0xff]
    %v1387 = vld [vmem:[#allocation6 + $0xe18] sm:$0xff]
    %v1388 = vld [vmem:[#allocation6 + $0xe20] sm:$0xff]
    %v1389 = vld [vmem:[#allocation6 + $0xe28] sm:$0xff]
    %v1390 = vld [vmem:[#allocation6 + $0xe30] sm:$0xf]
    %v1391 = vld [vmem:[#allocation6 + $0xe34] sm:$0xff]
    %v1392 = vld [vmem:[#allocation6 + $0xe3c] sm:$0xff]
    %v1393 = vld [vmem:[#allocation6 + $0xe44] sm:$0xff]
    %v1394 = vld [vmem:[#allocation6 + $0xe4c] sm:$0xff]
    %v1395 = vld [vmem:[#allocation6 + $0xe54] sm:$0xf]
    %v1396 = vld [vmem:[#allocation6 + $0xe58] sm:$0xff]
    %v1397 = vld [vmem:[#allocation6 + $0xe60] sm:$0xff]
    %v1398 = vld [vmem:[#allocation6 + $0xe68] sm:$0xff]
    %v1399 = vld [vmem:[#allocation6 + $0xe70] sm:$0xff]
    %v1400 = vld [vmem:[#allocation6 + $0xe78] sm:$0xf]
    %v1401 = vld [vmem:[#allocation6 + $0xe7c] sm:$0xff]
    %v1402 = vld [vmem:[#allocation6 + $0xe84] sm:$0xff]
    %v1403 = vld [vmem:[#allocation6 + $0xe8c] sm:$0xff]
    %v1404 = vld [vmem:[#allocation6 + $0xe94] sm:$0xff]
    %v1405 = vld [vmem:[#allocation6 + $0xe9c] sm:$0xf]
    %v1406 = vld [vmem:[#allocation6 + $0xea0] sm:$0xff]
    %v1407 = vld [vmem:[#allocation6 + $0xea8] sm:$0xff]
    %v1408 = vld [vmem:[#allocation6 + $0xeb0] sm:$0xff]
    %v1409 = vld [vmem:[#allocation6 + $0xeb8] sm:$0xff]
    %v1410 = vld [vmem:[#allocation6 + $0xec0] sm:$0xf]
    %v1411 = vld [vmem:[#allocation6 + $0xec4] sm:$0xff]
    %v1412 = vld [vmem:[#allocation6 + $0xecc] sm:$0xff]
    %v1413 = vld [vmem:[#allocation6 + $0xed4] sm:$0xff]
    %v1414 = vld [vmem:[#allocation6 + $0xedc] sm:$0xff]
    %v1415 = vld [vmem:[#allocation6 + $0xee4] sm:$0xf]
    %v1416 = vld [vmem:[#allocation6 + $0xee8] sm:$0xff]
    %v1417 = vld [vmem:[#allocation6 + $0xef0] sm:$0xff]
    %v1418 = vld [vmem:[#allocation6 + $0xef8] sm:$0xff]
    %v1419 = vld [vmem:[#allocation6 + $0xf00] sm:$0xff]
    %v1420 = vld [vmem:[#allocation6 + $0xf08] sm:$0xf]
    %v1421 = vld [vmem:[#allocation6 + $0xf0c] sm:$0xff]
    %v1422 = vld [vmem:[#allocation6 + $0xf14] sm:$0xff]
    %v1423 = vld [vmem:[#allocation6 + $0xf1c] sm:$0xff]
    %v1424 = vld [vmem:[#allocation6 + $0xf24] sm:$0xff]
    %v1425 = vld [vmem:[#allocation6 + $0xf2c] sm:$0xf]
    %v1426 = vld [vmem:[#allocation6 + $0xf30] sm:$0xff]
    %v1427 = vld [vmem:[#allocation6 + $0xf38] sm:$0xff]
    %v1428 = vld [vmem:[#allocation6 + $0xf40] sm:$0xff]
    %v1429 = vld [vmem:[#allocation6 + $0xf48] sm:$0xff]
    %v1430 = vld [vmem:[#allocation6 + $0xf50] sm:$0xf]
    %v1431 = vld [vmem:[#allocation6 + $0xf54] sm:$0xff]
    %v1432 = vld [vmem:[#allocation6 + $0xf5c] sm:$0xff]
    %v1433 = vld [vmem:[#allocation6 + $0xf64] sm:$0xff]
    %v1434 = vld [vmem:[#allocation6 + $0xf6c] sm:$0xff]
    %v1435 = vld [vmem:[#allocation6 + $0xf74] sm:$0xf]
    %v1436 = vld [vmem:[#allocation6 + $0xf78] sm:$0xff]
    %v1437 = vld [vmem:[#allocation6 + $0xf80] sm:$0xff]
    %v1438 = vld [vmem:[#allocation6 + $0xf88] sm:$0xff]
    %v1439 = vld [vmem:[#allocation6 + $0xf90] sm:$0xff]
    %v1440 = vld [vmem:[#allocation6 + $0xf98] sm:$0xf]
    %v1441 = vld [vmem:[#allocation6 + $0xf9c] sm:$0xff]
    %v1442 = vld [vmem:[#allocation6 + $0xfa4] sm:$0xff]
    %v1443 = vld [vmem:[#allocation6 + $0xfac] sm:$0xff]
    %v1444 = vld [vmem:[#allocation6 + $0xfb4] sm:$0xff]
    %v1445 = vld [vmem:[#allocation6 + $0xfbc] sm:$0xf]
    %v1446 = vld [vmem:[#allocation6 + $0xfc0] sm:$0xff]
    %v1447 = vld [vmem:[#allocation6 + $0xfc8] sm:$0xff]
    %v1448 = vld [vmem:[#allocation6 + $0xfd0] sm:$0xff]
    %v1449 = vld [vmem:[#allocation6 + $0xfd8] sm:$0xff]
    %v1450 = vld [vmem:[#allocation6 + $0xfe0] sm:$0xf]
    %v1451 = vld [vmem:[#allocation6 + $0xfe4] sm:$0xff]
    %v1452 = vld [vmem:[#allocation6 + $0xfec] sm:$0xff]
    %v1453 = vld [vmem:[#allocation6 + $0xff4] sm:$0xff]
    %v1454 = vld [vmem:[#allocation6 + $0xffc] sm:$0xff]
    %v1455 = vld [vmem:[#allocation6 + $0x1004] sm:$0xf]
    %v1456 = vld [vmem:[#allocation6 + $0x1008] sm:$0xff]
    %v1457 = vld [vmem:[#allocation6 + $0x1010] sm:$0xff]
    %v1458 = vld [vmem:[#allocation6 + $0x1018] sm:$0xff]
    %v1459 = vld [vmem:[#allocation6 + $0x1020] sm:$0xff]
    %v1460 = vld [vmem:[#allocation6 + $0x1028] sm:$0xf]
    %v1461 = vld [vmem:[#allocation6 + $0x102c] sm:$0xff]
    %v1462 = vld [vmem:[#allocation6 + $0x1034] sm:$0xff]
    %v1463 = vld [vmem:[#allocation6 + $0x103c] sm:$0xff]
    %v1464 = vld [vmem:[#allocation6 + $0x1044] sm:$0xff]
    %v1465 = vld [vmem:[#allocation6 + $0x104c] sm:$0xf]
    %v1466 = vld [vmem:[#allocation6 + $0x1050] sm:$0xff]
    %v1467 = vld [vmem:[#allocation6 + $0x1058] sm:$0xff]
    %v1468 = vld [vmem:[#allocation6 + $0x1060] sm:$0xff]
    %v1469 = vld [vmem:[#allocation6 + $0x1068] sm:$0xff]
    %v1470 = vld [vmem:[#allocation6 + $0x1070] sm:$0xf]
    %v1471 = vld [vmem:[#allocation6 + $0x1074] sm:$0xff]
    %v1472 = vld [vmem:[#allocation6 + $0x107c] sm:$0xff]
    %v1473 = vld [vmem:[#allocation6 + $0x1084] sm:$0xff]
    %v1474 = vld [vmem:[#allocation6 + $0x108c] sm:$0xff]
    %v1475 = vld [vmem:[#allocation6 + $0x1094] sm:$0xf]
    %v1476 = vld [vmem:[#allocation6 + $0x1098] sm:$0xff]
    %v1477 = vld [vmem:[#allocation6 + $0x10a0] sm:$0xff]
    %v1478 = vld [vmem:[#allocation6 + $0x10a8] sm:$0xff]
    %v1479 = vld [vmem:[#allocation6 + $0x10b0] sm:$0xff]
    %v1480 = vld [vmem:[#allocation6 + $0x10b8] sm:$0xf]
    %v1481 = vld [vmem:[#allocation6 + $0x10bc] sm:$0xff]
    %v1482 = vld [vmem:[#allocation6 + $0x10c4] sm:$0xff]
    %v1483 = vld [vmem:[#allocation6 + $0x10cc] sm:$0xff]
    %v1484 = vld [vmem:[#allocation6 + $0x10d4] sm:$0xff]
    %v1485 = vld [vmem:[#allocation6 + $0x10dc] sm:$0xf]
    %v1486 = vld [vmem:[#allocation6 + $0x10e0] sm:$0xff]
    %v1487 = vld [vmem:[#allocation6 + $0x10e8] sm:$0xff]
    %v1488 = vld [vmem:[#allocation6 + $0x10f0] sm:$0xff]
    %v1489 = vld [vmem:[#allocation6 + $0x10f8] sm:$0xff]
    %v1490 = vld [vmem:[#allocation6 + $0x1100] sm:$0xf]
    %v1491 = vld [vmem:[#allocation6 + $0x1104] sm:$0xff]
    %v1492 = vld [vmem:[#allocation6 + $0x110c] sm:$0xff]
    %v1493 = vld [vmem:[#allocation6 + $0x1114] sm:$0xff]
    %v1494 = vld [vmem:[#allocation6 + $0x111c] sm:$0xff]
    %v1495 = vld [vmem:[#allocation6 + $0x1124] sm:$0xf]
    %v1496 = vld [vmem:[#allocation6 + $0x1128] sm:$0xff]
    %v1497 = vld [vmem:[#allocation6 + $0x1130] sm:$0xff]
    %v1498 = vld [vmem:[#allocation6 + $0x1138] sm:$0xff]
    %v1499 = vld [vmem:[#allocation6 + $0x1140] sm:$0xff]
    %v1500 = vld [vmem:[#allocation6 + $0x1148] sm:$0xf]
    %v1501 = vld [vmem:[#allocation6 + $0x114c] sm:$0xff]
    %v1502 = vld [vmem:[#allocation6 + $0x1154] sm:$0xff]
    %v1503 = vld [vmem:[#allocation6 + $0x115c] sm:$0xff]
    %v1504 = vld [vmem:[#allocation6 + $0x1164] sm:$0xff]
    %v1505 = vld [vmem:[#allocation6 + $0x116c] sm:$0xf]
    %v1506 = vld [vmem:[#allocation6 + $0x1170] sm:$0xff]
    %v1507 = vld [vmem:[#allocation6 + $0x1178] sm:$0xff]
    %v1508 = vld [vmem:[#allocation6 + $0x1180] sm:$0xff]
    %v1509 = vld [vmem:[#allocation6 + $0x1188] sm:$0xff]
    %v1510 = vld [vmem:[#allocation6 + $0x1190] sm:$0xf]
    %v1511 = vld [vmem:[#allocation6 + $0x1194] sm:$0xff]
    %v1512 = vld [vmem:[#allocation6 + $0x119c] sm:$0xff]
    %v1513 = vld [vmem:[#allocation6 + $0x11a4] sm:$0xff]
    %v1514 = vld [vmem:[#allocation6 + $0x11ac] sm:$0xff]
    %v1515 = vld [vmem:[#allocation6 + $0x11b4] sm:$0xf]
    %v1516 = vld [vmem:[#allocation6 + $0x11b8] sm:$0xff]
    %v1517 = vld [vmem:[#allocation6 + $0x11c0] sm:$0xff]
    %v1518 = vld [vmem:[#allocation6 + $0x11c8] sm:$0xff]
    %v1519 = vld [vmem:[#allocation6 + $0x11d0] sm:$0xff]
    %v1520 = vld [vmem:[#allocation6 + $0x11d8] sm:$0xf]
    %v1521 = vld [vmem:[#allocation6 + $0x11dc] sm:$0xff]
    %v1522 = vld [vmem:[#allocation6 + $0x11e4] sm:$0xff]
    %v1523 = vld [vmem:[#allocation6 + $0x11ec] sm:$0xff]
    %v1524 = vld [vmem:[#allocation6 + $0x11f4] sm:$0xff]
    %v1525 = vld [vmem:[#allocation6 + $0x11fc] sm:$0xf]
    %v1526 = vld [vmem:[#allocation6 + $0x1200] sm:$0xff]
    %v1527 = vld [vmem:[#allocation6 + $0x1208] sm:$0xff]
    %v1528 = vld [vmem:[#allocation6 + $0x1210] sm:$0xff]
    %v1529 = vld [vmem:[#allocation6 + $0x1218] sm:$0xff]
    %v1530 = vld [vmem:[#allocation6 + $0x1220] sm:$0xf]
    %v1531 = vld [vmem:[#allocation6 + $0x1224] sm:$0xff]
    %v1532 = vld [vmem:[#allocation6 + $0x122c] sm:$0xff]
    %v1533 = vld [vmem:[#allocation6 + $0x1234] sm:$0xff]
    %v1534 = vld [vmem:[#allocation6 + $0x123c] sm:$0xff]
    %v1535 = vld [vmem:[#allocation6 + $0x1244] sm:$0xf]
    %v1536 = vld [vmem:[#allocation6 + $0x1248] sm:$0xff]
    %v1537 = vld [vmem:[#allocation6 + $0x1250] sm:$0xff]
    %v1538 = vld [vmem:[#allocation6 + $0x1258] sm:$0xff]
    %v1539 = vld [vmem:[#allocation6 + $0x1260] sm:$0xff]
    %v1540 = vld [vmem:[#allocation6 + $0x1268] sm:$0xf]
    %v1541 = vld [vmem:[#allocation6 + $0x126c] sm:$0xff]
    %v1542 = vld [vmem:[#allocation6 + $0x1274] sm:$0xff]
    %v1543 = vld [vmem:[#allocation6 + $0x127c] sm:$0xff]
    %v1544 = vld [vmem:[#allocation6 + $0x1284] sm:$0xff]
    %v1545 = vld [vmem:[#allocation6 + $0x128c] sm:$0xf]
    %v1546 = vld [vmem:[#allocation6 + $0x1290] sm:$0xff]
    %v1547 = vld [vmem:[#allocation6 + $0x1298] sm:$0xff]
    %v1548 = vld [vmem:[#allocation6 + $0x12a0] sm:$0xff]
    %v1549 = vld [vmem:[#allocation6 + $0x12a8] sm:$0xff]
    %v1550 = vld [vmem:[#allocation6 + $0x12b0] sm:$0xf]
    %v1551 = vld [vmem:[#allocation6 + $0x12b4] sm:$0xff]
    %v1552 = vld [vmem:[#allocation6 + $0x12bc] sm:$0xff]
    %v1553 = vld [vmem:[#allocation6 + $0x12c4] sm:$0xff]
    %v1554 = vld [vmem:[#allocation6 + $0x12cc] sm:$0xff]
    %v1555 = vld [vmem:[#allocation6 + $0x12d4] sm:$0xf]
    %v1556 = vld [vmem:[#allocation6 + $0x12d8] sm:$0xff]
    %v1557 = vld [vmem:[#allocation6 + $0x12e0] sm:$0xff]
    %v1558 = vld [vmem:[#allocation6 + $0x12e8] sm:$0xff]
    %v1559 = vld [vmem:[#allocation6 + $0x12f0] sm:$0xff]
    %v1560 = vld [vmem:[#allocation6 + $0x12f8] sm:$0xf]
    %v1561 = vld [vmem:[#allocation6 + $0x12fc] sm:$0xff]
    %v1562 = vld [vmem:[#allocation6 + $0x1304] sm:$0xff]
    %v1563 = vld [vmem:[#allocation6 + $0x130c] sm:$0xff]
    %v1564 = vld [vmem:[#allocation6 + $0x1314] sm:$0xff]
    %v1565 = vld [vmem:[#allocation6 + $0x131c] sm:$0xf]
    %v1566 = vld [vmem:[#allocation6 + $0x1320] sm:$0xff]
    %v1567 = vld [vmem:[#allocation6 + $0x1328] sm:$0xff]
    %v1568 = vld [vmem:[#allocation6 + $0x1330] sm:$0xff]
    %v1569 = vld [vmem:[#allocation6 + $0x1338] sm:$0xff]
    %v1570 = vld [vmem:[#allocation6 + $0x1340] sm:$0xf]
    %v1571 = vld [vmem:[#allocation6 + $0x1344] sm:$0xff]
    %v1572 = vld [vmem:[#allocation6 + $0x134c] sm:$0xff]
    %v1573 = vld [vmem:[#allocation6 + $0x1354] sm:$0xff]
    %v1574 = vld [vmem:[#allocation6 + $0x135c] sm:$0xff]
    %v1575 = vld [vmem:[#allocation6 + $0x1364] sm:$0xf]
    %v1576 = vld [vmem:[#allocation6 + $0x1368] sm:$0xff]
    %v1577 = vld [vmem:[#allocation6 + $0x1370] sm:$0xff]
    %v1578 = vld [vmem:[#allocation6 + $0x1378] sm:$0xff]
    %v1579 = vld [vmem:[#allocation6 + $0x1380] sm:$0xff]
    %v1580 = vld [vmem:[#allocation6 + $0x1388] sm:$0xf]
    %v1581 = vld [vmem:[#allocation6 + $0x138c] sm:$0xff]
    %v1582 = vld [vmem:[#allocation6 + $0x1394] sm:$0xff]
    %v1583 = vld [vmem:[#allocation6 + $0x139c] sm:$0xff]
    %v1584 = vld [vmem:[#allocation6 + $0x13a4] sm:$0xff]
    %v1585 = vld [vmem:[#allocation6 + $0x13ac] sm:$0xf]
    %v1586 = vld [vmem:[#allocation6 + $0x13b0] sm:$0xff]
    %v1587 = vld [vmem:[#allocation6 + $0x13b8] sm:$0xff]
    %v1588 = vld [vmem:[#allocation6 + $0x13c0] sm:$0xff]
    %v1589 = vld [vmem:[#allocation6 + $0x13c8] sm:$0xff]
    %v1590 = vld [vmem:[#allocation6 + $0x13d0] sm:$0xf]
    %v1591 = vld [vmem:[#allocation6 + $0x13d4] sm:$0xff]
    %v1592 = vld [vmem:[#allocation6 + $0x13dc] sm:$0xff]
    %v1593 = vld [vmem:[#allocation6 + $0x13e4] sm:$0xff]
    %v1594 = vld [vmem:[#allocation6 + $0x13ec] sm:$0xff]
    %v1595 = vld [vmem:[#allocation6 + $0x13f4] sm:$0xf]
    %v1596 = vld [vmem:[#allocation6 + $0x13f8] sm:$0xff]
    %v1597 = vld [vmem:[#allocation6 + $0x1400] sm:$0xff]
    %v1598 = vld [vmem:[#allocation6 + $0x1408] sm:$0xff]
    %v1599 = vld [vmem:[#allocation6 + $0x1410] sm:$0xff]
    %v1600 = vld [vmem:[#allocation6 + $0x1418] sm:$0xf]
    %v1601 = vld [vmem:[#allocation6 + $0x141c] sm:$0xff]
    %v1602 = vld [vmem:[#allocation6 + $0x1424] sm:$0xff]
    %v1603 = vld [vmem:[#allocation6 + $0x142c] sm:$0xff]
    %v1604 = vld [vmem:[#allocation6 + $0x1434] sm:$0xff]
    %v1605 = vld [vmem:[#allocation6 + $0x143c] sm:$0xf]
    %v1606 = vld [vmem:[#allocation7] sm:$0xff]
    %v1607 = vld [vmem:[#allocation7 + $0x8] sm:$0x1]
    %v1610 = vlaneseq
    %v1611 = vshrl.u32 %v1610, 7
    %v1612 = vsub.s32 0, %v1611
    %v1613 = vrot.slane %v1606, %v1612
    %v1614 = vlaneseq
    %v1615 = vshrl.u32 %v1614, 7
    %v1616 = vsub.s32 1, %v1615
    %v1617 = vrot.slane %v1606, %v1616
    %v1618 = vlaneseq
    %v1619 = vshrl.u32 %v1618, 7
    %v1620 = vsub.s32 2, %v1619
    %v1621 = vrot.slane %v1606, %v1620
    %v1622 = vlaneseq
    %v1623 = vshrl.u32 %v1622, 7
    %v1624 = vsub.s32 3, %v1623
    %v1625 = vrot.slane %v1606, %v1624
    %v1626 = vlaneseq
    %v1627 = vshrl.u32 %v1626, 7
    %v1628 = vsub.s32 4, %v1627
    %v1629 = vrot.slane %v1606, %v1628
    %v1630 = vlaneseq
    %v1631 = vshrl.u32 %v1630, 7
    %v1632 = vsub.s32 5, %v1631
    %v1633 = vrot.slane %v1606, %v1632
    %v1634 = vlaneseq
    %v1635 = vshrl.u32 %v1634, 7
    %v1636 = vsub.s32 6, %v1635
    %v1637 = vrot.slane %v1606, %v1636
    %v1638 = vlaneseq
    %v1639 = vshrl.u32 %v1638, 7
    %v1640 = vsub.s32 7, %v1639
    %v1641 = vrot.slane %v1606, %v1640
    %v1642 = vlaneseq
    %v1643 = vshrl.u32 %v1642, 7
    %v1644 = vsub.s32 0, %v1643
    %v1645 = vrot.slane %v1607, %v1644
    %v2375 = vunpack.c.l.b16 %v886
    %v2376 = vunpack.c.h.b16 %v886
    %v2377 = vunpack.c.l.b16 %v887
    %v2378 = vunpack.c.h.b16 %v887
    %v2379 = vunpack.c.l.b16 %v888
    %v2380 = vunpack.c.h.b16 %v888
    %v2381 = vunpack.c.l.b16 %v889
    %v2382 = vunpack.c.h.b16 %v889
    %v2383 = vunpack.c.l.b16 %v890
    %v2384 = vunpack.c.l.b16 %v891
    %v2385 = vunpack.c.h.b16 %v891
    %v2386 = vunpack.c.l.b16 %v892
    %v2387 = vunpack.c.h.b16 %v892
    %v2388 = vunpack.c.l.b16 %v893
    %v2389 = vunpack.c.h.b16 %v893
    %v2390 = vunpack.c.l.b16 %v894
    %v2391 = vunpack.c.h.b16 %v894
    %v2392 = vunpack.c.l.b16 %v895
    %v2393 = vunpack.c.l.b16 %v896
    %v2394 = vunpack.c.h.b16 %v896
    %v2395 = vunpack.c.l.b16 %v897
    %v2396 = vunpack.c.h.b16 %v897
    %v2397 = vunpack.c.l.b16 %v898
    %v2398 = vunpack.c.h.b16 %v898
    %v2399 = vunpack.c.l.b16 %v899
    %v2400 = vunpack.c.h.b16 %v899
    %v2401 = vunpack.c.l.b16 %v900
    %v2402 = vunpack.c.l.b16 %v901
    %v2403 = vunpack.c.h.b16 %v901
    %v2404 = vunpack.c.l.b16 %v902
    %v2405 = vunpack.c.h.b16 %v902
    %v2406 = vunpack.c.l.b16 %v903
    %v2407 = vunpack.c.h.b16 %v903
    %v2408 = vunpack.c.l.b16 %v904
    %v2409 = vunpack.c.h.b16 %v904
    %v2410 = vunpack.c.l.b16 %v905
    %v2411 = vunpack.c.l.b16 %v906
    %v2412 = vunpack.c.h.b16 %v906
    %v2413 = vunpack.c.l.b16 %v907
    %v2414 = vunpack.c.h.b16 %v907
    %v2415 = vunpack.c.l.b16 %v908
    %v2416 = vunpack.c.h.b16 %v908
    %v2417 = vunpack.c.l.b16 %v909
    %v2418 = vunpack.c.h.b16 %v909
    %v2419 = vunpack.c.l.b16 %v910
    %v2420 = vunpack.c.l.b16 %v911
    %v2421 = vunpack.c.h.b16 %v911
    %v2422 = vunpack.c.l.b16 %v912
    %v2423 = vunpack.c.h.b16 %v912
    %v2424 = vunpack.c.l.b16 %v913
    %v2425 = vunpack.c.h.b16 %v913
    %v2426 = vunpack.c.l.b16 %v914
    %v2427 = vunpack.c.h.b16 %v914
    %v2428 = vunpack.c.l.b16 %v915
    %v2429 = vunpack.c.l.b16 %v916
    %v2430 = vunpack.c.h.b16 %v916
    %v2431 = vunpack.c.l.b16 %v917
    %v2432 = vunpack.c.h.b16 %v917
    %v2433 = vunpack.c.l.b16 %v918
    %v2434 = vunpack.c.h.b16 %v918
    %v2435 = vunpack.c.l.b16 %v919
    %v2436 = vunpack.c.h.b16 %v919
    %v2437 = vunpack.c.l.b16 %v920
    %v2438 = vunpack.c.l.b16 %v921
    %v2439 = vunpack.c.h.b16 %v921
    %v2440 = vunpack.c.l.b16 %v922
    %v2441 = vunpack.c.h.b16 %v922
    %v2442 = vunpack.c.l.b16 %v923
    %v2443 = vunpack.c.h.b16 %v923
    %v2444 = vunpack.c.l.b16 %v924
    %v2445 = vunpack.c.h.b16 %v924
    %v2446 = vunpack.c.l.b16 %v925
    %v2447 = vunpack.c.l.b16 %v926
    %v2448 = vunpack.c.h.b16 %v926
    %v2449 = vunpack.c.l.b16 %v927
    %v2450 = vunpack.c.h.b16 %v927
    %v2451 = vunpack.c.l.b16 %v928
    %v2452 = vunpack.c.h.b16 %v928
    %v2453 = vunpack.c.l.b16 %v929
    %v2454 = vunpack.c.h.b16 %v929
    %v2455 = vunpack.c.l.b16 %v930
    %v2456 = vunpack.c.l.b16 %v931
    %v2457 = vunpack.c.h.b16 %v931
    %v2458 = vunpack.c.l.b16 %v932
    %v2459 = vunpack.c.h.b16 %v932
    %v2460 = vunpack.c.l.b16 %v933
    %v2461 = vunpack.c.h.b16 %v933
    %v2462 = vunpack.c.l.b16 %v934
    %v2463 = vunpack.c.h.b16 %v934
    %v2464 = vunpack.c.l.b16 %v935
    %v2465 = vunpack.c.l.b16 %v936
    %v2466 = vunpack.c.h.b16 %v936
    %v2467 = vunpack.c.l.b16 %v937
    %v2468 = vunpack.c.h.b16 %v937
    %v2469 = vunpack.c.l.b16 %v938
    %v2470 = vunpack.c.h.b16 %v938
    %v2471 = vunpack.c.l.b16 %v939
    %v2472 = vunpack.c.h.b16 %v939
    %v2473 = vunpack.c.l.b16 %v940
    %v2474 = vunpack.c.l.b16 %v941
    %v2475 = vunpack.c.h.b16 %v941
    %v2476 = vunpack.c.l.b16 %v942
    %v2477 = vunpack.c.h.b16 %v942
    %v2478 = vunpack.c.l.b16 %v943
    %v2479 = vunpack.c.h.b16 %v943
    %v2480 = vunpack.c.l.b16 %v944
    %v2481 = vunpack.c.h.b16 %v944
    %v2482 = vunpack.c.l.b16 %v945
    %v2483 = vunpack.c.l.b16 %v946
    %v2484 = vunpack.c.h.b16 %v946
    %v2485 = vunpack.c.l.b16 %v947
    %v2486 = vunpack.c.h.b16 %v947
    %v2487 = vunpack.c.l.b16 %v948
    %v2488 = vunpack.c.h.b16 %v948
    %v2489 = vunpack.c.l.b16 %v949
    %v2490 = vunpack.c.h.b16 %v949
    %v2491 = vunpack.c.l.b16 %v950
    %v2492 = vunpack.c.l.b16 %v951
    %v2493 = vunpack.c.h.b16 %v951
    %v2494 = vunpack.c.l.b16 %v952
    %v2495 = vunpack.c.h.b16 %v952
    %v2496 = vunpack.c.l.b16 %v953
    %v2497 = vunpack.c.h.b16 %v953
    %v2498 = vunpack.c.l.b16 %v954
    %v2499 = vunpack.c.h.b16 %v954
    %v2500 = vunpack.c.l.b16 %v955
    %v2501 = vunpack.c.l.b16 %v956
    %v2502 = vunpack.c.h.b16 %v956
    %v2503 = vunpack.c.l.b16 %v957
    %v2504 = vunpack.c.h.b16 %v957
    %v2505 = vunpack.c.l.b16 %v958
    %v2506 = vunpack.c.h.b16 %v958
    %v2507 = vunpack.c.l.b16 %v959
    %v2508 = vunpack.c.h.b16 %v959
    %v2509 = vunpack.c.l.b16 %v960
    %v2510 = vunpack.c.l.b16 %v961
    %v2511 = vunpack.c.h.b16 %v961
    %v2512 = vunpack.c.l.b16 %v962
    %v2513 = vunpack.c.h.b16 %v962
    %v2514 = vunpack.c.l.b16 %v963
    %v2515 = vunpack.c.h.b16 %v963
    %v2516 = vunpack.c.l.b16 %v964
    %v2517 = vunpack.c.h.b16 %v964
    %v2518 = vunpack.c.l.b16 %v965
    %v2519 = vunpack.c.l.b16 %v966
    %v2520 = vunpack.c.h.b16 %v966
    %v2521 = vunpack.c.l.b16 %v967
    %v2522 = vunpack.c.h.b16 %v967
    %v2523 = vunpack.c.l.b16 %v968
    %v2524 = vunpack.c.h.b16 %v968
    %v2525 = vunpack.c.l.b16 %v969
    %v2526 = vunpack.c.h.b16 %v969
    %v2527 = vunpack.c.l.b16 %v970
    %v2528 = vunpack.c.l.b16 %v971
    %v2529 = vunpack.c.h.b16 %v971
    %v2530 = vunpack.c.l.b16 %v972
    %v2531 = vunpack.c.h.b16 %v972
    %v2532 = vunpack.c.l.b16 %v973
    %v2533 = vunpack.c.h.b16 %v973
    %v2534 = vunpack.c.l.b16 %v974
    %v2535 = vunpack.c.h.b16 %v974
    %v2536 = vunpack.c.l.b16 %v975
    %v2537 = vunpack.c.l.b16 %v976
    %v2538 = vunpack.c.h.b16 %v976
    %v2539 = vunpack.c.l.b16 %v977
    %v2540 = vunpack.c.h.b16 %v977
    %v2541 = vunpack.c.l.b16 %v978
    %v2542 = vunpack.c.h.b16 %v978
    %v2543 = vunpack.c.l.b16 %v979
    %v2544 = vunpack.c.h.b16 %v979
    %v2545 = vunpack.c.l.b16 %v980
    %v2546 = vunpack.c.l.b16 %v981
    %v2547 = vunpack.c.h.b16 %v981
    %v2548 = vunpack.c.l.b16 %v982
    %v2549 = vunpack.c.h.b16 %v982
    %v2550 = vunpack.c.l.b16 %v983
    %v2551 = vunpack.c.h.b16 %v983
    %v2552 = vunpack.c.l.b16 %v984
    %v2553 = vunpack.c.h.b16 %v984
    %v2554 = vunpack.c.l.b16 %v985
    %v2555 = vunpack.c.l.b16 %v986
    %v2556 = vunpack.c.h.b16 %v986
    %v2557 = vunpack.c.l.b16 %v987
    %v2558 = vunpack.c.h.b16 %v987
    %v2559 = vunpack.c.l.b16 %v988
    %v2560 = vunpack.c.h.b16 %v988
    %v2561 = vunpack.c.l.b16 %v989
    %v2562 = vunpack.c.h.b16 %v989
    %v2563 = vunpack.c.l.b16 %v990
    %v2564 = vunpack.c.l.b16 %v991
    %v2565 = vunpack.c.h.b16 %v991
    %v2566 = vunpack.c.l.b16 %v992
    %v2567 = vunpack.c.h.b16 %v992
    %v2568 = vunpack.c.l.b16 %v993
    %v2569 = vunpack.c.h.b16 %v993
    %v2570 = vunpack.c.l.b16 %v994
    %v2571 = vunpack.c.h.b16 %v994
    %v2572 = vunpack.c.l.b16 %v995
    %v2573 = vunpack.c.l.b16 %v996
    %v2574 = vunpack.c.h.b16 %v996
    %v2575 = vunpack.c.l.b16 %v997
    %v2576 = vunpack.c.h.b16 %v997
    %v2577 = vunpack.c.l.b16 %v998
    %v2578 = vunpack.c.h.b16 %v998
    %v2579 = vunpack.c.l.b16 %v999
    %v2580 = vunpack.c.h.b16 %v999
    %v2581 = vunpack.c.l.b16 %v1000
    %v2582 = vunpack.c.l.b16 %v1001
    %v2583 = vunpack.c.h.b16 %v1001
    %v2584 = vunpack.c.l.b16 %v1002
    %v2585 = vunpack.c.h.b16 %v1002
    %v2586 = vunpack.c.l.b16 %v1003
    %v2587 = vunpack.c.h.b16 %v1003
    %v2588 = vunpack.c.l.b16 %v1004
    %v2589 = vunpack.c.h.b16 %v1004
    %v2590 = vunpack.c.l.b16 %v1005
    %v2591 = vunpack.c.l.b16 %v1006
    %v2592 = vunpack.c.h.b16 %v1006
    %v2593 = vunpack.c.l.b16 %v1007
    %v2594 = vunpack.c.h.b16 %v1007
    %v2595 = vunpack.c.l.b16 %v1008
    %v2596 = vunpack.c.h.b16 %v1008
    %v2597 = vunpack.c.l.b16 %v1009
    %v2598 = vunpack.c.h.b16 %v1009
    %v2599 = vunpack.c.l.b16 %v1010
    %v2600 = vunpack.c.l.b16 %v1011
    %v2601 = vunpack.c.h.b16 %v1011
    %v2602 = vunpack.c.l.b16 %v1012
    %v2603 = vunpack.c.h.b16 %v1012
    %v2604 = vunpack.c.l.b16 %v1013
    %v2605 = vunpack.c.h.b16 %v1013
    %v2606 = vunpack.c.l.b16 %v1014
    %v2607 = vunpack.c.h.b16 %v1014
    %v2608 = vunpack.c.l.b16 %v1015
    %v2609 = vunpack.c.l.b16 %v1016
    %v2610 = vunpack.c.h.b16 %v1016
    %v2611 = vunpack.c.l.b16 %v1017
    %v2612 = vunpack.c.h.b16 %v1017
    %v2613 = vunpack.c.l.b16 %v1018
    %v2614 = vunpack.c.h.b16 %v1018
    %v2615 = vunpack.c.l.b16 %v1019
    %v2616 = vunpack.c.h.b16 %v1019
    %v2617 = vunpack.c.l.b16 %v1020
    %v2618 = vunpack.c.l.b16 %v1021
    %v2619 = vunpack.c.h.b16 %v1021
    %v2620 = vunpack.c.l.b16 %v1022
    %v2621 = vunpack.c.h.b16 %v1022
    %v2622 = vunpack.c.l.b16 %v1023
    %v2623 = vunpack.c.h.b16 %v1023
    %v2624 = vunpack.c.l.b16 %v1024
    %v2625 = vunpack.c.h.b16 %v1024
    %v2626 = vunpack.c.l.b16 %v1025
    %v2627 = vunpack.c.l.b16 %v1026
    %v2628 = vunpack.c.h.b16 %v1026
    %v2629 = vunpack.c.l.b16 %v1027
    %v2630 = vunpack.c.h.b16 %v1027
    %v2631 = vunpack.c.l.b16 %v1028
    %v2632 = vunpack.c.h.b16 %v1028
    %v2633 = vunpack.c.l.b16 %v1029
    %v2634 = vunpack.c.h.b16 %v1029
    %v2635 = vunpack.c.l.b16 %v1030
    %v2636 = vunpack.c.l.b16 %v1031
    %v2637 = vunpack.c.h.b16 %v1031
    %v2638 = vunpack.c.l.b16 %v1032
    %v2639 = vunpack.c.h.b16 %v1032
    %v2640 = vunpack.c.l.b16 %v1033
    %v2641 = vunpack.c.h.b16 %v1033
    %v2642 = vunpack.c.l.b16 %v1034
    %v2643 = vunpack.c.h.b16 %v1034
    %v2644 = vunpack.c.l.b16 %v1035
    %v2645 = vunpack.c.l.b16 %v1036
    %v2646 = vunpack.c.h.b16 %v1036
    %v2647 = vunpack.c.l.b16 %v1037
    %v2648 = vunpack.c.h.b16 %v1037
    %v2649 = vunpack.c.l.b16 %v1038
    %v2650 = vunpack.c.h.b16 %v1038
    %v2651 = vunpack.c.l.b16 %v1039
    %v2652 = vunpack.c.h.b16 %v1039
    %v2653 = vunpack.c.l.b16 %v1040
    %v2654 = vunpack.c.l.b16 %v1041
    %v2655 = vunpack.c.h.b16 %v1041
    %v2656 = vunpack.c.l.b16 %v1042
    %v2657 = vunpack.c.h.b16 %v1042
    %v2658 = vunpack.c.l.b16 %v1043
    %v2659 = vunpack.c.h.b16 %v1043
    %v2660 = vunpack.c.l.b16 %v1044
    %v2661 = vunpack.c.h.b16 %v1044
    %v2662 = vunpack.c.l.b16 %v1045
    %v2663 = vunpack.c.l.b16 %v1046
    %v2664 = vunpack.c.h.b16 %v1046
    %v2665 = vunpack.c.l.b16 %v1047
    %v2666 = vunpack.c.h.b16 %v1047
    %v2667 = vunpack.c.l.b16 %v1048
    %v2668 = vunpack.c.h.b16 %v1048
    %v2669 = vunpack.c.l.b16 %v1049
    %v2670 = vunpack.c.h.b16 %v1049
    %v2671 = vunpack.c.l.b16 %v1050
    %v2672 = vunpack.c.l.b16 %v1051
    %v2673 = vunpack.c.h.b16 %v1051
    %v2674 = vunpack.c.l.b16 %v1052
    %v2675 = vunpack.c.h.b16 %v1052
    %v2676 = vunpack.c.l.b16 %v1053
    %v2677 = vunpack.c.h.b16 %v1053
    %v2678 = vunpack.c.l.b16 %v1054
    %v2679 = vunpack.c.h.b16 %v1054
    %v2680 = vunpack.c.l.b16 %v1055
    %v2681 = vunpack.c.l.b16 %v1056
    %v2682 = vunpack.c.h.b16 %v1056
    %v2683 = vunpack.c.l.b16 %v1057
    %v2684 = vunpack.c.h.b16 %v1057
    %v2685 = vunpack.c.l.b16 %v1058
    %v2686 = vunpack.c.h.b16 %v1058
    %v2687 = vunpack.c.l.b16 %v1059
    %v2688 = vunpack.c.h.b16 %v1059
    %v2689 = vunpack.c.l.b16 %v1060
    %v2690 = vunpack.c.l.b16 %v1061
    %v2691 = vunpack.c.h.b16 %v1061
    %v2692 = vunpack.c.l.b16 %v1062
    %v2693 = vunpack.c.h.b16 %v1062
    %v2694 = vunpack.c.l.b16 %v1063
    %v2695 = vunpack.c.h.b16 %v1063
    %v2696 = vunpack.c.l.b16 %v1064
    %v2697 = vunpack.c.h.b16 %v1064
    %v2698 = vunpack.c.l.b16 %v1065
    %v2699 = vunpack.c.l.b16 %v1066
    %v2700 = vunpack.c.h.b16 %v1066
    %v2701 = vunpack.c.l.b16 %v1067
    %v2702 = vunpack.c.h.b16 %v1067
    %v2703 = vunpack.c.l.b16 %v1068
    %v2704 = vunpack.c.h.b16 %v1068
    %v2705 = vunpack.c.l.b16 %v1069
    %v2706 = vunpack.c.h.b16 %v1069
    %v2707 = vunpack.c.l.b16 %v1070
    %v2708 = vunpack.c.l.b16 %v1071
    %v2709 = vunpack.c.h.b16 %v1071
    %v2710 = vunpack.c.l.b16 %v1072
    %v2711 = vunpack.c.h.b16 %v1072
    %v2712 = vunpack.c.l.b16 %v1073
    %v2713 = vunpack.c.h.b16 %v1073
    %v2714 = vunpack.c.l.b16 %v1074
    %v2715 = vunpack.c.h.b16 %v1074
    %v2716 = vunpack.c.l.b16 %v1075
    %v2717 = vunpack.c.l.b16 %v1076
    %v2718 = vunpack.c.h.b16 %v1076
    %v2719 = vunpack.c.l.b16 %v1077
    %v2720 = vunpack.c.h.b16 %v1077
    %v2721 = vunpack.c.l.b16 %v1078
    %v2722 = vunpack.c.h.b16 %v1078
    %v2723 = vunpack.c.l.b16 %v1079
    %v2724 = vunpack.c.h.b16 %v1079
    %v2725 = vunpack.c.l.b16 %v1080
    %v2726 = vunpack.c.l.b16 %v1081
    %v2727 = vunpack.c.h.b16 %v1081
    %v2728 = vunpack.c.l.b16 %v1082
    %v2729 = vunpack.c.h.b16 %v1082
    %v2730 = vunpack.c.l.b16 %v1083
    %v2731 = vunpack.c.h.b16 %v1083
    %v2732 = vunpack.c.l.b16 %v1084
    %v2733 = vunpack.c.h.b16 %v1084
    %v2734 = vunpack.c.l.b16 %v1085
    %v2735 = vunpack.c.l.b16 %v1086
    %v2736 = vunpack.c.h.b16 %v1086
    %v2737 = vunpack.c.l.b16 %v1087
    %v2738 = vunpack.c.h.b16 %v1087
    %v2739 = vunpack.c.l.b16 %v1088
    %v2740 = vunpack.c.h.b16 %v1088
    %v2741 = vunpack.c.l.b16 %v1089
    %v2742 = vunpack.c.h.b16 %v1089
    %v2743 = vunpack.c.l.b16 %v1090
    %v2744 = vunpack.c.l.b16 %v1091
    %v2745 = vunpack.c.h.b16 %v1091
    %v2746 = vunpack.c.l.b16 %v1092
    %v2747 = vunpack.c.h.b16 %v1092
    %v2748 = vunpack.c.l.b16 %v1093
    %v2749 = vunpack.c.h.b16 %v1093
    %v2750 = vunpack.c.l.b16 %v1094
    %v2751 = vunpack.c.h.b16 %v1094
    %v2752 = vunpack.c.l.b16 %v1095
    %v2753 = vunpack.c.l.b16 %v1096
    %v2754 = vunpack.c.h.b16 %v1096
    %v2755 = vunpack.c.l.b16 %v1097
    %v2756 = vunpack.c.h.b16 %v1097
    %v2757 = vunpack.c.l.b16 %v1098
    %v2758 = vunpack.c.h.b16 %v1098
    %v2759 = vunpack.c.l.b16 %v1099
    %v2760 = vunpack.c.h.b16 %v1099
    %v2761 = vunpack.c.l.b16 %v1100
    %v2762 = vunpack.c.l.b16 %v1101
    %v2763 = vunpack.c.h.b16 %v1101
    %v2764 = vunpack.c.l.b16 %v1102
    %v2765 = vunpack.c.h.b16 %v1102
    %v2766 = vunpack.c.l.b16 %v1103
    %v2767 = vunpack.c.h.b16 %v1103
    %v2768 = vunpack.c.l.b16 %v1104
    %v2769 = vunpack.c.h.b16 %v1104
    %v2770 = vunpack.c.l.b16 %v1105
    %v2771 = vunpack.c.l.b16 %v1106
    %v2772 = vunpack.c.h.b16 %v1106
    %v2773 = vunpack.c.l.b16 %v1107
    %v2774 = vunpack.c.h.b16 %v1107
    %v2775 = vunpack.c.l.b16 %v1108
    %v2776 = vunpack.c.h.b16 %v1108
    %v2777 = vunpack.c.l.b16 %v1109
    %v2778 = vunpack.c.h.b16 %v1109
    %v2779 = vunpack.c.l.b16 %v1110
    %v2780 = vunpack.c.l.b16 %v1111
    %v2781 = vunpack.c.h.b16 %v1111
    %v2782 = vunpack.c.l.b16 %v1112
    %v2783 = vunpack.c.h.b16 %v1112
    %v2784 = vunpack.c.l.b16 %v1113
    %v2785 = vunpack.c.h.b16 %v1113
    %v2786 = vunpack.c.l.b16 %v1114
    %v2787 = vunpack.c.h.b16 %v1114
    %v2788 = vunpack.c.l.b16 %v1115
    %v2789 = vunpack.c.l.b16 %v1116
    %v2790 = vunpack.c.h.b16 %v1116
    %v2791 = vunpack.c.l.b16 %v1117
    %v2792 = vunpack.c.h.b16 %v1117
    %v2793 = vunpack.c.l.b16 %v1118
    %v2794 = vunpack.c.h.b16 %v1118
    %v2795 = vunpack.c.l.b16 %v1119
    %v2796 = vunpack.c.h.b16 %v1119
    %v2797 = vunpack.c.l.b16 %v1120
    %v2798 = vunpack.c.l.b16 %v1121
    %v2799 = vunpack.c.h.b16 %v1121
    %v2800 = vunpack.c.l.b16 %v1122
    %v2801 = vunpack.c.h.b16 %v1122
    %v2802 = vunpack.c.l.b16 %v1123
    %v2803 = vunpack.c.h.b16 %v1123
    %v2804 = vunpack.c.l.b16 %v1124
    %v2805 = vunpack.c.h.b16 %v1124
    %v2806 = vunpack.c.l.b16 %v1125
    %v2807 = vunpack.c.l.b16 %v1126
    %v2808 = vunpack.c.h.b16 %v1126
    %v2809 = vunpack.c.l.b16 %v1127
    %v2810 = vunpack.c.h.b16 %v1127
    %v2811 = vunpack.c.l.b16 %v1128
    %v2812 = vunpack.c.h.b16 %v1128
    %v2813 = vunpack.c.l.b16 %v1129
    %v2814 = vunpack.c.h.b16 %v1129
    %v2815 = vunpack.c.l.b16 %v1130
    %v2816 = vunpack.c.l.b16 %v1131
    %v2817 = vunpack.c.h.b16 %v1131
    %v2818 = vunpack.c.l.b16 %v1132
    %v2819 = vunpack.c.h.b16 %v1132
    %v2820 = vunpack.c.l.b16 %v1133
    %v2821 = vunpack.c.h.b16 %v1133
    %v2822 = vunpack.c.l.b16 %v1134
    %v2823 = vunpack.c.h.b16 %v1134
    %v2824 = vunpack.c.l.b16 %v1135
    %v2825 = vunpack.c.l.b16 %v1136
    %v2826 = vunpack.c.h.b16 %v1136
    %v2827 = vunpack.c.l.b16 %v1137
    %v2828 = vunpack.c.h.b16 %v1137
    %v2829 = vunpack.c.l.b16 %v1138
    %v2830 = vunpack.c.h.b16 %v1138
    %v2831 = vunpack.c.l.b16 %v1139
    %v2832 = vunpack.c.h.b16 %v1139
    %v2833 = vunpack.c.l.b16 %v1140
    %v2834 = vunpack.c.l.b16 %v1141
    %v2835 = vunpack.c.h.b16 %v1141
    %v2836 = vunpack.c.l.b16 %v1142
    %v2837 = vunpack.c.h.b16 %v1142
    %v2838 = vunpack.c.l.b16 %v1143
    %v2839 = vunpack.c.h.b16 %v1143
    %v2840 = vunpack.c.l.b16 %v1144
    %v2841 = vunpack.c.h.b16 %v1144
    %v2842 = vunpack.c.l.b16 %v1145
    %v2843 = vunpack.c.l.b16 %v1146
    %v2844 = vunpack.c.h.b16 %v1146
    %v2845 = vunpack.c.l.b16 %v1147
    %v2846 = vunpack.c.h.b16 %v1147
    %v2847 = vunpack.c.l.b16 %v1148
    %v2848 = vunpack.c.h.b16 %v1148
    %v2849 = vunpack.c.l.b16 %v1149
    %v2850 = vunpack.c.h.b16 %v1149
    %v2851 = vunpack.c.l.b16 %v1150
    %v2852 = vunpack.c.l.b16 %v1151
    %v2853 = vunpack.c.h.b16 %v1151
    %v2854 = vunpack.c.l.b16 %v1152
    %v2855 = vunpack.c.h.b16 %v1152
    %v2856 = vunpack.c.l.b16 %v1153
    %v2857 = vunpack.c.h.b16 %v1153
    %v2858 = vunpack.c.l.b16 %v1154
    %v2859 = vunpack.c.h.b16 %v1154
    %v2860 = vunpack.c.l.b16 %v1155
    %v2861 = vunpack.c.l.b16 %v1156
    %v2862 = vunpack.c.h.b16 %v1156
    %v2863 = vunpack.c.l.b16 %v1157
    %v2864 = vunpack.c.h.b16 %v1157
    %v2865 = vunpack.c.l.b16 %v1158
    %v2866 = vunpack.c.h.b16 %v1158
    %v2867 = vunpack.c.l.b16 %v1159
    %v2868 = vunpack.c.h.b16 %v1159
    %v2869 = vunpack.c.l.b16 %v1160
    %v2870 = vunpack.c.l.b16 %v1161
    %v2871 = vunpack.c.h.b16 %v1161
    %v2872 = vunpack.c.l.b16 %v1162
    %v2873 = vunpack.c.h.b16 %v1162
    %v2874 = vunpack.c.l.b16 %v1163
    %v2875 = vunpack.c.h.b16 %v1163
    %v2876 = vunpack.c.l.b16 %v1164
    %v2877 = vunpack.c.h.b16 %v1164
    %v2878 = vunpack.c.l.b16 %v1165
    %v2879 = vunpack.c.l.b16 %v1166
    %v2880 = vunpack.c.h.b16 %v1166
    %v2881 = vunpack.c.l.b16 %v1167
    %v2882 = vunpack.c.h.b16 %v1167
    %v2883 = vunpack.c.l.b16 %v1168
    %v2884 = vunpack.c.h.b16 %v1168
    %v2885 = vunpack.c.l.b16 %v1169
    %v2886 = vunpack.c.h.b16 %v1169
    %v2887 = vunpack.c.l.b16 %v1170
    %v2888 = vunpack.c.l.b16 %v1171
    %v2889 = vunpack.c.h.b16 %v1171
    %v2890 = vunpack.c.l.b16 %v1172
    %v2891 = vunpack.c.h.b16 %v1172
    %v2892 = vunpack.c.l.b16 %v1173
    %v2893 = vunpack.c.h.b16 %v1173
    %v2894 = vunpack.c.l.b16 %v1174
    %v2895 = vunpack.c.h.b16 %v1174
    %v2896 = vunpack.c.l.b16 %v1175
    %v2897 = vunpack.c.l.b16 %v1176
    %v2898 = vunpack.c.h.b16 %v1176
    %v2899 = vunpack.c.l.b16 %v1177
    %v2900 = vunpack.c.h.b16 %v1177
    %v2901 = vunpack.c.l.b16 %v1178
    %v2902 = vunpack.c.h.b16 %v1178
    %v2903 = vunpack.c.l.b16 %v1179
    %v2904 = vunpack.c.h.b16 %v1179
    %v2905 = vunpack.c.l.b16 %v1180
    %v2906 = vunpack.c.l.b16 %v1181
    %v2907 = vunpack.c.h.b16 %v1181
    %v2908 = vunpack.c.l.b16 %v1182
    %v2909 = vunpack.c.h.b16 %v1182
    %v2910 = vunpack.c.l.b16 %v1183
    %v2911 = vunpack.c.h.b16 %v1183
    %v2912 = vunpack.c.l.b16 %v1184
    %v2913 = vunpack.c.h.b16 %v1184
    %v2914 = vunpack.c.l.b16 %v1185
    %v2915 = vunpack.c.l.b16 %v1186
    %v2916 = vunpack.c.h.b16 %v1186
    %v2917 = vunpack.c.l.b16 %v1187
    %v2918 = vunpack.c.h.b16 %v1187
    %v2919 = vunpack.c.l.b16 %v1188
    %v2920 = vunpack.c.h.b16 %v1188
    %v2921 = vunpack.c.l.b16 %v1189
    %v2922 = vunpack.c.h.b16 %v1189
    %v2923 = vunpack.c.l.b16 %v1190
    %v2924 = vunpack.c.l.b16 %v1191
    %v2925 = vunpack.c.h.b16 %v1191
    %v2926 = vunpack.c.l.b16 %v1192
    %v2927 = vunpack.c.h.b16 %v1192
    %v2928 = vunpack.c.l.b16 %v1193
    %v2929 = vunpack.c.h.b16 %v1193
    %v2930 = vunpack.c.l.b16 %v1194
    %v2931 = vunpack.c.h.b16 %v1194
    %v2932 = vunpack.c.l.b16 %v1195
    %v2933 = vunpack.c.l.b16 %v1196
    %v2934 = vunpack.c.h.b16 %v1196
    %v2935 = vunpack.c.l.b16 %v1197
    %v2936 = vunpack.c.h.b16 %v1197
    %v2937 = vunpack.c.l.b16 %v1198
    %v2938 = vunpack.c.h.b16 %v1198
    %v2939 = vunpack.c.l.b16 %v1199
    %v2940 = vunpack.c.h.b16 %v1199
    %v2941 = vunpack.c.l.b16 %v1200
    %v2942 = vunpack.c.l.b16 %v1201
    %v2943 = vunpack.c.h.b16 %v1201
    %v2944 = vunpack.c.l.b16 %v1202
    %v2945 = vunpack.c.h.b16 %v1202
    %v2946 = vunpack.c.l.b16 %v1203
    %v2947 = vunpack.c.h.b16 %v1203
    %v2948 = vunpack.c.l.b16 %v1204
    %v2949 = vunpack.c.h.b16 %v1204
    %v2950 = vunpack.c.l.b16 %v1205
    %v2951 = vunpack.c.l.b16 %v1206
    %v2952 = vunpack.c.h.b16 %v1206
    %v2953 = vunpack.c.l.b16 %v1207
    %v2954 = vunpack.c.h.b16 %v1207
    %v2955 = vunpack.c.l.b16 %v1208
    %v2956 = vunpack.c.h.b16 %v1208
    %v2957 = vunpack.c.l.b16 %v1209
    %v2958 = vunpack.c.h.b16 %v1209
    %v2959 = vunpack.c.l.b16 %v1210
    %v2960 = vunpack.c.l.b16 %v1211
    %v2961 = vunpack.c.h.b16 %v1211
    %v2962 = vunpack.c.l.b16 %v1212
    %v2963 = vunpack.c.h.b16 %v1212
    %v2964 = vunpack.c.l.b16 %v1213
    %v2965 = vunpack.c.h.b16 %v1213
    %v2966 = vunpack.c.l.b16 %v1214
    %v2967 = vunpack.c.h.b16 %v1214
    %v2968 = vunpack.c.l.b16 %v1215
    %v2969 = vunpack.c.l.b16 %v1216
    %v2970 = vunpack.c.h.b16 %v1216
    %v2971 = vunpack.c.l.b16 %v1217
    %v2972 = vunpack.c.h.b16 %v1217
    %v2973 = vunpack.c.l.b16 %v1218
    %v2974 = vunpack.c.h.b16 %v1218
    %v2975 = vunpack.c.l.b16 %v1219
    %v2976 = vunpack.c.h.b16 %v1219
    %v2977 = vunpack.c.l.b16 %v1220
    %v2978 = vunpack.c.l.b16 %v1221
    %v2979 = vunpack.c.h.b16 %v1221
    %v2980 = vunpack.c.l.b16 %v1222
    %v2981 = vunpack.c.h.b16 %v1222
    %v2982 = vunpack.c.l.b16 %v1223
    %v2983 = vunpack.c.h.b16 %v1223
    %v2984 = vunpack.c.l.b16 %v1224
    %v2985 = vunpack.c.h.b16 %v1224
    %v2986 = vunpack.c.l.b16 %v1225
    %v2987 = vunpack.c.l.b16 %v1226
    %v2988 = vunpack.c.h.b16 %v1226
    %v2989 = vunpack.c.l.b16 %v1227
    %v2990 = vunpack.c.h.b16 %v1227
    %v2991 = vunpack.c.l.b16 %v1228
    %v2992 = vunpack.c.h.b16 %v1228
    %v2993 = vunpack.c.l.b16 %v1229
    %v2994 = vunpack.c.h.b16 %v1229
    %v2995 = vunpack.c.l.b16 %v1230
    %v2996 = vunpack.c.l.b16 %v1231
    %v2997 = vunpack.c.h.b16 %v1231
    %v2998 = vunpack.c.l.b16 %v1232
    %v2999 = vunpack.c.h.b16 %v1232
    %v3000 = vunpack.c.l.b16 %v1233
    %v3001 = vunpack.c.h.b16 %v1233
    %v3002 = vunpack.c.l.b16 %v1234
    %v3003 = vunpack.c.h.b16 %v1234
    %v3004 = vunpack.c.l.b16 %v1235
    %v3005 = vunpack.c.l.b16 %v1236
    %v3006 = vunpack.c.h.b16 %v1236
    %v3007 = vunpack.c.l.b16 %v1237
    %v3008 = vunpack.c.h.b16 %v1237
    %v3009 = vunpack.c.l.b16 %v1238
    %v3010 = vunpack.c.h.b16 %v1238
    %v3011 = vunpack.c.l.b16 %v1239
    %v3012 = vunpack.c.h.b16 %v1239
    %v3013 = vunpack.c.l.b16 %v1240
    %v3014 = vunpack.c.l.b16 %v1241
    %v3015 = vunpack.c.h.b16 %v1241
    %v3016 = vunpack.c.l.b16 %v1242
    %v3017 = vunpack.c.h.b16 %v1242
    %v3018 = vunpack.c.l.b16 %v1243
    %v3019 = vunpack.c.h.b16 %v1243
    %v3020 = vunpack.c.l.b16 %v1244
    %v3021 = vunpack.c.h.b16 %v1244
    %v3022 = vunpack.c.l.b16 %v1245
    %v3023 = vunpack.c.l.b16 %v1246
    %v3024 = vunpack.c.h.b16 %v1246
    %v3025 = vunpack.c.l.b16 %v1247
    %v3026 = vunpack.c.h.b16 %v1247
    %v3027 = vunpack.c.l.b16 %v1248
    %v3028 = vunpack.c.h.b16 %v1248
    %v3029 = vunpack.c.l.b16 %v1249
    %v3030 = vunpack.c.h.b16 %v1249
    %v3031 = vunpack.c.l.b16 %v1250
    %v3032 = vunpack.c.l.b16 %v1251
    %v3033 = vunpack.c.h.b16 %v1251
    %v3034 = vunpack.c.l.b16 %v1252
    %v3035 = vunpack.c.h.b16 %v1252
    %v3036 = vunpack.c.l.b16 %v1253
    %v3037 = vunpack.c.h.b16 %v1253
    %v3038 = vunpack.c.l.b16 %v1254
    %v3039 = vunpack.c.h.b16 %v1254
    %v3040 = vunpack.c.l.b16 %v1255
    %v3041 = vunpack.c.l.b16 %v1256
    %v3042 = vunpack.c.h.b16 %v1256
    %v3043 = vunpack.c.l.b16 %v1257
    %v3044 = vunpack.c.h.b16 %v1257
    %v3045 = vunpack.c.l.b16 %v1258
    %v3046 = vunpack.c.h.b16 %v1258
    %v3047 = vunpack.c.l.b16 %v1259
    %v3048 = vunpack.c.h.b16 %v1259
    %v3049 = vunpack.c.l.b16 %v1260
    %v3050 = vunpack.c.l.b16 %v1261
    %v3051 = vunpack.c.h.b16 %v1261
    %v3052 = vunpack.c.l.b16 %v1262
    %v3053 = vunpack.c.h.b16 %v1262
    %v3054 = vunpack.c.l.b16 %v1263
    %v3055 = vunpack.c.h.b16 %v1263
    %v3056 = vunpack.c.l.b16 %v1264
    %v3057 = vunpack.c.h.b16 %v1264
    %v3058 = vunpack.c.l.b16 %v1265
    %v3059 = vunpack.c.l.b16 %v1266
    %v3060 = vunpack.c.h.b16 %v1266
    %v3061 = vunpack.c.l.b16 %v1267
    %v3062 = vunpack.c.h.b16 %v1267
    %v3063 = vunpack.c.l.b16 %v1268
    %v3064 = vunpack.c.h.b16 %v1268
    %v3065 = vunpack.c.l.b16 %v1269
    %v3066 = vunpack.c.h.b16 %v1269
    %v3067 = vunpack.c.l.b16 %v1270
    %v3068 = vunpack.c.l.b16 %v1271
    %v3069 = vunpack.c.h.b16 %v1271
    %v3070 = vunpack.c.l.b16 %v1272
    %v3071 = vunpack.c.h.b16 %v1272
    %v3072 = vunpack.c.l.b16 %v1273
    %v3073 = vunpack.c.h.b16 %v1273
    %v3074 = vunpack.c.l.b16 %v1274
    %v3075 = vunpack.c.h.b16 %v1274
    %v3076 = vunpack.c.l.b16 %v1275
    %v3077 = vunpack.c.l.b16 %v1276
    %v3078 = vunpack.c.h.b16 %v1276
    %v3079 = vunpack.c.l.b16 %v1277
    %v3080 = vunpack.c.h.b16 %v1277
    %v3081 = vunpack.c.l.b16 %v1278
    %v3082 = vunpack.c.h.b16 %v1278
    %v3083 = vunpack.c.l.b16 %v1279
    %v3084 = vunpack.c.h.b16 %v1279
    %v3085 = vunpack.c.l.b16 %v1280
    %v3086 = vunpack.c.l.b16 %v1281
    %v3087 = vunpack.c.h.b16 %v1281
    %v3088 = vunpack.c.l.b16 %v1282
    %v3089 = vunpack.c.h.b16 %v1282
    %v3090 = vunpack.c.l.b16 %v1283
    %v3091 = vunpack.c.h.b16 %v1283
    %v3092 = vunpack.c.l.b16 %v1284
    %v3093 = vunpack.c.h.b16 %v1284
    %v3094 = vunpack.c.l.b16 %v1285
    %v3095 = vunpack.c.l.b16 %v1286
    %v3096 = vunpack.c.h.b16 %v1286
    %v3097 = vunpack.c.l.b16 %v1287
    %v3098 = vunpack.c.h.b16 %v1287
    %v3099 = vunpack.c.l.b16 %v1288
    %v3100 = vunpack.c.h.b16 %v1288
    %v3101 = vunpack.c.l.b16 %v1289
    %v3102 = vunpack.c.h.b16 %v1289
    %v3103 = vunpack.c.l.b16 %v1290
    %v3104 = vunpack.c.l.b16 %v1291
    %v3105 = vunpack.c.h.b16 %v1291
    %v3106 = vunpack.c.l.b16 %v1292
    %v3107 = vunpack.c.h.b16 %v1292
    %v3108 = vunpack.c.l.b16 %v1293
    %v3109 = vunpack.c.h.b16 %v1293
    %v3110 = vunpack.c.l.b16 %v1294
    %v3111 = vunpack.c.h.b16 %v1294
    %v3112 = vunpack.c.l.b16 %v1295
    %v3113 = vunpack.c.l.b16 %v1296
    %v3114 = vunpack.c.h.b16 %v1296
    %v3115 = vunpack.c.l.b16 %v1297
    %v3116 = vunpack.c.h.b16 %v1297
    %v3117 = vunpack.c.l.b16 %v1298
    %v3118 = vunpack.c.h.b16 %v1298
    %v3119 = vunpack.c.l.b16 %v1299
    %v3120 = vunpack.c.h.b16 %v1299
    %v3121 = vunpack.c.l.b16 %v1300
    %v3122 = vunpack.c.l.b16 %v1301
    %v3123 = vunpack.c.h.b16 %v1301
    %v3124 = vunpack.c.l.b16 %v1302
    %v3125 = vunpack.c.h.b16 %v1302
    %v3126 = vunpack.c.l.b16 %v1303
    %v3127 = vunpack.c.h.b16 %v1303
    %v3128 = vunpack.c.l.b16 %v1304
    %v3129 = vunpack.c.h.b16 %v1304
    %v3130 = vunpack.c.l.b16 %v1305
    %v3131 = vunpack.c.l.b16 %v1306
    %v3132 = vunpack.c.h.b16 %v1306
    %v3133 = vunpack.c.l.b16 %v1307
    %v3134 = vunpack.c.h.b16 %v1307
    %v3135 = vunpack.c.l.b16 %v1308
    %v3136 = vunpack.c.h.b16 %v1308
    %v3137 = vunpack.c.l.b16 %v1309
    %v3138 = vunpack.c.h.b16 %v1309
    %v3139 = vunpack.c.l.b16 %v1310
    %v3140 = vunpack.c.l.b16 %v1311
    %v3141 = vunpack.c.h.b16 %v1311
    %v3142 = vunpack.c.l.b16 %v1312
    %v3143 = vunpack.c.h.b16 %v1312
    %v3144 = vunpack.c.l.b16 %v1313
    %v3145 = vunpack.c.h.b16 %v1313
    %v3146 = vunpack.c.l.b16 %v1314
    %v3147 = vunpack.c.h.b16 %v1314
    %v3148 = vunpack.c.l.b16 %v1315
    %v3149 = vunpack.c.l.b16 %v1316
    %v3150 = vunpack.c.h.b16 %v1316
    %v3151 = vunpack.c.l.b16 %v1317
    %v3152 = vunpack.c.h.b16 %v1317
    %v3153 = vunpack.c.l.b16 %v1318
    %v3154 = vunpack.c.h.b16 %v1318
    %v3155 = vunpack.c.l.b16 %v1319
    %v3156 = vunpack.c.h.b16 %v1319
    %v3157 = vunpack.c.l.b16 %v1320
    %v3158 = vunpack.c.l.b16 %v1321
    %v3159 = vunpack.c.h.b16 %v1321
    %v3160 = vunpack.c.l.b16 %v1322
    %v3161 = vunpack.c.h.b16 %v1322
    %v3162 = vunpack.c.l.b16 %v1323
    %v3163 = vunpack.c.h.b16 %v1323
    %v3164 = vunpack.c.l.b16 %v1324
    %v3165 = vunpack.c.h.b16 %v1324
    %v3166 = vunpack.c.l.b16 %v1325
    %v3167 = vunpack.c.l.b16 %v1326
    %v3168 = vunpack.c.h.b16 %v1326
    %v3169 = vunpack.c.l.b16 %v1327
    %v3170 = vunpack.c.h.b16 %v1327
    %v3171 = vunpack.c.l.b16 %v1328
    %v3172 = vunpack.c.h.b16 %v1328
    %v3173 = vunpack.c.l.b16 %v1329
    %v3174 = vunpack.c.h.b16 %v1329
    %v3175 = vunpack.c.l.b16 %v1330
    %v3176 = vunpack.c.l.b16 %v1331
    %v3177 = vunpack.c.h.b16 %v1331
    %v3178 = vunpack.c.l.b16 %v1332
    %v3179 = vunpack.c.h.b16 %v1332
    %v3180 = vunpack.c.l.b16 %v1333
    %v3181 = vunpack.c.h.b16 %v1333
    %v3182 = vunpack.c.l.b16 %v1334
    %v3183 = vunpack.c.h.b16 %v1334
    %v3184 = vunpack.c.l.b16 %v1335
    %v3185 = vunpack.c.l.b16 %v1336
    %v3186 = vunpack.c.h.b16 %v1336
    %v3187 = vunpack.c.l.b16 %v1337
    %v3188 = vunpack.c.h.b16 %v1337
    %v3189 = vunpack.c.l.b16 %v1338
    %v3190 = vunpack.c.h.b16 %v1338
    %v3191 = vunpack.c.l.b16 %v1339
    %v3192 = vunpack.c.h.b16 %v1339
    %v3193 = vunpack.c.l.b16 %v1340
    %v3194 = vunpack.c.l.b16 %v1341
    %v3195 = vunpack.c.h.b16 %v1341
    %v3196 = vunpack.c.l.b16 %v1342
    %v3197 = vunpack.c.h.b16 %v1342
    %v3198 = vunpack.c.l.b16 %v1343
    %v3199 = vunpack.c.h.b16 %v1343
    %v3200 = vunpack.c.l.b16 %v1344
    %v3201 = vunpack.c.h.b16 %v1344
    %v3202 = vunpack.c.l.b16 %v1345
    %v3203 = vunpack.c.l.b16 %v1346
    %v3204 = vunpack.c.h.b16 %v1346
    %v3205 = vunpack.c.l.b16 %v1347
    %v3206 = vunpack.c.h.b16 %v1347
    %v3207 = vunpack.c.l.b16 %v1348
    %v3208 = vunpack.c.h.b16 %v1348
    %v3209 = vunpack.c.l.b16 %v1349
    %v3210 = vunpack.c.h.b16 %v1349
    %v3211 = vunpack.c.l.b16 %v1350
    %v3212 = vunpack.c.l.b16 %v1351
    %v3213 = vunpack.c.h.b16 %v1351
    %v3214 = vunpack.c.l.b16 %v1352
    %v3215 = vunpack.c.h.b16 %v1352
    %v3216 = vunpack.c.l.b16 %v1353
    %v3217 = vunpack.c.h.b16 %v1353
    %v3218 = vunpack.c.l.b16 %v1354
    %v3219 = vunpack.c.h.b16 %v1354
    %v3220 = vunpack.c.l.b16 %v1355
    %v3221 = vunpack.c.l.b16 %v1356
    %v3222 = vunpack.c.h.b16 %v1356
    %v3223 = vunpack.c.l.b16 %v1357
    %v3224 = vunpack.c.h.b16 %v1357
    %v3225 = vunpack.c.l.b16 %v1358
    %v3226 = vunpack.c.h.b16 %v1358
    %v3227 = vunpack.c.l.b16 %v1359
    %v3228 = vunpack.c.h.b16 %v1359
    %v3229 = vunpack.c.l.b16 %v1360
    %v3230 = vunpack.c.l.b16 %v1361
    %v3231 = vunpack.c.h.b16 %v1361
    %v3232 = vunpack.c.l.b16 %v1362
    %v3233 = vunpack.c.h.b16 %v1362
    %v3234 = vunpack.c.l.b16 %v1363
    %v3235 = vunpack.c.h.b16 %v1363
    %v3236 = vunpack.c.l.b16 %v1364
    %v3237 = vunpack.c.h.b16 %v1364
    %v3238 = vunpack.c.l.b16 %v1365
    %v3239 = vunpack.c.l.b16 %v1366
    %v3240 = vunpack.c.h.b16 %v1366
    %v3241 = vunpack.c.l.b16 %v1367
    %v3242 = vunpack.c.h.b16 %v1367
    %v3243 = vunpack.c.l.b16 %v1368
    %v3244 = vunpack.c.h.b16 %v1368
    %v3245 = vunpack.c.l.b16 %v1369
    %v3246 = vunpack.c.h.b16 %v1369
    %v3247 = vunpack.c.l.b16 %v1370
    %v3248 = vunpack.c.l.b16 %v1371
    %v3249 = vunpack.c.h.b16 %v1371
    %v3250 = vunpack.c.l.b16 %v1372
    %v3251 = vunpack.c.h.b16 %v1372
    %v3252 = vunpack.c.l.b16 %v1373
    %v3253 = vunpack.c.h.b16 %v1373
    %v3254 = vunpack.c.l.b16 %v1374
    %v3255 = vunpack.c.h.b16 %v1374
    %v3256 = vunpack.c.l.b16 %v1375
    %v3257 = vunpack.c.l.b16 %v1376
    %v3258 = vunpack.c.h.b16 %v1376
    %v3259 = vunpack.c.l.b16 %v1377
    %v3260 = vunpack.c.h.b16 %v1377
    %v3261 = vunpack.c.l.b16 %v1378
    %v3262 = vunpack.c.h.b16 %v1378
    %v3263 = vunpack.c.l.b16 %v1379
    %v3264 = vunpack.c.h.b16 %v1379
    %v3265 = vunpack.c.l.b16 %v1380
    %v3266 = vunpack.c.l.b16 %v1381
    %v3267 = vunpack.c.h.b16 %v1381
    %v3268 = vunpack.c.l.b16 %v1382
    %v3269 = vunpack.c.h.b16 %v1382
    %v3270 = vunpack.c.l.b16 %v1383
    %v3271 = vunpack.c.h.b16 %v1383
    %v3272 = vunpack.c.l.b16 %v1384
    %v3273 = vunpack.c.h.b16 %v1384
    %v3274 = vunpack.c.l.b16 %v1385
    %v3275 = vunpack.c.l.b16 %v1386
    %v3276 = vunpack.c.h.b16 %v1386
    %v3277 = vunpack.c.l.b16 %v1387
    %v3278 = vunpack.c.h.b16 %v1387
    %v3279 = vunpack.c.l.b16 %v1388
    %v3280 = vunpack.c.h.b16 %v1388
    %v3281 = vunpack.c.l.b16 %v1389
    %v3282 = vunpack.c.h.b16 %v1389
    %v3283 = vunpack.c.l.b16 %v1390
    %v3284 = vunpack.c.l.b16 %v1391
    %v3285 = vunpack.c.h.b16 %v1391
    %v3286 = vunpack.c.l.b16 %v1392
    %v3287 = vunpack.c.h.b16 %v1392
    %v3288 = vunpack.c.l.b16 %v1393
    %v3289 = vunpack.c.h.b16 %v1393
    %v3290 = vunpack.c.l.b16 %v1394
    %v3291 = vunpack.c.h.b16 %v1394
    %v3292 = vunpack.c.l.b16 %v1395
    %v3293 = vunpack.c.l.b16 %v1396
    %v3294 = vunpack.c.h.b16 %v1396
    %v3295 = vunpack.c.l.b16 %v1397
    %v3296 = vunpack.c.h.b16 %v1397
    %v3297 = vunpack.c.l.b16 %v1398
    %v3298 = vunpack.c.h.b16 %v1398
    %v3299 = vunpack.c.l.b16 %v1399
    %v3300 = vunpack.c.h.b16 %v1399
    %v3301 = vunpack.c.l.b16 %v1400
    %v3302 = vunpack.c.l.b16 %v1401
    %v3303 = vunpack.c.h.b16 %v1401
    %v3304 = vunpack.c.l.b16 %v1402
    %v3305 = vunpack.c.h.b16 %v1402
    %v3306 = vunpack.c.l.b16 %v1403
    %v3307 = vunpack.c.h.b16 %v1403
    %v3308 = vunpack.c.l.b16 %v1404
    %v3309 = vunpack.c.h.b16 %v1404
    %v3310 = vunpack.c.l.b16 %v1405
    %v3311 = vunpack.c.l.b16 %v1406
    %v3312 = vunpack.c.h.b16 %v1406
    %v3313 = vunpack.c.l.b16 %v1407
    %v3314 = vunpack.c.h.b16 %v1407
    %v3315 = vunpack.c.l.b16 %v1408
    %v3316 = vunpack.c.h.b16 %v1408
    %v3317 = vunpack.c.l.b16 %v1409
    %v3318 = vunpack.c.h.b16 %v1409
    %v3319 = vunpack.c.l.b16 %v1410
    %v3320 = vunpack.c.l.b16 %v1411
    %v3321 = vunpack.c.h.b16 %v1411
    %v3322 = vunpack.c.l.b16 %v1412
    %v3323 = vunpack.c.h.b16 %v1412
    %v3324 = vunpack.c.l.b16 %v1413
    %v3325 = vunpack.c.h.b16 %v1413
    %v3326 = vunpack.c.l.b16 %v1414
    %v3327 = vunpack.c.h.b16 %v1414
    %v3328 = vunpack.c.l.b16 %v1415
    %v3329 = vunpack.c.l.b16 %v1416
    %v3330 = vunpack.c.h.b16 %v1416
    %v3331 = vunpack.c.l.b16 %v1417
    %v3332 = vunpack.c.h.b16 %v1417
    %v3333 = vunpack.c.l.b16 %v1418
    %v3334 = vunpack.c.h.b16 %v1418
    %v3335 = vunpack.c.l.b16 %v1419
    %v3336 = vunpack.c.h.b16 %v1419
    %v3337 = vunpack.c.l.b16 %v1420
    %v3338 = vunpack.c.l.b16 %v1421
    %v3339 = vunpack.c.h.b16 %v1421
    %v3340 = vunpack.c.l.b16 %v1422
    %v3341 = vunpack.c.h.b16 %v1422
    %v3342 = vunpack.c.l.b16 %v1423
    %v3343 = vunpack.c.h.b16 %v1423
    %v3344 = vunpack.c.l.b16 %v1424
    %v3345 = vunpack.c.h.b16 %v1424
    %v3346 = vunpack.c.l.b16 %v1425
    %v3347 = vunpack.c.l.b16 %v1426
    %v3348 = vunpack.c.h.b16 %v1426
    %v3349 = vunpack.c.l.b16 %v1427
    %v3350 = vunpack.c.h.b16 %v1427
    %v3351 = vunpack.c.l.b16 %v1428
    %v3352 = vunpack.c.h.b16 %v1428
    %v3353 = vunpack.c.l.b16 %v1429
    %v3354 = vunpack.c.h.b16 %v1429
    %v3355 = vunpack.c.l.b16 %v1430
    %v3356 = vunpack.c.l.b16 %v1431
    %v3357 = vunpack.c.h.b16 %v1431
    %v3358 = vunpack.c.l.b16 %v1432
    %v3359 = vunpack.c.h.b16 %v1432
    %v3360 = vunpack.c.l.b16 %v1433
    %v3361 = vunpack.c.h.b16 %v1433
    %v3362 = vunpack.c.l.b16 %v1434
    %v3363 = vunpack.c.h.b16 %v1434
    %v3364 = vunpack.c.l.b16 %v1435
    %v3365 = vunpack.c.l.b16 %v1436
    %v3366 = vunpack.c.h.b16 %v1436
    %v3367 = vunpack.c.l.b16 %v1437
    %v3368 = vunpack.c.h.b16 %v1437
    %v3369 = vunpack.c.l.b16 %v1438
    %v3370 = vunpack.c.h.b16 %v1438
    %v3371 = vunpack.c.l.b16 %v1439
    %v3372 = vunpack.c.h.b16 %v1439
    %v3373 = vunpack.c.l.b16 %v1440
    %v3374 = vunpack.c.l.b16 %v1441
    %v3375 = vunpack.c.h.b16 %v1441
    %v3376 = vunpack.c.l.b16 %v1442
    %v3377 = vunpack.c.h.b16 %v1442
    %v3378 = vunpack.c.l.b16 %v1443
    %v3379 = vunpack.c.h.b16 %v1443
    %v3380 = vunpack.c.l.b16 %v1444
    %v3381 = vunpack.c.h.b16 %v1444
    %v3382 = vunpack.c.l.b16 %v1445
    %v3383 = vunpack.c.l.b16 %v1446
    %v3384 = vunpack.c.h.b16 %v1446
    %v3385 = vunpack.c.l.b16 %v1447
    %v3386 = vunpack.c.h.b16 %v1447
    %v3387 = vunpack.c.l.b16 %v1448
    %v3388 = vunpack.c.h.b16 %v1448
    %v3389 = vunpack.c.l.b16 %v1449
    %v3390 = vunpack.c.h.b16 %v1449
    %v3391 = vunpack.c.l.b16 %v1450
    %v3392 = vunpack.c.l.b16 %v1451
    %v3393 = vunpack.c.h.b16 %v1451
    %v3394 = vunpack.c.l.b16 %v1452
    %v3395 = vunpack.c.h.b16 %v1452
    %v3396 = vunpack.c.l.b16 %v1453
    %v3397 = vunpack.c.h.b16 %v1453
    %v3398 = vunpack.c.l.b16 %v1454
    %v3399 = vunpack.c.h.b16 %v1454
    %v3400 = vunpack.c.l.b16 %v1455
    %v3401 = vunpack.c.l.b16 %v1456
    %v3402 = vunpack.c.h.b16 %v1456
    %v3403 = vunpack.c.l.b16 %v1457
    %v3404 = vunpack.c.h.b16 %v1457
    %v3405 = vunpack.c.l.b16 %v1458
    %v3406 = vunpack.c.h.b16 %v1458
    %v3407 = vunpack.c.l.b16 %v1459
    %v3408 = vunpack.c.h.b16 %v1459
    %v3409 = vunpack.c.l.b16 %v1460
    %v3410 = vunpack.c.l.b16 %v1461
    %v3411 = vunpack.c.h.b16 %v1461
    %v3412 = vunpack.c.l.b16 %v1462
    %v3413 = vunpack.c.h.b16 %v1462
    %v3414 = vunpack.c.l.b16 %v1463
    %v3415 = vunpack.c.h.b16 %v1463
    %v3416 = vunpack.c.l.b16 %v1464
    %v3417 = vunpack.c.h.b16 %v1464
    %v3418 = vunpack.c.l.b16 %v1465
    %v3419 = vunpack.c.l.b16 %v1466
    %v3420 = vunpack.c.h.b16 %v1466
    %v3421 = vunpack.c.l.b16 %v1467
    %v3422 = vunpack.c.h.b16 %v1467
    %v3423 = vunpack.c.l.b16 %v1468
    %v3424 = vunpack.c.h.b16 %v1468
    %v3425 = vunpack.c.l.b16 %v1469
    %v3426 = vunpack.c.h.b16 %v1469
    %v3427 = vunpack.c.l.b16 %v1470
    %v3428 = vunpack.c.l.b16 %v1471
    %v3429 = vunpack.c.h.b16 %v1471
    %v3430 = vunpack.c.l.b16 %v1472
    %v3431 = vunpack.c.h.b16 %v1472
    %v3432 = vunpack.c.l.b16 %v1473
    %v3433 = vunpack.c.h.b16 %v1473
    %v3434 = vunpack.c.l.b16 %v1474
    %v3435 = vunpack.c.h.b16 %v1474
    %v3436 = vunpack.c.l.b16 %v1475
    %v3437 = vunpack.c.l.b16 %v1476
    %v3438 = vunpack.c.h.b16 %v1476
    %v3439 = vunpack.c.l.b16 %v1477
    %v3440 = vunpack.c.h.b16 %v1477
    %v3441 = vunpack.c.l.b16 %v1478
    %v3442 = vunpack.c.h.b16 %v1478
    %v3443 = vunpack.c.l.b16 %v1479
    %v3444 = vunpack.c.h.b16 %v1479
    %v3445 = vunpack.c.l.b16 %v1480
    %v3446 = vunpack.c.l.b16 %v1481
    %v3447 = vunpack.c.h.b16 %v1481
    %v3448 = vunpack.c.l.b16 %v1482
    %v3449 = vunpack.c.h.b16 %v1482
    %v3450 = vunpack.c.l.b16 %v1483
    %v3451 = vunpack.c.h.b16 %v1483
    %v3452 = vunpack.c.l.b16 %v1484
    %v3453 = vunpack.c.h.b16 %v1484
    %v3454 = vunpack.c.l.b16 %v1485
    %v3455 = vunpack.c.l.b16 %v1486
    %v3456 = vunpack.c.h.b16 %v1486
    %v3457 = vunpack.c.l.b16 %v1487
    %v3458 = vunpack.c.h.b16 %v1487
    %v3459 = vunpack.c.l.b16 %v1488
    %v3460 = vunpack.c.h.b16 %v1488
    %v3461 = vunpack.c.l.b16 %v1489
    %v3462 = vunpack.c.h.b16 %v1489
    %v3463 = vunpack.c.l.b16 %v1490
    %v3464 = vunpack.c.l.b16 %v1491
    %v3465 = vunpack.c.h.b16 %v1491
    %v3466 = vunpack.c.l.b16 %v1492
    %v3467 = vunpack.c.h.b16 %v1492
    %v3468 = vunpack.c.l.b16 %v1493
    %v3469 = vunpack.c.h.b16 %v1493
    %v3470 = vunpack.c.l.b16 %v1494
    %v3471 = vunpack.c.h.b16 %v1494
    %v3472 = vunpack.c.l.b16 %v1495
    %v3473 = vunpack.c.l.b16 %v1496
    %v3474 = vunpack.c.h.b16 %v1496
    %v3475 = vunpack.c.l.b16 %v1497
    %v3476 = vunpack.c.h.b16 %v1497
    %v3477 = vunpack.c.l.b16 %v1498
    %v3478 = vunpack.c.h.b16 %v1498
    %v3479 = vunpack.c.l.b16 %v1499
    %v3480 = vunpack.c.h.b16 %v1499
    %v3481 = vunpack.c.l.b16 %v1500
    %v3482 = vunpack.c.l.b16 %v1501
    %v3483 = vunpack.c.h.b16 %v1501
    %v3484 = vunpack.c.l.b16 %v1502
    %v3485 = vunpack.c.h.b16 %v1502
    %v3486 = vunpack.c.l.b16 %v1503
    %v3487 = vunpack.c.h.b16 %v1503
    %v3488 = vunpack.c.l.b16 %v1504
    %v3489 = vunpack.c.h.b16 %v1504
    %v3490 = vunpack.c.l.b16 %v1505
    %v3491 = vunpack.c.l.b16 %v1506
    %v3492 = vunpack.c.h.b16 %v1506
    %v3493 = vunpack.c.l.b16 %v1507
    %v3494 = vunpack.c.h.b16 %v1507
    %v3495 = vunpack.c.l.b16 %v1508
    %v3496 = vunpack.c.h.b16 %v1508
    %v3497 = vunpack.c.l.b16 %v1509
    %v3498 = vunpack.c.h.b16 %v1509
    %v3499 = vunpack.c.l.b16 %v1510
    %v3500 = vunpack.c.l.b16 %v1511
    %v3501 = vunpack.c.h.b16 %v1511
    %v3502 = vunpack.c.l.b16 %v1512
    %v3503 = vunpack.c.h.b16 %v1512
    %v3504 = vunpack.c.l.b16 %v1513
    %v3505 = vunpack.c.h.b16 %v1513
    %v3506 = vunpack.c.l.b16 %v1514
    %v3507 = vunpack.c.h.b16 %v1514
    %v3508 = vunpack.c.l.b16 %v1515
    %v3509 = vunpack.c.l.b16 %v1516
    %v3510 = vunpack.c.h.b16 %v1516
    %v3511 = vunpack.c.l.b16 %v1517
    %v3512 = vunpack.c.h.b16 %v1517
    %v3513 = vunpack.c.l.b16 %v1518
    %v3514 = vunpack.c.h.b16 %v1518
    %v3515 = vunpack.c.l.b16 %v1519
    %v3516 = vunpack.c.h.b16 %v1519
    %v3517 = vunpack.c.l.b16 %v1520
    %v3518 = vunpack.c.l.b16 %v1521
    %v3519 = vunpack.c.h.b16 %v1521
    %v3520 = vunpack.c.l.b16 %v1522
    %v3521 = vunpack.c.h.b16 %v1522
    %v3522 = vunpack.c.l.b16 %v1523
    %v3523 = vunpack.c.h.b16 %v1523
    %v3524 = vunpack.c.l.b16 %v1524
    %v3525 = vunpack.c.h.b16 %v1524
    %v3526 = vunpack.c.l.b16 %v1525
    %v3527 = vunpack.c.l.b16 %v1526
    %v3528 = vunpack.c.h.b16 %v1526
    %v3529 = vunpack.c.l.b16 %v1527
    %v3530 = vunpack.c.h.b16 %v1527
    %v3531 = vunpack.c.l.b16 %v1528
    %v3532 = vunpack.c.h.b16 %v1528
    %v3533 = vunpack.c.l.b16 %v1529
    %v3534 = vunpack.c.h.b16 %v1529
    %v3535 = vunpack.c.l.b16 %v1530
    %v3536 = vunpack.c.l.b16 %v1531
    %v3537 = vunpack.c.h.b16 %v1531
    %v3538 = vunpack.c.l.b16 %v1532
    %v3539 = vunpack.c.h.b16 %v1532
    %v3540 = vunpack.c.l.b16 %v1533
    %v3541 = vunpack.c.h.b16 %v1533
    %v3542 = vunpack.c.l.b16 %v1534
    %v3543 = vunpack.c.h.b16 %v1534
    %v3544 = vunpack.c.l.b16 %v1535
    %v3545 = vunpack.c.l.b16 %v1536
    %v3546 = vunpack.c.h.b16 %v1536
    %v3547 = vunpack.c.l.b16 %v1537
    %v3548 = vunpack.c.h.b16 %v1537
    %v3549 = vunpack.c.l.b16 %v1538
    %v3550 = vunpack.c.h.b16 %v1538
    %v3551 = vunpack.c.l.b16 %v1539
    %v3552 = vunpack.c.h.b16 %v1539
    %v3553 = vunpack.c.l.b16 %v1540
    %v3554 = vunpack.c.l.b16 %v1541
    %v3555 = vunpack.c.h.b16 %v1541
    %v3556 = vunpack.c.l.b16 %v1542
    %v3557 = vunpack.c.h.b16 %v1542
    %v3558 = vunpack.c.l.b16 %v1543
    %v3559 = vunpack.c.h.b16 %v1543
    %v3560 = vunpack.c.l.b16 %v1544
    %v3561 = vunpack.c.h.b16 %v1544
    %v3562 = vunpack.c.l.b16 %v1545
    %v3563 = vunpack.c.l.b16 %v1546
    %v3564 = vunpack.c.h.b16 %v1546
    %v3565 = vunpack.c.l.b16 %v1547
    %v3566 = vunpack.c.h.b16 %v1547
    %v3567 = vunpack.c.l.b16 %v1548
    %v3568 = vunpack.c.h.b16 %v1548
    %v3569 = vunpack.c.l.b16 %v1549
    %v3570 = vunpack.c.h.b16 %v1549
    %v3571 = vunpack.c.l.b16 %v1550
    %v3572 = vunpack.c.l.b16 %v1551
    %v3573 = vunpack.c.h.b16 %v1551
    %v3574 = vunpack.c.l.b16 %v1552
    %v3575 = vunpack.c.h.b16 %v1552
    %v3576 = vunpack.c.l.b16 %v1553
    %v3577 = vunpack.c.h.b16 %v1553
    %v3578 = vunpack.c.l.b16 %v1554
    %v3579 = vunpack.c.h.b16 %v1554
    %v3580 = vunpack.c.l.b16 %v1555
    %v3581 = vunpack.c.l.b16 %v1556
    %v3582 = vunpack.c.h.b16 %v1556
    %v3583 = vunpack.c.l.b16 %v1557
    %v3584 = vunpack.c.h.b16 %v1557
    %v3585 = vunpack.c.l.b16 %v1558
    %v3586 = vunpack.c.h.b16 %v1558
    %v3587 = vunpack.c.l.b16 %v1559
    %v3588 = vunpack.c.h.b16 %v1559
    %v3589 = vunpack.c.l.b16 %v1560
    %v3590 = vunpack.c.l.b16 %v1561
    %v3591 = vunpack.c.h.b16 %v1561
    %v3592 = vunpack.c.l.b16 %v1562
    %v3593 = vunpack.c.h.b16 %v1562
    %v3594 = vunpack.c.l.b16 %v1563
    %v3595 = vunpack.c.h.b16 %v1563
    %v3596 = vunpack.c.l.b16 %v1564
    %v3597 = vunpack.c.h.b16 %v1564
    %v3598 = vunpack.c.l.b16 %v1565
    %v3599 = vunpack.c.l.b16 %v1566
    %v3600 = vunpack.c.h.b16 %v1566
    %v3601 = vunpack.c.l.b16 %v1567
    %v3602 = vunpack.c.h.b16 %v1567
    %v3603 = vunpack.c.l.b16 %v1568
    %v3604 = vunpack.c.h.b16 %v1568
    %v3605 = vunpack.c.l.b16 %v1569
    %v3606 = vunpack.c.h.b16 %v1569
    %v3607 = vunpack.c.l.b16 %v1570
    %v3608 = vunpack.c.l.b16 %v1571
    %v3609 = vunpack.c.h.b16 %v1571
    %v3610 = vunpack.c.l.b16 %v1572
    %v3611 = vunpack.c.h.b16 %v1572
    %v3612 = vunpack.c.l.b16 %v1573
    %v3613 = vunpack.c.h.b16 %v1573
    %v3614 = vunpack.c.l.b16 %v1574
    %v3615 = vunpack.c.h.b16 %v1574
    %v3616 = vunpack.c.l.b16 %v1575
    %v3617 = vunpack.c.l.b16 %v1576
    %v3618 = vunpack.c.h.b16 %v1576
    %v3619 = vunpack.c.l.b16 %v1577
    %v3620 = vunpack.c.h.b16 %v1577
    %v3621 = vunpack.c.l.b16 %v1578
    %v3622 = vunpack.c.h.b16 %v1578
    %v3623 = vunpack.c.l.b16 %v1579
    %v3624 = vunpack.c.h.b16 %v1579
    %v3625 = vunpack.c.l.b16 %v1580
    %v3626 = vunpack.c.l.b16 %v1581
    %v3627 = vunpack.c.h.b16 %v1581
    %v3628 = vunpack.c.l.b16 %v1582
    %v3629 = vunpack.c.h.b16 %v1582
    %v3630 = vunpack.c.l.b16 %v1583
    %v3631 = vunpack.c.h.b16 %v1583
    %v3632 = vunpack.c.l.b16 %v1584
    %v3633 = vunpack.c.h.b16 %v1584
    %v3634 = vunpack.c.l.b16 %v1585
    %v3635 = vunpack.c.l.b16 %v1586
    %v3636 = vunpack.c.h.b16 %v1586
    %v3637 = vunpack.c.l.b16 %v1587
    %v3638 = vunpack.c.h.b16 %v1587
    %v3639 = vunpack.c.l.b16 %v1588
    %v3640 = vunpack.c.h.b16 %v1588
    %v3641 = vunpack.c.l.b16 %v1589
    %v3642 = vunpack.c.h.b16 %v1589
    %v3643 = vunpack.c.l.b16 %v1590
    %v3644 = vunpack.c.l.b16 %v1591
    %v3645 = vunpack.c.h.b16 %v1591
    %v3646 = vunpack.c.l.b16 %v1592
    %v3647 = vunpack.c.h.b16 %v1592
    %v3648 = vunpack.c.l.b16 %v1593
    %v3649 = vunpack.c.h.b16 %v1593
    %v3650 = vunpack.c.l.b16 %v1594
    %v3651 = vunpack.c.h.b16 %v1594
    %v3652 = vunpack.c.l.b16 %v1595
    %v3653 = vunpack.c.l.b16 %v1596
    %v3654 = vunpack.c.h.b16 %v1596
    %v3655 = vunpack.c.l.b16 %v1597
    %v3656 = vunpack.c.h.b16 %v1597
    %v3657 = vunpack.c.l.b16 %v1598
    %v3658 = vunpack.c.h.b16 %v1598
    %v3659 = vunpack.c.l.b16 %v1599
    %v3660 = vunpack.c.h.b16 %v1599
    %v3661 = vunpack.c.l.b16 %v1600
    %v3662 = vunpack.c.l.b16 %v1601
    %v3663 = vunpack.c.h.b16 %v1601
    %v3664 = vunpack.c.l.b16 %v1602
    %v3665 = vunpack.c.h.b16 %v1602
    %v3666 = vunpack.c.l.b16 %v1603
    %v3667 = vunpack.c.h.b16 %v1603
    %v3668 = vunpack.c.l.b16 %v1604
    %v3669 = vunpack.c.h.b16 %v1604
    %v3670 = vunpack.c.l.b16 %v1605
    %v3671 = vpack.c.b16 %v2384, %v2375
    %v3672 = vpack.c.b16 %v2385, %v2376
    %v3673 = vpack.c.b16 %v2386, %v2377
    %v3674 = vpack.c.b16 %v2387, %v2378
    %v3675 = vpack.c.b16 %v2388, %v2379
    %v3676 = vpack.c.b16 %v2389, %v2380
    %v3677 = vpack.c.b16 %v2390, %v2381
    %v3678 = vpack.c.b16 %v2391, %v2382
    %v3679 = vpack.c.b16 %v2392, %v2383
    %v3680 = vpack.c.b16 %v2402, %v2393
    %v3681 = vpack.c.b16 %v2403, %v2394
    %v3682 = vpack.c.b16 %v2404, %v2395
    %v3683 = vpack.c.b16 %v2405, %v2396
    %v3684 = vpack.c.b16 %v2406, %v2397
    %v3685 = vpack.c.b16 %v2407, %v2398
    %v3686 = vpack.c.b16 %v2408, %v2399
    %v3687 = vpack.c.b16 %v2409, %v2400
    %v3688 = vpack.c.b16 %v2410, %v2401
    %v3689 = vpack.c.b16 %v2420, %v2411
    %v3690 = vpack.c.b16 %v2421, %v2412
    %v3691 = vpack.c.b16 %v2422, %v2413
    %v3692 = vpack.c.b16 %v2423, %v2414
    %v3693 = vpack.c.b16 %v2424, %v2415
    %v3694 = vpack.c.b16 %v2425, %v2416
    %v3695 = vpack.c.b16 %v2426, %v2417
    %v3696 = vpack.c.b16 %v2427, %v2418
    %v3697 = vpack.c.b16 %v2428, %v2419
    %v3698 = vpack.c.b16 %v2438, %v2429
    %v3699 = vpack.c.b16 %v2439, %v2430
    %v3700 = vpack.c.b16 %v2440, %v2431
    %v3701 = vpack.c.b16 %v2441, %v2432
    %v3702 = vpack.c.b16 %v2442, %v2433
    %v3703 = vpack.c.b16 %v2443, %v2434
    %v3704 = vpack.c.b16 %v2444, %v2435
    %v3705 = vpack.c.b16 %v2445, %v2436
    %v3706 = vpack.c.b16 %v2446, %v2437
    %v3707 = vpack.c.b16 %v2456, %v2447
    %v3708 = vpack.c.b16 %v2457, %v2448
    %v3709 = vpack.c.b16 %v2458, %v2449
    %v3710 = vpack.c.b16 %v2459, %v2450
    %v3711 = vpack.c.b16 %v2460, %v2451
    %v3712 = vpack.c.b16 %v2461, %v2452
    %v3713 = vpack.c.b16 %v2462, %v2453
    %v3714 = vpack.c.b16 %v2463, %v2454
    %v3715 = vpack.c.b16 %v2464, %v2455
    %v3716 = vpack.c.b16 %v2474, %v2465
    %v3717 = vpack.c.b16 %v2475, %v2466
    %v3718 = vpack.c.b16 %v2476, %v2467
    %v3719 = vpack.c.b16 %v2477, %v2468
    %v3720 = vpack.c.b16 %v2478, %v2469
    %v3721 = vpack.c.b16 %v2479, %v2470
    %v3722 = vpack.c.b16 %v2480, %v2471
    %v3723 = vpack.c.b16 %v2481, %v2472
    %v3724 = vpack.c.b16 %v2482, %v2473
    %v3725 = vpack.c.b16 %v2492, %v2483
    %v3726 = vpack.c.b16 %v2493, %v2484
    %v3727 = vpack.c.b16 %v2494, %v2485
    %v3728 = vpack.c.b16 %v2495, %v2486
    %v3729 = vpack.c.b16 %v2496, %v2487
    %v3730 = vpack.c.b16 %v2497, %v2488
    %v3731 = vpack.c.b16 %v2498, %v2489
    %v3732 = vpack.c.b16 %v2499, %v2490
    %v3733 = vpack.c.b16 %v2500, %v2491
    %v3734 = vpack.c.b16 %v2510, %v2501
    %v3735 = vpack.c.b16 %v2511, %v2502
    %v3736 = vpack.c.b16 %v2512, %v2503
    %v3737 = vpack.c.b16 %v2513, %v2504
    %v3738 = vpack.c.b16 %v2514, %v2505
    %v3739 = vpack.c.b16 %v2515, %v2506
    %v3740 = vpack.c.b16 %v2516, %v2507
    %v3741 = vpack.c.b16 %v2517, %v2508
    %v3742 = vpack.c.b16 %v2518, %v2509
    %v3743 = vpack.c.b16 %v2528, %v2519
    %v3744 = vpack.c.b16 %v2529, %v2520
    %v3745 = vpack.c.b16 %v2530, %v2521
    %v3746 = vpack.c.b16 %v2531, %v2522
    %v3747 = vpack.c.b16 %v2532, %v2523
    %v3748 = vpack.c.b16 %v2533, %v2524
    %v3749 = vpack.c.b16 %v2534, %v2525
    %v3750 = vpack.c.b16 %v2535, %v2526
    %v3751 = vpack.c.b16 %v2536, %v2527
    %v3752 = vpack.c.b16 %v2546, %v2537
    %v3753 = vpack.c.b16 %v2547, %v2538
    %v3754 = vpack.c.b16 %v2548, %v2539
    %v3755 = vpack.c.b16 %v2549, %v2540
    %v3756 = vpack.c.b16 %v2550, %v2541
    %v3757 = vpack.c.b16 %v2551, %v2542
    %v3758 = vpack.c.b16 %v2552, %v2543
    %v3759 = vpack.c.b16 %v2553, %v2544
    %v3760 = vpack.c.b16 %v2554, %v2545
    %v3761 = vpack.c.b16 %v2564, %v2555
    %v3762 = vpack.c.b16 %v2565, %v2556
    %v3763 = vpack.c.b16 %v2566, %v2557
    %v3764 = vpack.c.b16 %v2567, %v2558
    %v3765 = vpack.c.b16 %v2568, %v2559
    %v3766 = vpack.c.b16 %v2569, %v2560
    %v3767 = vpack.c.b16 %v2570, %v2561
    %v3768 = vpack.c.b16 %v2571, %v2562
    %v3769 = vpack.c.b16 %v2572, %v2563
    %v3770 = vpack.c.b16 %v2582, %v2573
    %v3771 = vpack.c.b16 %v2583, %v2574
    %v3772 = vpack.c.b16 %v2584, %v2575
    %v3773 = vpack.c.b16 %v2585, %v2576
    %v3774 = vpack.c.b16 %v2586, %v2577
    %v3775 = vpack.c.b16 %v2587, %v2578
    %v3776 = vpack.c.b16 %v2588, %v2579
    %v3777 = vpack.c.b16 %v2589, %v2580
    %v3778 = vpack.c.b16 %v2590, %v2581
    %v3779 = vpack.c.b16 %v2600, %v2591
    %v3780 = vpack.c.b16 %v2601, %v2592
    %v3781 = vpack.c.b16 %v2602, %v2593
    %v3782 = vpack.c.b16 %v2603, %v2594
    %v3783 = vpack.c.b16 %v2604, %v2595
    %v3784 = vpack.c.b16 %v2605, %v2596
    %v3785 = vpack.c.b16 %v2606, %v2597
    %v3786 = vpack.c.b16 %v2607, %v2598
    %v3787 = vpack.c.b16 %v2608, %v2599
    %v3788 = vpack.c.b16 %v2618, %v2609
    %v3789 = vpack.c.b16 %v2619, %v2610
    %v3790 = vpack.c.b16 %v2620, %v2611
    %v3791 = vpack.c.b16 %v2621, %v2612
    %v3792 = vpack.c.b16 %v2622, %v2613
    %v3793 = vpack.c.b16 %v2623, %v2614
    %v3794 = vpack.c.b16 %v2624, %v2615
    %v3795 = vpack.c.b16 %v2625, %v2616
    %v3796 = vpack.c.b16 %v2626, %v2617
    %v3797 = vpack.c.b16 %v2636, %v2627
    %v3798 = vpack.c.b16 %v2637, %v2628
    %v3799 = vpack.c.b16 %v2638, %v2629
    %v3800 = vpack.c.b16 %v2639, %v2630
    %v3801 = vpack.c.b16 %v2640, %v2631
    %v3802 = vpack.c.b16 %v2641, %v2632
    %v3803 = vpack.c.b16 %v2642, %v2633
    %v3804 = vpack.c.b16 %v2643, %v2634
    %v3805 = vpack.c.b16 %v2644, %v2635
    %v3806 = vpack.c.b16 %v2654, %v2645
    %v3807 = vpack.c.b16 %v2655, %v2646
    %v3808 = vpack.c.b16 %v2656, %v2647
    %v3809 = vpack.c.b16 %v2657, %v2648
    %v3810 = vpack.c.b16 %v2658, %v2649
    %v3811 = vpack.c.b16 %v2659, %v2650
    %v3812 = vpack.c.b16 %v2660, %v2651
    %v3813 = vpack.c.b16 %v2661, %v2652
    %v3814 = vpack.c.b16 %v2662, %v2653
    %v3815 = vpack.c.b16 %v2672, %v2663
    %v3816 = vpack.c.b16 %v2673, %v2664
    %v3817 = vpack.c.b16 %v2674, %v2665
    %v3818 = vpack.c.b16 %v2675, %v2666
    %v3819 = vpack.c.b16 %v2676, %v2667
    %v3820 = vpack.c.b16 %v2677, %v2668
    %v3821 = vpack.c.b16 %v2678, %v2669
    %v3822 = vpack.c.b16 %v2679, %v2670
    %v3823 = vpack.c.b16 %v2680, %v2671
    %v3824 = vpack.c.b16 %v2690, %v2681
    %v3825 = vpack.c.b16 %v2691, %v2682
    %v3826 = vpack.c.b16 %v2692, %v2683
    %v3827 = vpack.c.b16 %v2693, %v2684
    %v3828 = vpack.c.b16 %v2694, %v2685
    %v3829 = vpack.c.b16 %v2695, %v2686
    %v3830 = vpack.c.b16 %v2696, %v2687
    %v3831 = vpack.c.b16 %v2697, %v2688
    %v3832 = vpack.c.b16 %v2698, %v2689
    %v3833 = vpack.c.b16 %v2708, %v2699
    %v3834 = vpack.c.b16 %v2709, %v2700
    %v3835 = vpack.c.b16 %v2710, %v2701
    %v3836 = vpack.c.b16 %v2711, %v2702
    %v3837 = vpack.c.b16 %v2712, %v2703
    %v3838 = vpack.c.b16 %v2713, %v2704
    %v3839 = vpack.c.b16 %v2714, %v2705
    %v3840 = vpack.c.b16 %v2715, %v2706
    %v3841 = vpack.c.b16 %v2716, %v2707
    %v3842 = vpack.c.b16 %v2726, %v2717
    %v3843 = vpack.c.b16 %v2727, %v2718
    %v3844 = vpack.c.b16 %v2728, %v2719
    %v3845 = vpack.c.b16 %v2729, %v2720
    %v3846 = vpack.c.b16 %v2730, %v2721
    %v3847 = vpack.c.b16 %v2731, %v2722
    %v3848 = vpack.c.b16 %v2732, %v2723
    %v3849 = vpack.c.b16 %v2733, %v2724
    %v3850 = vpack.c.b16 %v2734, %v2725
    %v3851 = vpack.c.b16 %v2744, %v2735
    %v3852 = vpack.c.b16 %v2745, %v2736
    %v3853 = vpack.c.b16 %v2746, %v2737
    %v3854 = vpack.c.b16 %v2747, %v2738
    %v3855 = vpack.c.b16 %v2748, %v2739
    %v3856 = vpack.c.b16 %v2749, %v2740
    %v3857 = vpack.c.b16 %v2750, %v2741
    %v3858 = vpack.c.b16 %v2751, %v2742
    %v3859 = vpack.c.b16 %v2752, %v2743
    %v3860 = vpack.c.b16 %v2762, %v2753
    %v3861 = vpack.c.b16 %v2763, %v2754
    %v3862 = vpack.c.b16 %v2764, %v2755
    %v3863 = vpack.c.b16 %v2765, %v2756
    %v3864 = vpack.c.b16 %v2766, %v2757
    %v3865 = vpack.c.b16 %v2767, %v2758
    %v3866 = vpack.c.b16 %v2768, %v2759
    %v3867 = vpack.c.b16 %v2769, %v2760
    %v3868 = vpack.c.b16 %v2770, %v2761
    %v3869 = vpack.c.b16 %v2780, %v2771
    %v3870 = vpack.c.b16 %v2781, %v2772
    %v3871 = vpack.c.b16 %v2782, %v2773
    %v3872 = vpack.c.b16 %v2783, %v2774
    %v3873 = vpack.c.b16 %v2784, %v2775
    %v3874 = vpack.c.b16 %v2785, %v2776
    %v3875 = vpack.c.b16 %v2786, %v2777
    %v3876 = vpack.c.b16 %v2787, %v2778
    %v3877 = vpack.c.b16 %v2788, %v2779
    %v3878 = vpack.c.b16 %v2798, %v2789
    %v3879 = vpack.c.b16 %v2799, %v2790
    %v3880 = vpack.c.b16 %v2800, %v2791
    %v3881 = vpack.c.b16 %v2801, %v2792
    %v3882 = vpack.c.b16 %v2802, %v2793
    %v3883 = vpack.c.b16 %v2803, %v2794
    %v3884 = vpack.c.b16 %v2804, %v2795
    %v3885 = vpack.c.b16 %v2805, %v2796
    %v3886 = vpack.c.b16 %v2806, %v2797
    %v3887 = vpack.c.b16 %v2816, %v2807
    %v3888 = vpack.c.b16 %v2817, %v2808
    %v3889 = vpack.c.b16 %v2818, %v2809
    %v3890 = vpack.c.b16 %v2819, %v2810
    %v3891 = vpack.c.b16 %v2820, %v2811
    %v3892 = vpack.c.b16 %v2821, %v2812
    %v3893 = vpack.c.b16 %v2822, %v2813
    %v3894 = vpack.c.b16 %v2823, %v2814
    %v3895 = vpack.c.b16 %v2824, %v2815
    %v3896 = vpack.c.b16 %v2834, %v2825
    %v3897 = vpack.c.b16 %v2835, %v2826
    %v3898 = vpack.c.b16 %v2836, %v2827
    %v3899 = vpack.c.b16 %v2837, %v2828
    %v3900 = vpack.c.b16 %v2838, %v2829
    %v3901 = vpack.c.b16 %v2839, %v2830
    %v3902 = vpack.c.b16 %v2840, %v2831
    %v3903 = vpack.c.b16 %v2841, %v2832
    %v3904 = vpack.c.b16 %v2842, %v2833
    %v3905 = vpack.c.b16 %v2852, %v2843
    %v3906 = vpack.c.b16 %v2853, %v2844
    %v3907 = vpack.c.b16 %v2854, %v2845
    %v3908 = vpack.c.b16 %v2855, %v2846
    %v3909 = vpack.c.b16 %v2856, %v2847
    %v3910 = vpack.c.b16 %v2857, %v2848
    %v3911 = vpack.c.b16 %v2858, %v2849
    %v3912 = vpack.c.b16 %v2859, %v2850
    %v3913 = vpack.c.b16 %v2860, %v2851
    %v3914 = vpack.c.b16 %v2870, %v2861
    %v3915 = vpack.c.b16 %v2871, %v2862
    %v3916 = vpack.c.b16 %v2872, %v2863
    %v3917 = vpack.c.b16 %v2873, %v2864
    %v3918 = vpack.c.b16 %v2874, %v2865
    %v3919 = vpack.c.b16 %v2875, %v2866
    %v3920 = vpack.c.b16 %v2876, %v2867
    %v3921 = vpack.c.b16 %v2877, %v2868
    %v3922 = vpack.c.b16 %v2878, %v2869
    %v3923 = vpack.c.b16 %v2888, %v2879
    %v3924 = vpack.c.b16 %v2889, %v2880
    %v3925 = vpack.c.b16 %v2890, %v2881
    %v3926 = vpack.c.b16 %v2891, %v2882
    %v3927 = vpack.c.b16 %v2892, %v2883
    %v3928 = vpack.c.b16 %v2893, %v2884
    %v3929 = vpack.c.b16 %v2894, %v2885
    %v3930 = vpack.c.b16 %v2895, %v2886
    %v3931 = vpack.c.b16 %v2896, %v2887
    %v3932 = vpack.c.b16 %v2906, %v2897
    %v3933 = vpack.c.b16 %v2907, %v2898
    %v3934 = vpack.c.b16 %v2908, %v2899
    %v3935 = vpack.c.b16 %v2909, %v2900
    %v3936 = vpack.c.b16 %v2910, %v2901
    %v3937 = vpack.c.b16 %v2911, %v2902
    %v3938 = vpack.c.b16 %v2912, %v2903
    %v3939 = vpack.c.b16 %v2913, %v2904
    %v3940 = vpack.c.b16 %v2914, %v2905
    %v3941 = vpack.c.b16 %v2924, %v2915
    %v3942 = vpack.c.b16 %v2925, %v2916
    %v3943 = vpack.c.b16 %v2926, %v2917
    %v3944 = vpack.c.b16 %v2927, %v2918
    %v3945 = vpack.c.b16 %v2928, %v2919
    %v3946 = vpack.c.b16 %v2929, %v2920
    %v3947 = vpack.c.b16 %v2930, %v2921
    %v3948 = vpack.c.b16 %v2931, %v2922
    %v3949 = vpack.c.b16 %v2932, %v2923
    %v3950 = vpack.c.b16 %v2942, %v2933
    %v3951 = vpack.c.b16 %v2943, %v2934
    %v3952 = vpack.c.b16 %v2944, %v2935
    %v3953 = vpack.c.b16 %v2945, %v2936
    %v3954 = vpack.c.b16 %v2946, %v2937
    %v3955 = vpack.c.b16 %v2947, %v2938
    %v3956 = vpack.c.b16 %v2948, %v2939
    %v3957 = vpack.c.b16 %v2949, %v2940
    %v3958 = vpack.c.b16 %v2950, %v2941
    %v3959 = vpack.c.b16 %v2960, %v2951
    %v3960 = vpack.c.b16 %v2961, %v2952
    %v3961 = vpack.c.b16 %v2962, %v2953
    %v3962 = vpack.c.b16 %v2963, %v2954
    %v3963 = vpack.c.b16 %v2964, %v2955
    %v3964 = vpack.c.b16 %v2965, %v2956
    %v3965 = vpack.c.b16 %v2966, %v2957
    %v3966 = vpack.c.b16 %v2967, %v2958
    %v3967 = vpack.c.b16 %v2968, %v2959
    %v3968 = vpack.c.b16 %v2978, %v2969
    %v3969 = vpack.c.b16 %v2979, %v2970
    %v3970 = vpack.c.b16 %v2980, %v2971
    %v3971 = vpack.c.b16 %v2981, %v2972
    %v3972 = vpack.c.b16 %v2982, %v2973
    %v3973 = vpack.c.b16 %v2983, %v2974
    %v3974 = vpack.c.b16 %v2984, %v2975
    %v3975 = vpack.c.b16 %v2985, %v2976
    %v3976 = vpack.c.b16 %v2986, %v2977
    %v3977 = vpack.c.b16 %v2996, %v2987
    %v3978 = vpack.c.b16 %v2997, %v2988
    %v3979 = vpack.c.b16 %v2998, %v2989
    %v3980 = vpack.c.b16 %v2999, %v2990
    %v3981 = vpack.c.b16 %v3000, %v2991
    %v3982 = vpack.c.b16 %v3001, %v2992
    %v3983 = vpack.c.b16 %v3002, %v2993
    %v3984 = vpack.c.b16 %v3003, %v2994
    %v3985 = vpack.c.b16 %v3004, %v2995
    %v3986 = vpack.c.b16 %v3014, %v3005
    %v3987 = vpack.c.b16 %v3015, %v3006
    %v3988 = vpack.c.b16 %v3016, %v3007
    %v3989 = vpack.c.b16 %v3017, %v3008
    %v3990 = vpack.c.b16 %v3018, %v3009
    %v3991 = vpack.c.b16 %v3019, %v3010
    %v3992 = vpack.c.b16 %v3020, %v3011
    %v3993 = vpack.c.b16 %v3021, %v3012
    %v3994 = vpack.c.b16 %v3022, %v3013
    %v3995 = vpack.c.b16 %v3032, %v3023
    %v3996 = vpack.c.b16 %v3033, %v3024
    %v3997 = vpack.c.b16 %v3034, %v3025
    %v3998 = vpack.c.b16 %v3035, %v3026
    %v3999 = vpack.c.b16 %v3036, %v3027
    %v4000 = vpack.c.b16 %v3037, %v3028
    %v4001 = vpack.c.b16 %v3038, %v3029
    %v4002 = vpack.c.b16 %v3039, %v3030
    %v4003 = vpack.c.b16 %v3040, %v3031
    %v4004 = vpack.c.b16 %v3050, %v3041
    %v4005 = vpack.c.b16 %v3051, %v3042
    %v4006 = vpack.c.b16 %v3052, %v3043
    %v4007 = vpack.c.b16 %v3053, %v3044
    %v4008 = vpack.c.b16 %v3054, %v3045
    %v4009 = vpack.c.b16 %v3055, %v3046
    %v4010 = vpack.c.b16 %v3056, %v3047
    %v4011 = vpack.c.b16 %v3057, %v3048
    %v4012 = vpack.c.b16 %v3058, %v3049
    %v4013 = vpack.c.b16 %v3068, %v3059
    %v4014 = vpack.c.b16 %v3069, %v3060
    %v4015 = vpack.c.b16 %v3070, %v3061
    %v4016 = vpack.c.b16 %v3071, %v3062
    %v4017 = vpack.c.b16 %v3072, %v3063
    %v4018 = vpack.c.b16 %v3073, %v3064
    %v4019 = vpack.c.b16 %v3074, %v3065
    %v4020 = vpack.c.b16 %v3075, %v3066
    %v4021 = vpack.c.b16 %v3076, %v3067
    %v4022 = vpack.c.b16 %v3086, %v3077
    %v4023 = vpack.c.b16 %v3087, %v3078
    %v4024 = vpack.c.b16 %v3088, %v3079
    %v4025 = vpack.c.b16 %v3089, %v3080
    %v4026 = vpack.c.b16 %v3090, %v3081
    %v4027 = vpack.c.b16 %v3091, %v3082
    %v4028 = vpack.c.b16 %v3092, %v3083
    %v4029 = vpack.c.b16 %v3093, %v3084
    %v4030 = vpack.c.b16 %v3094, %v3085
    %v4031 = vpack.c.b16 %v3104, %v3095
    %v4032 = vpack.c.b16 %v3105, %v3096
    %v4033 = vpack.c.b16 %v3106, %v3097
    %v4034 = vpack.c.b16 %v3107, %v3098
    %v4035 = vpack.c.b16 %v3108, %v3099
    %v4036 = vpack.c.b16 %v3109, %v3100
    %v4037 = vpack.c.b16 %v3110, %v3101
    %v4038 = vpack.c.b16 %v3111, %v3102
    %v4039 = vpack.c.b16 %v3112, %v3103
    %v4040 = vpack.c.b16 %v3122, %v3113
    %v4041 = vpack.c.b16 %v3123, %v3114
    %v4042 = vpack.c.b16 %v3124, %v3115
    %v4043 = vpack.c.b16 %v3125, %v3116
    %v4044 = vpack.c.b16 %v3126, %v3117
    %v4045 = vpack.c.b16 %v3127, %v3118
    %v4046 = vpack.c.b16 %v3128, %v3119
    %v4047 = vpack.c.b16 %v3129, %v3120
    %v4048 = vpack.c.b16 %v3130, %v3121
    %v4049 = vpack.c.b16 %v3140, %v3131
    %v4050 = vpack.c.b16 %v3141, %v3132
    %v4051 = vpack.c.b16 %v3142, %v3133
    %v4052 = vpack.c.b16 %v3143, %v3134
    %v4053 = vpack.c.b16 %v3144, %v3135
    %v4054 = vpack.c.b16 %v3145, %v3136
    %v4055 = vpack.c.b16 %v3146, %v3137
    %v4056 = vpack.c.b16 %v3147, %v3138
    %v4057 = vpack.c.b16 %v3148, %v3139
    %v4058 = vpack.c.b16 %v3158, %v3149
    %v4059 = vpack.c.b16 %v3159, %v3150
    %v4060 = vpack.c.b16 %v3160, %v3151
    %v4061 = vpack.c.b16 %v3161, %v3152
    %v4062 = vpack.c.b16 %v3162, %v3153
    %v4063 = vpack.c.b16 %v3163, %v3154
    %v4064 = vpack.c.b16 %v3164, %v3155
    %v4065 = vpack.c.b16 %v3165, %v3156
    %v4066 = vpack.c.b16 %v3166, %v3157
    %v4067 = vpack.c.b16 %v3176, %v3167
    %v4068 = vpack.c.b16 %v3177, %v3168
    %v4069 = vpack.c.b16 %v3178, %v3169
    %v4070 = vpack.c.b16 %v3179, %v3170
    %v4071 = vpack.c.b16 %v3180, %v3171
    %v4072 = vpack.c.b16 %v3181, %v3172
    %v4073 = vpack.c.b16 %v3182, %v3173
    %v4074 = vpack.c.b16 %v3183, %v3174
    %v4075 = vpack.c.b16 %v3184, %v3175
    %v4076 = vpack.c.b16 %v3194, %v3185
    %v4077 = vpack.c.b16 %v3195, %v3186
    %v4078 = vpack.c.b16 %v3196, %v3187
    %v4079 = vpack.c.b16 %v3197, %v3188
    %v4080 = vpack.c.b16 %v3198, %v3189
    %v4081 = vpack.c.b16 %v3199, %v3190
    %v4082 = vpack.c.b16 %v3200, %v3191
    %v4083 = vpack.c.b16 %v3201, %v3192
    %v4084 = vpack.c.b16 %v3202, %v3193
    %v4085 = vpack.c.b16 %v3212, %v3203
    %v4086 = vpack.c.b16 %v3213, %v3204
    %v4087 = vpack.c.b16 %v3214, %v3205
    %v4088 = vpack.c.b16 %v3215, %v3206
    %v4089 = vpack.c.b16 %v3216, %v3207
    %v4090 = vpack.c.b16 %v3217, %v3208
    %v4091 = vpack.c.b16 %v3218, %v3209
    %v4092 = vpack.c.b16 %v3219, %v3210
    %v4093 = vpack.c.b16 %v3220, %v3211
    %v4094 = vpack.c.b16 %v3230, %v3221
    %v4095 = vpack.c.b16 %v3231, %v3222
    %v4096 = vpack.c.b16 %v3232, %v3223
    %v4097 = vpack.c.b16 %v3233, %v3224
    %v4098 = vpack.c.b16 %v3234, %v3225
    %v4099 = vpack.c.b16 %v3235, %v3226
    %v4100 = vpack.c.b16 %v3236, %v3227
    %v4101 = vpack.c.b16 %v3237, %v3228
    %v4102 = vpack.c.b16 %v3238, %v3229
    %v4103 = vpack.c.b16 %v3248, %v3239
    %v4104 = vpack.c.b16 %v3249, %v3240
    %v4105 = vpack.c.b16 %v3250, %v3241
    %v4106 = vpack.c.b16 %v3251, %v3242
    %v4107 = vpack.c.b16 %v3252, %v3243
    %v4108 = vpack.c.b16 %v3253, %v3244
    %v4109 = vpack.c.b16 %v3254, %v3245
    %v4110 = vpack.c.b16 %v3255, %v3246
    %v4111 = vpack.c.b16 %v3256, %v3247
    %v4112 = vpack.c.b16 %v3266, %v3257
    %v4113 = vpack.c.b16 %v3267, %v3258
    %v4114 = vpack.c.b16 %v3268, %v3259
    %v4115 = vpack.c.b16 %v3269, %v3260
    %v4116 = vpack.c.b16 %v3270, %v3261
    %v4117 = vpack.c.b16 %v3271, %v3262
    %v4118 = vpack.c.b16 %v3272, %v3263
    %v4119 = vpack.c.b16 %v3273, %v3264
    %v4120 = vpack.c.b16 %v3274, %v3265
    %v4121 = vpack.c.b16 %v3284, %v3275
    %v4122 = vpack.c.b16 %v3285, %v3276
    %v4123 = vpack.c.b16 %v3286, %v3277
    %v4124 = vpack.c.b16 %v3287, %v3278
    %v4125 = vpack.c.b16 %v3288, %v3279
    %v4126 = vpack.c.b16 %v3289, %v3280
    %v4127 = vpack.c.b16 %v3290, %v3281
    %v4128 = vpack.c.b16 %v3291, %v3282
    %v4129 = vpack.c.b16 %v3292, %v3283
    %v4130 = vpack.c.b16 %v3302, %v3293
    %v4131 = vpack.c.b16 %v3303, %v3294
    %v4132 = vpack.c.b16 %v3304, %v3295
    %v4133 = vpack.c.b16 %v3305, %v3296
    %v4134 = vpack.c.b16 %v3306, %v3297
    %v4135 = vpack.c.b16 %v3307, %v3298
    %v4136 = vpack.c.b16 %v3308, %v3299
    %v4137 = vpack.c.b16 %v3309, %v3300
    %v4138 = vpack.c.b16 %v3310, %v3301
    %v4139 = vpack.c.b16 %v3320, %v3311
    %v4140 = vpack.c.b16 %v3321, %v3312
    %v4141 = vpack.c.b16 %v3322, %v3313
    %v4142 = vpack.c.b16 %v3323, %v3314
    %v4143 = vpack.c.b16 %v3324, %v3315
    %v4144 = vpack.c.b16 %v3325, %v3316
    %v4145 = vpack.c.b16 %v3326, %v3317
    %v4146 = vpack.c.b16 %v3327, %v3318
    %v4147 = vpack.c.b16 %v3328, %v3319
    %v4148 = vpack.c.b16 %v3338, %v3329
    %v4149 = vpack.c.b16 %v3339, %v3330
    %v4150 = vpack.c.b16 %v3340, %v3331
    %v4151 = vpack.c.b16 %v3341, %v3332
    %v4152 = vpack.c.b16 %v3342, %v3333
    %v4153 = vpack.c.b16 %v3343, %v3334
    %v4154 = vpack.c.b16 %v3344, %v3335
    %v4155 = vpack.c.b16 %v3345, %v3336
    %v4156 = vpack.c.b16 %v3346, %v3337
    %v4157 = vpack.c.b16 %v3356, %v3347
    %v4158 = vpack.c.b16 %v3357, %v3348
    %v4159 = vpack.c.b16 %v3358, %v3349
    %v4160 = vpack.c.b16 %v3359, %v3350
    %v4161 = vpack.c.b16 %v3360, %v3351
    %v4162 = vpack.c.b16 %v3361, %v3352
    %v4163 = vpack.c.b16 %v3362, %v3353
    %v4164 = vpack.c.b16 %v3363, %v3354
    %v4165 = vpack.c.b16 %v3364, %v3355
    %v4166 = vpack.c.b16 %v3374, %v3365
    %v4167 = vpack.c.b16 %v3375, %v3366
    %v4168 = vpack.c.b16 %v3376, %v3367
    %v4169 = vpack.c.b16 %v3377, %v3368
    %v4170 = vpack.c.b16 %v3378, %v3369
    %v4171 = vpack.c.b16 %v3379, %v3370
    %v4172 = vpack.c.b16 %v3380, %v3371
    %v4173 = vpack.c.b16 %v3381, %v3372
    %v4174 = vpack.c.b16 %v3382, %v3373
    %v4175 = vpack.c.b16 %v3392, %v3383
    %v4176 = vpack.c.b16 %v3393, %v3384
    %v4177 = vpack.c.b16 %v3394, %v3385
    %v4178 = vpack.c.b16 %v3395, %v3386
    %v4179 = vpack.c.b16 %v3396, %v3387
    %v4180 = vpack.c.b16 %v3397, %v3388
    %v4181 = vpack.c.b16 %v3398, %v3389
    %v4182 = vpack.c.b16 %v3399, %v3390
    %v4183 = vpack.c.b16 %v3400, %v3391
    %v4184 = vpack.c.b16 %v3410, %v3401
    %v4185 = vpack.c.b16 %v3411, %v3402
    %v4186 = vpack.c.b16 %v3412, %v3403
    %v4187 = vpack.c.b16 %v3413, %v3404
    %v4188 = vpack.c.b16 %v3414, %v3405
    %v4189 = vpack.c.b16 %v3415, %v3406
    %v4190 = vpack.c.b16 %v3416, %v3407
    %v4191 = vpack.c.b16 %v3417, %v3408
    %v4192 = vpack.c.b16 %v3418, %v3409
    %v4193 = vpack.c.b16 %v3428, %v3419
    %v4194 = vpack.c.b16 %v3429, %v3420
    %v4195 = vpack.c.b16 %v3430, %v3421
    %v4196 = vpack.c.b16 %v3431, %v3422
    %v4197 = vpack.c.b16 %v3432, %v3423
    %v4198 = vpack.c.b16 %v3433, %v3424
    %v4199 = vpack.c.b16 %v3434, %v3425
    %v4200 = vpack.c.b16 %v3435, %v3426
    %v4201 = vpack.c.b16 %v3436, %v3427
    %v4202 = vpack.c.b16 %v3446, %v3437
    %v4203 = vpack.c.b16 %v3447, %v3438
    %v4204 = vpack.c.b16 %v3448, %v3439
    %v4205 = vpack.c.b16 %v3449, %v3440
    %v4206 = vpack.c.b16 %v3450, %v3441
    %v4207 = vpack.c.b16 %v3451, %v3442
    %v4208 = vpack.c.b16 %v3452, %v3443
    %v4209 = vpack.c.b16 %v3453, %v3444
    %v4210 = vpack.c.b16 %v3454, %v3445
    %v4211 = vpack.c.b16 %v3464, %v3455
    %v4212 = vpack.c.b16 %v3465, %v3456
    %v4213 = vpack.c.b16 %v3466, %v3457
    %v4214 = vpack.c.b16 %v3467, %v3458
    %v4215 = vpack.c.b16 %v3468, %v3459
    %v4216 = vpack.c.b16 %v3469, %v3460
    %v4217 = vpack.c.b16 %v3470, %v3461
    %v4218 = vpack.c.b16 %v3471, %v3462
    %v4219 = vpack.c.b16 %v3472, %v3463
    %v4220 = vpack.c.b16 %v3482, %v3473
    %v4221 = vpack.c.b16 %v3483, %v3474
    %v4222 = vpack.c.b16 %v3484, %v3475
    %v4223 = vpack.c.b16 %v3485, %v3476
    %v4224 = vpack.c.b16 %v3486, %v3477
    %v4225 = vpack.c.b16 %v3487, %v3478
    %v4226 = vpack.c.b16 %v3488, %v3479
    %v4227 = vpack.c.b16 %v3489, %v3480
    %v4228 = vpack.c.b16 %v3490, %v3481
    %v4229 = vpack.c.b16 %v3500, %v3491
    %v4230 = vpack.c.b16 %v3501, %v3492
    %v4231 = vpack.c.b16 %v3502, %v3493
    %v4232 = vpack.c.b16 %v3503, %v3494
    %v4233 = vpack.c.b16 %v3504, %v3495
    %v4234 = vpack.c.b16 %v3505, %v3496
    %v4235 = vpack.c.b16 %v3506, %v3497
    %v4236 = vpack.c.b16 %v3507, %v3498
    %v4237 = vpack.c.b16 %v3508, %v3499
    %v4238 = vpack.c.b16 %v3518, %v3509
    %v4239 = vpack.c.b16 %v3519, %v3510
    %v4240 = vpack.c.b16 %v3520, %v3511
    %v4241 = vpack.c.b16 %v3521, %v3512
    %v4242 = vpack.c.b16 %v3522, %v3513
    %v4243 = vpack.c.b16 %v3523, %v3514
    %v4244 = vpack.c.b16 %v3524, %v3515
    %v4245 = vpack.c.b16 %v3525, %v3516
    %v4246 = vpack.c.b16 %v3526, %v3517
    %v4247 = vpack.c.b16 %v3536, %v3527
    %v4248 = vpack.c.b16 %v3537, %v3528
    %v4249 = vpack.c.b16 %v3538, %v3529
    %v4250 = vpack.c.b16 %v3539, %v3530
    %v4251 = vpack.c.b16 %v3540, %v3531
    %v4252 = vpack.c.b16 %v3541, %v3532
    %v4253 = vpack.c.b16 %v3542, %v3533
    %v4254 = vpack.c.b16 %v3543, %v3534
    %v4255 = vpack.c.b16 %v3544, %v3535
    %v4256 = vpack.c.b16 %v3554, %v3545
    %v4257 = vpack.c.b16 %v3555, %v3546
    %v4258 = vpack.c.b16 %v3556, %v3547
    %v4259 = vpack.c.b16 %v3557, %v3548
    %v4260 = vpack.c.b16 %v3558, %v3549
    %v4261 = vpack.c.b16 %v3559, %v3550
    %v4262 = vpack.c.b16 %v3560, %v3551
    %v4263 = vpack.c.b16 %v3561, %v3552
    %v4264 = vpack.c.b16 %v3562, %v3553
    %v4265 = vpack.c.b16 %v3572, %v3563
    %v4266 = vpack.c.b16 %v3573, %v3564
    %v4267 = vpack.c.b16 %v3574, %v3565
    %v4268 = vpack.c.b16 %v3575, %v3566
    %v4269 = vpack.c.b16 %v3576, %v3567
    %v4270 = vpack.c.b16 %v3577, %v3568
    %v4271 = vpack.c.b16 %v3578, %v3569
    %v4272 = vpack.c.b16 %v3579, %v3570
    %v4273 = vpack.c.b16 %v3580, %v3571
    %v4274 = vpack.c.b16 %v3590, %v3581
    %v4275 = vpack.c.b16 %v3591, %v3582
    %v4276 = vpack.c.b16 %v3592, %v3583
    %v4277 = vpack.c.b16 %v3593, %v3584
    %v4278 = vpack.c.b16 %v3594, %v3585
    %v4279 = vpack.c.b16 %v3595, %v3586
    %v4280 = vpack.c.b16 %v3596, %v3587
    %v4281 = vpack.c.b16 %v3597, %v3588
    %v4282 = vpack.c.b16 %v3598, %v3589
    %v4283 = vpack.c.b16 %v3608, %v3599
    %v4284 = vpack.c.b16 %v3609, %v3600
    %v4285 = vpack.c.b16 %v3610, %v3601
    %v4286 = vpack.c.b16 %v3611, %v3602
    %v4287 = vpack.c.b16 %v3612, %v3603
    %v4288 = vpack.c.b16 %v3613, %v3604
    %v4289 = vpack.c.b16 %v3614, %v3605
    %v4290 = vpack.c.b16 %v3615, %v3606
    %v4291 = vpack.c.b16 %v3616, %v3607
    %v4292 = vpack.c.b16 %v3626, %v3617
    %v4293 = vpack.c.b16 %v3627, %v3618
    %v4294 = vpack.c.b16 %v3628, %v3619
    %v4295 = vpack.c.b16 %v3629, %v3620
    %v4296 = vpack.c.b16 %v3630, %v3621
    %v4297 = vpack.c.b16 %v3631, %v3622
    %v4298 = vpack.c.b16 %v3632, %v3623
    %v4299 = vpack.c.b16 %v3633, %v3624
    %v4300 = vpack.c.b16 %v3634, %v3625
    %v4301 = vpack.c.b16 %v3644, %v3635
    %v4302 = vpack.c.b16 %v3645, %v3636
    %v4303 = vpack.c.b16 %v3646, %v3637
    %v4304 = vpack.c.b16 %v3647, %v3638
    %v4305 = vpack.c.b16 %v3648, %v3639
    %v4306 = vpack.c.b16 %v3649, %v3640
    %v4307 = vpack.c.b16 %v3650, %v3641
    %v4308 = vpack.c.b16 %v3651, %v3642
    %v4309 = vpack.c.b16 %v3652, %v3643
    %v4310 = vpack.c.b16 %v3662, %v3653
    %v4311 = vpack.c.b16 %v3663, %v3654
    %v4312 = vpack.c.b16 %v3664, %v3655
    %v4313 = vpack.c.b16 %v3665, %v3656
    %v4314 = vpack.c.b16 %v3666, %v3657
    %v4315 = vpack.c.b16 %v3667, %v3658
    %v4316 = vpack.c.b16 %v3668, %v3659
    %v4317 = vpack.c.b16 %v3669, %v3660
    %v4318 = vpack.c.b16 %v3670, %v3661
    %4967 = vmatprep.subr.bf16.mxu0 %v3672
    %4968 = vmatpush1.bf16.msra.mxu0 %v3671
    %4969 = vmatprep.subr.bf16.mxu0 %v3681
    %4970 = vmatpush1.bf16.msra.mxu0 %v3680
    %4971 = vmatprep.subr.bf16.mxu0 %v3690
    %4972 = vmatpush1.bf16.msra.mxu0 %v3689
    %4973 = vmatprep.subr.bf16.mxu0 %v3699
    %4974 = vmatpush1.bf16.msra.mxu0 %v3698
    %4975 = vmatprep.subr.bf16.mxu0 %v3708
    %4976 = vmatpush1.bf16.msra.mxu0 %v3707
    %4977 = vmatprep.subr.bf16.mxu0 %v3717
    %4978 = vmatpush1.bf16.msra.mxu0 %v3716
    %4979 = vmatprep.subr.bf16.mxu0 %v3726
    %4980 = vmatpush1.bf16.msra.mxu0 %v3725
    %4981 = vmatprep.subr.bf16.mxu0 %v3735
    %4982 = vmatpush1.bf16.msra.mxu0 %v3734
    %4983 = vmatprep.subr.bf16.mxu0 %v3744
    %4984 = vmatpush1.bf16.msra.mxu0 %v3743
    %4985 = vmatprep.subr.bf16.mxu0 %v3753
    %4986 = vmatpush1.bf16.msra.mxu0 %v3752
    %4987 = vmatprep.subr.bf16.mxu0 %v3762
    %4988 = vmatpush1.bf16.msra.mxu0 %v3761
    %4989 = vmatprep.subr.bf16.mxu0 %v3771
    %4990 = vmatpush1.bf16.msra.mxu0 %v3770
    %4991 = vmatprep.subr.bf16.mxu0 %v3780
    %4992 = vmatpush1.bf16.msra.mxu0 %v3779
    %4993 = vmatprep.subr.bf16.mxu0 %v3789
    %4994 = vmatpush1.bf16.msra.mxu0 %v3788
    %4995 = vmatprep.subr.bf16.mxu0 %v3798
    %4996 = vmatpush1.bf16.msra.mxu0 %v3797
    %4997 = vmatprep.subr.bf16.mxu0 %v3807
    %4998 = vmatpush1.bf16.msra.mxu0 %v3806
    %4999 = vmatprep.mubr.bf16.mxu0 %v878
    %5000 = vmatmul.mubr.bf16.gmra.mrb[0].mxu0 %v877
    %v5001 = vpop.f32.mrb[0].mxu0
    %v5002 = vadd.f32 %v1613, %v5001
    %v5003 = vpop.f32.mrb[0].mxu0
    %v5004 = vadd.f32 %v1617, %v5003
    %v5005 = vpop.f32.mrb[0].mxu0
    %v5006 = vpop.f32.mrb[0].mxu0
    %5007 = vdwg.mxu0
    %5008 = vmatprep.subr.bf16.mxu0 %v3816
    %5009 = vmatpush1.bf16.msra.mxu0 %v3815
    %5010 = vmatprep.subr.bf16.mxu0 %v3825
    %5011 = vmatpush1.bf16.msra.mxu0 %v3824
    %5012 = vmatprep.subr.bf16.mxu0 %v3834
    %5013 = vmatpush1.bf16.msra.mxu0 %v3833
    %5014 = vmatprep.subr.bf16.mxu0 %v3843
    %5015 = vmatpush1.bf16.msra.mxu0 %v3842
    %5016 = vmatprep.subr.bf16.mxu0 %v3852
    %5017 = vmatpush1.bf16.msra.mxu0 %v3851
    %5018 = vmatprep.subr.bf16.mxu0 %v3861
    %5019 = vmatpush1.bf16.msra.mxu0 %v3860
    %5020 = vmatprep.subr.bf16.mxu0 %v3870
    %5021 = vmatpush1.bf16.msra.mxu0 %v3869
    %5022 = vmatprep.subr.bf16.mxu0 %v3879
    %5023 = vmatpush1.bf16.msra.mxu0 %v3878
    %5024 = vmatprep.subr.bf16.mxu0 %v3888
    %5025 = vmatpush1.bf16.msra.mxu0 %v3887
    %5026 = vmatprep.subr.bf16.mxu0 %v3897
    %5027 = vmatpush1.bf16.msra.mxu0 %v3896
    %5028 = vmatprep.subr.bf16.mxu0 %v3906
    %5029 = vmatpush1.bf16.msra.mxu0 %v3905
    %5030 = vmatprep.subr.bf16.mxu0 %v3915
    %5031 = vmatpush1.bf16.msra.mxu0 %v3914
    %5032 = vmatprep.subr.bf16.mxu0 %v3924
    %5033 = vmatpush1.bf16.msra.mxu0 %v3923
    %5034 = vmatprep.subr.bf16.mxu0 %v3933
    %5035 = vmatpush1.bf16.msra.mxu0 %v3932
    %5036 = vmatprep.subr.bf16.mxu0 %v3942
    %5037 = vmatpush1.bf16.msra.mxu0 %v3941
    %5038 = vmatprep.subr.bf16.mxu0 %v3951
    %5039 = vmatpush1.bf16.msra.mxu0 %v3950
    %5040 = vmatprep.mubr.bf16.mxu0 %v880
    %5041 = vmatmul.mubr.bf16.gmra.mrb[0].mxu0 %v879
    %v5042 = vpop.f32.mrb[0].mxu0
    %v5043 = vadd.f32 %v5002, %v5042
    %v5044 = vpop.f32.mrb[0].mxu0
    %v5045 = vadd.f32 %v5004, %v5044
    %v5046 = vpop.f32.mrb[0].mxu0
    %v5047 = vpop.f32.mrb[0].mxu0
    %5048 = vdwg.mxu0
    %5049 = vmatprep.subr.bf16.mxu0 %v3960
    %5050 = vmatpush1.bf16.msra.mxu0 %v3959
    %5051 = vmatprep.subr.bf16.mxu0 %v3969
    %5052 = vmatpush1.bf16.msra.mxu0 %v3968
    %5053 = vmatprep.subr.bf16.mxu0 %v3978
    %5054 = vmatpush1.bf16.msra.mxu0 %v3977
    %5055 = vmatprep.subr.bf16.mxu0 %v3987
    %5056 = vmatpush1.bf16.msra.mxu0 %v3986
    %5057 = vmatprep.subr.bf16.mxu0 %v3996
    %5058 = vmatpush1.bf16.msra.mxu0 %v3995
    %5059 = vmatprep.subr.bf16.mxu0 %v4005
    %5060 = vmatpush1.bf16.msra.mxu0 %v4004
    %5061 = vmatprep.subr.bf16.mxu0 %v4014
    %5062 = vmatpush1.bf16.msra.mxu0 %v4013
    %5063 = vmatprep.subr.bf16.mxu0 %v4023
    %5064 = vmatpush1.bf16.msra.mxu0 %v4022
    %5065 = vmatprep.subr.bf16.mxu0 %v4032
    %5066 = vmatpush1.bf16.msra.mxu0 %v4031
    %5067 = vmatprep.subr.bf16.mxu0 %v4041
    %5068 = vmatpush1.bf16.msra.mxu0 %v4040
    %5069 = vmatprep.subr.bf16.mxu0 %v4050
    %5070 = vmatpush1.bf16.msra.mxu0 %v4049
    %5071 = vmatprep.subr.bf16.mxu0 %v4059
    %5072 = vmatpush1.bf16.msra.mxu0 %v4058
    %5073 = vmatprep.subr.bf16.mxu0 %v4068
    %5074 = vmatpush1.bf16.msra.mxu0 %v4067
    %5075 = vmatprep.subr.bf16.mxu0 %v4077
    %5076 = vmatpush1.bf16.msra.mxu0 %v4076
    %5077 = vmatprep.subr.bf16.mxu0 %v4086
    %5078 = vmatpush1.bf16.msra.mxu0 %v4085
    %5079 = vmatprep.subr.bf16.mxu0 %v4095
    %5080 = vmatpush1.bf16.msra.mxu0 %v4094
    %5081 = vmatprep.mubr.bf16.mxu0 %v882
    %5082 = vmatmul.mubr.bf16.gmra.mrb[0].mxu0 %v881
    %v5083 = vpop.f32.mrb[0].mxu0
    %v5084 = vadd.f32 %v5043, %v5083
    %v5085 = vpop.f32.mrb[0].mxu0
    %v5086 = vadd.f32 %v5045, %v5085
    %v5087 = vpop.f32.mrb[0].mxu0
    %v5088 = vpop.f32.mrb[0].mxu0
    %5089 = vdwg.mxu0
    %5090 = vmatprep.subr.bf16.mxu0 %v4104
    %5091 = vmatpush1.bf16.msra.mxu0 %v4103
    %5092 = vmatprep.subr.bf16.mxu0 %v4113
    %5093 = vmatpush1.bf16.msra.mxu0 %v4112
    %5094 = vmatprep.subr.bf16.mxu0 %v4122
    %5095 = vmatpush1.bf16.msra.mxu0 %v4121
    %5096 = vmatprep.subr.bf16.mxu0 %v4131
    %5097 = vmatpush1.bf16.msra.mxu0 %v4130
    %5098 = vmatprep.subr.bf16.mxu0 %v4140
    %5099 = vmatpush1.bf16.msra.mxu0 %v4139
    %5100 = vmatprep.subr.bf16.mxu0 %v4149
    %5101 = vmatpush1.bf16.msra.mxu0 %v4148
    %5102 = vmatprep.subr.bf16.mxu0 %v4158
    %5103 = vmatpush1.bf16.msra.mxu0 %v4157
    %5104 = vmatprep.subr.bf16.mxu0 %v4167
    %5105 = vmatpush1.bf16.msra.mxu0 %v4166
    %5106 = vmatprep.subr.bf16.mxu0 %v4176
    %5107 = vmatpush1.bf16.msra.mxu0 %v4175
    %5108 = vmatprep.subr.bf16.mxu0 %v4185
    %5109 = vmatpush1.bf16.msra.mxu0 %v4184
    %5110 = vmatprep.subr.bf16.mxu0 %v4194
    %5111 = vmatpush1.bf16.msra.mxu0 %v4193
    %5112 = vmatprep.subr.bf16.mxu0 %v4203
    %5113 = vmatpush1.bf16.msra.mxu0 %v4202
    %5114 = vmatprep.subr.bf16.mxu0 %v4212
    %5115 = vmatpush1.bf16.msra.mxu0 %v4211
    %5116 = vmatprep.subr.bf16.mxu0 %v4221
    %5117 = vmatpush1.bf16.msra.mxu0 %v4220
    %5118 = vmatprep.subr.bf16.mxu0 %v4230
    %5119 = vmatpush1.bf16.msra.mxu0 %v4229
    %5120 = vmatprep.subr.bf16.mxu0 %v4239
    %5121 = vmatpush1.bf16.msra.mxu0 %v4238
    %5122 = vmatprep.mubr.bf16.mxu0 %v884
    %5123 = vmatmul.mubr.bf16.gmra.mrb[0].mxu0 %v883
    %v5124 = vpop.f32.mrb[0].mxu0
    %v5125 = vadd.f32 %v5084, %v5124
    %v5126 = vpop.f32.mrb[0].mxu0
    %v5127 = vadd.f32 %v5086, %v5126
    %v5128 = vpop.f32.mrb[0].mxu0
    %v5129 = vpop.f32.mrb[0].mxu0
    %5130 = vdwg.mxu0
    %5131 = vmatprep.subr.bf16.mxu0 %v4248
    %5132 = vmatpush1.bf16.msra.mxu0 %v4247
    %5133 = vmatprep.subr.bf16.mxu0 %v4257
    %5134 = vmatpush1.bf16.msra.mxu0 %v4256
    %5135 = vmatprep.subr.bf16.mxu0 %v4266
    %5136 = vmatpush1.bf16.msra.mxu0 %v4265
    %5137 = vmatprep.subr.bf16.mxu0 %v4275
    %5138 = vmatpush1.bf16.msra.mxu0 %v4274
    %5139 = vmatprep.subr.bf16.mxu0 %v4284
    %5140 = vmatpush1.bf16.msra.mxu0 %v4283
    %5141 = vmatprep.subr.bf16.mxu0 %v4293
    %5142 = vmatpush1.bf16.msra.mxu0 %v4292
    %5143 = vmatprep.subr.bf16.mxu0 %v4302
    %5144 = vmatpush1.bf16.msra.mxu0 %v4301
    %5145 = vmatprep.subr.bf16.mxu0 %v4311
    %5146 = vmatpush1.bf16.msra.mxu0 %v4310
    %5147 = vmatprep.subr.bf16.mxu0 0
    %5148 = vmatpush1.bf16.msra.mxu0 0
    %5149 = vmatprep.subr.bf16.mxu0 0
    %5150 = vmatpush1.bf16.msra.mxu0 0
    %5151 = vmatprep.subr.bf16.mxu0 0
    %5152 = vmatpush1.bf16.msra.mxu0 0
    %5153 = vmatprep.subr.bf16.mxu0 0
    %5154 = vmatpush1.bf16.msra.mxu0 0
    %5155 = vmatprep.subr.bf16.mxu0 0
    %5156 = vmatpush1.bf16.msra.mxu0 0
    %5157 = vmatprep.subr.bf16.mxu0 0
    %5158 = vmatpush1.bf16.msra.mxu0 0
    %5159 = vmatprep.subr.bf16.mxu0 0
    %5160 = vmatpush1.bf16.msra.mxu0 0
    %5161 = vmatprep.subr.bf16.mxu0 0
    %5162 = vmatpush1.bf16.msra.mxu0 0
    %5163 = vmatprep.mubr.bf16.mxu0 0
    %5164 = vmatmul.mubr.bf16.gmra.mrb[0].mxu0 %v885
    %v5165 = vpop.f32.mrb[0].mxu0
    %v5166 = vadd.f32 %v5125, %v5165
    %v5167 = vpop.f32.mrb[0].mxu0
    %v5168 = vadd.f32 %v5127, %v5167
    %v5169 = vpop.f32.mrb[0].mxu0
    %v5170 = vpop.f32.mrb[0].mxu0
    %5171 = vdwg.mxu0
    %5172 = vmatprep.subr.bf16.mxu0 %v3674
    %5173 = vmatpush1.bf16.msra.mxu0 %v3673
    %5174 = vmatprep.subr.bf16.mxu0 %v3683
    %5175 = vmatpush1.bf16.msra.mxu0 %v3682
    %5176 = vmatprep.subr.bf16.mxu0 %v3692
    %5177 = vmatpush1.bf16.msra.mxu0 %v3691
    %5178 = vmatprep.subr.bf16.mxu0 %v3701
    %5179 = vmatpush1.bf16.msra.mxu0 %v3700
    %5180 = vmatprep.subr.bf16.mxu0 %v3710
    %5181 = vmatpush1.bf16.msra.mxu0 %v3709
    %5182 = vmatprep.subr.bf16.mxu0 %v3719
    %5183 = vmatpush1.bf16.msra.mxu0 %v3718
    %5184 = vmatprep.subr.bf16.mxu0 %v3728
    %5185 = vmatpush1.bf16.msra.mxu0 %v3727
    %5186 = vmatprep.subr.bf16.mxu0 %v3737
    %5187 = vmatpush1.bf16.msra.mxu0 %v3736
    %5188 = vmatprep.subr.bf16.mxu0 %v3746
    %5189 = vmatpush1.bf16.msra.mxu0 %v3745
    %5190 = vmatprep.subr.bf16.mxu0 %v3755
    %5191 = vmatpush1.bf16.msra.mxu0 %v3754
    %5192 = vmatprep.subr.bf16.mxu0 %v3764
    %5193 = vmatpush1.bf16.msra.mxu0 %v3763
    %5194 = vmatprep.subr.bf16.mxu0 %v3773
    %5195 = vmatpush1.bf16.msra.mxu0 %v3772
    %5196 = vmatprep.subr.bf16.mxu0 %v3782
    %5197 = vmatpush1.bf16.msra.mxu0 %v3781
    %5198 = vmatprep.subr.bf16.mxu0 %v3791
    %5199 = vmatpush1.bf16.msra.mxu0 %v3790
    %5200 = vmatprep.subr.bf16.mxu0 %v3800
    %5201 = vmatpush1.bf16.msra.mxu0 %v3799
    %5202 = vmatprep.subr.bf16.mxu0 %v3809
    %5203 = vmatpush1.bf16.msra.mxu0 %v3808
    %5204 = vmatprep.mubr.bf16.mxu0 %v878
    %5205 = vmatmul.mubr.bf16.gmra.mrb[0].mxu0 %v877
    %v5206 = vpop.f32.mrb[0].mxu0
    %v5207 = vadd.f32 %v1621, %v5206
    %v5208 = vpop.f32.mrb[0].mxu0
    %v5209 = vadd.f32 %v1625, %v5208
    %v5210 = vpop.f32.mrb[0].mxu0
    %v5211 = vpop.f32.mrb[0].mxu0
    %5212 = vdwg.mxu0
    %5213 = vmatprep.subr.bf16.mxu0 %v3818
    %5214 = vmatpush1.bf16.msra.mxu0 %v3817
    %5215 = vmatprep.subr.bf16.mxu0 %v3827
    %5216 = vmatpush1.bf16.msra.mxu0 %v3826
    %5217 = vmatprep.subr.bf16.mxu0 %v3836
    %5218 = vmatpush1.bf16.msra.mxu0 %v3835
    %5219 = vmatprep.subr.bf16.mxu0 %v3845
    %5220 = vmatpush1.bf16.msra.mxu0 %v3844
    %5221 = vmatprep.subr.bf16.mxu0 %v3854
    %5222 = vmatpush1.bf16.msra.mxu0 %v3853
    %5223 = vmatprep.subr.bf16.mxu0 %v3863
    %5224 = vmatpush1.bf16.msra.mxu0 %v3862
    %5225 = vmatprep.subr.bf16.mxu0 %v3872
    %5226 = vmatpush1.bf16.msra.mxu0 %v3871
    %5227 = vmatprep.subr.bf16.mxu0 %v3881
    %5228 = vmatpush1.bf16.msra.mxu0 %v3880
    %5229 = vmatprep.subr.bf16.mxu0 %v3890
    %5230 = vmatpush1.bf16.msra.mxu0 %v3889
    %5231 = vmatprep.subr.bf16.mxu0 %v3899
    %5232 = vmatpush1.bf16.msra.mxu0 %v3898
    %5233 = vmatprep.subr.bf16.mxu0 %v3908
    %5234 = vmatpush1.bf16.msra.mxu0 %v3907
    %5235 = vmatprep.subr.bf16.mxu0 %v3917
    %5236 = vmatpush1.bf16.msra.mxu0 %v3916
    %5237 = vmatprep.subr.bf16.mxu0 %v3926
    %5238 = vmatpush1.bf16.msra.mxu0 %v3925
    %5239 = vmatprep.subr.bf16.mxu0 %v3935
    %5240 = vmatpush1.bf16.msra.mxu0 %v3934
    %5241 = vmatprep.subr.bf16.mxu0 %v3944
    %5242 = vmatpush1.bf16.msra.mxu0 %v3943
    %5243 = vmatprep.subr.bf16.mxu0 %v3953
    %5244 = vmatpush1.bf16.msra.mxu0 %v3952
    %5245 = vmatprep.mubr.bf16.mxu0 %v880
    %5246 = vmatmul.mubr.bf16.gmra.mrb[0].mxu0 %v879
    %v5247 = vpop.f32.mrb[0].mxu0
    %v5248 = vadd.f32 %v5207, %v5247
    %v5249 = vpop.f32.mrb[0].mxu0
    %v5250 = vadd.f32 %v5209, %v5249
    %v5251 = vpop.f32.mrb[0].mxu0
    %v5252 = vpop.f32.mrb[0].mxu0
    %5253 = vdwg.mxu0
    %5254 = vmatprep.subr.bf16.mxu0 %v3962
    %5255 = vmatpush1.bf16.msra.mxu0 %v3961
    %5256 = vmatprep.subr.bf16.mxu0 %v3971
    %5257 = vmatpush1.bf16.msra.mxu0 %v3970
    %5258 = vmatprep.subr.bf16.mxu0 %v3980
    %5259 = vmatpush1.bf16.msra.mxu0 %v3979
    %5260 = vmatprep.subr.bf16.mxu0 %v3989
    %5261 = vmatpush1.bf16.msra.mxu0 %v3988
    %5262 = vmatprep.subr.bf16.mxu0 %v3998
    %5263 = vmatpush1.bf16.msra.mxu0 %v3997
    %5264 = vmatprep.subr.bf16.mxu0 %v4007
    %5265 = vmatpush1.bf16.msra.mxu0 %v4006
    %5266 = vmatprep.subr.bf16.mxu0 %v4016
    %5267 = vmatpush1.bf16.msra.mxu0 %v4015
    %5268 = vmatprep.subr.bf16.mxu0 %v4025
    %5269 = vmatpush1.bf16.msra.mxu0 %v4024
    %5270 = vmatprep.subr.bf16.mxu0 %v4034
    %5271 = vmatpush1.bf16.msra.mxu0 %v4033
    %5272 = vmatprep.subr.bf16.mxu0 %v4043
    %5273 = vmatpush1.bf16.msra.mxu0 %v4042
    %5274 = vmatprep.subr.bf16.mxu0 %v4052
    %5275 = vmatpush1.bf16.msra.mxu0 %v4051
    %5276 = vmatprep.subr.bf16.mxu0 %v4061
    %5277 = vmatpush1.bf16.msra.mxu0 %v4060
    %5278 = vmatprep.subr.bf16.mxu0 %v4070
    %5279 = vmatpush1.bf16.msra.mxu0 %v4069
    %5280 = vmatprep.subr.bf16.mxu0 %v4079
    %5281 = vmatpush1.bf16.msra.mxu0 %v4078
    %5282 = vmatprep.subr.bf16.mxu0 %v4088
    %5283 = vmatpush1.bf16.msra.mxu0 %v4087
    %5284 = vmatprep.subr.bf16.mxu0 %v4097
    %5285 = vmatpush1.bf16.msra.mxu0 %v4096
    %5286 = vmatprep.mubr.bf16.mxu0 %v882
    %5287 = vmatmul.mubr.bf16.gmra.mrb[0].mxu0 %v881
    %v5288 = vpop.f32.mrb[0].mxu0
    %v5289 = vadd.f32 %v5248, %v5288
    %v5290 = vpop.f32.mrb[0].mxu0
    %v5291 = vadd.f32 %v5250, %v5290
    %v5292 = vpop.f32.mrb[0].mxu0
    %v5293 = vpop.f32.mrb[0].mxu0
    %5294 = vdwg.mxu0
    %5295 = vmatprep.subr.bf16.mxu0 %v4106
    %5296 = vmatpush1.bf16.msra.mxu0 %v4105
    %5297 = vmatprep.subr.bf16.mxu0 %v4115
    %5298 = vmatpush1.bf16.msra.mxu0 %v4114
    %5299 = vmatprep.subr.bf16.mxu0 %v4124
    %5300 = vmatpush1.bf16.msra.mxu0 %v4123
    %5301 = vmatprep.subr.bf16.mxu0 %v4133
    %5302 = vmatpush1.bf16.msra.mxu0 %v4132
    %5303 = vmatprep.subr.bf16.mxu0 %v4142
    %5304 = vmatpush1.bf16.msra.mxu0 %v4141
    %5305 = vmatprep.subr.bf16.mxu0 %v4151
    %5306 = vmatpush1.bf16.msra.mxu0 %v4150
    %5307 = vmatprep.subr.bf16.mxu0 %v4160
    %5308 = vmatpush1.bf16.msra.mxu0 %v4159
    %5309 = vmatprep.subr.bf16.mxu0 %v4169
    %5310 = vmatpush1.bf16.msra.mxu0 %v4168
    %5311 = vmatprep.subr.bf16.mxu0 %v4178
    %5312 = vmatpush1.bf16.msra.mxu0 %v4177
    %5313 = vmatprep.subr.bf16.mxu0 %v4187
    %5314 = vmatpush1.bf16.msra.mxu0 %v4186
    %5315 = vmatprep.subr.bf16.mxu0 %v4196
    %5316 = vmatpush1.bf16.msra.mxu0 %v4195
    %5317 = vmatprep.subr.bf16.mxu0 %v4205
    %5318 = vmatpush1.bf16.msra.mxu0 %v4204
    %5319 = vmatprep.subr.bf16.mxu0 %v4214
    %5320 = vmatpush1.bf16.msra.mxu0 %v4213
    %5321 = vmatprep.subr.bf16.mxu0 %v4223
    %5322 = vmatpush1.bf16.msra.mxu0 %v4222
    %5323 = vmatprep.subr.bf16.mxu0 %v4232
    %5324 = vmatpush1.bf16.msra.mxu0 %v4231
    %5325 = vmatprep.subr.bf16.mxu0 %v4241
    %5326 = vmatpush1.bf16.msra.mxu0 %v4240
    %5327 = vmatprep.mubr.bf16.mxu0 %v884
    %5328 = vmatmul.mubr.bf16.gmra.mrb[0].mxu0 %v883
    %v5329 = vpop.f32.mrb[0].mxu0
    %v5330 = vadd.f32 %v5289, %v5329
    %v5331 = vpop.f32.mrb[0].mxu0
    %v5332 = vadd.f32 %v5291, %v5331
    %v5333 = vpop.f32.mrb[0].mxu0
    %v5334 = vpop.f32.mrb[0].mxu0
    %5335 = vdwg.mxu0
    %5336 = vmatprep.subr.bf16.mxu0 %v4250
    %5337 = vmatpush1.bf16.msra.mxu0 %v4249
    %5338 = vmatprep.subr.bf16.mxu0 %v4259
    %5339 = vmatpush1.bf16.msra.mxu0 %v4258
    %5340 = vmatprep.subr.bf16.mxu0 %v4268
    %5341 = vmatpush1.bf16.msra.mxu0 %v4267
    %5342 = vmatprep.subr.bf16.mxu0 %v4277
    %5343 = vmatpush1.bf16.msra.mxu0 %v4276
    %5344 = vmatprep.subr.bf16.mxu0 %v4286
    %5345 = vmatpush1.bf16.msra.mxu0 %v4285
    %5346 = vmatprep.subr.bf16.mxu0 %v4295
    %5347 = vmatpush1.bf16.msra.mxu0 %v4294
    %5348 = vmatprep.subr.bf16.mxu0 %v4304
    %5349 = vmatpush1.bf16.msra.mxu0 %v4303
    %5350 = vmatprep.subr.bf16.mxu0 %v4313
    %5351 = vmatpush1.bf16.msra.mxu0 %v4312
    %5352 = vmatprep.subr.bf16.mxu0 0
    %5353 = vmatpush1.bf16.msra.mxu0 0
    %5354 = vmatprep.subr.bf16.mxu0 0
    %5355 = vmatpush1.bf16.msra.mxu0 0
    %5356 = vmatprep.subr.bf16.mxu0 0
    %5357 = vmatpush1.bf16.msra.mxu0 0
    %5358 = vmatprep.subr.bf16.mxu0 0
    %5359 = vmatpush1.bf16.msra.mxu0 0
    %5360 = vmatprep.subr.bf16.mxu0 0
    %5361 = vmatpush1.bf16.msra.mxu0 0
    %5362 = vmatprep.subr.bf16.mxu0 0
    %5363 = vmatpush1.bf16.msra.mxu0 0
    %5364 = vmatprep.subr.bf16.mxu0 0
    %5365 = vmatpush1.bf16.msra.mxu0 0
    %5366 = vmatprep.subr.bf16.mxu0 0
    %5367 = vmatpush1.bf16.msra.mxu0 0
    %5368 = vmatprep.mubr.bf16.mxu0 0
    %5369 = vmatmul.mubr.bf16.gmra.mrb[0].mxu0 %v885
    %v5370 = vpop.f32.mrb[0].mxu0
    %v5371 = vadd.f32 %v5330, %v5370
    %v5372 = vpop.f32.mrb[0].mxu0
    %v5373 = vadd.f32 %v5332, %v5372
    %v5374 = vpop.f32.mrb[0].mxu0
    %v5375 = vpop.f32.mrb[0].mxu0
    %5376 = vdwg.mxu0
    %5377 = vmatprep.subr.bf16.mxu0 %v3676
    %5378 = vmatpush1.bf16.msra.mxu0 %v3675
    %5379 = vmatprep.subr.bf16.mxu0 %v3685
    %5380 = vmatpush1.bf16.msra.mxu0 %v3684
    %5381 = vmatprep.subr.bf16.mxu0 %v3694
    %5382 = vmatpush1.bf16.msra.mxu0 %v3693
    %5383 = vmatprep.subr.bf16.mxu0 %v3703
    %5384 = vmatpush1.bf16.msra.mxu0 %v3702
    %5385 = vmatprep.subr.bf16.mxu0 %v3712
    %5386 = vmatpush1.bf16.msra.mxu0 %v3711
    %5387 = vmatprep.subr.bf16.mxu0 %v3721
    %5388 = vmatpush1.bf16.msra.mxu0 %v3720
    %5389 = vmatprep.subr.bf16.mxu0 %v3730
    %5390 = vmatpush1.bf16.msra.mxu0 %v3729
    %5391 = vmatprep.subr.bf16.mxu0 %v3739
    %5392 = vmatpush1.bf16.msra.mxu0 %v3738
    %5393 = vmatprep.subr.bf16.mxu0 %v3748
    %5394 = vmatpush1.bf16.msra.mxu0 %v3747
    %5395 = vmatprep.subr.bf16.mxu0 %v3757
    %5396 = vmatpush1.bf16.msra.mxu0 %v3756
    %5397 = vmatprep.subr.bf16.mxu0 %v3766
    %5398 = vmatpush1.bf16.msra.mxu0 %v3765
    %5399 = vmatprep.subr.bf16.mxu0 %v3775
    %5400 = vmatpush1.bf16.msra.mxu0 %v3774
    %5401 = vmatprep.subr.bf16.mxu0 %v3784
    %5402 = vmatpush1.bf16.msra.mxu0 %v3783
    %5403 = vmatprep.subr.bf16.mxu0 %v3793
    %5404 = vmatpush1.bf16.msra.mxu0 %v3792
    %5405 = vmatprep.subr.bf16.mxu0 %v3802
    %5406 = vmatpush1.bf16.msra.mxu0 %v3801
    %5407 = vmatprep.subr.bf16.mxu0 %v3811
    %5408 = vmatpush1.bf16.msra.mxu0 %v3810
    %5409 = vmatprep.mubr.bf16.mxu0 %v878
    %5410 = vmatmul.mubr.bf16.gmra.mrb[0].mxu0 %v877
    %v5411 = vpop.f32.mrb[0].mxu0
    %v5412 = vadd.f32 %v1629, %v5411
    %v5413 = vpop.f32.mrb[0].mxu0
    %v5414 = vadd.f32 %v1633, %v5413
    %v5415 = vpop.f32.mrb[0].mxu0
    %v5416 = vpop.f32.mrb[0].mxu0
    %5417 = vdwg.mxu0
    %5418 = vmatprep.subr.bf16.mxu0 %v3820
    %5419 = vmatpush1.bf16.msra.mxu0 %v3819
    %5420 = vmatprep.subr.bf16.mxu0 %v3829
    %5421 = vmatpush1.bf16.msra.mxu0 %v3828
    %5422 = vmatprep.subr.bf16.mxu0 %v3838
    %5423 = vmatpush1.bf16.msra.mxu0 %v3837
    %5424 = vmatprep.subr.bf16.mxu0 %v3847
    %5425 = vmatpush1.bf16.msra.mxu0 %v3846
    %5426 = vmatprep.subr.bf16.mxu0 %v3856
    %5427 = vmatpush1.bf16.msra.mxu0 %v3855
    %5428 = vmatprep.subr.bf16.mxu0 %v3865
    %5429 = vmatpush1.bf16.msra.mxu0 %v3864
    %5430 = vmatprep.subr.bf16.mxu0 %v3874
    %5431 = vmatpush1.bf16.msra.mxu0 %v3873
    %5432 = vmatprep.subr.bf16.mxu0 %v3883
    %5433 = vmatpush1.bf16.msra.mxu0 %v3882
    %5434 = vmatprep.subr.bf16.mxu0 %v3892
    %5435 = vmatpush1.bf16.msra.mxu0 %v3891
    %5436 = vmatprep.subr.bf16.mxu0 %v3901
    %5437 = vmatpush1.bf16.msra.mxu0 %v3900
    %5438 = vmatprep.subr.bf16.mxu0 %v3910
    %5439 = vmatpush1.bf16.msra.mxu0 %v3909
    %5440 = vmatprep.subr.bf16.mxu0 %v3919
    %5441 = vmatpush1.bf16.msra.mxu0 %v3918
    %5442 = vmatprep.subr.bf16.mxu0 %v3928
    %5443 = vmatpush1.bf16.msra.mxu0 %v3927
    %5444 = vmatprep.subr.bf16.mxu0 %v3937
    %5445 = vmatpush1.bf16.msra.mxu0 %v3936
    %5446 = vmatprep.subr.bf16.mxu0 %v3946
    %5447 = vmatpush1.bf16.msra.mxu0 %v3945
    %5448 = vmatprep.subr.bf16.mxu0 %v3955
    %5449 = vmatpush1.bf16.msra.mxu0 %v3954
    %5450 = vmatprep.mubr.bf16.mxu0 %v880
    %5451 = vmatmul.mubr.bf16.gmra.mrb[0].mxu0 %v879
    %v5452 = vpop.f32.mrb[0].mxu0
    %v5453 = vadd.f32 %v5412, %v5452
    %v5454 = vpop.f32.mrb[0].mxu0
    %v5455 = vadd.f32 %v5414, %v5454
    %v5456 = vpop.f32.mrb[0].mxu0
    %v5457 = vpop.f32.mrb[0].mxu0
    %5458 = vdwg.mxu0
    %5459 = vmatprep.subr.bf16.mxu0 %v3964
    %5460 = vmatpush1.bf16.msra.mxu0 %v3963
    %5461 = vmatprep.subr.bf16.mxu0 %v3973
    %5462 = vmatpush1.bf16.msra.mxu0 %v3972
    %5463 = vmatprep.subr.bf16.mxu0 %v3982
    %5464 = vmatpush1.bf16.msra.mxu0 %v3981
    %5465 = vmatprep.subr.bf16.mxu0 %v3991
    %5466 = vmatpush1.bf16.msra.mxu0 %v3990
    %5467 = vmatprep.subr.bf16.mxu0 %v4000
    %5468 = vmatpush1.bf16.msra.mxu0 %v3999
    %5469 = vmatprep.subr.bf16.mxu0 %v4009
    %5470 = vmatpush1.bf16.msra.mxu0 %v4008
    %5471 = vmatprep.subr.bf16.mxu0 %v4018
    %5472 = vmatpush1.bf16.msra.mxu0 %v4017
    %5473 = vmatprep.subr.bf16.mxu0 %v4027
    %5474 = vmatpush1.bf16.msra.mxu0 %v4026
    %5475 = vmatprep.subr.bf16.mxu0 %v4036
    %5476 = vmatpush1.bf16.msra.mxu0 %v4035
    %5477 = vmatprep.subr.bf16.mxu0 %v4045
    %5478 = vmatpush1.bf16.msra.mxu0 %v4044
    %5479 = vmatprep.subr.bf16.mxu0 %v4054
    %5480 = vmatpush1.bf16.msra.mxu0 %v4053
    %5481 = vmatprep.subr.bf16.mxu0 %v4063
    %5482 = vmatpush1.bf16.msra.mxu0 %v4062
    %5483 = vmatprep.subr.bf16.mxu0 %v4072
    %5484 = vmatpush1.bf16.msra.mxu0 %v4071
    %5485 = vmatprep.subr.bf16.mxu0 %v4081
    %5486 = vmatpush1.bf16.msra.mxu0 %v4080
    %5487 = vmatprep.subr.bf16.mxu0 %v4090
    %5488 = vmatpush1.bf16.msra.mxu0 %v4089
    %5489 = vmatprep.subr.bf16.mxu0 %v4099
    %5490 = vmatpush1.bf16.msra.mxu0 %v4098
    %5491 = vmatprep.mubr.bf16.mxu0 %v882
    %5492 = vmatmul.mubr.bf16.gmra.mrb[0].mxu0 %v881
    %v5493 = vpop.f32.mrb[0].mxu0
    %v5494 = vadd.f32 %v5453, %v5493
    %v5495 = vpop.f32.mrb[0].mxu0
    %v5496 = vadd.f32 %v5455, %v5495
    %v5497 = vpop.f32.mrb[0].mxu0
    %v5498 = vpop.f32.mrb[0].mxu0
    %5499 = vdwg.mxu0
    %5500 = vmatprep.subr.bf16.mxu0 %v4108
    %5501 = vmatpush1.bf16.msra.mxu0 %v4107
    %5502 = vmatprep.subr.bf16.mxu0 %v4117
    %5503 = vmatpush1.bf16.msra.mxu0 %v4116
    %5504 = vmatprep.subr.bf16.mxu0 %v4126
    %5505 = vmatpush1.bf16.msra.mxu0 %v4125
    %5506 = vmatprep.subr.bf16.mxu0 %v4135
    %5507 = vmatpush1.bf16.msra.mxu0 %v4134
    %5508 = vmatprep.subr.bf16.mxu0 %v4144
    %5509 = vmatpush1.bf16.msra.mxu0 %v4143
    %5510 = vmatprep.subr.bf16.mxu0 %v4153
    %5511 = vmatpush1.bf16.msra.mxu0 %v4152
    %5512 = vmatprep.subr.bf16.mxu0 %v4162
    %5513 = vmatpush1.bf16.msra.mxu0 %v4161
    %5514 = vmatprep.subr.bf16.mxu0 %v4171
    %5515 = vmatpush1.bf16.msra.mxu0 %v4170
    %5516 = vmatprep.subr.bf16.mxu0 %v4180
    %5517 = vmatpush1.bf16.msra.mxu0 %v4179
    %5518 = vmatprep.subr.bf16.mxu0 %v4189
    %5519 = vmatpush1.bf16.msra.mxu0 %v4188
    %5520 = vmatprep.subr.bf16.mxu0 %v4198
    %5521 = vmatpush1.bf16.msra.mxu0 %v4197
    %5522 = vmatprep.subr.bf16.mxu0 %v4207
    %5523 = vmatpush1.bf16.msra.mxu0 %v4206
    %5524 = vmatprep.subr.bf16.mxu0 %v4216
    %5525 = vmatpush1.bf16.msra.mxu0 %v4215
    %5526 = vmatprep.subr.bf16.mxu0 %v4225
    %5527 = vmatpush1.bf16.msra.mxu0 %v4224
    %5528 = vmatprep.subr.bf16.mxu0 %v4234
    %5529 = vmatpush1.bf16.msra.mxu0 %v4233
    %5530 = vmatprep.subr.bf16.mxu0 %v4243
    %5531 = vmatpush1.bf16.msra.mxu0 %v4242
    %5532 = vmatprep.mubr.bf16.mxu0 %v884
    %5533 = vmatmul.mubr.bf16.gmra.mrb[0].mxu0 %v883
    %v5534 = vpop.f32.mrb[0].mxu0
    %v5535 = vadd.f32 %v5494, %v5534
    %v5536 = vpop.f32.mrb[0].mxu0
    %v5537 = vadd.f32 %v5496, %v5536
    %v5538 = vpop.f32.mrb[0].mxu0
    %v5539 = vpop.f32.mrb[0].mxu0
    %5540 = vdwg.mxu0
    %5541 = vmatprep.subr.bf16.mxu0 %v4252
    %5542 = vmatpush1.bf16.msra.mxu0 %v4251
    %5543 = vmatprep.subr.bf16.mxu0 %v4261
    %5544 = vmatpush1.bf16.msra.mxu0 %v4260
    %5545 = vmatprep.subr.bf16.mxu0 %v4270
    %5546 = vmatpush1.bf16.msra.mxu0 %v4269
    %5547 = vmatprep.subr.bf16.mxu0 %v4279
    %5548 = vmatpush1.bf16.msra.mxu0 %v4278
    %5549 = vmatprep.subr.bf16.mxu0 %v4288
    %5550 = vmatpush1.bf16.msra.mxu0 %v4287
    %5551 = vmatprep.subr.bf16.mxu0 %v4297
    %5552 = vmatpush1.bf16.msra.mxu0 %v4296
    %5553 = vmatprep.subr.bf16.mxu0 %v4306
    %5554 = vmatpush1.bf16.msra.mxu0 %v4305
    %5555 = vmatprep.subr.bf16.mxu0 %v4315
    %5556 = vmatpush1.bf16.msra.mxu0 %v4314
    %5557 = vmatprep.subr.bf16.mxu0 0
    %5558 = vmatpush1.bf16.msra.mxu0 0
    %5559 = vmatprep.subr.bf16.mxu0 0
    %5560 = vmatpush1.bf16.msra.mxu0 0
    %5561 = vmatprep.subr.bf16.mxu0 0
    %5562 = vmatpush1.bf16.msra.mxu0 0
    %5563 = vmatprep.subr.bf16.mxu0 0
    %5564 = vmatpush1.bf16.msra.mxu0 0
    %5565 = vmatprep.subr.bf16.mxu0 0
    %5566 = vmatpush1.bf16.msra.mxu0 0
    %5567 = vmatprep.subr.bf16.mxu0 0
    %5568 = vmatpush1.bf16.msra.mxu0 0
    %5569 = vmatprep.subr.bf16.mxu0 0
    %5570 = vmatpush1.bf16.msra.mxu0 0
    %5571 = vmatprep.subr.bf16.mxu0 0
    %5572 = vmatpush1.bf16.msra.mxu0 0
    %5573 = vmatprep.mubr.bf16.mxu0 0
    %5574 = vmatmul.mubr.bf16.gmra.mrb[0].mxu0 %v885
    %v5575 = vpop.f32.mrb[0].mxu0
    %v5576 = vadd.f32 %v5535, %v5575
    %v5577 = vpop.f32.mrb[0].mxu0
    %v5578 = vadd.f32 %v5537, %v5577
    %v5579 = vpop.f32.mrb[0].mxu0
    %v5580 = vpop.f32.mrb[0].mxu0
    %5581 = vdwg.mxu0
    %5582 = vmatprep.subr.bf16.mxu0 %v3678
    %5583 = vmatpush1.bf16.msra.mxu0 %v3677
    %5584 = vmatprep.subr.bf16.mxu0 %v3687
    %5585 = vmatpush1.bf16.msra.mxu0 %v3686
    %5586 = vmatprep.subr.bf16.mxu0 %v3696
    %5587 = vmatpush1.bf16.msra.mxu0 %v3695
    %5588 = vmatprep.subr.bf16.mxu0 %v3705
    %5589 = vmatpush1.bf16.msra.mxu0 %v3704
    %5590 = vmatprep.subr.bf16.mxu0 %v3714
    %5591 = vmatpush1.bf16.msra.mxu0 %v3713
    %5592 = vmatprep.subr.bf16.mxu0 %v3723
    %5593 = vmatpush1.bf16.msra.mxu0 %v3722
    %5594 = vmatprep.subr.bf16.mxu0 %v3732
    %5595 = vmatpush1.bf16.msra.mxu0 %v3731
    %5596 = vmatprep.subr.bf16.mxu0 %v3741
    %5597 = vmatpush1.bf16.msra.mxu0 %v3740
    %5598 = vmatprep.subr.bf16.mxu0 %v3750
    %5599 = vmatpush1.bf16.msra.mxu0 %v3749
    %5600 = vmatprep.subr.bf16.mxu0 %v3759
    %5601 = vmatpush1.bf16.msra.mxu0 %v3758
    %5602 = vmatprep.subr.bf16.mxu0 %v3768
    %5603 = vmatpush1.bf16.msra.mxu0 %v3767
    %5604 = vmatprep.subr.bf16.mxu0 %v3777
    %5605 = vmatpush1.bf16.msra.mxu0 %v3776
    %5606 = vmatprep.subr.bf16.mxu0 %v3786
    %5607 = vmatpush1.bf16.msra.mxu0 %v3785
    %5608 = vmatprep.subr.bf16.mxu0 %v3795
    %5609 = vmatpush1.bf16.msra.mxu0 %v3794
    %5610 = vmatprep.subr.bf16.mxu0 %v3804
    %5611 = vmatpush1.bf16.msra.mxu0 %v3803
    %5612 = vmatprep.subr.bf16.mxu0 %v3813
    %5613 = vmatpush1.bf16.msra.mxu0 %v3812
    %5614 = vmatprep.mubr.bf16.mxu0 %v878
    %5615 = vmatmul.mubr.bf16.gmra.mrb[0].mxu0 %v877
    %v5616 = vpop.f32.mrb[0].mxu0
    %v5617 = vadd.f32 %v1637, %v5616
    %v5618 = vpop.f32.mrb[0].mxu0
    %v5619 = vadd.f32 %v1641, %v5618
    %v5620 = vpop.f32.mrb[0].mxu0
    %v5621 = vpop.f32.mrb[0].mxu0
    %5622 = vdwg.mxu0
    %5623 = vmatprep.subr.bf16.mxu0 %v3822
    %5624 = vmatpush1.bf16.msra.mxu0 %v3821
    %5625 = vmatprep.subr.bf16.mxu0 %v3831
    %5626 = vmatpush1.bf16.msra.mxu0 %v3830
    %5627 = vmatprep.subr.bf16.mxu0 %v3840
    %5628 = vmatpush1.bf16.msra.mxu0 %v3839
    %5629 = vmatprep.subr.bf16.mxu0 %v3849
    %5630 = vmatpush1.bf16.msra.mxu0 %v3848
    %5631 = vmatprep.subr.bf16.mxu0 %v3858
    %5632 = vmatpush1.bf16.msra.mxu0 %v3857
    %5633 = vmatprep.subr.bf16.mxu0 %v3867
    %5634 = vmatpush1.bf16.msra.mxu0 %v3866
    %5635 = vmatprep.subr.bf16.mxu0 %v3876
    %5636 = vmatpush1.bf16.msra.mxu0 %v3875
    %5637 = vmatprep.subr.bf16.mxu0 %v3885
    %5638 = vmatpush1.bf16.msra.mxu0 %v3884
    %5639 = vmatprep.subr.bf16.mxu0 %v3894
    %5640 = vmatpush1.bf16.msra.mxu0 %v3893
    %5641 = vmatprep.subr.bf16.mxu0 %v3903
    %5642 = vmatpush1.bf16.msra.mxu0 %v3902
    %5643 = vmatprep.subr.bf16.mxu0 %v3912
    %5644 = vmatpush1.bf16.msra.mxu0 %v3911
    %5645 = vmatprep.subr.bf16.mxu0 %v3921
    %5646 = vmatpush1.bf16.msra.mxu0 %v3920
    %5647 = vmatprep.subr.bf16.mxu0 %v3930
    %5648 = vmatpush1.bf16.msra.mxu0 %v3929
    %5649 = vmatprep.subr.bf16.mxu0 %v3939
    %5650 = vmatpush1.bf16.msra.mxu0 %v3938
    %5651 = vmatprep.subr.bf16.mxu0 %v3948
    %5652 = vmatpush1.bf16.msra.mxu0 %v3947
    %5653 = vmatprep.subr.bf16.mxu0 %v3957
    %5654 = vmatpush1.bf16.msra.mxu0 %v3956
    %5655 = vmatprep.mubr.bf16.mxu0 %v880
    %5656 = vmatmul.mubr.bf16.gmra.mrb[0].mxu0 %v879
    %v5657 = vpop.f32.mrb[0].mxu0
    %v5658 = vadd.f32 %v5617, %v5657
    %v5659 = vpop.f32.mrb[0].mxu0
    %v5660 = vadd.f32 %v5619, %v5659
    %v5661 = vpop.f32.mrb[0].mxu0
    %v5662 = vpop.f32.mrb[0].mxu0
    %5663 = vdwg.mxu0
    %5664 = vmatprep.subr.bf16.mxu0 %v3966
    %5665 = vmatpush1.bf16.msra.mxu0 %v3965
    %5666 = vmatprep.subr.bf16.mxu0 %v3975
    %5667 = vmatpush1.bf16.msra.mxu0 %v3974
    %5668 = vmatprep.subr.bf16.mxu0 %v3984
    %5669 = vmatpush1.bf16.msra.mxu0 %v3983
    %5670 = vmatprep.subr.bf16.mxu0 %v3993
    %5671 = vmatpush1.bf16.msra.mxu0 %v3992
    %5672 = vmatprep.subr.bf16.mxu0 %v4002
    %5673 = vmatpush1.bf16.msra.mxu0 %v4001
    %5674 = vmatprep.subr.bf16.mxu0 %v4011
    %5675 = vmatpush1.bf16.msra.mxu0 %v4010
    %5676 = vmatprep.subr.bf16.mxu0 %v4020
    %5677 = vmatpush1.bf16.msra.mxu0 %v4019
    %5678 = vmatprep.subr.bf16.mxu0 %v4029
    %5679 = vmatpush1.bf16.msra.mxu0 %v4028
    %5680 = vmatprep.subr.bf16.mxu0 %v4038
    %5681 = vmatpush1.bf16.msra.mxu0 %v4037
    %5682 = vmatprep.subr.bf16.mxu0 %v4047
    %5683 = vmatpush1.bf16.msra.mxu0 %v4046
    %5684 = vmatprep.subr.bf16.mxu0 %v4056
    %5685 = vmatpush1.bf16.msra.mxu0 %v4055
    %5686 = vmatprep.subr.bf16.mxu0 %v4065
    %5687 = vmatpush1.bf16.msra.mxu0 %v4064
    %5688 = vmatprep.subr.bf16.mxu0 %v4074
    %5689 = vmatpush1.bf16.msra.mxu0 %v4073
    %5690 = vmatprep.subr.bf16.mxu0 %v4083
    %5691 = vmatpush1.bf16.msra.mxu0 %v4082
    %5692 = vmatprep.subr.bf16.mxu0 %v4092
    %5693 = vmatpush1.bf16.msra.mxu0 %v4091
    %5694 = vmatprep.subr.bf16.mxu0 %v4101
    %5695 = vmatpush1.bf16.msra.mxu0 %v4100
    %5696 = vmatprep.mubr.bf16.mxu0 %v882
    %5697 = vmatmul.mubr.bf16.gmra.mrb[0].mxu0 %v881
    %v5698 = vpop.f32.mrb[0].mxu0
    %v5699 = vadd.f32 %v5658, %v5698
    %v5700 = vpop.f32.mrb[0].mxu0
    %v5701 = vadd.f32 %v5660, %v5700
    %v5702 = vpop.f32.mrb[0].mxu0
    %v5703 = vpop.f32.mrb[0].mxu0
    %5704 = vdwg.mxu0
    %5705 = vmatprep.subr.bf16.mxu0 %v4110
    %5706 = vmatpush1.bf16.msra.mxu0 %v4109
    %5707 = vmatprep.subr.bf16.mxu0 %v4119
    %5708 = vmatpush1.bf16.msra.mxu0 %v4118
    %5709 = vmatprep.subr.bf16.mxu0 %v4128
    %5710 = vmatpush1.bf16.msra.mxu0 %v4127
    %5711 = vmatprep.subr.bf16.mxu0 %v4137
    %5712 = vmatpush1.bf16.msra.mxu0 %v4136
    %5713 = vmatprep.subr.bf16.mxu0 %v4146
    %5714 = vmatpush1.bf16.msra.mxu0 %v4145
    %5715 = vmatprep.subr.bf16.mxu0 %v4155
    %5716 = vmatpush1.bf16.msra.mxu0 %v4154
    %5717 = vmatprep.subr.bf16.mxu0 %v4164
    %5718 = vmatpush1.bf16.msra.mxu0 %v4163
    %5719 = vmatprep.subr.bf16.mxu0 %v4173
    %5720 = vmatpush1.bf16.msra.mxu0 %v4172
    %5721 = vmatprep.subr.bf16.mxu0 %v4182
    %5722 = vmatpush1.bf16.msra.mxu0 %v4181
    %5723 = vmatprep.subr.bf16.mxu0 %v4191
    %5724 = vmatpush1.bf16.msra.mxu0 %v4190
    %5725 = vmatprep.subr.bf16.mxu0 %v4200
    %5726 = vmatpush1.bf16.msra.mxu0 %v4199
    %5727 = vmatprep.subr.bf16.mxu0 %v4209
    %5728 = vmatpush1.bf16.msra.mxu0 %v4208
    %5729 = vmatprep.subr.bf16.mxu0 %v4218
    %5730 = vmatpush1.bf16.msra.mxu0 %v4217
    %5731 = vmatprep.subr.bf16.mxu0 %v4227
    %5732 = vmatpush1.bf16.msra.mxu0 %v4226
    %5733 = vmatprep.subr.bf16.mxu0 %v4236
    %5734 = vmatpush1.bf16.msra.mxu0 %v4235
    %5735 = vmatprep.subr.bf16.mxu0 %v4245
    %5736 = vmatpush1.bf16.msra.mxu0 %v4244
    %5737 = vmatprep.mubr.bf16.mxu0 %v884
    %5738 = vmatmul.mubr.bf16.gmra.mrb[0].mxu0 %v883
    %v5739 = vpop.f32.mrb[0].mxu0
    %v5740 = vadd.f32 %v5699, %v5739
    %v5741 = vpop.f32.mrb[0].mxu0
    %v5742 = vadd.f32 %v5701, %v5741
    %v5743 = vpop.f32.mrb[0].mxu0
    %v5744 = vpop.f32.mrb[0].mxu0
    %5745 = vdwg.mxu0
    %5746 = vmatprep.subr.bf16.mxu0 %v4254
    %5747 = vmatpush1.bf16.msra.mxu0 %v4253
    %5748 = vmatprep.subr.bf16.mxu0 %v4263
    %5749 = vmatpush1.bf16.msra.mxu0 %v4262
    %5750 = vmatprep.subr.bf16.mxu0 %v4272
    %5751 = vmatpush1.bf16.msra.mxu0 %v4271
    %5752 = vmatprep.subr.bf16.mxu0 %v4281
    %5753 = vmatpush1.bf16.msra.mxu0 %v4280
    %5754 = vmatprep.subr.bf16.mxu0 %v4290
    %5755 = vmatpush1.bf16.msra.mxu0 %v4289
    %5756 = vmatprep.subr.bf16.mxu0 %v4299
    %5757 = vmatpush1.bf16.msra.mxu0 %v4298
    %5758 = vmatprep.subr.bf16.mxu0 %v4308
    %5759 = vmatpush1.bf16.msra.mxu0 %v4307
    %5760 = vmatprep.subr.bf16.mxu0 %v4317
    %5761 = vmatpush1.bf16.msra.mxu0 %v4316
    %5762 = vmatprep.subr.bf16.mxu0 0
    %5763 = vmatpush1.bf16.msra.mxu0 0
    %5764 = vmatprep.subr.bf16.mxu0 0
    %5765 = vmatpush1.bf16.msra.mxu0 0
    %5766 = vmatprep.subr.bf16.mxu0 0
    %5767 = vmatpush1.bf16.msra.mxu0 0
    %5768 = vmatprep.subr.bf16.mxu0 0
    %5769 = vmatpush1.bf16.msra.mxu0 0
    %5770 = vmatprep.subr.bf16.mxu0 0
    %5771 = vmatpush1.bf16.msra.mxu0 0
    %5772 = vmatprep.subr.bf16.mxu0 0
    %5773 = vmatpush1.bf16.msra.mxu0 0
    %5774 = vmatprep.subr.bf16.mxu0 0
    %5775 = vmatpush1.bf16.msra.mxu0 0
    %5776 = vmatprep.subr.bf16.mxu0 0
    %5777 = vmatpush1.bf16.msra.mxu0 0
    %5778 = vmatprep.mubr.bf16.mxu0 0
    %5779 = vmatmul.mubr.bf16.gmra.mrb[0].mxu0 %v885
    %v5780 = vpop.f32.mrb[0].mxu0
    %v5781 = vadd.f32 %v5740, %v5780
    %v5782 = vpop.f32.mrb[0].mxu0
    %v5783 = vadd.f32 %v5742, %v5782
    %v5784 = vpop.f32.mrb[0].mxu0
    %v5785 = vpop.f32.mrb[0].mxu0
    %5786 = vdwg.mxu0
    %5787 = vmatprep.subr.bf16.mxu0 0
    %5788 = vmatpush1.bf16.msra.mxu0 %v3679
    %5789 = vmatprep.subr.bf16.mxu0 0
    %5790 = vmatpush1.bf16.msra.mxu0 %v3688
    %5791 = vmatprep.subr.bf16.mxu0 0
    %5792 = vmatpush1.bf16.msra.mxu0 %v3697
    %5793 = vmatprep.subr.bf16.mxu0 0
    %5794 = vmatpush1.bf16.msra.mxu0 %v3706
    %5795 = vmatprep.subr.bf16.mxu0 0
    %5796 = vmatpush1.bf16.msra.mxu0 %v3715
    %5797 = vmatprep.subr.bf16.mxu0 0
    %5798 = vmatpush1.bf16.msra.mxu0 %v3724
    %5799 = vmatprep.subr.bf16.mxu0 0
    %5800 = vmatpush1.bf16.msra.mxu0 %v3733
    %5801 = vmatprep.subr.bf16.mxu0 0
    %5802 = vmatpush1.bf16.msra.mxu0 %v3742
    %5803 = vmatprep.subr.bf16.mxu0 0
    %5804 = vmatpush1.bf16.msra.mxu0 %v3751
    %5805 = vmatprep.subr.bf16.mxu0 0
    %5806 = vmatpush1.bf16.msra.mxu0 %v3760
    %5807 = vmatprep.subr.bf16.mxu0 0
    %5808 = vmatpush1.bf16.msra.mxu0 %v3769
    %5809 = vmatprep.subr.bf16.mxu0 0
    %5810 = vmatpush1.bf16.msra.mxu0 %v3778
    %5811 = vmatprep.subr.bf16.mxu0 0
    %5812 = vmatpush1.bf16.msra.mxu0 %v3787
    %5813 = vmatprep.subr.bf16.mxu0 0
    %5814 = vmatpush1.bf16.msra.mxu0 %v3796
    %5815 = vmatprep.subr.bf16.mxu0 0
    %5816 = vmatpush1.bf16.msra.mxu0 %v3805
    %5817 = vmatprep.subr.bf16.mxu0 0
    %5818 = vmatpush1.bf16.msra.mxu0 %v3814
    %5819 = vmatprep.mubr.bf16.mxu0 %v878
    %5820 = vmatmul.mubr.bf16.gmra.mrb[0].mxu0 %v877
    %v5821 = vpop.f32.mrb[0].mxu0
    %v5822 = vadd.f32 %v1645, %v5821
    %v5823 = vpop.f32.mrb[0].mxu0
    %v5824 = vpop.f32.mrb[0].mxu0
    %v5825 = vpop.f32.mrb[0].mxu0
    %5826 = vdwg.mxu0
    %5827 = vmatprep.subr.bf16.mxu0 0
    %5828 = vmatpush1.bf16.msra.mxu0 %v3823
    %5829 = vmatprep.subr.bf16.mxu0 0
    %5830 = vmatpush1.bf16.msra.mxu0 %v3832
    %5831 = vmatprep.subr.bf16.mxu0 0
    %5832 = vmatpush1.bf16.msra.mxu0 %v3841
    %5833 = vmatprep.subr.bf16.mxu0 0
    %5834 = vmatpush1.bf16.msra.mxu0 %v3850
    %5835 = vmatprep.subr.bf16.mxu0 0
    %5836 = vmatpush1.bf16.msra.mxu0 %v3859
    %5837 = vmatprep.subr.bf16.mxu0 0
    %5838 = vmatpush1.bf16.msra.mxu0 %v3868
    %5839 = vmatprep.subr.bf16.mxu0 0
    %5840 = vmatpush1.bf16.msra.mxu0 %v3877
    %5841 = vmatprep.subr.bf16.mxu0 0
    %5842 = vmatpush1.bf16.msra.mxu0 %v3886
    %5843 = vmatprep.subr.bf16.mxu0 0
    %5844 = vmatpush1.bf16.msra.mxu0 %v3895
    %5845 = vmatprep.subr.bf16.mxu0 0
    %5846 = vmatpush1.bf16.msra.mxu0 %v3904
    %5847 = vmatprep.subr.bf16.mxu0 0
    %5848 = vmatpush1.bf16.msra.mxu0 %v3913
    %5849 = vmatprep.subr.bf16.mxu0 0
    %5850 = vmatpush1.bf16.msra.mxu0 %v3922
    %5851 = vmatprep.subr.bf16.mxu0 0
    %5852 = vmatpush1.bf16.msra.mxu0 %v3931
    %5853 = vmatprep.subr.bf16.mxu0 0
    %5854 = vmatpush1.bf16.msra.mxu0 %v3940
    %5855 = vmatprep.subr.bf16.mxu0 0
    %5856 = vmatpush1.bf16.msra.mxu0 %v3949
    %5857 = vmatprep.subr.bf16.mxu0 0
    %5858 = vmatpush1.bf16.msra.mxu0 %v3958
    %5859 = vmatprep.mubr.bf16.mxu0 %v880
    %5860 = vmatmul.mubr.bf16.gmra.mrb[0].mxu0 %v879
    %v5861 = vpop.f32.mrb[0].mxu0
    %v5862 = vadd.f32 %v5822, %v5861
    %v5863 = vpop.f32.mrb[0].mxu0
    %v5864 = vpop.f32.mrb[0].mxu0
    %v5865 = vpop.f32.mrb[0].mxu0
    %5866 = vdwg.mxu0
    %5867 = vmatprep.subr.bf16.mxu0 0
    %5868 = vmatpush1.bf16.msra.mxu0 %v3967
    %5869 = vmatprep.subr.bf16.mxu0 0
    %5870 = vmatpush1.bf16.msra.mxu0 %v3976
    %5871 = vmatprep.subr.bf16.mxu0 0
    %5872 = vmatpush1.bf16.msra.mxu0 %v3985
    %5873 = vmatprep.subr.bf16.mxu0 0
    %5874 = vmatpush1.bf16.msra.mxu0 %v3994
    %5875 = vmatprep.subr.bf16.mxu0 0
    %5876 = vmatpush1.bf16.msra.mxu0 %v4003
    %5877 = vmatprep.subr.bf16.mxu0 0
    %5878 = vmatpush1.bf16.msra.mxu0 %v4012
    %5879 = vmatprep.subr.bf16.mxu0 0
    %5880 = vmatpush1.bf16.msra.mxu0 %v4021
    %5881 = vmatprep.subr.bf16.mxu0 0
    %5882 = vmatpush1.bf16.msra.mxu0 %v4030
    %5883 = vmatprep.subr.bf16.mxu0 0
    %5884 = vmatpush1.bf16.msra.mxu0 %v4039
    %5885 = vmatprep.subr.bf16.mxu0 0
    %5886 = vmatpush1.bf16.msra.mxu0 %v4048
    %5887 = vmatprep.subr.bf16.mxu0 0
    %5888 = vmatpush1.bf16.msra.mxu0 %v4057
    %5889 = vmatprep.subr.bf16.mxu0 0
    %5890 = vmatpush1.bf16.msra.mxu0 %v4066
    %5891 = vmatprep.subr.bf16.mxu0 0
    %5892 = vmatpush1.bf16.msra.mxu0 %v4075
    %5893 = vmatprep.subr.bf16.mxu0 0
    %5894 = vmatpush1.bf16.msra.mxu0 %v4084
    %5895 = vmatprep.subr.bf16.mxu0 0
    %5896 = vmatpush1.bf16.msra.mxu0 %v4093
    %5897 = vmatprep.subr.bf16.mxu0 0
    %5898 = vmatpush1.bf16.msra.mxu0 %v4102
    %5899 = vmatprep.mubr.bf16.mxu0 %v882
    %5900 = vmatmul.mubr.bf16.gmra.mrb[0].mxu0 %v881
    %v5901 = vpop.f32.mrb[0].mxu0
    %v5902 = vadd.f32 %v5862, %v5901
    %v5903 = vpop.f32.mrb[0].mxu0
    %v5904 = vpop.f32.mrb[0].mxu0
    %v5905 = vpop.f32.mrb[0].mxu0
    %5906 = vdwg.mxu0
    %5907 = vmatprep.subr.bf16.mxu0 0
    %5908 = vmatpush1.bf16.msra.mxu0 %v4111
    %5909 = vmatprep.subr.bf16.mxu0 0
    %5910 = vmatpush1.bf16.msra.mxu0 %v4120
    %5911 = vmatprep.subr.bf16.mxu0 0
    %5912 = vmatpush1.bf16.msra.mxu0 %v4129
    %5913 = vmatprep.subr.bf16.mxu0 0
    %5914 = vmatpush1.bf16.msra.mxu0 %v4138
    %5915 = vmatprep.subr.bf16.mxu0 0
    %5916 = vmatpush1.bf16.msra.mxu0 %v4147
    %5917 = vmatprep.subr.bf16.mxu0 0
    %5918 = vmatpush1.bf16.msra.mxu0 %v4156
    %5919 = vmatprep.subr.bf16.mxu0 0
    %5920 = vmatpush1.bf16.msra.mxu0 %v4165
    %5921 = vmatprep.subr.bf16.mxu0 0
    %5922 = vmatpush1.bf16.msra.mxu0 %v4174
    %5923 = vmatprep.subr.bf16.mxu0 0
    %5924 = vmatpush1.bf16.msra.mxu0 %v4183
    %5925 = vmatprep.subr.bf16.mxu0 0
    %5926 = vmatpush1.bf16.msra.mxu0 %v4192
    %5927 = vmatprep.subr.bf16.mxu0 0
    %5928 = vmatpush1.bf16.msra.mxu0 %v4201
    %5929 = vmatprep.subr.bf16.mxu0 0
    %5930 = vmatpush1.bf16.msra.mxu0 %v4210
    %5931 = vmatprep.subr.bf16.mxu0 0
    %5932 = vmatpush1.bf16.msra.mxu0 %v4219
    %5933 = vmatprep.subr.bf16.mxu0 0
    %5934 = vmatpush1.bf16.msra.mxu0 %v4228
    %5935 = vmatprep.subr.bf16.mxu0 0
    %5936 = vmatpush1.bf16.msra.mxu0 %v4237
    %5937 = vmatprep.subr.bf16.mxu0 0
    %5938 = vmatpush1.bf16.msra.mxu0 %v4246
    %5939 = vmatprep.mubr.bf16.mxu0 %v884
    %5940 = vmatmul.mubr.bf16.gmra.mrb[0].mxu0 %v883
    %v5941 = vpop.f32.mrb[0].mxu0
    %v5942 = vadd.f32 %v5902, %v5941
    %v5943 = vpop.f32.mrb[0].mxu0
    %v5944 = vpop.f32.mrb[0].mxu0
    %v5945 = vpop.f32.mrb[0].mxu0
    %5946 = vdwg.mxu0
    %5947 = vmatprep.subr.bf16.mxu0 0
    %5948 = vmatpush1.bf16.msra.mxu0 %v4255
    %5949 = vmatprep.subr.bf16.mxu0 0
    %5950 = vmatpush1.bf16.msra.mxu0 %v4264
    %5951 = vmatprep.subr.bf16.mxu0 0
    %5952 = vmatpush1.bf16.msra.mxu0 %v4273
    %5953 = vmatprep.subr.bf16.mxu0 0
    %5954 = vmatpush1.bf16.msra.mxu0 %v4282
    %5955 = vmatprep.subr.bf16.mxu0 0
    %5956 = vmatpush1.bf16.msra.mxu0 %v4291
    %5957 = vmatprep.subr.bf16.mxu0 0
    %5958 = vmatpush1.bf16.msra.mxu0 %v4300
    %5959 = vmatprep.subr.bf16.mxu0 0
    %5960 = vmatpush1.bf16.msra.mxu0 %v4309
    %5961 = vmatprep.subr.bf16.mxu0 0
    %5962 = vmatpush1.bf16.msra.mxu0 %v4318
    %5963 = vmatprep.subr.bf16.mxu0 0
    %5964 = vmatpush1.bf16.msra.mxu0 0
    %5965 = vmatprep.subr.bf16.mxu0 0
    %5966 = vmatpush1.bf16.msra.mxu0 0
    %5967 = vmatprep.subr.bf16.mxu0 0
    %5968 = vmatpush1.bf16.msra.mxu0 0
    %5969 = vmatprep.subr.bf16.mxu0 0
    %5970 = vmatpush1.bf16.msra.mxu0 0
    %5971 = vmatprep.subr.bf16.mxu0 0
    %5972 = vmatpush1.bf16.msra.mxu0 0
    %5973 = vmatprep.subr.bf16.mxu0 0
    %5974 = vmatpush1.bf16.msra.mxu0 0
    %5975 = vmatprep.subr.bf16.mxu0 0
    %5976 = vmatpush1.bf16.msra.mxu0 0
    %5977 = vmatprep.subr.bf16.mxu0 0
    %5978 = vmatpush1.bf16.msra.mxu0 0
    %5979 = vmatprep.mubr.bf16.mxu0 0
    %5980 = vmatmul.mubr.bf16.gmra.mrb[0].mxu0 %v885
    %v5981 = vpop.f32.mrb[0].mxu0
    %v5982 = vadd.f32 %v5942, %v5981
    %v5983 = vpop.f32.mrb[0].mxu0
    %v5984 = vpop.f32.mrb[0].mxu0
    %v5985 = vpop.f32.mrb[0].mxu0
    %5986 = vdwg.mxu0
    %v5987 = vmax.f32 %v5166, 0.0
    %v5988 = vmax.f32 %v5168, 0.0
    %v5989 = vmax.f32 %v5371, 0.0
    %v5990 = vmax.f32 %v5373, 0.0
    %v5991 = vmax.f32 %v5576, 0.0
    %v5992 = vmax.f32 %v5578, 0.0
    %v5993 = vmax.f32 %v5781, 0.0
    %v5994 = vmax.f32 %v5783, 0.0
    %v5995 = vmax.f32 %v5982, 0.0
    %v5996 = vpack.c.bf16 %v5987, %v5987
    %v5997 = vpack.c.bf16 %v5988, %v5988
    %v5998 = vpack.c.bf16 %v5989, %v5989
    %v5999 = vpack.c.bf16 %v5990, %v5990
    %v6000 = vpack.c.bf16 %v5991, %v5991
    %v6001 = vpack.c.bf16 %v5992, %v5992
    %v6002 = vpack.c.bf16 %v5993, %v5993
    %v6003 = vpack.c.bf16 %v5994, %v5994
    %v6004 = vpack.c.bf16 %v5995, %v5995
    %v6005 = vld [vmem:[#allocation9] sm:$0xff]
    %v6006 = vld [vmem:[#allocation9 + $0x8] sm:$0xff]
    %v6007 = vld [vmem:[#allocation9 + $0x10] sm:$0xf]
    %v6008 = vld [vmem:[#allocation9 + $0x14] sm:$0xff]
    %v6009 = vld [vmem:[#allocation9 + $0x1c] sm:$0xff]
    %v6010 = vld [vmem:[#allocation9 + $0x24] sm:$0xf]
    %v6011 = vld [vmem:[#allocation9 + $0x28] sm:$0xff]
    %v6012 = vld [vmem:[#allocation9 + $0x30] sm:$0xff]
    %v6013 = vld [vmem:[#allocation9 + $0x38] sm:$0xf]
    %v6014 = vld [vmem:[#allocation9 + $0x3c] sm:$0xff]
    %v6015 = vld [vmem:[#allocation9 + $0x44] sm:$0xff]
    %v6016 = vld [vmem:[#allocation9 + $0x4c] sm:$0xf]
    %v6017 = vld [vmem:[#allocation9 + $0x50] sm:$0xff]
    %v6018 = vld [vmem:[#allocation9 + $0x58] sm:$0xff]
    %v6019 = vld [vmem:[#allocation9 + $0x60] sm:$0xf]
    %v6020 = vld [vmem:[#allocation9 + $0x64] sm:$0xff]
    %v6021 = vld [vmem:[#allocation9 + $0x6c] sm:$0xff]
    %v6022 = vld [vmem:[#allocation9 + $0x74] sm:$0xf]
    %v6023 = vld [vmem:[#allocation9 + $0x78] sm:$0xff]
    %v6024 = vld [vmem:[#allocation9 + $0x80] sm:$0xff]
    %v6025 = vld [vmem:[#allocation9 + $0x88] sm:$0xf]
    %v6026 = vld [vmem:[#allocation9 + $0x8c] sm:$0xff]
    %v6027 = vld [vmem:[#allocation9 + $0x94] sm:$0xff]
    %v6028 = vld [vmem:[#allocation9 + $0x9c] sm:$0xf]
    %v6029 = vld [vmem:[#allocation9 + $0xa0] sm:$0xff]
    %v6030 = vld [vmem:[#allocation9 + $0xa8] sm:$0xff]
    %v6031 = vld [vmem:[#allocation9 + $0xb0] sm:$0xf]
    %v6032 = vld [vmem:[#allocation9 + $0xb4] sm:$0xff]
    %v6033 = vld [vmem:[#allocation9 + $0xbc] sm:$0xff]
    %v6034 = vld [vmem:[#allocation9 + $0xc4] sm:$0xf]
    %v6035 = vld [vmem:[#allocation9 + $0xc8] sm:$0xff]
    %v6036 = vld [vmem:[#allocation9 + $0xd0] sm:$0xff]
    %v6037 = vld [vmem:[#allocation9 + $0xd8] sm:$0xf]
    %v6038 = vld [vmem:[#allocation9 + $0xdc] sm:$0xff]
    %v6039 = vld [vmem:[#allocation9 + $0xe4] sm:$0xff]
    %v6040 = vld [vmem:[#allocation9 + $0xec] sm:$0xf]
    %v6041 = vld [vmem:[#allocation9 + $0xf0] sm:$0xff]
    %v6042 = vld [vmem:[#allocation9 + $0xf8] sm:$0xff]
    %v6043 = vld [vmem:[#allocation9 + $0x100] sm:$0xf]
    %v6044 = vld [vmem:[#allocation9 + $0x104] sm:$0xff]
    %v6045 = vld [vmem:[#allocation9 + $0x10c] sm:$0xff]
    %v6046 = vld [vmem:[#allocation9 + $0x114] sm:$0xf]
    %v6047 = vld [vmem:[#allocation9 + $0x118] sm:$0xff]
    %v6048 = vld [vmem:[#allocation9 + $0x120] sm:$0xff]
    %v6049 = vld [vmem:[#allocation9 + $0x128] sm:$0xf]
    %v6050 = vld [vmem:[#allocation9 + $0x12c] sm:$0xff]
    %v6051 = vld [vmem:[#allocation9 + $0x134] sm:$0xff]
    %v6052 = vld [vmem:[#allocation9 + $0x13c] sm:$0xf]
    %v6053 = vld [vmem:[#allocation9 + $0x140] sm:$0xff]
    %v6054 = vld [vmem:[#allocation9 + $0x148] sm:$0xff]
    %v6055 = vld [vmem:[#allocation9 + $0x150] sm:$0xf]
    %v6056 = vld [vmem:[#allocation9 + $0x154] sm:$0xff]
    %v6057 = vld [vmem:[#allocation9 + $0x15c] sm:$0xff]
    %v6058 = vld [vmem:[#allocation9 + $0x164] sm:$0xf]
    %v6059 = vld [vmem:[#allocation9 + $0x168] sm:$0xff]
    %v6060 = vld [vmem:[#allocation9 + $0x170] sm:$0xff]
    %v6061 = vld [vmem:[#allocation9 + $0x178] sm:$0xf]
    %v6062 = vld [vmem:[#allocation9 + $0x17c] sm:$0xff]
    %v6063 = vld [vmem:[#allocation9 + $0x184] sm:$0xff]
    %v6064 = vld [vmem:[#allocation9 + $0x18c] sm:$0xf]
    %v6065 = vld [vmem:[#allocation9 + $0x190] sm:$0xff]
    %v6066 = vld [vmem:[#allocation9 + $0x198] sm:$0xff]
    %v6067 = vld [vmem:[#allocation9 + $0x1a0] sm:$0xf]
    %v6068 = vld [vmem:[#allocation9 + $0x1a4] sm:$0xff]
    %v6069 = vld [vmem:[#allocation9 + $0x1ac] sm:$0xff]
    %v6070 = vld [vmem:[#allocation9 + $0x1b4] sm:$0xf]
    %v6071 = vld [vmem:[#allocation9 + $0x1b8] sm:$0xff]
    %v6072 = vld [vmem:[#allocation9 + $0x1c0] sm:$0xff]
    %v6073 = vld [vmem:[#allocation9 + $0x1c8] sm:$0xf]
    %v6074 = vld [vmem:[#allocation9 + $0x1cc] sm:$0xff]
    %v6075 = vld [vmem:[#allocation9 + $0x1d4] sm:$0xff]
    %v6076 = vld [vmem:[#allocation9 + $0x1dc] sm:$0xf]
    %v6077 = vld [vmem:[#allocation9 + $0x1e0] sm:$0xff]
    %v6078 = vld [vmem:[#allocation9 + $0x1e8] sm:$0xff]
    %v6079 = vld [vmem:[#allocation9 + $0x1f0] sm:$0xf]
    %v6080 = vld [vmem:[#allocation9 + $0x1f4] sm:$0xff]
    %v6081 = vld [vmem:[#allocation9 + $0x1fc] sm:$0xff]
    %v6082 = vld [vmem:[#allocation9 + $0x204] sm:$0xf]
    %v6083 = vld [vmem:[#allocation9 + $0x208] sm:$0xff]
    %v6084 = vld [vmem:[#allocation9 + $0x210] sm:$0xff]
    %v6085 = vld [vmem:[#allocation9 + $0x218] sm:$0xf]
    %v6086 = vld [vmem:[#allocation9 + $0x21c] sm:$0xff]
    %v6087 = vld [vmem:[#allocation9 + $0x224] sm:$0xff]
    %v6088 = vld [vmem:[#allocation9 + $0x22c] sm:$0xf]
    %v6089 = vld [vmem:[#allocation9 + $0x230] sm:$0xff]
    %v6090 = vld [vmem:[#allocation9 + $0x238] sm:$0xff]
    %v6091 = vld [vmem:[#allocation9 + $0x240] sm:$0xf]
    %v6092 = vld [vmem:[#allocation9 + $0x244] sm:$0xff]
    %v6093 = vld [vmem:[#allocation9 + $0x24c] sm:$0xff]
    %v6094 = vld [vmem:[#allocation9 + $0x254] sm:$0xf]
    %v6095 = vld [vmem:[#allocation9 + $0x258] sm:$0xff]
    %v6096 = vld [vmem:[#allocation9 + $0x260] sm:$0xff]
    %v6097 = vld [vmem:[#allocation9 + $0x268] sm:$0xf]
    %v6098 = vld [vmem:[#allocation9 + $0x26c] sm:$0xff]
    %v6099 = vld [vmem:[#allocation9 + $0x274] sm:$0xff]
    %v6100 = vld [vmem:[#allocation9 + $0x27c] sm:$0xf]
    %v6101 = vld [vmem:[#allocation9 + $0x280] sm:$0xff]
    %v6102 = vld [vmem:[#allocation9 + $0x288] sm:$0xff]
    %v6103 = vld [vmem:[#allocation9 + $0x290] sm:$0xf]
    %v6104 = vld [vmem:[#allocation9 + $0x294] sm:$0xff]
    %v6105 = vld [vmem:[#allocation9 + $0x29c] sm:$0xff]
    %v6106 = vld [vmem:[#allocation9 + $0x2a4] sm:$0xf]
    %v6107 = vld [vmem:[#allocation9 + $0x2a8] sm:$0xff]
    %v6108 = vld [vmem:[#allocation9 + $0x2b0] sm:$0xff]
    %v6109 = vld [vmem:[#allocation9 + $0x2b8] sm:$0xf]
    %v6110 = vld [vmem:[#allocation9 + $0x2bc] sm:$0xff]
    %v6111 = vld [vmem:[#allocation9 + $0x2c4] sm:$0xff]
    %v6112 = vld [vmem:[#allocation9 + $0x2cc] sm:$0xf]
    %v6113 = vld [vmem:[#allocation9 + $0x2d0] sm:$0xff]
    %v6114 = vld [vmem:[#allocation9 + $0x2d8] sm:$0xff]
    %v6115 = vld [vmem:[#allocation9 + $0x2e0] sm:$0xf]
    %v6116 = vld [vmem:[#allocation9 + $0x2e4] sm:$0xff]
    %v6117 = vld [vmem:[#allocation9 + $0x2ec] sm:$0xff]
    %v6118 = vld [vmem:[#allocation9 + $0x2f4] sm:$0xf]
    %v6119 = vld [vmem:[#allocation9 + $0x2f8] sm:$0xff]
    %v6120 = vld [vmem:[#allocation9 + $0x300] sm:$0xff]
    %v6121 = vld [vmem:[#allocation9 + $0x308] sm:$0xf]
    %v6122 = vld [vmem:[#allocation9 + $0x30c] sm:$0xff]
    %v6123 = vld [vmem:[#allocation9 + $0x314] sm:$0xff]
    %v6124 = vld [vmem:[#allocation9 + $0x31c] sm:$0xf]
    %v6125 = vld [vmem:[#allocation9 + $0x320] sm:$0xff]
    %v6126 = vld [vmem:[#allocation9 + $0x328] sm:$0xff]
    %v6127 = vld [vmem:[#allocation9 + $0x330] sm:$0xf]
    %v6128 = vld [vmem:[#allocation9 + $0x334] sm:$0xff]
    %v6129 = vld [vmem:[#allocation9 + $0x33c] sm:$0xff]
    %v6130 = vld [vmem:[#allocation9 + $0x344] sm:$0xf]
    %v6131 = vld [vmem:[#allocation9 + $0x348] sm:$0xff]
    %v6132 = vld [vmem:[#allocation9 + $0x350] sm:$0xff]
    %v6133 = vld [vmem:[#allocation9 + $0x358] sm:$0xf]
    %v6134 = vld [vmem:[#allocation9 + $0x35c] sm:$0xff]
    %v6135 = vld [vmem:[#allocation9 + $0x364] sm:$0xff]
    %v6136 = vld [vmem:[#allocation9 + $0x36c] sm:$0xf]
    %v6137 = vld [vmem:[#allocation9 + $0x370] sm:$0xff]
    %v6138 = vld [vmem:[#allocation9 + $0x378] sm:$0xff]
    %v6139 = vld [vmem:[#allocation9 + $0x380] sm:$0xf]
    %v6140 = vld [vmem:[#allocation9 + $0x384] sm:$0xff]
    %v6141 = vld [vmem:[#allocation9 + $0x38c] sm:$0xff]
    %v6142 = vld [vmem:[#allocation9 + $0x394] sm:$0xf]
    %v6143 = vld [vmem:[#allocation9 + $0x398] sm:$0xff]
    %v6144 = vld [vmem:[#allocation9 + $0x3a0] sm:$0xff]
    %v6145 = vld [vmem:[#allocation9 + $0x3a8] sm:$0xf]
    %v6146 = vld [vmem:[#allocation9 + $0x3ac] sm:$0xff]
    %v6147 = vld [vmem:[#allocation9 + $0x3b4] sm:$0xff]
    %v6148 = vld [vmem:[#allocation9 + $0x3bc] sm:$0xf]
    %v6149 = vld [vmem:[#allocation9 + $0x3c0] sm:$0xff]
    %v6150 = vld [vmem:[#allocation9 + $0x3c8] sm:$0xff]
    %v6151 = vld [vmem:[#allocation9 + $0x3d0] sm:$0xf]
    %v6152 = vld [vmem:[#allocation9 + $0x3d4] sm:$0xff]
    %v6153 = vld [vmem:[#allocation9 + $0x3dc] sm:$0xff]
    %v6154 = vld [vmem:[#allocation9 + $0x3e4] sm:$0xf]
    %v6155 = vld [vmem:[#allocation9 + $0x3e8] sm:$0xff]
    %v6156 = vld [vmem:[#allocation9 + $0x3f0] sm:$0xff]
    %v6157 = vld [vmem:[#allocation9 + $0x3f8] sm:$0xf]
    %v6158 = vld [vmem:[#allocation9 + $0x3fc] sm:$0xff]
    %v6159 = vld [vmem:[#allocation9 + $0x404] sm:$0xff]
    %v6160 = vld [vmem:[#allocation9 + $0x40c] sm:$0xf]
    %v6161 = vld [vmem:[#allocation9 + $0x410] sm:$0xff]
    %v6162 = vld [vmem:[#allocation9 + $0x418] sm:$0xff]
    %v6163 = vld [vmem:[#allocation9 + $0x420] sm:$0xf]
    %v6164 = vld [vmem:[#allocation9 + $0x424] sm:$0xff]
    %v6165 = vld [vmem:[#allocation9 + $0x42c] sm:$0xff]
    %v6166 = vld [vmem:[#allocation9 + $0x434] sm:$0xf]
    %v6167 = vld [vmem:[#allocation9 + $0x438] sm:$0xff]
    %v6168 = vld [vmem:[#allocation9 + $0x440] sm:$0xff]
    %v6169 = vld [vmem:[#allocation9 + $0x448] sm:$0xf]
    %v6170 = vld [vmem:[#allocation9 + $0x44c] sm:$0xff]
    %v6171 = vld [vmem:[#allocation9 + $0x454] sm:$0xff]
    %v6172 = vld [vmem:[#allocation9 + $0x45c] sm:$0xf]
    %v6173 = vld [vmem:[#allocation9 + $0x460] sm:$0xff]
    %v6174 = vld [vmem:[#allocation9 + $0x468] sm:$0xff]
    %v6175 = vld [vmem:[#allocation9 + $0x470] sm:$0xf]
    %v6176 = vld [vmem:[#allocation9 + $0x474] sm:$0xff]
    %v6177 = vld [vmem:[#allocation9 + $0x47c] sm:$0xff]
    %v6178 = vld [vmem:[#allocation9 + $0x484] sm:$0xf]
    %v6179 = vld [vmem:[#allocation9 + $0x488] sm:$0xff]
    %v6180 = vld [vmem:[#allocation9 + $0x490] sm:$0xff]
    %v6181 = vld [vmem:[#allocation9 + $0x498] sm:$0xf]
    %v6182 = vld [vmem:[#allocation9 + $0x49c] sm:$0xff]
    %v6183 = vld [vmem:[#allocation9 + $0x4a4] sm:$0xff]
    %v6184 = vld [vmem:[#allocation9 + $0x4ac] sm:$0xf]
    %v6185 = vld [vmem:[#allocation9 + $0x4b0] sm:$0xff]
    %v6186 = vld [vmem:[#allocation9 + $0x4b8] sm:$0xff]
    %v6187 = vld [vmem:[#allocation9 + $0x4c0] sm:$0xf]
    %v6188 = vld [vmem:[#allocation9 + $0x4c4] sm:$0xff]
    %v6189 = vld [vmem:[#allocation9 + $0x4cc] sm:$0xff]
    %v6190 = vld [vmem:[#allocation9 + $0x4d4] sm:$0xf]
    %v6191 = vld [vmem:[#allocation9 + $0x4d8] sm:$0xff]
    %v6192 = vld [vmem:[#allocation9 + $0x4e0] sm:$0xff]
    %v6193 = vld [vmem:[#allocation9 + $0x4e8] sm:$0xf]
    %v6194 = vld [vmem:[#allocation9 + $0x4ec] sm:$0xff]
    %v6195 = vld [vmem:[#allocation9 + $0x4f4] sm:$0xff]
    %v6196 = vld [vmem:[#allocation9 + $0x4fc] sm:$0xf]
    %v6197 = vld [vmem:[#allocation9 + $0x500] sm:$0xff]
    %v6198 = vld [vmem:[#allocation9 + $0x508] sm:$0xff]
    %v6199 = vld [vmem:[#allocation9 + $0x510] sm:$0xf]
    %v6200 = vld [vmem:[#allocation9 + $0x514] sm:$0xff]
    %v6201 = vld [vmem:[#allocation9 + $0x51c] sm:$0xff]
    %v6202 = vld [vmem:[#allocation9 + $0x524] sm:$0xf]
    %v6203 = vld [vmem:[#allocation9 + $0x528] sm:$0xff]
    %v6204 = vld [vmem:[#allocation9 + $0x530] sm:$0xff]
    %v6205 = vld [vmem:[#allocation9 + $0x538] sm:$0xf]
    %v6206 = vld [vmem:[#allocation9 + $0x53c] sm:$0xff]
    %v6207 = vld [vmem:[#allocation9 + $0x544] sm:$0xff]
    %v6208 = vld [vmem:[#allocation9 + $0x54c] sm:$0xf]
    %v6209 = vld [vmem:[#allocation9 + $0x550] sm:$0xff]
    %v6210 = vld [vmem:[#allocation9 + $0x558] sm:$0xff]
    %v6211 = vld [vmem:[#allocation9 + $0x560] sm:$0xf]
    %v6212 = vld [vmem:[#allocation9 + $0x564] sm:$0xff]
    %v6213 = vld [vmem:[#allocation9 + $0x56c] sm:$0xff]
    %v6214 = vld [vmem:[#allocation9 + $0x574] sm:$0xf]
    %v6215 = vld [vmem:[#allocation9 + $0x578] sm:$0xff]
    %v6216 = vld [vmem:[#allocation9 + $0x580] sm:$0xff]
    %v6217 = vld [vmem:[#allocation9 + $0x588] sm:$0xf]
    %v6218 = vld [vmem:[#allocation9 + $0x58c] sm:$0xff]
    %v6219 = vld [vmem:[#allocation9 + $0x594] sm:$0xff]
    %v6220 = vld [vmem:[#allocation9 + $0x59c] sm:$0xf]
    %v6221 = vld [vmem:[#allocation9 + $0x5a0] sm:$0xff]
    %v6222 = vld [vmem:[#allocation9 + $0x5a8] sm:$0xff]
    %v6223 = vld [vmem:[#allocation9 + $0x5b0] sm:$0xf]
    %v6224 = vld [vmem:[#allocation9 + $0x5b4] sm:$0xff]
    %v6225 = vld [vmem:[#allocation9 + $0x5bc] sm:$0xff]
    %v6226 = vld [vmem:[#allocation9 + $0x5c4] sm:$0xf]
    %v6227 = vld [vmem:[#allocation9 + $0x5c8] sm:$0xff]
    %v6228 = vld [vmem:[#allocation9 + $0x5d0] sm:$0xff]
    %v6229 = vld [vmem:[#allocation9 + $0x5d8] sm:$0xf]
    %v6230 = vld [vmem:[#allocation9 + $0x5dc] sm:$0xff]
    %v6231 = vld [vmem:[#allocation9 + $0x5e4] sm:$0xff]
    %v6232 = vld [vmem:[#allocation9 + $0x5ec] sm:$0xf]
    %v6233 = vld [vmem:[#allocation9 + $0x5f0] sm:$0xff]
    %v6234 = vld [vmem:[#allocation9 + $0x5f8] sm:$0xff]
    %v6235 = vld [vmem:[#allocation9 + $0x600] sm:$0xf]
    %v6236 = vld [vmem:[#allocation9 + $0x604] sm:$0xff]
    %v6237 = vld [vmem:[#allocation9 + $0x60c] sm:$0xff]
    %v6238 = vld [vmem:[#allocation9 + $0x614] sm:$0xf]
    %v6239 = vld [vmem:[#allocation9 + $0x618] sm:$0xff]
    %v6240 = vld [vmem:[#allocation9 + $0x620] sm:$0xff]
    %v6241 = vld [vmem:[#allocation9 + $0x628] sm:$0xf]
    %v6242 = vld [vmem:[#allocation9 + $0x62c] sm:$0xff]
    %v6243 = vld [vmem:[#allocation9 + $0x634] sm:$0xff]
    %v6244 = vld [vmem:[#allocation9 + $0x63c] sm:$0xf]
    %v6245 = vld [vmem:[#allocation9 + $0x640] sm:$0xff]
    %v6246 = vld [vmem:[#allocation9 + $0x648] sm:$0xff]
    %v6247 = vld [vmem:[#allocation9 + $0x650] sm:$0xf]
    %v6248 = vld [vmem:[#allocation9 + $0x654] sm:$0xff]
    %v6249 = vld [vmem:[#allocation9 + $0x65c] sm:$0xff]
    %v6250 = vld [vmem:[#allocation9 + $0x664] sm:$0xf]
    %v6251 = vld [vmem:[#allocation9 + $0x668] sm:$0xff]
    %v6252 = vld [vmem:[#allocation9 + $0x670] sm:$0xff]
    %v6253 = vld [vmem:[#allocation9 + $0x678] sm:$0xf]
    %v6254 = vld [vmem:[#allocation9 + $0x67c] sm:$0xff]
    %v6255 = vld [vmem:[#allocation9 + $0x684] sm:$0xff]
    %v6256 = vld [vmem:[#allocation9 + $0x68c] sm:$0xf]
    %v6257 = vld [vmem:[#allocation9 + $0x690] sm:$0xff]
    %v6258 = vld [vmem:[#allocation9 + $0x698] sm:$0xff]
    %v6259 = vld [vmem:[#allocation9 + $0x6a0] sm:$0xf]
    %v6260 = vld [vmem:[#allocation9 + $0x6a4] sm:$0xff]
    %v6261 = vld [vmem:[#allocation9 + $0x6ac] sm:$0xff]
    %v6262 = vld [vmem:[#allocation9 + $0x6b4] sm:$0xf]
    %v6263 = vld [vmem:[#allocation9 + $0x6b8] sm:$0xff]
    %v6264 = vld [vmem:[#allocation9 + $0x6c0] sm:$0xff]
    %v6265 = vld [vmem:[#allocation9 + $0x6c8] sm:$0xf]
    %v6266 = vld [vmem:[#allocation9 + $0x6cc] sm:$0xff]
    %v6267 = vld [vmem:[#allocation9 + $0x6d4] sm:$0xff]
    %v6268 = vld [vmem:[#allocation9 + $0x6dc] sm:$0xf]
    %v6269 = vld [vmem:[#allocation9 + $0x6e0] sm:$0xff]
    %v6270 = vld [vmem:[#allocation9 + $0x6e8] sm:$0xff]
    %v6271 = vld [vmem:[#allocation9 + $0x6f0] sm:$0xf]
    %v6272 = vld [vmem:[#allocation9 + $0x6f4] sm:$0xff]
    %v6273 = vld [vmem:[#allocation9 + $0x6fc] sm:$0xff]
    %v6274 = vld [vmem:[#allocation9 + $0x704] sm:$0xf]
    %v6275 = vld [vmem:[#allocation9 + $0x708] sm:$0xff]
    %v6276 = vld [vmem:[#allocation9 + $0x710] sm:$0xff]
    %v6277 = vld [vmem:[#allocation9 + $0x718] sm:$0xf]
    %v6278 = vld [vmem:[#allocation9 + $0x71c] sm:$0xff]
    %v6279 = vld [vmem:[#allocation9 + $0x724] sm:$0xff]
    %v6280 = vld [vmem:[#allocation9 + $0x72c] sm:$0xf]
    %v6281 = vld [vmem:[#allocation9 + $0x730] sm:$0xff]
    %v6282 = vld [vmem:[#allocation9 + $0x738] sm:$0xff]
    %v6283 = vld [vmem:[#allocation9 + $0x740] sm:$0xf]
    %v6284 = vld [vmem:[#allocation9 + $0x744] sm:$0xff]
    %v6285 = vld [vmem:[#allocation9 + $0x74c] sm:$0xff]
    %v6286 = vld [vmem:[#allocation9 + $0x754] sm:$0xf]
    %v6287 = vld [vmem:[#allocation9 + $0x758] sm:$0xff]
    %v6288 = vld [vmem:[#allocation9 + $0x760] sm:$0xff]
    %v6289 = vld [vmem:[#allocation9 + $0x768] sm:$0xf]
    %v6290 = vld [vmem:[#allocation9 + $0x76c] sm:$0xff]
    %v6291 = vld [vmem:[#allocation9 + $0x774] sm:$0xff]
    %v6292 = vld [vmem:[#allocation9 + $0x77c] sm:$0xf]
    %v6293 = vld [vmem:[#allocation9 + $0x780] sm:$0xff]
    %v6294 = vld [vmem:[#allocation9 + $0x788] sm:$0xff]
    %v6295 = vld [vmem:[#allocation9 + $0x790] sm:$0xf]
    %v6296 = vld [vmem:[#allocation9 + $0x794] sm:$0xff]
    %v6297 = vld [vmem:[#allocation9 + $0x79c] sm:$0xff]
    %v6298 = vld [vmem:[#allocation9 + $0x7a4] sm:$0xf]
    %v6299 = vld [vmem:[#allocation9 + $0x7a8] sm:$0xff]
    %v6300 = vld [vmem:[#allocation9 + $0x7b0] sm:$0xff]
    %v6301 = vld [vmem:[#allocation9 + $0x7b8] sm:$0xf]
    %v6302 = vld [vmem:[#allocation9 + $0x7bc] sm:$0xff]
    %v6303 = vld [vmem:[#allocation9 + $0x7c4] sm:$0xff]
    %v6304 = vld [vmem:[#allocation9 + $0x7cc] sm:$0xf]
    %v6305 = vld [vmem:[#allocation9 + $0x7d0] sm:$0xff]
    %v6306 = vld [vmem:[#allocation9 + $0x7d8] sm:$0xff]
    %v6307 = vld [vmem:[#allocation9 + $0x7e0] sm:$0xf]
    %v6308 = vld [vmem:[#allocation9 + $0x7e4] sm:$0xff]
    %v6309 = vld [vmem:[#allocation9 + $0x7ec] sm:$0xff]
    %v6310 = vld [vmem:[#allocation9 + $0x7f4] sm:$0xf]
    %v6311 = vld [vmem:[#allocation9 + $0x7f8] sm:$0xff]
    %v6312 = vld [vmem:[#allocation9 + $0x800] sm:$0xff]
    %v6313 = vld [vmem:[#allocation9 + $0x808] sm:$0xf]
    %v6314 = vld [vmem:[#allocation9 + $0x80c] sm:$0xff]
    %v6315 = vld [vmem:[#allocation9 + $0x814] sm:$0xff]
    %v6316 = vld [vmem:[#allocation9 + $0x81c] sm:$0xf]
    %v6317 = vld [vmem:[#allocation9 + $0x820] sm:$0xff]
    %v6318 = vld [vmem:[#allocation9 + $0x828] sm:$0xff]
    %v6319 = vld [vmem:[#allocation9 + $0x830] sm:$0xf]
    %v6320 = vld [vmem:[#allocation9 + $0x834] sm:$0xff]
    %v6321 = vld [vmem:[#allocation9 + $0x83c] sm:$0xff]
    %v6322 = vld [vmem:[#allocation9 + $0x844] sm:$0xf]
    %v6323 = vld [vmem:[#allocation9 + $0x848] sm:$0xff]
    %v6324 = vld [vmem:[#allocation9 + $0x850] sm:$0xff]
    %v6325 = vld [vmem:[#allocation9 + $0x858] sm:$0xf]
    %v6326 = vld [vmem:[#allocation9 + $0x85c] sm:$0xff]
    %v6327 = vld [vmem:[#allocation9 + $0x864] sm:$0xff]
    %v6328 = vld [vmem:[#allocation9 + $0x86c] sm:$0xf]
    %v6329 = vld [vmem:[#allocation9 + $0x870] sm:$0xff]
    %v6330 = vld [vmem:[#allocation9 + $0x878] sm:$0xff]
    %v6331 = vld [vmem:[#allocation9 + $0x880] sm:$0xf]
    %v6332 = vld [vmem:[#allocation9 + $0x884] sm:$0xff]
    %v6333 = vld [vmem:[#allocation9 + $0x88c] sm:$0xff]
    %v6334 = vld [vmem:[#allocation9 + $0x894] sm:$0xf]
    %v6335 = vld [vmem:[#allocation9 + $0x898] sm:$0xff]
    %v6336 = vld [vmem:[#allocation9 + $0x8a0] sm:$0xff]
    %v6337 = vld [vmem:[#allocation9 + $0x8a8] sm:$0xf]
    %v6338 = vld [vmem:[#allocation9 + $0x8ac] sm:$0xff]
    %v6339 = vld [vmem:[#allocation9 + $0x8b4] sm:$0xff]
    %v6340 = vld [vmem:[#allocation9 + $0x8bc] sm:$0xf]
    %v6341 = vld [vmem:[#allocation9 + $0x8c0] sm:$0xff]
    %v6342 = vld [vmem:[#allocation9 + $0x8c8] sm:$0xff]
    %v6343 = vld [vmem:[#allocation9 + $0x8d0] sm:$0xf]
    %v6344 = vld [vmem:[#allocation9 + $0x8d4] sm:$0xff]
    %v6345 = vld [vmem:[#allocation9 + $0x8dc] sm:$0xff]
    %v6346 = vld [vmem:[#allocation9 + $0x8e4] sm:$0xf]
    %v6347 = vld [vmem:[#allocation9 + $0x8e8] sm:$0xff]
    %v6348 = vld [vmem:[#allocation9 + $0x8f0] sm:$0xff]
    %v6349 = vld [vmem:[#allocation9 + $0x8f8] sm:$0xf]
    %v6350 = vld [vmem:[#allocation9 + $0x8fc] sm:$0xff]
    %v6351 = vld [vmem:[#allocation9 + $0x904] sm:$0xff]
    %v6352 = vld [vmem:[#allocation9 + $0x90c] sm:$0xf]
    %v6353 = vld [vmem:[#allocation9 + $0x910] sm:$0xff]
    %v6354 = vld [vmem:[#allocation9 + $0x918] sm:$0xff]
    %v6355 = vld [vmem:[#allocation9 + $0x920] sm:$0xf]
    %v6356 = vld [vmem:[#allocation9 + $0x924] sm:$0xff]
    %v6357 = vld [vmem:[#allocation9 + $0x92c] sm:$0xff]
    %v6358 = vld [vmem:[#allocation9 + $0x934] sm:$0xf]
    %v6359 = vld [vmem:[#allocation9 + $0x938] sm:$0xff]
    %v6360 = vld [vmem:[#allocation9 + $0x940] sm:$0xff]
    %v6361 = vld [vmem:[#allocation9 + $0x948] sm:$0xf]
    %v6362 = vld [vmem:[#allocation9 + $0x94c] sm:$0xff]
    %v6363 = vld [vmem:[#allocation9 + $0x954] sm:$0xff]
    %v6364 = vld [vmem:[#allocation9 + $0x95c] sm:$0xf]
    %v6365 = vld [vmem:[#allocation9 + $0x960] sm:$0xff]
    %v6366 = vld [vmem:[#allocation9 + $0x968] sm:$0xff]
    %v6367 = vld [vmem:[#allocation9 + $0x970] sm:$0xf]
    %v6368 = vld [vmem:[#allocation9 + $0x974] sm:$0xff]
    %v6369 = vld [vmem:[#allocation9 + $0x97c] sm:$0xff]
    %v6370 = vld [vmem:[#allocation9 + $0x984] sm:$0xf]
    %v6371 = vld [vmem:[#allocation9 + $0x988] sm:$0xff]
    %v6372 = vld [vmem:[#allocation9 + $0x990] sm:$0xff]
    %v6373 = vld [vmem:[#allocation9 + $0x998] sm:$0xf]
    %v6374 = vld [vmem:[#allocation9 + $0x99c] sm:$0xff]
    %v6375 = vld [vmem:[#allocation9 + $0x9a4] sm:$0xff]
    %v6376 = vld [vmem:[#allocation9 + $0x9ac] sm:$0xf]
    %v6377 = vld [vmem:[#allocation9 + $0x9b0] sm:$0xff]
    %v6378 = vld [vmem:[#allocation9 + $0x9b8] sm:$0xff]
    %v6379 = vld [vmem:[#allocation9 + $0x9c0] sm:$0xf]
    %v6380 = vld [vmem:[#allocation9 + $0x9c4] sm:$0xff]
    %v6381 = vld [vmem:[#allocation9 + $0x9cc] sm:$0xff]
    %v6382 = vld [vmem:[#allocation9 + $0x9d4] sm:$0xf]
    %v6383 = vld [vmem:[#allocation9 + $0x9d8] sm:$0xff]
    %v6384 = vld [vmem:[#allocation9 + $0x9e0] sm:$0xff]
    %v6385 = vld [vmem:[#allocation9 + $0x9e8] sm:$0xf]
    %v6386 = vld [vmem:[#allocation9 + $0x9ec] sm:$0xff]
    %v6387 = vld [vmem:[#allocation9 + $0x9f4] sm:$0xff]
    %v6388 = vld [vmem:[#allocation9 + $0x9fc] sm:$0xf]
    %v6389 = vld [vmem:[#allocation9 + $0xa00] sm:$0xff]
    %v6390 = vld [vmem:[#allocation9 + $0xa08] sm:$0xff]
    %v6391 = vld [vmem:[#allocation9 + $0xa10] sm:$0xf]
    %v6392 = vld [vmem:[#allocation9 + $0xa14] sm:$0xff]
    %v6393 = vld [vmem:[#allocation9 + $0xa1c] sm:$0xff]
    %v6394 = vld [vmem:[#allocation9 + $0xa24] sm:$0xf]
    %v6395 = vld [vmem:[#allocation9 + $0xa28] sm:$0xff]
    %v6396 = vld [vmem:[#allocation9 + $0xa30] sm:$0xff]
    %v6397 = vld [vmem:[#allocation9 + $0xa38] sm:$0xf]
    %v6398 = vld [vmem:[#allocation9 + $0xa3c] sm:$0xff]
    %v6399 = vld [vmem:[#allocation9 + $0xa44] sm:$0xff]
    %v6400 = vld [vmem:[#allocation9 + $0xa4c] sm:$0xf]
    %v6401 = vld [vmem:[#allocation9 + $0xa50] sm:$0xff]
    %v6402 = vld [vmem:[#allocation9 + $0xa58] sm:$0xff]
    %v6403 = vld [vmem:[#allocation9 + $0xa60] sm:$0xf]
    %v6404 = vld [vmem:[#allocation9 + $0xa64] sm:$0xff]
    %v6405 = vld [vmem:[#allocation9 + $0xa6c] sm:$0xff]
    %v6406 = vld [vmem:[#allocation9 + $0xa74] sm:$0xf]
    %v6407 = vld [vmem:[#allocation9 + $0xa78] sm:$0xff]
    %v6408 = vld [vmem:[#allocation9 + $0xa80] sm:$0xff]
    %v6409 = vld [vmem:[#allocation9 + $0xa88] sm:$0xf]
    %v6410 = vld [vmem:[#allocation9 + $0xa8c] sm:$0xff]
    %v6411 = vld [vmem:[#allocation9 + $0xa94] sm:$0xff]
    %v6412 = vld [vmem:[#allocation9 + $0xa9c] sm:$0xf]
    %v6413 = vld [vmem:[#allocation9 + $0xaa0] sm:$0xff]
    %v6414 = vld [vmem:[#allocation9 + $0xaa8] sm:$0xff]
    %v6415 = vld [vmem:[#allocation9 + $0xab0] sm:$0xf]
    %v6416 = vld [vmem:[#allocation9 + $0xab4] sm:$0xff]
    %v6417 = vld [vmem:[#allocation9 + $0xabc] sm:$0xff]
    %v6418 = vld [vmem:[#allocation9 + $0xac4] sm:$0xf]
    %v6419 = vld [vmem:[#allocation9 + $0xac8] sm:$0xff]
    %v6420 = vld [vmem:[#allocation9 + $0xad0] sm:$0xff]
    %v6421 = vld [vmem:[#allocation9 + $0xad8] sm:$0xf]
    %v6422 = vld [vmem:[#allocation9 + $0xadc] sm:$0xff]
    %v6423 = vld [vmem:[#allocation9 + $0xae4] sm:$0xff]
    %v6424 = vld [vmem:[#allocation9 + $0xaec] sm:$0xf]
    %v6425 = vld [vmem:[#allocation9 + $0xaf0] sm:$0xff]
    %v6426 = vld [vmem:[#allocation9 + $0xaf8] sm:$0xff]
    %v6427 = vld [vmem:[#allocation9 + $0xb00] sm:$0xf]
    %v6428 = vld [vmem:[#allocation9 + $0xb04] sm:$0xff]
    %v6429 = vld [vmem:[#allocation9 + $0xb0c] sm:$0xff]
    %v6430 = vld [vmem:[#allocation9 + $0xb14] sm:$0xf]
    %v6431 = vld [vmem:[#allocation9 + $0xb18] sm:$0xff]
    %v6432 = vld [vmem:[#allocation9 + $0xb20] sm:$0xff]
    %v6433 = vld [vmem:[#allocation9 + $0xb28] sm:$0xf]
    %v6434 = vld [vmem:[#allocation9 + $0xb2c] sm:$0xff]
    %v6435 = vld [vmem:[#allocation9 + $0xb34] sm:$0xff]
    %v6436 = vld [vmem:[#allocation9 + $0xb3c] sm:$0xf]
    %v6437 = vld [vmem:[#allocation10] sm:$0x1f]
    %v6439 = vlaneseq
    %v6440 = vshrl.u32 %v6439, 7
    %v6441 = vsub.s32 0, %v6440
    %v6442 = vrot.slane %v6437, %v6441
    %v6443 = vlaneseq
    %v6444 = vshrl.u32 %v6443, 7
    %v6445 = vsub.s32 1, %v6444
    %v6446 = vrot.slane %v6437, %v6445
    %v6447 = vlaneseq
    %v6448 = vshrl.u32 %v6447, 7
    %v6449 = vsub.s32 2, %v6448
    %v6450 = vrot.slane %v6437, %v6449
    %v6451 = vlaneseq
    %v6452 = vshrl.u32 %v6451, 7
    %v6453 = vsub.s32 3, %v6452
    %v6454 = vrot.slane %v6437, %v6453
    %v6455 = vlaneseq
    %v6456 = vshrl.u32 %v6455, 7
    %v6457 = vsub.s32 4, %v6456
    %v6458 = vrot.slane %v6437, %v6457
    %v6896 = vunpack.c.l.b16 %v6005
    %v6897 = vunpack.c.h.b16 %v6005
    %v6898 = vunpack.c.l.b16 %v6006
    %v6899 = vunpack.c.h.b16 %v6006
    %v6900 = vunpack.c.l.b16 %v6007
    %v6901 = vunpack.c.l.b16 %v6008
    %v6902 = vunpack.c.h.b16 %v6008
    %v6903 = vunpack.c.l.b16 %v6009
    %v6904 = vunpack.c.h.b16 %v6009
    %v6905 = vunpack.c.l.b16 %v6010
    %v6906 = vunpack.c.l.b16 %v6011
    %v6907 = vunpack.c.h.b16 %v6011
    %v6908 = vunpack.c.l.b16 %v6012
    %v6909 = vunpack.c.h.b16 %v6012
    %v6910 = vunpack.c.l.b16 %v6013
    %v6911 = vunpack.c.l.b16 %v6014
    %v6912 = vunpack.c.h.b16 %v6014
    %v6913 = vunpack.c.l.b16 %v6015
    %v6914 = vunpack.c.h.b16 %v6015
    %v6915 = vunpack.c.l.b16 %v6016
    %v6916 = vunpack.c.l.b16 %v6017
    %v6917 = vunpack.c.h.b16 %v6017
    %v6918 = vunpack.c.l.b16 %v6018
    %v6919 = vunpack.c.h.b16 %v6018
    %v6920 = vunpack.c.l.b16 %v6019
    %v6921 = vunpack.c.l.b16 %v6020
    %v6922 = vunpack.c.h.b16 %v6020
    %v6923 = vunpack.c.l.b16 %v6021
    %v6924 = vunpack.c.h.b16 %v6021
    %v6925 = vunpack.c.l.b16 %v6022
    %v6926 = vunpack.c.l.b16 %v6023
    %v6927 = vunpack.c.h.b16 %v6023
    %v6928 = vunpack.c.l.b16 %v6024
    %v6929 = vunpack.c.h.b16 %v6024
    %v6930 = vunpack.c.l.b16 %v6025
    %v6931 = vunpack.c.l.b16 %v6026
    %v6932 = vunpack.c.h.b16 %v6026
    %v6933 = vunpack.c.l.b16 %v6027
    %v6934 = vunpack.c.h.b16 %v6027
    %v6935 = vunpack.c.l.b16 %v6028
    %v6936 = vunpack.c.l.b16 %v6029
    %v6937 = vunpack.c.h.b16 %v6029
    %v6938 = vunpack.c.l.b16 %v6030
    %v6939 = vunpack.c.h.b16 %v6030
    %v6940 = vunpack.c.l.b16 %v6031
    %v6941 = vunpack.c.l.b16 %v6032
    %v6942 = vunpack.c.h.b16 %v6032
    %v6943 = vunpack.c.l.b16 %v6033
    %v6944 = vunpack.c.h.b16 %v6033
    %v6945 = vunpack.c.l.b16 %v6034
    %v6946 = vunpack.c.l.b16 %v6035
    %v6947 = vunpack.c.h.b16 %v6035
    %v6948 = vunpack.c.l.b16 %v6036
    %v6949 = vunpack.c.h.b16 %v6036
    %v6950 = vunpack.c.l.b16 %v6037
    %v6951 = vunpack.c.l.b16 %v6038
    %v6952 = vunpack.c.h.b16 %v6038
    %v6953 = vunpack.c.l.b16 %v6039
    %v6954 = vunpack.c.h.b16 %v6039
    %v6955 = vunpack.c.l.b16 %v6040
    %v6956 = vunpack.c.l.b16 %v6041
    %v6957 = vunpack.c.h.b16 %v6041
    %v6958 = vunpack.c.l.b16 %v6042
    %v6959 = vunpack.c.h.b16 %v6042
    %v6960 = vunpack.c.l.b16 %v6043
    %v6961 = vunpack.c.l.b16 %v6044
    %v6962 = vunpack.c.h.b16 %v6044
    %v6963 = vunpack.c.l.b16 %v6045
    %v6964 = vunpack.c.h.b16 %v6045
    %v6965 = vunpack.c.l.b16 %v6046
    %v6966 = vunpack.c.l.b16 %v6047
    %v6967 = vunpack.c.h.b16 %v6047
    %v6968 = vunpack.c.l.b16 %v6048
    %v6969 = vunpack.c.h.b16 %v6048
    %v6970 = vunpack.c.l.b16 %v6049
    %v6971 = vunpack.c.l.b16 %v6050
    %v6972 = vunpack.c.h.b16 %v6050
    %v6973 = vunpack.c.l.b16 %v6051
    %v6974 = vunpack.c.h.b16 %v6051
    %v6975 = vunpack.c.l.b16 %v6052
    %v6976 = vunpack.c.l.b16 %v6053
    %v6977 = vunpack.c.h.b16 %v6053
    %v6978 = vunpack.c.l.b16 %v6054
    %v6979 = vunpack.c.h.b16 %v6054
    %v6980 = vunpack.c.l.b16 %v6055
    %v6981 = vunpack.c.l.b16 %v6056
    %v6982 = vunpack.c.h.b16 %v6056
    %v6983 = vunpack.c.l.b16 %v6057
    %v6984 = vunpack.c.h.b16 %v6057
    %v6985 = vunpack.c.l.b16 %v6058
    %v6986 = vunpack.c.l.b16 %v6059
    %v6987 = vunpack.c.h.b16 %v6059
    %v6988 = vunpack.c.l.b16 %v6060
    %v6989 = vunpack.c.h.b16 %v6060
    %v6990 = vunpack.c.l.b16 %v6061
    %v6991 = vunpack.c.l.b16 %v6062
    %v6992 = vunpack.c.h.b16 %v6062
    %v6993 = vunpack.c.l.b16 %v6063
    %v6994 = vunpack.c.h.b16 %v6063
    %v6995 = vunpack.c.l.b16 %v6064
    %v6996 = vunpack.c.l.b16 %v6065
    %v6997 = vunpack.c.h.b16 %v6065
    %v6998 = vunpack.c.l.b16 %v6066
    %v6999 = vunpack.c.h.b16 %v6066
    %v7000 = vunpack.c.l.b16 %v6067
    %v7001 = vunpack.c.l.b16 %v6068
    %v7002 = vunpack.c.h.b16 %v6068
    %v7003 = vunpack.c.l.b16 %v6069
    %v7004 = vunpack.c.h.b16 %v6069
    %v7005 = vunpack.c.l.b16 %v6070
    %v7006 = vunpack.c.l.b16 %v6071
    %v7007 = vunpack.c.h.b16 %v6071
    %v7008 = vunpack.c.l.b16 %v6072
    %v7009 = vunpack.c.h.b16 %v6072
    %v7010 = vunpack.c.l.b16 %v6073
    %v7011 = vunpack.c.l.b16 %v6074
    %v7012 = vunpack.c.h.b16 %v6074
    %v7013 = vunpack.c.l.b16 %v6075
    %v7014 = vunpack.c.h.b16 %v6075
    %v7015 = vunpack.c.l.b16 %v6076
    %v7016 = vunpack.c.l.b16 %v6077
    %v7017 = vunpack.c.h.b16 %v6077
    %v7018 = vunpack.c.l.b16 %v6078
    %v7019 = vunpack.c.h.b16 %v6078
    %v7020 = vunpack.c.l.b16 %v6079
    %v7021 = vunpack.c.l.b16 %v6080
    %v7022 = vunpack.c.h.b16 %v6080
    %v7023 = vunpack.c.l.b16 %v6081
    %v7024 = vunpack.c.h.b16 %v6081
    %v7025 = vunpack.c.l.b16 %v6082
    %v7026 = vunpack.c.l.b16 %v6083
    %v7027 = vunpack.c.h.b16 %v6083
    %v7028 = vunpack.c.l.b16 %v6084
    %v7029 = vunpack.c.h.b16 %v6084
    %v7030 = vunpack.c.l.b16 %v6085
    %v7031 = vunpack.c.l.b16 %v6086
    %v7032 = vunpack.c.h.b16 %v6086
    %v7033 = vunpack.c.l.b16 %v6087
    %v7034 = vunpack.c.h.b16 %v6087
    %v7035 = vunpack.c.l.b16 %v6088
    %v7036 = vunpack.c.l.b16 %v6089
    %v7037 = vunpack.c.h.b16 %v6089
    %v7038 = vunpack.c.l.b16 %v6090
    %v7039 = vunpack.c.h.b16 %v6090
    %v7040 = vunpack.c.l.b16 %v6091
    %v7041 = vunpack.c.l.b16 %v6092
    %v7042 = vunpack.c.h.b16 %v6092
    %v7043 = vunpack.c.l.b16 %v6093
    %v7044 = vunpack.c.h.b16 %v6093
    %v7045 = vunpack.c.l.b16 %v6094
    %v7046 = vunpack.c.l.b16 %v6095
    %v7047 = vunpack.c.h.b16 %v6095
    %v7048 = vunpack.c.l.b16 %v6096
    %v7049 = vunpack.c.h.b16 %v6096
    %v7050 = vunpack.c.l.b16 %v6097
    %v7051 = vunpack.c.l.b16 %v6098
    %v7052 = vunpack.c.h.b16 %v6098
    %v7053 = vunpack.c.l.b16 %v6099
    %v7054 = vunpack.c.h.b16 %v6099
    %v7055 = vunpack.c.l.b16 %v6100
    %v7056 = vunpack.c.l.b16 %v6101
    %v7057 = vunpack.c.h.b16 %v6101
    %v7058 = vunpack.c.l.b16 %v6102
    %v7059 = vunpack.c.h.b16 %v6102
    %v7060 = vunpack.c.l.b16 %v6103
    %v7061 = vunpack.c.l.b16 %v6104
    %v7062 = vunpack.c.h.b16 %v6104
    %v7063 = vunpack.c.l.b16 %v6105
    %v7064 = vunpack.c.h.b16 %v6105
    %v7065 = vunpack.c.l.b16 %v6106
    %v7066 = vunpack.c.l.b16 %v6107
    %v7067 = vunpack.c.h.b16 %v6107
    %v7068 = vunpack.c.l.b16 %v6108
    %v7069 = vunpack.c.h.b16 %v6108
    %v7070 = vunpack.c.l.b16 %v6109
    %v7071 = vunpack.c.l.b16 %v6110
    %v7072 = vunpack.c.h.b16 %v6110
    %v7073 = vunpack.c.l.b16 %v6111
    %v7074 = vunpack.c.h.b16 %v6111
    %v7075 = vunpack.c.l.b16 %v6112
    %v7076 = vunpack.c.l.b16 %v6113
    %v7077 = vunpack.c.h.b16 %v6113
    %v7078 = vunpack.c.l.b16 %v6114
    %v7079 = vunpack.c.h.b16 %v6114
    %v7080 = vunpack.c.l.b16 %v6115
    %v7081 = vunpack.c.l.b16 %v6116
    %v7082 = vunpack.c.h.b16 %v6116
    %v7083 = vunpack.c.l.b16 %v6117
    %v7084 = vunpack.c.h.b16 %v6117
    %v7085 = vunpack.c.l.b16 %v6118
    %v7086 = vunpack.c.l.b16 %v6119
    %v7087 = vunpack.c.h.b16 %v6119
    %v7088 = vunpack.c.l.b16 %v6120
    %v7089 = vunpack.c.h.b16 %v6120
    %v7090 = vunpack.c.l.b16 %v6121
    %v7091 = vunpack.c.l.b16 %v6122
    %v7092 = vunpack.c.h.b16 %v6122
    %v7093 = vunpack.c.l.b16 %v6123
    %v7094 = vunpack.c.h.b16 %v6123
    %v7095 = vunpack.c.l.b16 %v6124
    %v7096 = vunpack.c.l.b16 %v6125
    %v7097 = vunpack.c.h.b16 %v6125
    %v7098 = vunpack.c.l.b16 %v6126
    %v7099 = vunpack.c.h.b16 %v6126
    %v7100 = vunpack.c.l.b16 %v6127
    %v7101 = vunpack.c.l.b16 %v6128
    %v7102 = vunpack.c.h.b16 %v6128
    %v7103 = vunpack.c.l.b16 %v6129
    %v7104 = vunpack.c.h.b16 %v6129
    %v7105 = vunpack.c.l.b16 %v6130
    %v7106 = vunpack.c.l.b16 %v6131
    %v7107 = vunpack.c.h.b16 %v6131
    %v7108 = vunpack.c.l.b16 %v6132
    %v7109 = vunpack.c.h.b16 %v6132
    %v7110 = vunpack.c.l.b16 %v6133
    %v7111 = vunpack.c.l.b16 %v6134
    %v7112 = vunpack.c.h.b16 %v6134
    %v7113 = vunpack.c.l.b16 %v6135
    %v7114 = vunpack.c.h.b16 %v6135
    %v7115 = vunpack.c.l.b16 %v6136
    %v7116 = vunpack.c.l.b16 %v6137
    %v7117 = vunpack.c.h.b16 %v6137
    %v7118 = vunpack.c.l.b16 %v6138
    %v7119 = vunpack.c.h.b16 %v6138
    %v7120 = vunpack.c.l.b16 %v6139
    %v7121 = vunpack.c.l.b16 %v6140
    %v7122 = vunpack.c.h.b16 %v6140
    %v7123 = vunpack.c.l.b16 %v6141
    %v7124 = vunpack.c.h.b16 %v6141
    %v7125 = vunpack.c.l.b16 %v6142
    %v7126 = vunpack.c.l.b16 %v6143
    %v7127 = vunpack.c.h.b16 %v6143
    %v7128 = vunpack.c.l.b16 %v6144
    %v7129 = vunpack.c.h.b16 %v6144
    %v7130 = vunpack.c.l.b16 %v6145
    %v7131 = vunpack.c.l.b16 %v6146
    %v7132 = vunpack.c.h.b16 %v6146
    %v7133 = vunpack.c.l.b16 %v6147
    %v7134 = vunpack.c.h.b16 %v6147
    %v7135 = vunpack.c.l.b16 %v6148
    %v7136 = vunpack.c.l.b16 %v6149
    %v7137 = vunpack.c.h.b16 %v6149
    %v7138 = vunpack.c.l.b16 %v6150
    %v7139 = vunpack.c.h.b16 %v6150
    %v7140 = vunpack.c.l.b16 %v6151
    %v7141 = vunpack.c.l.b16 %v6152
    %v7142 = vunpack.c.h.b16 %v6152
    %v7143 = vunpack.c.l.b16 %v6153
    %v7144 = vunpack.c.h.b16 %v6153
    %v7145 = vunpack.c.l.b16 %v6154
    %v7146 = vunpack.c.l.b16 %v6155
    %v7147 = vunpack.c.h.b16 %v6155
    %v7148 = vunpack.c.l.b16 %v6156
    %v7149 = vunpack.c.h.b16 %v6156
    %v7150 = vunpack.c.l.b16 %v6157
    %v7151 = vunpack.c.l.b16 %v6158
    %v7152 = vunpack.c.h.b16 %v6158
    %v7153 = vunpack.c.l.b16 %v6159
    %v7154 = vunpack.c.h.b16 %v6159
    %v7155 = vunpack.c.l.b16 %v6160
    %v7156 = vunpack.c.l.b16 %v6161
    %v7157 = vunpack.c.h.b16 %v6161
    %v7158 = vunpack.c.l.b16 %v6162
    %v7159 = vunpack.c.h.b16 %v6162
    %v7160 = vunpack.c.l.b16 %v6163
    %v7161 = vunpack.c.l.b16 %v6164
    %v7162 = vunpack.c.h.b16 %v6164
    %v7163 = vunpack.c.l.b16 %v6165
    %v7164 = vunpack.c.h.b16 %v6165
    %v7165 = vunpack.c.l.b16 %v6166
    %v7166 = vunpack.c.l.b16 %v6167
    %v7167 = vunpack.c.h.b16 %v6167
    %v7168 = vunpack.c.l.b16 %v6168
    %v7169 = vunpack.c.h.b16 %v6168
    %v7170 = vunpack.c.l.b16 %v6169
    %v7171 = vunpack.c.l.b16 %v6170
    %v7172 = vunpack.c.h.b16 %v6170
    %v7173 = vunpack.c.l.b16 %v6171
    %v7174 = vunpack.c.h.b16 %v6171
    %v7175 = vunpack.c.l.b16 %v6172
    %v7176 = vunpack.c.l.b16 %v6173
    %v7177 = vunpack.c.h.b16 %v6173
    %v7178 = vunpack.c.l.b16 %v6174
    %v7179 = vunpack.c.h.b16 %v6174
    %v7180 = vunpack.c.l.b16 %v6175
    %v7181 = vunpack.c.l.b16 %v6176
    %v7182 = vunpack.c.h.b16 %v6176
    %v7183 = vunpack.c.l.b16 %v6177
    %v7184 = vunpack.c.h.b16 %v6177
    %v7185 = vunpack.c.l.b16 %v6178
    %v7186 = vunpack.c.l.b16 %v6179
    %v7187 = vunpack.c.h.b16 %v6179
    %v7188 = vunpack.c.l.b16 %v6180
    %v7189 = vunpack.c.h.b16 %v6180
    %v7190 = vunpack.c.l.b16 %v6181
    %v7191 = vunpack.c.l.b16 %v6182
    %v7192 = vunpack.c.h.b16 %v6182
    %v7193 = vunpack.c.l.b16 %v6183
    %v7194 = vunpack.c.h.b16 %v6183
    %v7195 = vunpack.c.l.b16 %v6184
    %v7196 = vunpack.c.l.b16 %v6185
    %v7197 = vunpack.c.h.b16 %v6185
    %v7198 = vunpack.c.l.b16 %v6186
    %v7199 = vunpack.c.h.b16 %v6186
    %v7200 = vunpack.c.l.b16 %v6187
    %v7201 = vunpack.c.l.b16 %v6188
    %v7202 = vunpack.c.h.b16 %v6188
    %v7203 = vunpack.c.l.b16 %v6189
    %v7204 = vunpack.c.h.b16 %v6189
    %v7205 = vunpack.c.l.b16 %v6190
    %v7206 = vunpack.c.l.b16 %v6191
    %v7207 = vunpack.c.h.b16 %v6191
    %v7208 = vunpack.c.l.b16 %v6192
    %v7209 = vunpack.c.h.b16 %v6192
    %v7210 = vunpack.c.l.b16 %v6193
    %v7211 = vunpack.c.l.b16 %v6194
    %v7212 = vunpack.c.h.b16 %v6194
    %v7213 = vunpack.c.l.b16 %v6195
    %v7214 = vunpack.c.h.b16 %v6195
    %v7215 = vunpack.c.l.b16 %v6196
    %v7216 = vunpack.c.l.b16 %v6197
    %v7217 = vunpack.c.h.b16 %v6197
    %v7218 = vunpack.c.l.b16 %v6198
    %v7219 = vunpack.c.h.b16 %v6198
    %v7220 = vunpack.c.l.b16 %v6199
    %v7221 = vunpack.c.l.b16 %v6200
    %v7222 = vunpack.c.h.b16 %v6200
    %v7223 = vunpack.c.l.b16 %v6201
    %v7224 = vunpack.c.h.b16 %v6201
    %v7225 = vunpack.c.l.b16 %v6202
    %v7226 = vunpack.c.l.b16 %v6203
    %v7227 = vunpack.c.h.b16 %v6203
    %v7228 = vunpack.c.l.b16 %v6204
    %v7229 = vunpack.c.h.b16 %v6204
    %v7230 = vunpack.c.l.b16 %v6205
    %v7231 = vunpack.c.l.b16 %v6206
    %v7232 = vunpack.c.h.b16 %v6206
    %v7233 = vunpack.c.l.b16 %v6207
    %v7234 = vunpack.c.h.b16 %v6207
    %v7235 = vunpack.c.l.b16 %v6208
    %v7236 = vunpack.c.l.b16 %v6209
    %v7237 = vunpack.c.h.b16 %v6209
    %v7238 = vunpack.c.l.b16 %v6210
    %v7239 = vunpack.c.h.b16 %v6210
    %v7240 = vunpack.c.l.b16 %v6211
    %v7241 = vunpack.c.l.b16 %v6212
    %v7242 = vunpack.c.h.b16 %v6212
    %v7243 = vunpack.c.l.b16 %v6213
    %v7244 = vunpack.c.h.b16 %v6213
    %v7245 = vunpack.c.l.b16 %v6214
    %v7246 = vunpack.c.l.b16 %v6215
    %v7247 = vunpack.c.h.b16 %v6215
    %v7248 = vunpack.c.l.b16 %v6216
    %v7249 = vunpack.c.h.b16 %v6216
    %v7250 = vunpack.c.l.b16 %v6217
    %v7251 = vunpack.c.l.b16 %v6218
    %v7252 = vunpack.c.h.b16 %v6218
    %v7253 = vunpack.c.l.b16 %v6219
    %v7254 = vunpack.c.h.b16 %v6219
    %v7255 = vunpack.c.l.b16 %v6220
    %v7256 = vunpack.c.l.b16 %v6221
    %v7257 = vunpack.c.h.b16 %v6221
    %v7258 = vunpack.c.l.b16 %v6222
    %v7259 = vunpack.c.h.b16 %v6222
    %v7260 = vunpack.c.l.b16 %v6223
    %v7261 = vunpack.c.l.b16 %v6224
    %v7262 = vunpack.c.h.b16 %v6224
    %v7263 = vunpack.c.l.b16 %v6225
    %v7264 = vunpack.c.h.b16 %v6225
    %v7265 = vunpack.c.l.b16 %v6226
    %v7266 = vunpack.c.l.b16 %v6227
    %v7267 = vunpack.c.h.b16 %v6227
    %v7268 = vunpack.c.l.b16 %v6228
    %v7269 = vunpack.c.h.b16 %v6228
    %v7270 = vunpack.c.l.b16 %v6229
    %v7271 = vunpack.c.l.b16 %v6230
    %v7272 = vunpack.c.h.b16 %v6230
    %v7273 = vunpack.c.l.b16 %v6231
    %v7274 = vunpack.c.h.b16 %v6231
    %v7275 = vunpack.c.l.b16 %v6232
    %v7276 = vunpack.c.l.b16 %v6233
    %v7277 = vunpack.c.h.b16 %v6233
    %v7278 = vunpack.c.l.b16 %v6234
    %v7279 = vunpack.c.h.b16 %v6234
    %v7280 = vunpack.c.l.b16 %v6235
    %v7281 = vunpack.c.l.b16 %v6236
    %v7282 = vunpack.c.h.b16 %v6236
    %v7283 = vunpack.c.l.b16 %v6237
    %v7284 = vunpack.c.h.b16 %v6237
    %v7285 = vunpack.c.l.b16 %v6238
    %v7286 = vunpack.c.l.b16 %v6239
    %v7287 = vunpack.c.h.b16 %v6239
    %v7288 = vunpack.c.l.b16 %v6240
    %v7289 = vunpack.c.h.b16 %v6240
    %v7290 = vunpack.c.l.b16 %v6241
    %v7291 = vunpack.c.l.b16 %v6242
    %v7292 = vunpack.c.h.b16 %v6242
    %v7293 = vunpack.c.l.b16 %v6243
    %v7294 = vunpack.c.h.b16 %v6243
    %v7295 = vunpack.c.l.b16 %v6244
    %v7296 = vunpack.c.l.b16 %v6245
    %v7297 = vunpack.c.h.b16 %v6245
    %v7298 = vunpack.c.l.b16 %v6246
    %v7299 = vunpack.c.h.b16 %v6246
    %v7300 = vunpack.c.l.b16 %v6247
    %v7301 = vunpack.c.l.b16 %v6248
    %v7302 = vunpack.c.h.b16 %v6248
    %v7303 = vunpack.c.l.b16 %v6249
    %v7304 = vunpack.c.h.b16 %v6249
    %v7305 = vunpack.c.l.b16 %v6250
    %v7306 = vunpack.c.l.b16 %v6251
    %v7307 = vunpack.c.h.b16 %v6251
    %v7308 = vunpack.c.l.b16 %v6252
    %v7309 = vunpack.c.h.b16 %v6252
    %v7310 = vunpack.c.l.b16 %v6253
    %v7311 = vunpack.c.l.b16 %v6254
    %v7312 = vunpack.c.h.b16 %v6254
    %v7313 = vunpack.c.l.b16 %v6255
    %v7314 = vunpack.c.h.b16 %v6255
    %v7315 = vunpack.c.l.b16 %v6256
    %v7316 = vunpack.c.l.b16 %v6257
    %v7317 = vunpack.c.h.b16 %v6257
    %v7318 = vunpack.c.l.b16 %v6258
    %v7319 = vunpack.c.h.b16 %v6258
    %v7320 = vunpack.c.l.b16 %v6259
    %v7321 = vunpack.c.l.b16 %v6260
    %v7322 = vunpack.c.h.b16 %v6260
    %v7323 = vunpack.c.l.b16 %v6261
    %v7324 = vunpack.c.h.b16 %v6261
    %v7325 = vunpack.c.l.b16 %v6262
    %v7326 = vunpack.c.l.b16 %v6263
    %v7327 = vunpack.c.h.b16 %v6263
    %v7328 = vunpack.c.l.b16 %v6264
    %v7329 = vunpack.c.h.b16 %v6264
    %v7330 = vunpack.c.l.b16 %v6265
    %v7331 = vunpack.c.l.b16 %v6266
    %v7332 = vunpack.c.h.b16 %v6266
    %v7333 = vunpack.c.l.b16 %v6267
    %v7334 = vunpack.c.h.b16 %v6267
    %v7335 = vunpack.c.l.b16 %v6268
    %v7336 = vunpack.c.l.b16 %v6269
    %v7337 = vunpack.c.h.b16 %v6269
    %v7338 = vunpack.c.l.b16 %v6270
    %v7339 = vunpack.c.h.b16 %v6270
    %v7340 = vunpack.c.l.b16 %v6271
    %v7341 = vunpack.c.l.b16 %v6272
    %v7342 = vunpack.c.h.b16 %v6272
    %v7343 = vunpack.c.l.b16 %v6273
    %v7344 = vunpack.c.h.b16 %v6273
    %v7345 = vunpack.c.l.b16 %v6274
    %v7346 = vunpack.c.l.b16 %v6275
    %v7347 = vunpack.c.h.b16 %v6275
    %v7348 = vunpack.c.l.b16 %v6276
    %v7349 = vunpack.c.h.b16 %v6276
    %v7350 = vunpack.c.l.b16 %v6277
    %v7351 = vunpack.c.l.b16 %v6278
    %v7352 = vunpack.c.h.b16 %v6278
    %v7353 = vunpack.c.l.b16 %v6279
    %v7354 = vunpack.c.h.b16 %v6279
    %v7355 = vunpack.c.l.b16 %v6280
    %v7356 = vunpack.c.l.b16 %v6281
    %v7357 = vunpack.c.h.b16 %v6281
    %v7358 = vunpack.c.l.b16 %v6282
    %v7359 = vunpack.c.h.b16 %v6282
    %v7360 = vunpack.c.l.b16 %v6283
    %v7361 = vunpack.c.l.b16 %v6284
    %v7362 = vunpack.c.h.b16 %v6284
    %v7363 = vunpack.c.l.b16 %v6285
    %v7364 = vunpack.c.h.b16 %v6285
    %v7365 = vunpack.c.l.b16 %v6286
    %v7366 = vunpack.c.l.b16 %v6287
    %v7367 = vunpack.c.h.b16 %v6287
    %v7368 = vunpack.c.l.b16 %v6288
    %v7369 = vunpack.c.h.b16 %v6288
    %v7370 = vunpack.c.l.b16 %v6289
    %v7371 = vunpack.c.l.b16 %v6290
    %v7372 = vunpack.c.h.b16 %v6290
    %v7373 = vunpack.c.l.b16 %v6291
    %v7374 = vunpack.c.h.b16 %v6291
    %v7375 = vunpack.c.l.b16 %v6292
    %v7376 = vunpack.c.l.b16 %v6293
    %v7377 = vunpack.c.h.b16 %v6293
    %v7378 = vunpack.c.l.b16 %v6294
    %v7379 = vunpack.c.h.b16 %v6294
    %v7380 = vunpack.c.l.b16 %v6295
    %v7381 = vunpack.c.l.b16 %v6296
    %v7382 = vunpack.c.h.b16 %v6296
    %v7383 = vunpack.c.l.b16 %v6297
    %v7384 = vunpack.c.h.b16 %v6297
    %v7385 = vunpack.c.l.b16 %v6298
    %v7386 = vunpack.c.l.b16 %v6299
    %v7387 = vunpack.c.h.b16 %v6299
    %v7388 = vunpack.c.l.b16 %v6300
    %v7389 = vunpack.c.h.b16 %v6300
    %v7390 = vunpack.c.l.b16 %v6301
    %v7391 = vunpack.c.l.b16 %v6302
    %v7392 = vunpack.c.h.b16 %v6302
    %v7393 = vunpack.c.l.b16 %v6303
    %v7394 = vunpack.c.h.b16 %v6303
    %v7395 = vunpack.c.l.b16 %v6304
    %v7396 = vunpack.c.l.b16 %v6305
    %v7397 = vunpack.c.h.b16 %v6305
    %v7398 = vunpack.c.l.b16 %v6306
    %v7399 = vunpack.c.h.b16 %v6306
    %v7400 = vunpack.c.l.b16 %v6307
    %v7401 = vunpack.c.l.b16 %v6308
    %v7402 = vunpack.c.h.b16 %v6308
    %v7403 = vunpack.c.l.b16 %v6309
    %v7404 = vunpack.c.h.b16 %v6309
    %v7405 = vunpack.c.l.b16 %v6310
    %v7406 = vunpack.c.l.b16 %v6311
    %v7407 = vunpack.c.h.b16 %v6311
    %v7408 = vunpack.c.l.b16 %v6312
    %v7409 = vunpack.c.h.b16 %v6312
    %v7410 = vunpack.c.l.b16 %v6313
    %v7411 = vunpack.c.l.b16 %v6314
    %v7412 = vunpack.c.h.b16 %v6314
    %v7413 = vunpack.c.l.b16 %v6315
    %v7414 = vunpack.c.h.b16 %v6315
    %v7415 = vunpack.c.l.b16 %v6316
    %v7416 = vunpack.c.l.b16 %v6317
    %v7417 = vunpack.c.h.b16 %v6317
    %v7418 = vunpack.c.l.b16 %v6318
    %v7419 = vunpack.c.h.b16 %v6318
    %v7420 = vunpack.c.l.b16 %v6319
    %v7421 = vunpack.c.l.b16 %v6320
    %v7422 = vunpack.c.h.b16 %v6320
    %v7423 = vunpack.c.l.b16 %v6321
    %v7424 = vunpack.c.h.b16 %v6321
    %v7425 = vunpack.c.l.b16 %v6322
    %v7426 = vunpack.c.l.b16 %v6323
    %v7427 = vunpack.c.h.b16 %v6323
    %v7428 = vunpack.c.l.b16 %v6324
    %v7429 = vunpack.c.h.b16 %v6324
    %v7430 = vunpack.c.l.b16 %v6325
    %v7431 = vunpack.c.l.b16 %v6326
    %v7432 = vunpack.c.h.b16 %v6326
    %v7433 = vunpack.c.l.b16 %v6327
    %v7434 = vunpack.c.h.b16 %v6327
    %v7435 = vunpack.c.l.b16 %v6328
    %v7436 = vunpack.c.l.b16 %v6329
    %v7437 = vunpack.c.h.b16 %v6329
    %v7438 = vunpack.c.l.b16 %v6330
    %v7439 = vunpack.c.h.b16 %v6330
    %v7440 = vunpack.c.l.b16 %v6331
    %v7441 = vunpack.c.l.b16 %v6332
    %v7442 = vunpack.c.h.b16 %v6332
    %v7443 = vunpack.c.l.b16 %v6333
    %v7444 = vunpack.c.h.b16 %v6333
    %v7445 = vunpack.c.l.b16 %v6334
    %v7446 = vunpack.c.l.b16 %v6335
    %v7447 = vunpack.c.h.b16 %v6335
    %v7448 = vunpack.c.l.b16 %v6336
    %v7449 = vunpack.c.h.b16 %v6336
    %v7450 = vunpack.c.l.b16 %v6337
    %v7451 = vunpack.c.l.b16 %v6338
    %v7452 = vunpack.c.h.b16 %v6338
    %v7453 = vunpack.c.l.b16 %v6339
    %v7454 = vunpack.c.h.b16 %v6339
    %v7455 = vunpack.c.l.b16 %v6340
    %v7456 = vunpack.c.l.b16 %v6341
    %v7457 = vunpack.c.h.b16 %v6341
    %v7458 = vunpack.c.l.b16 %v6342
    %v7459 = vunpack.c.h.b16 %v6342
    %v7460 = vunpack.c.l.b16 %v6343
    %v7461 = vunpack.c.l.b16 %v6344
    %v7462 = vunpack.c.h.b16 %v6344
    %v7463 = vunpack.c.l.b16 %v6345
    %v7464 = vunpack.c.h.b16 %v6345
    %v7465 = vunpack.c.l.b16 %v6346
    %v7466 = vunpack.c.l.b16 %v6347
    %v7467 = vunpack.c.h.b16 %v6347
    %v7468 = vunpack.c.l.b16 %v6348
    %v7469 = vunpack.c.h.b16 %v6348
    %v7470 = vunpack.c.l.b16 %v6349
    %v7471 = vunpack.c.l.b16 %v6350
    %v7472 = vunpack.c.h.b16 %v6350
    %v7473 = vunpack.c.l.b16 %v6351
    %v7474 = vunpack.c.h.b16 %v6351
    %v7475 = vunpack.c.l.b16 %v6352
    %v7476 = vunpack.c.l.b16 %v6353
    %v7477 = vunpack.c.h.b16 %v6353
    %v7478 = vunpack.c.l.b16 %v6354
    %v7479 = vunpack.c.h.b16 %v6354
    %v7480 = vunpack.c.l.b16 %v6355
    %v7481 = vunpack.c.l.b16 %v6356
    %v7482 = vunpack.c.h.b16 %v6356
    %v7483 = vunpack.c.l.b16 %v6357
    %v7484 = vunpack.c.h.b16 %v6357
    %v7485 = vunpack.c.l.b16 %v6358
    %v7486 = vunpack.c.l.b16 %v6359
    %v7487 = vunpack.c.h.b16 %v6359
    %v7488 = vunpack.c.l.b16 %v6360
    %v7489 = vunpack.c.h.b16 %v6360
    %v7490 = vunpack.c.l.b16 %v6361
    %v7491 = vunpack.c.l.b16 %v6362
    %v7492 = vunpack.c.h.b16 %v6362
    %v7493 = vunpack.c.l.b16 %v6363
    %v7494 = vunpack.c.h.b16 %v6363
    %v7495 = vunpack.c.l.b16 %v6364
    %v7496 = vunpack.c.l.b16 %v6365
    %v7497 = vunpack.c.h.b16 %v6365
    %v7498 = vunpack.c.l.b16 %v6366
    %v7499 = vunpack.c.h.b16 %v6366
    %v7500 = vunpack.c.l.b16 %v6367
    %v7501 = vunpack.c.l.b16 %v6368
    %v7502 = vunpack.c.h.b16 %v6368
    %v7503 = vunpack.c.l.b16 %v6369
    %v7504 = vunpack.c.h.b16 %v6369
    %v7505 = vunpack.c.l.b16 %v6370
    %v7506 = vunpack.c.l.b16 %v6371
    %v7507 = vunpack.c.h.b16 %v6371
    %v7508 = vunpack.c.l.b16 %v6372
    %v7509 = vunpack.c.h.b16 %v6372
    %v7510 = vunpack.c.l.b16 %v6373
    %v7511 = vunpack.c.l.b16 %v6374
    %v7512 = vunpack.c.h.b16 %v6374
    %v7513 = vunpack.c.l.b16 %v6375
    %v7514 = vunpack.c.h.b16 %v6375
    %v7515 = vunpack.c.l.b16 %v6376
    %v7516 = vunpack.c.l.b16 %v6377
    %v7517 = vunpack.c.h.b16 %v6377
    %v7518 = vunpack.c.l.b16 %v6378
    %v7519 = vunpack.c.h.b16 %v6378
    %v7520 = vunpack.c.l.b16 %v6379
    %v7521 = vunpack.c.l.b16 %v6380
    %v7522 = vunpack.c.h.b16 %v6380
    %v7523 = vunpack.c.l.b16 %v6381
    %v7524 = vunpack.c.h.b16 %v6381
    %v7525 = vunpack.c.l.b16 %v6382
    %v7526 = vunpack.c.l.b16 %v6383
    %v7527 = vunpack.c.h.b16 %v6383
    %v7528 = vunpack.c.l.b16 %v6384
    %v7529 = vunpack.c.h.b16 %v6384
    %v7530 = vunpack.c.l.b16 %v6385
    %v7531 = vunpack.c.l.b16 %v6386
    %v7532 = vunpack.c.h.b16 %v6386
    %v7533 = vunpack.c.l.b16 %v6387
    %v7534 = vunpack.c.h.b16 %v6387
    %v7535 = vunpack.c.l.b16 %v6388
    %v7536 = vunpack.c.l.b16 %v6389
    %v7537 = vunpack.c.h.b16 %v6389
    %v7538 = vunpack.c.l.b16 %v6390
    %v7539 = vunpack.c.h.b16 %v6390
    %v7540 = vunpack.c.l.b16 %v6391
    %v7541 = vunpack.c.l.b16 %v6392
    %v7542 = vunpack.c.h.b16 %v6392
    %v7543 = vunpack.c.l.b16 %v6393
    %v7544 = vunpack.c.h.b16 %v6393
    %v7545 = vunpack.c.l.b16 %v6394
    %v7546 = vunpack.c.l.b16 %v6395
    %v7547 = vunpack.c.h.b16 %v6395
    %v7548 = vunpack.c.l.b16 %v6396
    %v7549 = vunpack.c.h.b16 %v6396
    %v7550 = vunpack.c.l.b16 %v6397
    %v7551 = vunpack.c.l.b16 %v6398
    %v7552 = vunpack.c.h.b16 %v6398
    %v7553 = vunpack.c.l.b16 %v6399
    %v7554 = vunpack.c.h.b16 %v6399
    %v7555 = vunpack.c.l.b16 %v6400
    %v7556 = vunpack.c.l.b16 %v6401
    %v7557 = vunpack.c.h.b16 %v6401
    %v7558 = vunpack.c.l.b16 %v6402
    %v7559 = vunpack.c.h.b16 %v6402
    %v7560 = vunpack.c.l.b16 %v6403
    %v7561 = vunpack.c.l.b16 %v6404
    %v7562 = vunpack.c.h.b16 %v6404
    %v7563 = vunpack.c.l.b16 %v6405
    %v7564 = vunpack.c.h.b16 %v6405
    %v7565 = vunpack.c.l.b16 %v6406
    %v7566 = vunpack.c.l.b16 %v6407
    %v7567 = vunpack.c.h.b16 %v6407
    %v7568 = vunpack.c.l.b16 %v6408
    %v7569 = vunpack.c.h.b16 %v6408
    %v7570 = vunpack.c.l.b16 %v6409
    %v7571 = vunpack.c.l.b16 %v6410
    %v7572 = vunpack.c.h.b16 %v6410
    %v7573 = vunpack.c.l.b16 %v6411
    %v7574 = vunpack.c.h.b16 %v6411
    %v7575 = vunpack.c.l.b16 %v6412
    %v7576 = vunpack.c.l.b16 %v6413
    %v7577 = vunpack.c.h.b16 %v6413
    %v7578 = vunpack.c.l.b16 %v6414
    %v7579 = vunpack.c.h.b16 %v6414
    %v7580 = vunpack.c.l.b16 %v6415
    %v7581 = vunpack.c.l.b16 %v6416
    %v7582 = vunpack.c.h.b16 %v6416
    %v7583 = vunpack.c.l.b16 %v6417
    %v7584 = vunpack.c.h.b16 %v6417
    %v7585 = vunpack.c.l.b16 %v6418
    %v7586 = vunpack.c.l.b16 %v6419
    %v7587 = vunpack.c.h.b16 %v6419
    %v7588 = vunpack.c.l.b16 %v6420
    %v7589 = vunpack.c.h.b16 %v6420
    %v7590 = vunpack.c.l.b16 %v6421
    %v7591 = vunpack.c.l.b16 %v6422
    %v7592 = vunpack.c.h.b16 %v6422
    %v7593 = vunpack.c.l.b16 %v6423
    %v7594 = vunpack.c.h.b16 %v6423
    %v7595 = vunpack.c.l.b16 %v6424
    %v7596 = vunpack.c.l.b16 %v6425
    %v7597 = vunpack.c.h.b16 %v6425
    %v7598 = vunpack.c.l.b16 %v6426
    %v7599 = vunpack.c.h.b16 %v6426
    %v7600 = vunpack.c.l.b16 %v6427
    %v7601 = vunpack.c.l.b16 %v6428
    %v7602 = vunpack.c.h.b16 %v6428
    %v7603 = vunpack.c.l.b16 %v6429
    %v7604 = vunpack.c.h.b16 %v6429
    %v7605 = vunpack.c.l.b16 %v6430
    %v7606 = vunpack.c.l.b16 %v6431
    %v7607 = vunpack.c.h.b16 %v6431
    %v7608 = vunpack.c.l.b16 %v6432
    %v7609 = vunpack.c.h.b16 %v6432
    %v7610 = vunpack.c.l.b16 %v6433
    %v7611 = vunpack.c.l.b16 %v6434
    %v7612 = vunpack.c.h.b16 %v6434
    %v7613 = vunpack.c.l.b16 %v6435
    %v7614 = vunpack.c.h.b16 %v6435
    %v7615 = vunpack.c.l.b16 %v6436
    %v7616 = vpack.c.b16 %v6901, %v6896
    %v7617 = vpack.c.b16 %v6902, %v6897
    %v7618 = vpack.c.b16 %v6903, %v6898
    %v7619 = vpack.c.b16 %v6904, %v6899
    %v7620 = vpack.c.b16 %v6905, %v6900
    %v7621 = vpack.c.b16 %v6911, %v6906
    %v7622 = vpack.c.b16 %v6912, %v6907
    %v7623 = vpack.c.b16 %v6913, %v6908
    %v7624 = vpack.c.b16 %v6914, %v6909
    %v7625 = vpack.c.b16 %v6915, %v6910
    %v7626 = vpack.c.b16 %v6921, %v6916
    %v7627 = vpack.c.b16 %v6922, %v6917
    %v7628 = vpack.c.b16 %v6923, %v6918
    %v7629 = vpack.c.b16 %v6924, %v6919
    %v7630 = vpack.c.b16 %v6925, %v6920
    %v7631 = vpack.c.b16 %v6931, %v6926
    %v7632 = vpack.c.b16 %v6932, %v6927
    %v7633 = vpack.c.b16 %v6933, %v6928
    %v7634 = vpack.c.b16 %v6934, %v6929
    %v7635 = vpack.c.b16 %v6935, %v6930
    %v7636 = vpack.c.b16 %v6941, %v6936
    %v7637 = vpack.c.b16 %v6942, %v6937
    %v7638 = vpack.c.b16 %v6943, %v6938
    %v7639 = vpack.c.b16 %v6944, %v6939
    %v7640 = vpack.c.b16 %v6945, %v6940
    %v7641 = vpack.c.b16 %v6951, %v6946
    %v7642 = vpack.c.b16 %v6952, %v6947
    %v7643 = vpack.c.b16 %v6953, %v6948
    %v7644 = vpack.c.b16 %v6954, %v6949
    %v7645 = vpack.c.b16 %v6955, %v6950
    %v7646 = vpack.c.b16 %v6961, %v6956
    %v7647 = vpack.c.b16 %v6962, %v6957
    %v7648 = vpack.c.b16 %v6963, %v6958
    %v7649 = vpack.c.b16 %v6964, %v6959
    %v7650 = vpack.c.b16 %v6965, %v6960
    %v7651 = vpack.c.b16 %v6971, %v6966
    %v7652 = vpack.c.b16 %v6972, %v6967
    %v7653 = vpack.c.b16 %v6973, %v6968
    %v7654 = vpack.c.b16 %v6974, %v6969
    %v7655 = vpack.c.b16 %v6975, %v6970
    %v7656 = vpack.c.b16 %v6981, %v6976
    %v7657 = vpack.c.b16 %v6982, %v6977
    %v7658 = vpack.c.b16 %v6983, %v6978
    %v7659 = vpack.c.b16 %v6984, %v6979
    %v7660 = vpack.c.b16 %v6985, %v6980
    %v7661 = vpack.c.b16 %v6991, %v6986
    %v7662 = vpack.c.b16 %v6992, %v6987
    %v7663 = vpack.c.b16 %v6993, %v6988
    %v7664 = vpack.c.b16 %v6994, %v6989
    %v7665 = vpack.c.b16 %v6995, %v6990
    %v7666 = vpack.c.b16 %v7001, %v6996
    %v7667 = vpack.c.b16 %v7002, %v6997
    %v7668 = vpack.c.b16 %v7003, %v6998
    %v7669 = vpack.c.b16 %v7004, %v6999
    %v7670 = vpack.c.b16 %v7005, %v7000
    %v7671 = vpack.c.b16 %v7011, %v7006
    %v7672 = vpack.c.b16 %v7012, %v7007
    %v7673 = vpack.c.b16 %v7013, %v7008
    %v7674 = vpack.c.b16 %v7014, %v7009
    %v7675 = vpack.c.b16 %v7015, %v7010
    %v7676 = vpack.c.b16 %v7021, %v7016
    %v7677 = vpack.c.b16 %v7022, %v7017
    %v7678 = vpack.c.b16 %v7023, %v7018
    %v7679 = vpack.c.b16 %v7024, %v7019
    %v7680 = vpack.c.b16 %v7025, %v7020
    %v7681 = vpack.c.b16 %v7031, %v7026
    %v7682 = vpack.c.b16 %v7032, %v7027
    %v7683 = vpack.c.b16 %v7033, %v7028
    %v7684 = vpack.c.b16 %v7034, %v7029
    %v7685 = vpack.c.b16 %v7035, %v7030
    %v7686 = vpack.c.b16 %v7041, %v7036
    %v7687 = vpack.c.b16 %v7042, %v7037
    %v7688 = vpack.c.b16 %v7043, %v7038
    %v7689 = vpack.c.b16 %v7044, %v7039
    %v7690 = vpack.c.b16 %v7045, %v7040
    %v7691 = vpack.c.b16 %v7051, %v7046
    %v7692 = vpack.c.b16 %v7052, %v7047
    %v7693 = vpack.c.b16 %v7053, %v7048
    %v7694 = vpack.c.b16 %v7054, %v7049
    %v7695 = vpack.c.b16 %v7055, %v7050
    %v7696 = vpack.c.b16 %v7061, %v7056
    %v7697 = vpack.c.b16 %v7062, %v7057
    %v7698 = vpack.c.b16 %v7063, %v7058
    %v7699 = vpack.c.b16 %v7064, %v7059
    %v7700 = vpack.c.b16 %v7065, %v7060
    %v7701 = vpack.c.b16 %v7071, %v7066
    %v7702 = vpack.c.b16 %v7072, %v7067
    %v7703 = vpack.c.b16 %v7073, %v7068
    %v7704 = vpack.c.b16 %v7074, %v7069
    %v7705 = vpack.c.b16 %v7075, %v7070
    %v7706 = vpack.c.b16 %v7081, %v7076
    %v7707 = vpack.c.b16 %v7082, %v7077
    %v7708 = vpack.c.b16 %v7083, %v7078
    %v7709 = vpack.c.b16 %v7084, %v7079
    %v7710 = vpack.c.b16 %v7085, %v7080
    %v7711 = vpack.c.b16 %v7091, %v7086
    %v7712 = vpack.c.b16 %v7092, %v7087
    %v7713 = vpack.c.b16 %v7093, %v7088
    %v7714 = vpack.c.b16 %v7094, %v7089
    %v7715 = vpack.c.b16 %v7095, %v7090
    %v7716 = vpack.c.b16 %v7101, %v7096
    %v7717 = vpack.c.b16 %v7102, %v7097
    %v7718 = vpack.c.b16 %v7103, %v7098
    %v7719 = vpack.c.b16 %v7104, %v7099
    %v7720 = vpack.c.b16 %v7105, %v7100
    %v7721 = vpack.c.b16 %v7111, %v7106
    %v7722 = vpack.c.b16 %v7112, %v7107
    %v7723 = vpack.c.b16 %v7113, %v7108
    %v7724 = vpack.c.b16 %v7114, %v7109
    %v7725 = vpack.c.b16 %v7115, %v7110
    %v7726 = vpack.c.b16 %v7121, %v7116
    %v7727 = vpack.c.b16 %v7122, %v7117
    %v7728 = vpack.c.b16 %v7123, %v7118
    %v7729 = vpack.c.b16 %v7124, %v7119
    %v7730 = vpack.c.b16 %v7125, %v7120
    %v7731 = vpack.c.b16 %v7131, %v7126
    %v7732 = vpack.c.b16 %v7132, %v7127
    %v7733 = vpack.c.b16 %v7133, %v7128
    %v7734 = vpack.c.b16 %v7134, %v7129
    %v7735 = vpack.c.b16 %v7135, %v7130
    %v7736 = vpack.c.b16 %v7141, %v7136
    %v7737 = vpack.c.b16 %v7142, %v7137
    %v7738 = vpack.c.b16 %v7143, %v7138
    %v7739 = vpack.c.b16 %v7144, %v7139
    %v7740 = vpack.c.b16 %v7145, %v7140
    %v7741 = vpack.c.b16 %v7151, %v7146
    %v7742 = vpack.c.b16 %v7152, %v7147
    %v7743 = vpack.c.b16 %v7153, %v7148
    %v7744 = vpack.c.b16 %v7154, %v7149
    %v7745 = vpack.c.b16 %v7155, %v7150
    %v7746 = vpack.c.b16 %v7161, %v7156
    %v7747 = vpack.c.b16 %v7162, %v7157
    %v7748 = vpack.c.b16 %v7163, %v7158
    %v7749 = vpack.c.b16 %v7164, %v7159
    %v7750 = vpack.c.b16 %v7165, %v7160
    %v7751 = vpack.c.b16 %v7171, %v7166
    %v7752 = vpack.c.b16 %v7172, %v7167
    %v7753 = vpack.c.b16 %v7173, %v7168
    %v7754 = vpack.c.b16 %v7174, %v7169
    %v7755 = vpack.c.b16 %v7175, %v7170
    %v7756 = vpack.c.b16 %v7181, %v7176
    %v7757 = vpack.c.b16 %v7182, %v7177
    %v7758 = vpack.c.b16 %v7183, %v7178
    %v7759 = vpack.c.b16 %v7184, %v7179
    %v7760 = vpack.c.b16 %v7185, %v7180
    %v7761 = vpack.c.b16 %v7191, %v7186
    %v7762 = vpack.c.b16 %v7192, %v7187
    %v7763 = vpack.c.b16 %v7193, %v7188
    %v7764 = vpack.c.b16 %v7194, %v7189
    %v7765 = vpack.c.b16 %v7195, %v7190
    %v7766 = vpack.c.b16 %v7201, %v7196
    %v7767 = vpack.c.b16 %v7202, %v7197
    %v7768 = vpack.c.b16 %v7203, %v7198
    %v7769 = vpack.c.b16 %v7204, %v7199
    %v7770 = vpack.c.b16 %v7205, %v7200
    %v7771 = vpack.c.b16 %v7211, %v7206
    %v7772 = vpack.c.b16 %v7212, %v7207
    %v7773 = vpack.c.b16 %v7213, %v7208
    %v7774 = vpack.c.b16 %v7214, %v7209
    %v7775 = vpack.c.b16 %v7215, %v7210
    %v7776 = vpack.c.b16 %v7221, %v7216
    %v7777 = vpack.c.b16 %v7222, %v7217
    %v7778 = vpack.c.b16 %v7223, %v7218
    %v7779 = vpack.c.b16 %v7224, %v7219
    %v7780 = vpack.c.b16 %v7225, %v7220
    %v7781 = vpack.c.b16 %v7231, %v7226
    %v7782 = vpack.c.b16 %v7232, %v7227
    %v7783 = vpack.c.b16 %v7233, %v7228
    %v7784 = vpack.c.b16 %v7234, %v7229
    %v7785 = vpack.c.b16 %v7235, %v7230
    %v7786 = vpack.c.b16 %v7241, %v7236
    %v7787 = vpack.c.b16 %v7242, %v7237
    %v7788 = vpack.c.b16 %v7243, %v7238
    %v7789 = vpack.c.b16 %v7244, %v7239
    %v7790 = vpack.c.b16 %v7245, %v7240
    %v7791 = vpack.c.b16 %v7251, %v7246
    %v7792 = vpack.c.b16 %v7252, %v7247
    %v7793 = vpack.c.b16 %v7253, %v7248
    %v7794 = vpack.c.b16 %v7254, %v7249
    %v7795 = vpack.c.b16 %v7255, %v7250
    %v7796 = vpack.c.b16 %v7261, %v7256
    %v7797 = vpack.c.b16 %v7262, %v7257
    %v7798 = vpack.c.b16 %v7263, %v7258
    %v7799 = vpack.c.b16 %v7264, %v7259
    %v7800 = vpack.c.b16 %v7265, %v7260
    %v7801 = vpack.c.b16 %v7271, %v7266
    %v7802 = vpack.c.b16 %v7272, %v7267
    %v7803 = vpack.c.b16 %v7273, %v7268
    %v7804 = vpack.c.b16 %v7274, %v7269
    %v7805 = vpack.c.b16 %v7275, %v7270
    %v7806 = vpack.c.b16 %v7281, %v7276
    %v7807 = vpack.c.b16 %v7282, %v7277
    %v7808 = vpack.c.b16 %v7283, %v7278
    %v7809 = vpack.c.b16 %v7284, %v7279
    %v7810 = vpack.c.b16 %v7285, %v7280
    %v7811 = vpack.c.b16 %v7291, %v7286
    %v7812 = vpack.c.b16 %v7292, %v7287
    %v7813 = vpack.c.b16 %v7293, %v7288
    %v7814 = vpack.c.b16 %v7294, %v7289
    %v7815 = vpack.c.b16 %v7295, %v7290
    %v7816 = vpack.c.b16 %v7301, %v7296
    %v7817 = vpack.c.b16 %v7302, %v7297
    %v7818 = vpack.c.b16 %v7303, %v7298
    %v7819 = vpack.c.b16 %v7304, %v7299
    %v7820 = vpack.c.b16 %v7305, %v7300
    %v7821 = vpack.c.b16 %v7311, %v7306
    %v7822 = vpack.c.b16 %v7312, %v7307
    %v7823 = vpack.c.b16 %v7313, %v7308
    %v7824 = vpack.c.b16 %v7314, %v7309
    %v7825 = vpack.c.b16 %v7315, %v7310
    %v7826 = vpack.c.b16 %v7321, %v7316
    %v7827 = vpack.c.b16 %v7322, %v7317
    %v7828 = vpack.c.b16 %v7323, %v7318
    %v7829 = vpack.c.b16 %v7324, %v7319
    %v7830 = vpack.c.b16 %v7325, %v7320
    %v7831 = vpack.c.b16 %v7331, %v7326
    %v7832 = vpack.c.b16 %v7332, %v7327
    %v7833 = vpack.c.b16 %v7333, %v7328
    %v7834 = vpack.c.b16 %v7334, %v7329
    %v7835 = vpack.c.b16 %v7335, %v7330
    %v7836 = vpack.c.b16 %v7341, %v7336
    %v7837 = vpack.c.b16 %v7342, %v7337
    %v7838 = vpack.c.b16 %v7343, %v7338
    %v7839 = vpack.c.b16 %v7344, %v7339
    %v7840 = vpack.c.b16 %v7345, %v7340
    %v7841 = vpack.c.b16 %v7351, %v7346
    %v7842 = vpack.c.b16 %v7352, %v7347
    %v7843 = vpack.c.b16 %v7353, %v7348
    %v7844 = vpack.c.b16 %v7354, %v7349
    %v7845 = vpack.c.b16 %v7355, %v7350
    %v7846 = vpack.c.b16 %v7361, %v7356
    %v7847 = vpack.c.b16 %v7362, %v7357
    %v7848 = vpack.c.b16 %v7363, %v7358
    %v7849 = vpack.c.b16 %v7364, %v7359
    %v7850 = vpack.c.b16 %v7365, %v7360
    %v7851 = vpack.c.b16 %v7371, %v7366
    %v7852 = vpack.c.b16 %v7372, %v7367
    %v7853 = vpack.c.b16 %v7373, %v7368
    %v7854 = vpack.c.b16 %v7374, %v7369
    %v7855 = vpack.c.b16 %v7375, %v7370
    %v7856 = vpack.c.b16 %v7381, %v7376
    %v7857 = vpack.c.b16 %v7382, %v7377
    %v7858 = vpack.c.b16 %v7383, %v7378
    %v7859 = vpack.c.b16 %v7384, %v7379
    %v7860 = vpack.c.b16 %v7385, %v7380
    %v7861 = vpack.c.b16 %v7391, %v7386
    %v7862 = vpack.c.b16 %v7392, %v7387
    %v7863 = vpack.c.b16 %v7393, %v7388
    %v7864 = vpack.c.b16 %v7394, %v7389
    %v7865 = vpack.c.b16 %v7395, %v7390
    %v7866 = vpack.c.b16 %v7401, %v7396
    %v7867 = vpack.c.b16 %v7402, %v7397
    %v7868 = vpack.c.b16 %v7403, %v7398
    %v7869 = vpack.c.b16 %v7404, %v7399
    %v7870 = vpack.c.b16 %v7405, %v7400
    %v7871 = vpack.c.b16 %v7411, %v7406
    %v7872 = vpack.c.b16 %v7412, %v7407
    %v7873 = vpack.c.b16 %v7413, %v7408
    %v7874 = vpack.c.b16 %v7414, %v7409
    %v7875 = vpack.c.b16 %v7415, %v7410
    %v7876 = vpack.c.b16 %v7421, %v7416
    %v7877 = vpack.c.b16 %v7422, %v7417
    %v7878 = vpack.c.b16 %v7423, %v7418
    %v7879 = vpack.c.b16 %v7424, %v7419
    %v7880 = vpack.c.b16 %v7425, %v7420
    %v7881 = vpack.c.b16 %v7431, %v7426
    %v7882 = vpack.c.b16 %v7432, %v7427
    %v7883 = vpack.c.b16 %v7433, %v7428
    %v7884 = vpack.c.b16 %v7434, %v7429
    %v7885 = vpack.c.b16 %v7435, %v7430
    %v7886 = vpack.c.b16 %v7441, %v7436
    %v7887 = vpack.c.b16 %v7442, %v7437
    %v7888 = vpack.c.b16 %v7443, %v7438
    %v7889 = vpack.c.b16 %v7444, %v7439
    %v7890 = vpack.c.b16 %v7445, %v7440
    %v7891 = vpack.c.b16 %v7451, %v7446
    %v7892 = vpack.c.b16 %v7452, %v7447
    %v7893 = vpack.c.b16 %v7453, %v7448
    %v7894 = vpack.c.b16 %v7454, %v7449
    %v7895 = vpack.c.b16 %v7455, %v7450
    %v7896 = vpack.c.b16 %v7461, %v7456
    %v7897 = vpack.c.b16 %v7462, %v7457
    %v7898 = vpack.c.b16 %v7463, %v7458
    %v7899 = vpack.c.b16 %v7464, %v7459
    %v7900 = vpack.c.b16 %v7465, %v7460
    %v7901 = vpack.c.b16 %v7471, %v7466
    %v7902 = vpack.c.b16 %v7472, %v7467
    %v7903 = vpack.c.b16 %v7473, %v7468
    %v7904 = vpack.c.b16 %v7474, %v7469
    %v7905 = vpack.c.b16 %v7475, %v7470
    %v7906 = vpack.c.b16 %v7481, %v7476
    %v7907 = vpack.c.b16 %v7482, %v7477
    %v7908 = vpack.c.b16 %v7483, %v7478
    %v7909 = vpack.c.b16 %v7484, %v7479
    %v7910 = vpack.c.b16 %v7485, %v7480
    %v7911 = vpack.c.b16 %v7491, %v7486
    %v7912 = vpack.c.b16 %v7492, %v7487
    %v7913 = vpack.c.b16 %v7493, %v7488
    %v7914 = vpack.c.b16 %v7494, %v7489
    %v7915 = vpack.c.b16 %v7495, %v7490
    %v7916 = vpack.c.b16 %v7501, %v7496
    %v7917 = vpack.c.b16 %v7502, %v7497
    %v7918 = vpack.c.b16 %v7503, %v7498
    %v7919 = vpack.c.b16 %v7504, %v7499
    %v7920 = vpack.c.b16 %v7505, %v7500
    %v7921 = vpack.c.b16 %v7511, %v7506
    %v7922 = vpack.c.b16 %v7512, %v7507
    %v7923 = vpack.c.b16 %v7513, %v7508
    %v7924 = vpack.c.b16 %v7514, %v7509
    %v7925 = vpack.c.b16 %v7515, %v7510
    %v7926 = vpack.c.b16 %v7521, %v7516
    %v7927 = vpack.c.b16 %v7522, %v7517
    %v7928 = vpack.c.b16 %v7523, %v7518
    %v7929 = vpack.c.b16 %v7524, %v7519
    %v7930 = vpack.c.b16 %v7525, %v7520
    %v7931 = vpack.c.b16 %v7531, %v7526
    %v7932 = vpack.c.b16 %v7532, %v7527
    %v7933 = vpack.c.b16 %v7533, %v7528
    %v7934 = vpack.c.b16 %v7534, %v7529
    %v7935 = vpack.c.b16 %v7535, %v7530
    %v7936 = vpack.c.b16 %v7541, %v7536
    %v7937 = vpack.c.b16 %v7542, %v7537
    %v7938 = vpack.c.b16 %v7543, %v7538
    %v7939 = vpack.c.b16 %v7544, %v7539
    %v7940 = vpack.c.b16 %v7545, %v7540
    %v7941 = vpack.c.b16 %v7551, %v7546
    %v7942 = vpack.c.b16 %v7552, %v7547
    %v7943 = vpack.c.b16 %v7553, %v7548
    %v7944 = vpack.c.b16 %v7554, %v7549
    %v7945 = vpack.c.b16 %v7555, %v7550
    %v7946 = vpack.c.b16 %v7561, %v7556
    %v7947 = vpack.c.b16 %v7562, %v7557
    %v7948 = vpack.c.b16 %v7563, %v7558
    %v7949 = vpack.c.b16 %v7564, %v7559
    %v7950 = vpack.c.b16 %v7565, %v7560
    %v7951 = vpack.c.b16 %v7571, %v7566
    %v7952 = vpack.c.b16 %v7572, %v7567
    %v7953 = vpack.c.b16 %v7573, %v7568
    %v7954 = vpack.c.b16 %v7574, %v7569
    %v7955 = vpack.c.b16 %v7575, %v7570
    %v7956 = vpack.c.b16 %v7581, %v7576
    %v7957 = vpack.c.b16 %v7582, %v7577
    %v7958 = vpack.c.b16 %v7583, %v7578
    %v7959 = vpack.c.b16 %v7584, %v7579
    %v7960 = vpack.c.b16 %v7585, %v7580
    %v7961 = vpack.c.b16 %v7591, %v7586
    %v7962 = vpack.c.b16 %v7592, %v7587
    %v7963 = vpack.c.b16 %v7593, %v7588
    %v7964 = vpack.c.b16 %v7594, %v7589
    %v7965 = vpack.c.b16 %v7595, %v7590
    %v7966 = vpack.c.b16 %v7601, %v7596
    %v7967 = vpack.c.b16 %v7602, %v7597
    %v7968 = vpack.c.b16 %v7603, %v7598
    %v7969 = vpack.c.b16 %v7604, %v7599
    %v7970 = vpack.c.b16 %v7605, %v7600
    %v7971 = vpack.c.b16 %v7611, %v7606
    %v7972 = vpack.c.b16 %v7612, %v7607
    %v7973 = vpack.c.b16 %v7613, %v7608
    %v7974 = vpack.c.b16 %v7614, %v7609
    %v7975 = vpack.c.b16 %v7615, %v7610
    %8336 = vmatprep.subr.bf16.mxu0 %v7617
    %8337 = vmatpush1.bf16.msra.mxu0 %v7616
    %8338 = vmatprep.subr.bf16.mxu0 %v7622
    %8339 = vmatpush1.bf16.msra.mxu0 %v7621
    %8340 = vmatprep.subr.bf16.mxu0 %v7627
    %8341 = vmatpush1.bf16.msra.mxu0 %v7626
    %8342 = vmatprep.subr.bf16.mxu0 %v7632
    %8343 = vmatpush1.bf16.msra.mxu0 %v7631
    %8344 = vmatprep.subr.bf16.mxu0 %v7637
    %8345 = vmatpush1.bf16.msra.mxu0 %v7636
    %8346 = vmatprep.subr.bf16.mxu0 %v7642
    %8347 = vmatpush1.bf16.msra.mxu0 %v7641
    %8348 = vmatprep.subr.bf16.mxu0 %v7647
    %8349 = vmatpush1.bf16.msra.mxu0 %v7646
    %8350 = vmatprep.subr.bf16.mxu0 %v7652
    %8351 = vmatpush1.bf16.msra.mxu0 %v7651
    %8352 = vmatprep.subr.bf16.mxu0 %v7657
    %8353 = vmatpush1.bf16.msra.mxu0 %v7656
    %8354 = vmatprep.subr.bf16.mxu0 %v7662
    %8355 = vmatpush1.bf16.msra.mxu0 %v7661
    %8356 = vmatprep.subr.bf16.mxu0 %v7667
    %8357 = vmatpush1.bf16.msra.mxu0 %v7666
    %8358 = vmatprep.subr.bf16.mxu0 %v7672
    %8359 = vmatpush1.bf16.msra.mxu0 %v7671
    %8360 = vmatprep.subr.bf16.mxu0 %v7677
    %8361 = vmatpush1.bf16.msra.mxu0 %v7676
    %8362 = vmatprep.subr.bf16.mxu0 %v7682
    %8363 = vmatpush1.bf16.msra.mxu0 %v7681
    %8364 = vmatprep.subr.bf16.mxu0 %v7687
    %8365 = vmatpush1.bf16.msra.mxu0 %v7686
    %8366 = vmatprep.subr.bf16.mxu0 %v7692
    %8367 = vmatpush1.bf16.msra.mxu0 %v7691
    %8368 = vmatprep.mubr.bf16.mxu0 %v5997
    %8369 = vmatmul.mubr.bf16.gmra.mrb[0].mxu0 %v5996
    %v8370 = vpop.f32.mrb[0].mxu0
    %v8371 = vadd.f32 %v6442, %v8370
    %v8372 = vpop.f32.mrb[0].mxu0
    %v8373 = vadd.f32 %v6446, %v8372
    %v8374 = vpop.f32.mrb[0].mxu0
    %v8375 = vpop.f32.mrb[0].mxu0
    %8376 = vdwg.mxu0
    %8377 = vmatprep.subr.bf16.mxu0 %v7697
    %8378 = vmatpush1.bf16.msra.mxu0 %v7696
    %8379 = vmatprep.subr.bf16.mxu0 %v7702
    %8380 = vmatpush1.bf16.msra.mxu0 %v7701
    %8381 = vmatprep.subr.bf16.mxu0 %v7707
    %8382 = vmatpush1.bf16.msra.mxu0 %v7706
    %8383 = vmatprep.subr.bf16.mxu0 %v7712
    %8384 = vmatpush1.bf16.msra.mxu0 %v7711
    %8385 = vmatprep.subr.bf16.mxu0 %v7717
    %8386 = vmatpush1.bf16.msra.mxu0 %v7716
    %8387 = vmatprep.subr.bf16.mxu0 %v7722
    %8388 = vmatpush1.bf16.msra.mxu0 %v7721
    %8389 = vmatprep.subr.bf16.mxu0 %v7727
    %8390 = vmatpush1.bf16.msra.mxu0 %v7726
    %8391 = vmatprep.subr.bf16.mxu0 %v7732
    %8392 = vmatpush1.bf16.msra.mxu0 %v7731
    %8393 = vmatprep.subr.bf16.mxu0 %v7737
    %8394 = vmatpush1.bf16.msra.mxu0 %v7736
    %8395 = vmatprep.subr.bf16.mxu0 %v7742
    %8396 = vmatpush1.bf16.msra.mxu0 %v7741
    %8397 = vmatprep.subr.bf16.mxu0 %v7747
    %8398 = vmatpush1.bf16.msra.mxu0 %v7746
    %8399 = vmatprep.subr.bf16.mxu0 %v7752
    %8400 = vmatpush1.bf16.msra.mxu0 %v7751
    %8401 = vmatprep.subr.bf16.mxu0 %v7757
    %8402 = vmatpush1.bf16.msra.mxu0 %v7756
    %8403 = vmatprep.subr.bf16.mxu0 %v7762
    %8404 = vmatpush1.bf16.msra.mxu0 %v7761
    %8405 = vmatprep.subr.bf16.mxu0 %v7767
    %8406 = vmatpush1.bf16.msra.mxu0 %v7766
    %8407 = vmatprep.subr.bf16.mxu0 %v7772
    %8408 = vmatpush1.bf16.msra.mxu0 %v7771
    %8409 = vmatprep.mubr.bf16.mxu0 %v5999
    %8410 = vmatmul.mubr.bf16.gmra.mrb[0].mxu0 %v5998
    %v8411 = vpop.f32.mrb[0].mxu0
    %v8412 = vadd.f32 %v8371, %v8411
    %v8413 = vpop.f32.mrb[0].mxu0
    %v8414 = vadd.f32 %v8373, %v8413
    %v8415 = vpop.f32.mrb[0].mxu0
    %v8416 = vpop.f32.mrb[0].mxu0
    %8417 = vdwg.mxu0
    %8418 = vmatprep.subr.bf16.mxu0 %v7777
    %8419 = vmatpush1.bf16.msra.mxu0 %v7776
    %8420 = vmatprep.subr.bf16.mxu0 %v7782
    %8421 = vmatpush1.bf16.msra.mxu0 %v7781
    %8422 = vmatprep.subr.bf16.mxu0 %v7787
    %8423 = vmatpush1.bf16.msra.mxu0 %v7786
    %8424 = vmatprep.subr.bf16.mxu0 %v7792
    %8425 = vmatpush1.bf16.msra.mxu0 %v7791
    %8426 = vmatprep.subr.bf16.mxu0 %v7797
    %8427 = vmatpush1.bf16.msra.mxu0 %v7796
    %8428 = vmatprep.subr.bf16.mxu0 %v7802
    %8429 = vmatpush1.bf16.msra.mxu0 %v7801
    %8430 = vmatprep.subr.bf16.mxu0 %v7807
    %8431 = vmatpush1.bf16.msra.mxu0 %v7806
    %8432 = vmatprep.subr.bf16.mxu0 %v7812
    %8433 = vmatpush1.bf16.msra.mxu0 %v7811
    %8434 = vmatprep.subr.bf16.mxu0 %v7817
    %8435 = vmatpush1.bf16.msra.mxu0 %v7816
    %8436 = vmatprep.subr.bf16.mxu0 %v7822
    %8437 = vmatpush1.bf16.msra.mxu0 %v7821
    %8438 = vmatprep.subr.bf16.mxu0 %v7827
    %8439 = vmatpush1.bf16.msra.mxu0 %v7826
    %8440 = vmatprep.subr.bf16.mxu0 %v7832
    %8441 = vmatpush1.bf16.msra.mxu0 %v7831
    %8442 = vmatprep.subr.bf16.mxu0 %v7837
    %8443 = vmatpush1.bf16.msra.mxu0 %v7836
    %8444 = vmatprep.subr.bf16.mxu0 %v7842
    %8445 = vmatpush1.bf16.msra.mxu0 %v7841
    %8446 = vmatprep.subr.bf16.mxu0 %v7847
    %8447 = vmatpush1.bf16.msra.mxu0 %v7846
    %8448 = vmatprep.subr.bf16.mxu0 %v7852
    %8449 = vmatpush1.bf16.msra.mxu0 %v7851
    %8450 = vmatprep.mubr.bf16.mxu0 %v6001
    %8451 = vmatmul.mubr.bf16.gmra.mrb[0].mxu0 %v6000
    %v8452 = vpop.f32.mrb[0].mxu0
    %v8453 = vadd.f32 %v8412, %v8452
    %v8454 = vpop.f32.mrb[0].mxu0
    %v8455 = vadd.f32 %v8414, %v8454
    %v8456 = vpop.f32.mrb[0].mxu0
    %v8457 = vpop.f32.mrb[0].mxu0
    %8458 = vdwg.mxu0
    %8459 = vmatprep.subr.bf16.mxu0 %v7857
    %8460 = vmatpush1.bf16.msra.mxu0 %v7856
    %8461 = vmatprep.subr.bf16.mxu0 %v7862
    %8462 = vmatpush1.bf16.msra.mxu0 %v7861
    %8463 = vmatprep.subr.bf16.mxu0 %v7867
    %8464 = vmatpush1.bf16.msra.mxu0 %v7866
    %8465 = vmatprep.subr.bf16.mxu0 %v7872
    %8466 = vmatpush1.bf16.msra.mxu0 %v7871
    %8467 = vmatprep.subr.bf16.mxu0 %v7877
    %8468 = vmatpush1.bf16.msra.mxu0 %v7876
    %8469 = vmatprep.subr.bf16.mxu0 %v7882
    %8470 = vmatpush1.bf16.msra.mxu0 %v7881
    %8471 = vmatprep.subr.bf16.mxu0 %v7887
    %8472 = vmatpush1.bf16.msra.mxu0 %v7886
    %8473 = vmatprep.subr.bf16.mxu0 %v7892
    %8474 = vmatpush1.bf16.msra.mxu0 %v7891
    %8475 = vmatprep.subr.bf16.mxu0 %v7897
    %8476 = vmatpush1.bf16.msra.mxu0 %v7896
    %8477 = vmatprep.subr.bf16.mxu0 %v7902
    %8478 = vmatpush1.bf16.msra.mxu0 %v7901
    %8479 = vmatprep.subr.bf16.mxu0 %v7907
    %8480 = vmatpush1.bf16.msra.mxu0 %v7906
    %8481 = vmatprep.subr.bf16.mxu0 %v7912
    %8482 = vmatpush1.bf16.msra.mxu0 %v7911
    %8483 = vmatprep.subr.bf16.mxu0 %v7917
    %8484 = vmatpush1.bf16.msra.mxu0 %v7916
    %8485 = vmatprep.subr.bf16.mxu0 %v7922
    %8486 = vmatpush1.bf16.msra.mxu0 %v7921
    %8487 = vmatprep.subr.bf16.mxu0 %v7927
    %8488 = vmatpush1.bf16.msra.mxu0 %v7926
    %8489 = vmatprep.subr.bf16.mxu0 %v7932
    %8490 = vmatpush1.bf16.msra.mxu0 %v7931
    %8491 = vmatprep.mubr.bf16.mxu0 %v6003
    %8492 = vmatmul.mubr.bf16.gmra.mrb[0].mxu0 %v6002
    %v8493 = vpop.f32.mrb[0].mxu0
    %v8494 = vadd.f32 %v8453, %v8493
    %v8495 = vpop.f32.mrb[0].mxu0
    %v8496 = vadd.f32 %v8455, %v8495
    %v8497 = vpop.f32.mrb[0].mxu0
    %v8498 = vpop.f32.mrb[0].mxu0
    %8499 = vdwg.mxu0
    %8500 = vmatprep.subr.bf16.mxu0 %v7937
    %8501 = vmatpush1.bf16.msra.mxu0 %v7936
    %8502 = vmatprep.subr.bf16.mxu0 %v7942
    %8503 = vmatpush1.bf16.msra.mxu0 %v7941
    %8504 = vmatprep.subr.bf16.mxu0 %v7947
    %8505 = vmatpush1.bf16.msra.mxu0 %v7946
    %8506 = vmatprep.subr.bf16.mxu0 %v7952
    %8507 = vmatpush1.bf16.msra.mxu0 %v7951
    %8508 = vmatprep.subr.bf16.mxu0 %v7957
    %8509 = vmatpush1.bf16.msra.mxu0 %v7956
    %8510 = vmatprep.subr.bf16.mxu0 %v7962
    %8511 = vmatpush1.bf16.msra.mxu0 %v7961
    %8512 = vmatprep.subr.bf16.mxu0 %v7967
    %8513 = vmatpush1.bf16.msra.mxu0 %v7966
    %8514 = vmatprep.subr.bf16.mxu0 %v7972
    %8515 = vmatpush1.bf16.msra.mxu0 %v7971
    %8516 = vmatprep.subr.bf16.mxu0 0
    %8517 = vmatpush1.bf16.msra.mxu0 0
    %8518 = vmatprep.subr.bf16.mxu0 0
    %8519 = vmatpush1.bf16.msra.mxu0 0
    %8520 = vmatprep.subr.bf16.mxu0 0
    %8521 = vmatpush1.bf16.msra.mxu0 0
    %8522 = vmatprep.subr.bf16.mxu0 0
    %8523 = vmatpush1.bf16.msra.mxu0 0
    %8524 = vmatprep.subr.bf16.mxu0 0
    %8525 = vmatpush1.bf16.msra.mxu0 0
    %8526 = vmatprep.subr.bf16.mxu0 0
    %8527 = vmatpush1.bf16.msra.mxu0 0
    %8528 = vmatprep.subr.bf16.mxu0 0
    %8529 = vmatpush1.bf16.msra.mxu0 0
    %8530 = vmatprep.subr.bf16.mxu0 0
    %8531 = vmatpush1.bf16.msra.mxu0 0
    %8532 = vmatprep.mubr.bf16.mxu0 0
    %8533 = vmatmul.mubr.bf16.gmra.mrb[0].mxu0 %v6004
    %v8534 = vpop.f32.mrb[0].mxu0
    %v8535 = vadd.f32 %v8494, %v8534
    %v8536 = vpop.f32.mrb[0].mxu0
    %v8537 = vadd.f32 %v8496, %v8536
    %v8538 = vpop.f32.mrb[0].mxu0
    %v8539 = vpop.f32.mrb[0].mxu0
    %8540 = vdwg.mxu0
    %8541 = vmatprep.subr.bf16.mxu0 %v7619
    %8542 = vmatpush1.bf16.msra.mxu0 %v7618
    %8543 = vmatprep.subr.bf16.mxu0 %v7624
    %8544 = vmatpush1.bf16.msra.mxu0 %v7623
    %8545 = vmatprep.subr.bf16.mxu0 %v7629
    %8546 = vmatpush1.bf16.msra.mxu0 %v7628
    %8547 = vmatprep.subr.bf16.mxu0 %v7634
    %8548 = vmatpush1.bf16.msra.mxu0 %v7633
    %8549 = vmatprep.subr.bf16.mxu0 %v7639
    %8550 = vmatpush1.bf16.msra.mxu0 %v7638
    %8551 = vmatprep.subr.bf16.mxu0 %v7644
    %8552 = vmatpush1.bf16.msra.mxu0 %v7643
    %8553 = vmatprep.subr.bf16.mxu0 %v7649
    %8554 = vmatpush1.bf16.msra.mxu0 %v7648
    %8555 = vmatprep.subr.bf16.mxu0 %v7654
    %8556 = vmatpush1.bf16.msra.mxu0 %v7653
    %8557 = vmatprep.subr.bf16.mxu0 %v7659
    %8558 = vmatpush1.bf16.msra.mxu0 %v7658
    %8559 = vmatprep.subr.bf16.mxu0 %v7664
    %8560 = vmatpush1.bf16.msra.mxu0 %v7663
    %8561 = vmatprep.subr.bf16.mxu0 %v7669
    %8562 = vmatpush1.bf16.msra.mxu0 %v7668
    %8563 = vmatprep.subr.bf16.mxu0 %v7674
    %8564 = vmatpush1.bf16.msra.mxu0 %v7673
    %8565 = vmatprep.subr.bf16.mxu0 %v7679
    %8566 = vmatpush1.bf16.msra.mxu0 %v7678
    %8567 = vmatprep.subr.bf16.mxu0 %v7684
    %8568 = vmatpush1.bf16.msra.mxu0 %v7683
    %8569 = vmatprep.subr.bf16.mxu0 %v7689
    %8570 = vmatpush1.bf16.msra.mxu0 %v7688
    %8571 = vmatprep.subr.bf16.mxu0 %v7694
    %8572 = vmatpush1.bf16.msra.mxu0 %v7693
    %8573 = vmatprep.mubr.bf16.mxu0 %v5997
    %8574 = vmatmul.mubr.bf16.gmra.mrb[0].mxu0 %v5996
    %v8575 = vpop.f32.mrb[0].mxu0
    %v8576 = vadd.f32 %v6450, %v8575
    %v8577 = vpop.f32.mrb[0].mxu0
    %v8578 = vadd.f32 %v6454, %v8577
    %v8579 = vpop.f32.mrb[0].mxu0
    %v8580 = vpop.f32.mrb[0].mxu0
    %8581 = vdwg.mxu0
    %8582 = vmatprep.subr.bf16.mxu0 %v7699
    %8583 = vmatpush1.bf16.msra.mxu0 %v7698
    %8584 = vmatprep.subr.bf16.mxu0 %v7704
    %8585 = vmatpush1.bf16.msra.mxu0 %v7703
    %8586 = vmatprep.subr.bf16.mxu0 %v7709
    %8587 = vmatpush1.bf16.msra.mxu0 %v7708
    %8588 = vmatprep.subr.bf16.mxu0 %v7714
    %8589 = vmatpush1.bf16.msra.mxu0 %v7713
    %8590 = vmatprep.subr.bf16.mxu0 %v7719
    %8591 = vmatpush1.bf16.msra.mxu0 %v7718
    %8592 = vmatprep.subr.bf16.mxu0 %v7724
    %8593 = vmatpush1.bf16.msra.mxu0 %v7723
    %8594 = vmatprep.subr.bf16.mxu0 %v7729
    %8595 = vmatpush1.bf16.msra.mxu0 %v7728
    %8596 = vmatprep.subr.bf16.mxu0 %v7734
    %8597 = vmatpush1.bf16.msra.mxu0 %v7733
    %8598 = vmatprep.subr.bf16.mxu0 %v7739
    %8599 = vmatpush1.bf16.msra.mxu0 %v7738
    %8600 = vmatprep.subr.bf16.mxu0 %v7744
    %8601 = vmatpush1.bf16.msra.mxu0 %v7743
    %8602 = vmatprep.subr.bf16.mxu0 %v7749
    %8603 = vmatpush1.bf16.msra.mxu0 %v7748
    %8604 = vmatprep.subr.bf16.mxu0 %v7754
    %8605 = vmatpush1.bf16.msra.mxu0 %v7753
    %8606 = vmatprep.subr.bf16.mxu0 %v7759
    %8607 = vmatpush1.bf16.msra.mxu0 %v7758
    %8608 = vmatprep.subr.bf16.mxu0 %v7764
    %8609 = vmatpush1.bf16.msra.mxu0 %v7763
    %8610 = vmatprep.subr.bf16.mxu0 %v7769
    %8611 = vmatpush1.bf16.msra.mxu0 %v7768
    %8612 = vmatprep.subr.bf16.mxu0 %v7774
    %8613 = vmatpush1.bf16.msra.mxu0 %v7773
    %8614 = vmatprep.mubr.bf16.mxu0 %v5999
    %8615 = vmatmul.mubr.bf16.gmra.mrb[0].mxu0 %v5998
    %v8616 = vpop.f32.mrb[0].mxu0
    %v8617 = vadd.f32 %v8576, %v8616
    %v8618 = vpop.f32.mrb[0].mxu0
    %v8619 = vadd.f32 %v8578, %v8618
    %v8620 = vpop.f32.mrb[0].mxu0
    %v8621 = vpop.f32.mrb[0].mxu0
    %8622 = vdwg.mxu0
    %8623 = vmatprep.subr.bf16.mxu0 %v7779
    %8624 = vmatpush1.bf16.msra.mxu0 %v7778
    %8625 = vmatprep.subr.bf16.mxu0 %v7784
    %8626 = vmatpush1.bf16.msra.mxu0 %v7783
    %8627 = vmatprep.subr.bf16.mxu0 %v7789
    %8628 = vmatpush1.bf16.msra.mxu0 %v7788
    %8629 = vmatprep.subr.bf16.mxu0 %v7794
    %8630 = vmatpush1.bf16.msra.mxu0 %v7793
    %8631 = vmatprep.subr.bf16.mxu0 %v7799
    %8632 = vmatpush1.bf16.msra.mxu0 %v7798
    %8633 = vmatprep.subr.bf16.mxu0 %v7804
    %8634 = vmatpush1.bf16.msra.mxu0 %v7803
    %8635 = vmatprep.subr.bf16.mxu0 %v7809
    %8636 = vmatpush1.bf16.msra.mxu0 %v7808
    %8637 = vmatprep.subr.bf16.mxu0 %v7814
    %8638 = vmatpush1.bf16.msra.mxu0 %v7813
    %8639 = vmatprep.subr.bf16.mxu0 %v7819
    %8640 = vmatpush1.bf16.msra.mxu0 %v7818
    %8641 = vmatprep.subr.bf16.mxu0 %v7824
    %8642 = vmatpush1.bf16.msra.mxu0 %v7823
    %8643 = vmatprep.subr.bf16.mxu0 %v7829
    %8644 = vmatpush1.bf16.msra.mxu0 %v7828
    %8645 = vmatprep.subr.bf16.mxu0 %v7834
    %8646 = vmatpush1.bf16.msra.mxu0 %v7833
    %8647 = vmatprep.subr.bf16.mxu0 %v7839
    %8648 = vmatpush1.bf16.msra.mxu0 %v7838
    %8649 = vmatprep.subr.bf16.mxu0 %v7844
    %8650 = vmatpush1.bf16.msra.mxu0 %v7843
    %8651 = vmatprep.subr.bf16.mxu0 %v7849
    %8652 = vmatpush1.bf16.msra.mxu0 %v7848
    %8653 = vmatprep.subr.bf16.mxu0 %v7854
    %8654 = vmatpush1.bf16.msra.mxu0 %v7853
    %8655 = vmatprep.mubr.bf16.mxu0 %v6001
    %8656 = vmatmul.mubr.bf16.gmra.mrb[0].mxu0 %v6000
    %v8657 = vpop.f32.mrb[0].mxu0
    %v8658 = vadd.f32 %v8617, %v8657
    %v8659 = vpop.f32.mrb[0].mxu0
    %v8660 = vadd.f32 %v8619, %v8659
    %v8661 = vpop.f32.mrb[0].mxu0
    %v8662 = vpop.f32.mrb[0].mxu0
    %8663 = vdwg.mxu0
    %8664 = vmatprep.subr.bf16.mxu0 %v7859
    %8665 = vmatpush1.bf16.msra.mxu0 %v7858
    %8666 = vmatprep.subr.bf16.mxu0 %v7864
    %8667 = vmatpush1.bf16.msra.mxu0 %v7863
    %8668 = vmatprep.subr.bf16.mxu0 %v7869
    %8669 = vmatpush1.bf16.msra.mxu0 %v7868
    %8670 = vmatprep.subr.bf16.mxu0 %v7874
    %8671 = vmatpush1.bf16.msra.mxu0 %v7873
    %8672 = vmatprep.subr.bf16.mxu0 %v7879
    %8673 = vmatpush1.bf16.msra.mxu0 %v7878
    %8674 = vmatprep.subr.bf16.mxu0 %v7884
    %8675 = vmatpush1.bf16.msra.mxu0 %v7883
    %8676 = vmatprep.subr.bf16.mxu0 %v7889
    %8677 = vmatpush1.bf16.msra.mxu0 %v7888
    %8678 = vmatprep.subr.bf16.mxu0 %v7894
    %8679 = vmatpush1.bf16.msra.mxu0 %v7893
    %8680 = vmatprep.subr.bf16.mxu0 %v7899
    %8681 = vmatpush1.bf16.msra.mxu0 %v7898
    %8682 = vmatprep.subr.bf16.mxu0 %v7904
    %8683 = vmatpush1.bf16.msra.mxu0 %v7903
    %8684 = vmatprep.subr.bf16.mxu0 %v7909
    %8685 = vmatpush1.bf16.msra.mxu0 %v7908
    %8686 = vmatprep.subr.bf16.mxu0 %v7914
    %8687 = vmatpush1.bf16.msra.mxu0 %v7913
    %8688 = vmatprep.subr.bf16.mxu0 %v7919
    %8689 = vmatpush1.bf16.msra.mxu0 %v7918
    %8690 = vmatprep.subr.bf16.mxu0 %v7924
    %8691 = vmatpush1.bf16.msra.mxu0 %v7923
    %8692 = vmatprep.subr.bf16.mxu0 %v7929
    %8693 = vmatpush1.bf16.msra.mxu0 %v7928
    %8694 = vmatprep.subr.bf16.mxu0 %v7934
    %8695 = vmatpush1.bf16.msra.mxu0 %v7933
    %8696 = vmatprep.mubr.bf16.mxu0 %v6003
    %8697 = vmatmul.mubr.bf16.gmra.mrb[0].mxu0 %v6002
    %v8698 = vpop.f32.mrb[0].mxu0
    %v8699 = vadd.f32 %v8658, %v8698
    %v8700 = vpop.f32.mrb[0].mxu0
    %v8701 = vadd.f32 %v8660, %v8700
    %v8702 = vpop.f32.mrb[0].mxu0
    %v8703 = vpop.f32.mrb[0].mxu0
    %8704 = vdwg.mxu0
    %8705 = vmatprep.subr.bf16.mxu0 %v7939
    %8706 = vmatpush1.bf16.msra.mxu0 %v7938
    %8707 = vmatprep.subr.bf16.mxu0 %v7944
    %8708 = vmatpush1.bf16.msra.mxu0 %v7943
    %8709 = vmatprep.subr.bf16.mxu0 %v7949
    %8710 = vmatpush1.bf16.msra.mxu0 %v7948
    %8711 = vmatprep.subr.bf16.mxu0 %v7954
    %8712 = vmatpush1.bf16.msra.mxu0 %v7953
    %8713 = vmatprep.subr.bf16.mxu0 %v7959
    %8714 = vmatpush1.bf16.msra.mxu0 %v7958
    %8715 = vmatprep.subr.bf16.mxu0 %v7964
    %8716 = vmatpush1.bf16.msra.mxu0 %v7963
    %8717 = vmatprep.subr.bf16.mxu0 %v7969
    %8718 = vmatpush1.bf16.msra.mxu0 %v7968
    %8719 = vmatprep.subr.bf16.mxu0 %v7974
    %8720 = vmatpush1.bf16.msra.mxu0 %v7973
    %8721 = vmatprep.subr.bf16.mxu0 0
    %8722 = vmatpush1.bf16.msra.mxu0 0
    %8723 = vmatprep.subr.bf16.mxu0 0
    %8724 = vmatpush1.bf16.msra.mxu0 0
    %8725 = vmatprep.subr.bf16.mxu0 0
    %8726 = vmatpush1.bf16.msra.mxu0 0
    %8727 = vmatprep.subr.bf16.mxu0 0
    %8728 = vmatpush1.bf16.msra.mxu0 0
    %8729 = vmatprep.subr.bf16.mxu0 0
    %8730 = vmatpush1.bf16.msra.mxu0 0
    %8731 = vmatprep.subr.bf16.mxu0 0
    %8732 = vmatpush1.bf16.msra.mxu0 0
    %8733 = vmatprep.subr.bf16.mxu0 0
    %8734 = vmatpush1.bf16.msra.mxu0 0
    %8735 = vmatprep.subr.bf16.mxu0 0
    %8736 = vmatpush1.bf16.msra.mxu0 0
    %8737 = vmatprep.mubr.bf16.mxu0 0
    %8738 = vmatmul.mubr.bf16.gmra.mrb[0].mxu0 %v6004
    %v8739 = vpop.f32.mrb[0].mxu0
    %v8740 = vadd.f32 %v8699, %v8739
    %v8741 = vpop.f32.mrb[0].mxu0
    %v8742 = vadd.f32 %v8701, %v8741
    %v8743 = vpop.f32.mrb[0].mxu0
    %v8744 = vpop.f32.mrb[0].mxu0
    %8745 = vdwg.mxu0
    %8746 = vmatprep.subr.bf16.mxu0 0
    %8747 = vmatpush1.bf16.msra.mxu0 %v7620
    %8748 = vmatprep.subr.bf16.mxu0 0
    %8749 = vmatpush1.bf16.msra.mxu0 %v7625
    %8750 = vmatprep.subr.bf16.mxu0 0
    %8751 = vmatpush1.bf16.msra.mxu0 %v7630
    %8752 = vmatprep.subr.bf16.mxu0 0
    %8753 = vmatpush1.bf16.msra.mxu0 %v7635
    %8754 = vmatprep.subr.bf16.mxu0 0
    %8755 = vmatpush1.bf16.msra.mxu0 %v7640
    %8756 = vmatprep.subr.bf16.mxu0 0
    %8757 = vmatpush1.bf16.msra.mxu0 %v7645
    %8758 = vmatprep.subr.bf16.mxu0 0
    %8759 = vmatpush1.bf16.msra.mxu0 %v7650
    %8760 = vmatprep.subr.bf16.mxu0 0
    %8761 = vmatpush1.bf16.msra.mxu0 %v7655
    %8762 = vmatprep.subr.bf16.mxu0 0
    %8763 = vmatpush1.bf16.msra.mxu0 %v7660
    %8764 = vmatprep.subr.bf16.mxu0 0
    %8765 = vmatpush1.bf16.msra.mxu0 %v7665
    %8766 = vmatprep.subr.bf16.mxu0 0
    %8767 = vmatpush1.bf16.msra.mxu0 %v7670
    %8768 = vmatprep.subr.bf16.mxu0 0
    %8769 = vmatpush1.bf16.msra.mxu0 %v7675
    %8770 = vmatprep.subr.bf16.mxu0 0
    %8771 = vmatpush1.bf16.msra.mxu0 %v7680
    %8772 = vmatprep.subr.bf16.mxu0 0
    %8773 = vmatpush1.bf16.msra.mxu0 %v7685
    %8774 = vmatprep.subr.bf16.mxu0 0
    %8775 = vmatpush1.bf16.msra.mxu0 %v7690
    %8776 = vmatprep.subr.bf16.mxu0 0
    %8777 = vmatpush1.bf16.msra.mxu0 %v7695
    %8778 = vmatprep.mubr.bf16.mxu0 %v5997
    %8779 = vmatmul.mubr.bf16.gmra.mrb[0].mxu0 %v5996
    %v8780 = vpop.f32.mrb[0].mxu0
    %v8781 = vadd.f32 %v6458, %v8780
    %v8782 = vpop.f32.mrb[0].mxu0
    %v8783 = vpop.f32.mrb[0].mxu0
    %v8784 = vpop.f32.mrb[0].mxu0
    %8785 = vdwg.mxu0
    %8786 = vmatprep.subr.bf16.mxu0 0
    %8787 = vmatpush1.bf16.msra.mxu0 %v7700
    %8788 = vmatprep.subr.bf16.mxu0 0
    %8789 = vmatpush1.bf16.msra.mxu0 %v7705
    %8790 = vmatprep.subr.bf16.mxu0 0
    %8791 = vmatpush1.bf16.msra.mxu0 %v7710
    %8792 = vmatprep.subr.bf16.mxu0 0
    %8793 = vmatpush1.bf16.msra.mxu0 %v7715
    %8794 = vmatprep.subr.bf16.mxu0 0
    %8795 = vmatpush1.bf16.msra.mxu0 %v7720
    %8796 = vmatprep.subr.bf16.mxu0 0
    %8797 = vmatpush1.bf16.msra.mxu0 %v7725
    %8798 = vmatprep.subr.bf16.mxu0 0
    %8799 = vmatpush1.bf16.msra.mxu0 %v7730
    %8800 = vmatprep.subr.bf16.mxu0 0
    %8801 = vmatpush1.bf16.msra.mxu0 %v7735
    %8802 = vmatprep.subr.bf16.mxu0 0
    %8803 = vmatpush1.bf16.msra.mxu0 %v7740
    %8804 = vmatprep.subr.bf16.mxu0 0
    %8805 = vmatpush1.bf16.msra.mxu0 %v7745
    %8806 = vmatprep.subr.bf16.mxu0 0
    %8807 = vmatpush1.bf16.msra.mxu0 %v7750
    %8808 = vmatprep.subr.bf16.mxu0 0
    %8809 = vmatpush1.bf16.msra.mxu0 %v7755
    %8810 = vmatprep.subr.bf16.mxu0 0
    %8811 = vmatpush1.bf16.msra.mxu0 %v7760
    %8812 = vmatprep.subr.bf16.mxu0 0
    %8813 = vmatpush1.bf16.msra.mxu0 %v7765
    %8814 = vmatprep.subr.bf16.mxu0 0
    %8815 = vmatpush1.bf16.msra.mxu0 %v7770
    %8816 = vmatprep.subr.bf16.mxu0 0
    %8817 = vmatpush1.bf16.msra.mxu0 %v7775
    %8818 = vmatprep.mubr.bf16.mxu0 %v5999
    %8819 = vmatmul.mubr.bf16.gmra.mrb[0].mxu0 %v5998
    %v8820 = vpop.f32.mrb[0].mxu0
    %v8821 = vadd.f32 %v8781, %v8820
    %v8822 = vpop.f32.mrb[0].mxu0
    %v8823 = vpop.f32.mrb[0].mxu0
    %v8824 = vpop.f32.mrb[0].mxu0
    %8825 = vdwg.mxu0
    %8826 = vmatprep.subr.bf16.mxu0 0
    %8827 = vmatpush1.bf16.msra.mxu0 %v7780
    %8828 = vmatprep.subr.bf16.mxu0 0
    %8829 = vmatpush1.bf16.msra.mxu0 %v7785
    %8830 = vmatprep.subr.bf16.mxu0 0
    %8831 = vmatpush1.bf16.msra.mxu0 %v7790
    %8832 = vmatprep.subr.bf16.mxu0 0
    %8833 = vmatpush1.bf16.msra.mxu0 %v7795
    %8834 = vmatprep.subr.bf16.mxu0 0
    %8835 = vmatpush1.bf16.msra.mxu0 %v7800
    %8836 = vmatprep.subr.bf16.mxu0 0
    %8837 = vmatpush1.bf16.msra.mxu0 %v7805
    %8838 = vmatprep.subr.bf16.mxu0 0
    %8839 = vmatpush1.bf16.msra.mxu0 %v7810
    %8840 = vmatprep.subr.bf16.mxu0 0
    %8841 = vmatpush1.bf16.msra.mxu0 %v7815
    %8842 = vmatprep.subr.bf16.mxu0 0
    %8843 = vmatpush1.bf16.msra.mxu0 %v7820
    %8844 = vmatprep.subr.bf16.mxu0 0
    %8845 = vmatpush1.bf16.msra.mxu0 %v7825
    %8846 = vmatprep.subr.bf16.mxu0 0
    %8847 = vmatpush1.bf16.msra.mxu0 %v7830
    %8848 = vmatprep.subr.bf16.mxu0 0
    %8849 = vmatpush1.bf16.msra.mxu0 %v7835
    %8850 = vmatprep.subr.bf16.mxu0 0
    %8851 = vmatpush1.bf16.msra.mxu0 %v7840
    %8852 = vmatprep.subr.bf16.mxu0 0
    %8853 = vmatpush1.bf16.msra.mxu0 %v7845
    %8854 = vmatprep.subr.bf16.mxu0 0
    %8855 = vmatpush1.bf16.msra.mxu0 %v7850
    %8856 = vmatprep.subr.bf16.mxu0 0
    %8857 = vmatpush1.bf16.msra.mxu0 %v7855
    %8858 = vmatprep.mubr.bf16.mxu0 %v6001
    %8859 = vmatmul.mubr.bf16.gmra.mrb[0].mxu0 %v6000
    %v8860 = vpop.f32.mrb[0].mxu0
    %v8861 = vadd.f32 %v8821, %v8860
    %v8862 = vpop.f32.mrb[0].mxu0
    %v8863 = vpop.f32.mrb[0].mxu0
    %v8864 = vpop.f32.mrb[0].mxu0
    %8865 = vdwg.mxu0
    %8866 = vmatprep.subr.bf16.mxu0 0
    %8867 = vmatpush1.bf16.msra.mxu0 %v7860
    %8868 = vmatprep.subr.bf16.mxu0 0
    %8869 = vmatpush1.bf16.msra.mxu0 %v7865
    %8870 = vmatprep.subr.bf16.mxu0 0
    %8871 = vmatpush1.bf16.msra.mxu0 %v7870
    %8872 = vmatprep.subr.bf16.mxu0 0
    %8873 = vmatpush1.bf16.msra.mxu0 %v7875
    %8874 = vmatprep.subr.bf16.mxu0 0
    %8875 = vmatpush1.bf16.msra.mxu0 %v7880
    %8876 = vmatprep.subr.bf16.mxu0 0
    %8877 = vmatpush1.bf16.msra.mxu0 %v7885
    %8878 = vmatprep.subr.bf16.mxu0 0
    %8879 = vmatpush1.bf16.msra.mxu0 %v7890
    %8880 = vmatprep.subr.bf16.mxu0 0
    %8881 = vmatpush1.bf16.msra.mxu0 %v7895
    %8882 = vmatprep.subr.bf16.mxu0 0
    %8883 = vmatpush1.bf16.msra.mxu0 %v7900
    %8884 = vmatprep.subr.bf16.mxu0 0
    %8885 = vmatpush1.bf16.msra.mxu0 %v7905
    %8886 = vmatprep.subr.bf16.mxu0 0
    %8887 = vmatpush1.bf16.msra.mxu0 %v7910
    %8888 = vmatprep.subr.bf16.mxu0 0
    %8889 = vmatpush1.bf16.msra.mxu0 %v7915
    %8890 = vmatprep.subr.bf16.mxu0 0
    %8891 = vmatpush1.bf16.msra.mxu0 %v7920
    %8892 = vmatprep.subr.bf16.mxu0 0
    %8893 = vmatpush1.bf16.msra.mxu0 %v7925
    %8894 = vmatprep.subr.bf16.mxu0 0
    %8895 = vmatpush1.bf16.msra.mxu0 %v7930
    %8896 = vmatprep.subr.bf16.mxu0 0
    %8897 = vmatpush1.bf16.msra.mxu0 %v7935
    %8898 = vmatprep.mubr.bf16.mxu0 %v6003
    %8899 = vmatmul.mubr.bf16.gmra.mrb[0].mxu0 %v6002
    %v8900 = vpop.f32.mrb[0].mxu0
    %v8901 = vadd.f32 %v8861, %v8900
    %v8902 = vpop.f32.mrb[0].mxu0
    %v8903 = vpop.f32.mrb[0].mxu0
    %v8904 = vpop.f32.mrb[0].mxu0
    %8905 = vdwg.mxu0
    %8906 = vmatprep.subr.bf16.mxu0 0
    %8907 = vmatpush1.bf16.msra.mxu0 %v7940
    %8908 = vmatprep.subr.bf16.mxu0 0
    %8909 = vmatpush1.bf16.msra.mxu0 %v7945
    %8910 = vmatprep.subr.bf16.mxu0 0
    %8911 = vmatpush1.bf16.msra.mxu0 %v7950
    %8912 = vmatprep.subr.bf16.mxu0 0
    %8913 = vmatpush1.bf16.msra.mxu0 %v7955
    %8914 = vmatprep.subr.bf16.mxu0 0
    %8915 = vmatpush1.bf16.msra.mxu0 %v7960
    %8916 = vmatprep.subr.bf16.mxu0 0
    %8917 = vmatpush1.bf16.msra.mxu0 %v7965
    %8918 = vmatprep.subr.bf16.mxu0 0
    %8919 = vmatpush1.bf16.msra.mxu0 %v7970
    %8920 = vmatprep.subr.bf16.mxu0 0
    %8921 = vmatpush1.bf16.msra.mxu0 %v7975
    %8922 = vmatprep.subr.bf16.mxu0 0
    %8923 = vmatpush1.bf16.msra.mxu0 0
    %8924 = vmatprep.subr.bf16.mxu0 0
    %8925 = vmatpush1.bf16.msra.mxu0 0
    %8926 = vmatprep.subr.bf16.mxu0 0
    %8927 = vmatpush1.bf16.msra.mxu0 0
    %8928 = vmatprep.subr.bf16.mxu0 0
    %8929 = vmatpush1.bf16.msra.mxu0 0
    %8930 = vmatprep.subr.bf16.mxu0 0
    %8931 = vmatpush1.bf16.msra.mxu0 0
    %8932 = vmatprep.subr.bf16.mxu0 0
    %8933 = vmatpush1.bf16.msra.mxu0 0
    %8934 = vmatprep.subr.bf16.mxu0 0
    %8935 = vmatpush1.bf16.msra.mxu0 0
    %8936 = vmatprep.subr.bf16.mxu0 0
    %8937 = vmatpush1.bf16.msra.mxu0 0
    %8938 = vmatprep.mubr.bf16.mxu0 0
    %8939 = vmatmul.mubr.bf16.gmra.mrb[0].mxu0 %v6004
    %v8940 = vpop.f32.mrb[0].mxu0
    %v8941 = vadd.f32 %v8901, %v8940
    %v8942 = vpop.f32.mrb[0].mxu0
    %v8943 = vpop.f32.mrb[0].mxu0
    %v8944 = vpop.f32.mrb[0].mxu0
    %8945 = vdwg.mxu0
    %v8946 = vmax.f32 %v8535, 0.0
    %v8947 = vmax.f32 %v8537, 0.0
    %v8948 = vmax.f32 %v8740, 0.0
    %v8949 = vmax.f32 %v8742, 0.0
    %v8950 = vmax.f32 %v8941, 0.0
    %v8951 = vpack.c.bf16 %v8946, %v8946
    %v8952 = vpack.c.bf16 %v8947, %v8947
    %v8953 = vpack.c.bf16 %v8948, %v8948
    %v8954 = vpack.c.bf16 %v8949, %v8949
    %v8955 = vpack.c.bf16 %v8950, %v8950
    %v8956 = vld [vmem:[#allocation12] sm:$0xff]
    %v8957 = vld [vmem:[#allocation12 + $0x8] sm:$0xff]
    %v8958 = vld [vmem:[#allocation12 + $0x10] sm:$0xff]
    %v8959 = vld [vmem:[#allocation12 + $0x18] sm:$0xff]
    %v8960 = vld [vmem:[#allocation12 + $0x20] sm:$0xff]
    %v8961 = vld [vmem:[#allocation12 + $0x28] sm:$0xff]
    %v8962 = vld [vmem:[#allocation12 + $0x30] sm:$0xff]
    %v8963 = vld [vmem:[#allocation12 + $0x38] sm:$0xff]
    %v8964 = vld [vmem:[#allocation12 + $0x40] sm:$0xff]
    %v8965 = vld [vmem:[#allocation12 + $0x48] sm:$0xff]
    %v8966 = vld [vmem:[#allocation12 + $0x50] sm:$0xff]
    %v8967 = vld [vmem:[#allocation12 + $0x58] sm:$0xff]
    %v8968 = vld [vmem:[#allocation12 + $0x60] sm:$0xff]
    %v8969 = vld [vmem:[#allocation12 + $0x68] sm:$0xff]
    %v8970 = vld [vmem:[#allocation12 + $0x70] sm:$0xff]
    %v8971 = vld [vmem:[#allocation12 + $0x78] sm:$0xff]
    %v8972 = vld [vmem:[#allocation12 + $0x80] sm:$0xff]
    %v8973 = vld [vmem:[#allocation12 + $0x88] sm:$0xff]
    %v8974 = vld [vmem:[#allocation12 + $0x90] sm:$0xff]
    %v8975 = vld [vmem:[#allocation12 + $0x98] sm:$0xff]
    %v8976 = vld [vmem:[#allocation12 + $0xa0] sm:$0xff]
    %v8977 = vld [vmem:[#allocation12 + $0xa8] sm:$0xff]
    %v8978 = vld [vmem:[#allocation12 + $0xb0] sm:$0xff]
    %v8979 = vld [vmem:[#allocation12 + $0xb8] sm:$0xff]
    %v8980 = vld [vmem:[#allocation12 + $0xc0] sm:$0xff]
    %v8981 = vld [vmem:[#allocation12 + $0xc8] sm:$0xff]
    %v8982 = vld [vmem:[#allocation12 + $0xd0] sm:$0xff]
    %v8983 = vld [vmem:[#allocation12 + $0xd8] sm:$0xff]
    %v8984 = vld [vmem:[#allocation12 + $0xe0] sm:$0xff]
    %v8985 = vld [vmem:[#allocation12 + $0xe8] sm:$0xff]
    %v8986 = vld [vmem:[#allocation12 + $0xf0] sm:$0xff]
    %v8987 = vld [vmem:[#allocation12 + $0xf8] sm:$0xff]
    %v8988 = vld [vmem:[#allocation12 + $0x100] sm:$0xff]
    %v8989 = vld [vmem:[#allocation12 + $0x108] sm:$0xff]
    %v8990 = vld [vmem:[#allocation12 + $0x110] sm:$0xff]
    %v8991 = vld [vmem:[#allocation12 + $0x118] sm:$0xff]
    %v8992 = vld [vmem:[#allocation12 + $0x120] sm:$0xff]
    %v8993 = vld [vmem:[#allocation12 + $0x128] sm:$0xff]
    %v8994 = vld [vmem:[#allocation12 + $0x130] sm:$0xff]
    %v8995 = vld [vmem:[#allocation12 + $0x138] sm:$0xff]
    %v8996 = vld [vmem:[#allocation12 + $0x140] sm:$0xff]
    %v8997 = vld [vmem:[#allocation12 + $0x148] sm:$0xff]
    %v8998 = vld [vmem:[#allocation12 + $0x150] sm:$0xff]
    %v8999 = vld [vmem:[#allocation12 + $0x158] sm:$0xff]
    %v9000 = vld [vmem:[#allocation12 + $0x160] sm:$0xff]
    %v9001 = vld [vmem:[#allocation12 + $0x168] sm:$0xff]
    %v9002 = vld [vmem:[#allocation12 + $0x170] sm:$0xff]
    %v9003 = vld [vmem:[#allocation12 + $0x178] sm:$0xff]
    %v9004 = vld [vmem:[#allocation12 + $0x180] sm:$0xff]
    %v9005 = vld [vmem:[#allocation12 + $0x188] sm:$0xff]
    %v9006 = vld [vmem:[#allocation12 + $0x190] sm:$0xff]
    %v9007 = vld [vmem:[#allocation12 + $0x198] sm:$0xff]
    %v9008 = vld [vmem:[#allocation12 + $0x1a0] sm:$0xff]
    %v9009 = vld [vmem:[#allocation12 + $0x1a8] sm:$0xff]
    %v9010 = vld [vmem:[#allocation12 + $0x1b0] sm:$0xff]
    %v9011 = vld [vmem:[#allocation12 + $0x1b8] sm:$0xff]
    %v9012 = vld [vmem:[#allocation12 + $0x1c0] sm:$0xff]
    %v9013 = vld [vmem:[#allocation12 + $0x1c8] sm:$0xff]
    %v9014 = vld [vmem:[#allocation12 + $0x1d0] sm:$0xff]
    %v9015 = vld [vmem:[#allocation12 + $0x1d8] sm:$0xff]
    %v9016 = vld [vmem:[#allocation12 + $0x1e0] sm:$0xff]
    %v9017 = vld [vmem:[#allocation12 + $0x1e8] sm:$0xff]
    %v9018 = vld [vmem:[#allocation12 + $0x1f0] sm:$0xff]
    %v9019 = vld [vmem:[#allocation12 + $0x1f8] sm:$0xff]
    %v9020 = vld [vmem:[#allocation12 + $0x200] sm:$0xff]
    %v9021 = vld [vmem:[#allocation12 + $0x208] sm:$0xff]
    %v9022 = vld [vmem:[#allocation12 + $0x210] sm:$0xff]
    %v9023 = vld [vmem:[#allocation12 + $0x218] sm:$0xff]
    %v9024 = vld [vmem:[#allocation12 + $0x220] sm:$0xff]
    %v9025 = vld [vmem:[#allocation12 + $0x228] sm:$0xff]
    %v9026 = vld [vmem:[#allocation12 + $0x230] sm:$0xff]
    %v9027 = vld [vmem:[#allocation12 + $0x238] sm:$0xff]
    %v9028 = vld [vmem:[#allocation12 + $0x240] sm:$0xff]
    %v9029 = vld [vmem:[#allocation12 + $0x248] sm:$0xff]
    %v9030 = vld [vmem:[#allocation12 + $0x250] sm:$0xff]
    %v9031 = vld [vmem:[#allocation12 + $0x258] sm:$0xff]
    %v9032 = vld [vmem:[#allocation12 + $0x260] sm:$0xff]
    %v9033 = vld [vmem:[#allocation12 + $0x268] sm:$0xff]
    %v9034 = vld [vmem:[#allocation12 + $0x270] sm:$0xff]
    %v9035 = vld [vmem:[#allocation12 + $0x278] sm:$0xff]
    %v9036 = vld [vmem:[#allocation12 + $0x280] sm:$0xff]
    %v9037 = vld [vmem:[#allocation12 + $0x288] sm:$0xff]
    %v9038 = vld [vmem:[#allocation12 + $0x290] sm:$0xff]
    %v9039 = vld [vmem:[#allocation12 + $0x298] sm:$0xff]
    %v9040 = vld [vmem:[#allocation12 + $0x2a0] sm:$0xff]
    %v9041 = vld [vmem:[#allocation12 + $0x2a8] sm:$0xff]
    %v9042 = vld [vmem:[#allocation12 + $0x2b0] sm:$0xff]
    %v9043 = vld [vmem:[#allocation12 + $0x2b8] sm:$0xff]
    %v9044 = vld [vmem:[#allocation12 + $0x2c0] sm:$0xff]
    %v9045 = vld [vmem:[#allocation12 + $0x2c8] sm:$0xff]
    %v9046 = vld [vmem:[#allocation12 + $0x2d0] sm:$0xff]
    %v9047 = vld [vmem:[#allocation12 + $0x2d8] sm:$0xff]
    %v9048 = vld [vmem:[#allocation12 + $0x2e0] sm:$0xff]
    %v9049 = vld [vmem:[#allocation12 + $0x2e8] sm:$0xff]
    %v9050 = vld [vmem:[#allocation12 + $0x2f0] sm:$0xff]
    %v9051 = vld [vmem:[#allocation12 + $0x2f8] sm:$0xff]
    %v9052 = vld [vmem:[#allocation12 + $0x300] sm:$0xff]
    %v9053 = vld [vmem:[#allocation12 + $0x308] sm:$0xff]
    %v9054 = vld [vmem:[#allocation12 + $0x310] sm:$0xff]
    %v9055 = vld [vmem:[#allocation12 + $0x318] sm:$0xff]
    %v9056 = vld [vmem:[#allocation12 + $0x320] sm:$0xff]
    %v9057 = vld [vmem:[#allocation12 + $0x328] sm:$0xff]
    %v9058 = vld [vmem:[#allocation12 + $0x330] sm:$0xff]
    %v9059 = vld [vmem:[#allocation12 + $0x338] sm:$0xff]
    %v9060 = vld [vmem:[#allocation12 + $0x340] sm:$0xff]
    %v9061 = vld [vmem:[#allocation12 + $0x348] sm:$0xff]
    %v9062 = vld [vmem:[#allocation12 + $0x350] sm:$0xff]
    %v9063 = vld [vmem:[#allocation12 + $0x358] sm:$0xff]
    %v9064 = vld [vmem:[#allocation12 + $0x360] sm:$0xff]
    %v9065 = vld [vmem:[#allocation12 + $0x368] sm:$0xff]
    %v9066 = vld [vmem:[#allocation12 + $0x370] sm:$0xff]
    %v9067 = vld [vmem:[#allocation12 + $0x378] sm:$0xff]
    %v9068 = vld [vmem:[#allocation12 + $0x380] sm:$0xff]
    %v9069 = vld [vmem:[#allocation12 + $0x388] sm:$0xff]
    %v9070 = vld [vmem:[#allocation12 + $0x390] sm:$0xff]
    %v9071 = vld [vmem:[#allocation12 + $0x398] sm:$0xff]
    %v9072 = vld [vmem:[#allocation12 + $0x3a0] sm:$0xff]
    %v9073 = vld [vmem:[#allocation12 + $0x3a8] sm:$0xff]
    %v9074 = vld [vmem:[#allocation12 + $0x3b0] sm:$0xff]
    %v9075 = vld [vmem:[#allocation12 + $0x3b8] sm:$0xff]
    %v9076 = vld [vmem:[#allocation12 + $0x3c0] sm:$0xff]
    %v9077 = vld [vmem:[#allocation12 + $0x3c8] sm:$0xff]
    %v9078 = vld [vmem:[#allocation12 + $0x3d0] sm:$0xff]
    %v9079 = vld [vmem:[#allocation12 + $0x3d8] sm:$0xff]
    %v9080 = vld [vmem:[#allocation12 + $0x3e0] sm:$0xff]
    %v9081 = vld [vmem:[#allocation12 + $0x3e8] sm:$0xff]
    %v9082 = vld [vmem:[#allocation12 + $0x3f0] sm:$0xff]
    %v9083 = vld [vmem:[#allocation12 + $0x3f8] sm:$0xff]
    %v9084 = vld [vmem:[#allocation12 + $0x400] sm:$0xff]
    %v9085 = vld [vmem:[#allocation12 + $0x408] sm:$0xff]
    %v9086 = vld [vmem:[#allocation12 + $0x410] sm:$0xff]
    %v9087 = vld [vmem:[#allocation12 + $0x418] sm:$0xff]
    %v9088 = vld [vmem:[#allocation12 + $0x420] sm:$0xff]
    %v9089 = vld [vmem:[#allocation12 + $0x428] sm:$0xff]
    %v9090 = vld [vmem:[#allocation12 + $0x430] sm:$0xff]
    %v9091 = vld [vmem:[#allocation12 + $0x438] sm:$0xff]
    %v9092 = vld [vmem:[#allocation12 + $0x440] sm:$0xff]
    %v9093 = vld [vmem:[#allocation12 + $0x448] sm:$0xff]
    %v9094 = vld [vmem:[#allocation12 + $0x450] sm:$0xff]
    %v9095 = vld [vmem:[#allocation12 + $0x458] sm:$0xff]
    %v9096 = vld [vmem:[#allocation12 + $0x460] sm:$0xff]
    %v9097 = vld [vmem:[#allocation12 + $0x468] sm:$0xff]
    %v9098 = vld [vmem:[#allocation12 + $0x470] sm:$0xff]
    %v9099 = vld [vmem:[#allocation12 + $0x478] sm:$0xff]
    %v9100 = vld [vmem:[#allocation12 + $0x480] sm:$0xff]
    %v9101 = vld [vmem:[#allocation12 + $0x488] sm:$0xff]
    %v9102 = vld [vmem:[#allocation12 + $0x490] sm:$0xff]
    %v9103 = vld [vmem:[#allocation12 + $0x498] sm:$0xff]
    %v9104 = vld [vmem:[#allocation12 + $0x4a0] sm:$0xff]
    %v9105 = vld [vmem:[#allocation12 + $0x4a8] sm:$0xff]
    %v9106 = vld [vmem:[#allocation12 + $0x4b0] sm:$0xff]
    %v9107 = vld [vmem:[#allocation12 + $0x4b8] sm:$0xff]
    %v9108 = vld [vmem:[#allocation12 + $0x4c0] sm:$0xff]
    %v9109 = vld [vmem:[#allocation12 + $0x4c8] sm:$0xff]
    %v9110 = vld [vmem:[#allocation12 + $0x4d0] sm:$0xff]
    %v9111 = vld [vmem:[#allocation12 + $0x4d8] sm:$0xff]
    %v9112 = vld [vmem:[#allocation12 + $0x4e0] sm:$0xff]
    %v9113 = vld [vmem:[#allocation12 + $0x4e8] sm:$0xff]
    %v9114 = vld [vmem:[#allocation12 + $0x4f0] sm:$0xff]
    %v9115 = vld [vmem:[#allocation12 + $0x4f8] sm:$0xff]
    %v9116 = vld [vmem:[#allocation13] sm:$0xf]
    %v9118 = vlaneseq
    %v9119 = vshrl.u32 %v9118, 7
    %v9120 = vsub.s32 0, %v9119
    %v9121 = vrot.slane %v9116, %v9120
    %v9122 = vlaneseq
    %v9123 = vshrl.u32 %v9122, 7
    %v9124 = vsub.s32 1, %v9123
    %v9125 = vrot.slane %v9116, %v9124
    %v9126 = vlaneseq
    %v9127 = vshrl.u32 %v9126, 7
    %v9128 = vsub.s32 2, %v9127
    %v9129 = vrot.slane %v9116, %v9128
    %v9130 = vlaneseq
    %v9131 = vshrl.u32 %v9130, 7
    %v9132 = vsub.s32 3, %v9131
    %v9133 = vrot.slane %v9116, %v9132
    %v9298 = vunpack.c.l.b16 %v8956
    %v9299 = vunpack.c.h.b16 %v8956
    %v9300 = vunpack.c.l.b16 %v8957
    %v9301 = vunpack.c.h.b16 %v8957
    %v9302 = vunpack.c.l.b16 %v8958
    %v9303 = vunpack.c.h.b16 %v8958
    %v9304 = vunpack.c.l.b16 %v8959
    %v9305 = vunpack.c.h.b16 %v8959
    %v9306 = vunpack.c.l.b16 %v8960
    %v9307 = vunpack.c.h.b16 %v8960
    %v9308 = vunpack.c.l.b16 %v8961
    %v9309 = vunpack.c.h.b16 %v8961
    %v9310 = vunpack.c.l.b16 %v8962
    %v9311 = vunpack.c.h.b16 %v8962
    %v9312 = vunpack.c.l.b16 %v8963
    %v9313 = vunpack.c.h.b16 %v8963
    %v9314 = vunpack.c.l.b16 %v8964
    %v9315 = vunpack.c.h.b16 %v8964
    %v9316 = vunpack.c.l.b16 %v8965
    %v9317 = vunpack.c.h.b16 %v8965
    %v9318 = vunpack.c.l.b16 %v8966
    %v9319 = vunpack.c.h.b16 %v8966
    %v9320 = vunpack.c.l.b16 %v8967
    %v9321 = vunpack.c.h.b16 %v8967
    %v9322 = vunpack.c.l.b16 %v8968
    %v9323 = vunpack.c.h.b16 %v8968
    %v9324 = vunpack.c.l.b16 %v8969
    %v9325 = vunpack.c.h.b16 %v8969
    %v9326 = vunpack.c.l.b16 %v8970
    %v9327 = vunpack.c.h.b16 %v8970
    %v9328 = vunpack.c.l.b16 %v8971
    %v9329 = vunpack.c.h.b16 %v8971
    %v9330 = vunpack.c.l.b16 %v8972
    %v9331 = vunpack.c.h.b16 %v8972
    %v9332 = vunpack.c.l.b16 %v8973
    %v9333 = vunpack.c.h.b16 %v8973
    %v9334 = vunpack.c.l.b16 %v8974
    %v9335 = vunpack.c.h.b16 %v8974
    %v9336 = vunpack.c.l.b16 %v8975
    %v9337 = vunpack.c.h.b16 %v8975
    %v9338 = vunpack.c.l.b16 %v8976
    %v9339 = vunpack.c.h.b16 %v8976
    %v9340 = vunpack.c.l.b16 %v8977
    %v9341 = vunpack.c.h.b16 %v8977
    %v9342 = vunpack.c.l.b16 %v8978
    %v9343 = vunpack.c.h.b16 %v8978
    %v9344 = vunpack.c.l.b16 %v8979
    %v9345 = vunpack.c.h.b16 %v8979
    %v9346 = vunpack.c.l.b16 %v8980
    %v9347 = vunpack.c.h.b16 %v8980
    %v9348 = vunpack.c.l.b16 %v8981
    %v9349 = vunpack.c.h.b16 %v8981
    %v9350 = vunpack.c.l.b16 %v8982
    %v9351 = vunpack.c.h.b16 %v8982
    %v9352 = vunpack.c.l.b16 %v8983
    %v9353 = vunpack.c.h.b16 %v8983
    %v9354 = vunpack.c.l.b16 %v8984
    %v9355 = vunpack.c.h.b16 %v8984
    %v9356 = vunpack.c.l.b16 %v8985
    %v9357 = vunpack.c.h.b16 %v8985
    %v9358 = vunpack.c.l.b16 %v8986
    %v9359 = vunpack.c.h.b16 %v8986
    %v9360 = vunpack.c.l.b16 %v8987
    %v9361 = vunpack.c.h.b16 %v8987
    %v9362 = vunpack.c.l.b16 %v8988
    %v9363 = vunpack.c.h.b16 %v8988
    %v9364 = vunpack.c.l.b16 %v8989
    %v9365 = vunpack.c.h.b16 %v8989
    %v9366 = vunpack.c.l.b16 %v8990
    %v9367 = vunpack.c.h.b16 %v8990
    %v9368 = vunpack.c.l.b16 %v8991
    %v9369 = vunpack.c.h.b16 %v8991
    %v9370 = vunpack.c.l.b16 %v8992
    %v9371 = vunpack.c.h.b16 %v8992
    %v9372 = vunpack.c.l.b16 %v8993
    %v9373 = vunpack.c.h.b16 %v8993
    %v9374 = vunpack.c.l.b16 %v8994
    %v9375 = vunpack.c.h.b16 %v8994
    %v9376 = vunpack.c.l.b16 %v8995
    %v9377 = vunpack.c.h.b16 %v8995
    %v9378 = vunpack.c.l.b16 %v8996
    %v9379 = vunpack.c.h.b16 %v8996
    %v9380 = vunpack.c.l.b16 %v8997
    %v9381 = vunpack.c.h.b16 %v8997
    %v9382 = vunpack.c.l.b16 %v8998
    %v9383 = vunpack.c.h.b16 %v8998
    %v9384 = vunpack.c.l.b16 %v8999
    %v9385 = vunpack.c.h.b16 %v8999
    %v9386 = vunpack.c.l.b16 %v9000
    %v9387 = vunpack.c.h.b16 %v9000
    %v9388 = vunpack.c.l.b16 %v9001
    %v9389 = vunpack.c.h.b16 %v9001
    %v9390 = vunpack.c.l.b16 %v9002
    %v9391 = vunpack.c.h.b16 %v9002
    %v9392 = vunpack.c.l.b16 %v9003
    %v9393 = vunpack.c.h.b16 %v9003
    %v9394 = vunpack.c.l.b16 %v9004
    %v9395 = vunpack.c.h.b16 %v9004
    %v9396 = vunpack.c.l.b16 %v9005
    %v9397 = vunpack.c.h.b16 %v9005
    %v9398 = vunpack.c.l.b16 %v9006
    %v9399 = vunpack.c.h.b16 %v9006
    %v9400 = vunpack.c.l.b16 %v9007
    %v9401 = vunpack.c.h.b16 %v9007
    %v9402 = vunpack.c.l.b16 %v9008
    %v9403 = vunpack.c.h.b16 %v9008
    %v9404 = vunpack.c.l.b16 %v9009
    %v9405 = vunpack.c.h.b16 %v9009
    %v9406 = vunpack.c.l.b16 %v9010
    %v9407 = vunpack.c.h.b16 %v9010
    %v9408 = vunpack.c.l.b16 %v9011
    %v9409 = vunpack.c.h.b16 %v9011
    %v9410 = vunpack.c.l.b16 %v9012
    %v9411 = vunpack.c.h.b16 %v9012
    %v9412 = vunpack.c.l.b16 %v9013
    %v9413 = vunpack.c.h.b16 %v9013
    %v9414 = vunpack.c.l.b16 %v9014
    %v9415 = vunpack.c.h.b16 %v9014
    %v9416 = vunpack.c.l.b16 %v9015
    %v9417 = vunpack.c.h.b16 %v9015
    %v9418 = vunpack.c.l.b16 %v9016
    %v9419 = vunpack.c.h.b16 %v9016
    %v9420 = vunpack.c.l.b16 %v9017
    %v9421 = vunpack.c.h.b16 %v9017
    %v9422 = vunpack.c.l.b16 %v9018
    %v9423 = vunpack.c.h.b16 %v9018
    %v9424 = vunpack.c.l.b16 %v9019
    %v9425 = vunpack.c.h.b16 %v9019
    %v9426 = vunpack.c.l.b16 %v9020
    %v9427 = vunpack.c.h.b16 %v9020
    %v9428 = vunpack.c.l.b16 %v9021
    %v9429 = vunpack.c.h.b16 %v9021
    %v9430 = vunpack.c.l.b16 %v9022
    %v9431 = vunpack.c.h.b16 %v9022
    %v9432 = vunpack.c.l.b16 %v9023
    %v9433 = vunpack.c.h.b16 %v9023
    %v9434 = vunpack.c.l.b16 %v9024
    %v9435 = vunpack.c.h.b16 %v9024
    %v9436 = vunpack.c.l.b16 %v9025
    %v9437 = vunpack.c.h.b16 %v9025
    %v9438 = vunpack.c.l.b16 %v9026
    %v9439 = vunpack.c.h.b16 %v9026
    %v9440 = vunpack.c.l.b16 %v9027
    %v9441 = vunpack.c.h.b16 %v9027
    %v9442 = vunpack.c.l.b16 %v9028
    %v9443 = vunpack.c.h.b16 %v9028
    %v9444 = vunpack.c.l.b16 %v9029
    %v9445 = vunpack.c.h.b16 %v9029
    %v9446 = vunpack.c.l.b16 %v9030
    %v9447 = vunpack.c.h.b16 %v9030
    %v9448 = vunpack.c.l.b16 %v9031
    %v9449 = vunpack.c.h.b16 %v9031
    %v9450 = vunpack.c.l.b16 %v9032
    %v9451 = vunpack.c.h.b16 %v9032
    %v9452 = vunpack.c.l.b16 %v9033
    %v9453 = vunpack.c.h.b16 %v9033
    %v9454 = vunpack.c.l.b16 %v9034
    %v9455 = vunpack.c.h.b16 %v9034
    %v9456 = vunpack.c.l.b16 %v9035
    %v9457 = vunpack.c.h.b16 %v9035
    %v9458 = vunpack.c.l.b16 %v9036
    %v9459 = vunpack.c.h.b16 %v9036
    %v9460 = vunpack.c.l.b16 %v9037
    %v9461 = vunpack.c.h.b16 %v9037
    %v9462 = vunpack.c.l.b16 %v9038
    %v9463 = vunpack.c.h.b16 %v9038
    %v9464 = vunpack.c.l.b16 %v9039
    %v9465 = vunpack.c.h.b16 %v9039
    %v9466 = vunpack.c.l.b16 %v9040
    %v9467 = vunpack.c.h.b16 %v9040
    %v9468 = vunpack.c.l.b16 %v9041
    %v9469 = vunpack.c.h.b16 %v9041
    %v9470 = vunpack.c.l.b16 %v9042
    %v9471 = vunpack.c.h.b16 %v9042
    %v9472 = vunpack.c.l.b16 %v9043
    %v9473 = vunpack.c.h.b16 %v9043
    %v9474 = vunpack.c.l.b16 %v9044
    %v9475 = vunpack.c.h.b16 %v9044
    %v9476 = vunpack.c.l.b16 %v9045
    %v9477 = vunpack.c.h.b16 %v9045
    %v9478 = vunpack.c.l.b16 %v9046
    %v9479 = vunpack.c.h.b16 %v9046
    %v9480 = vunpack.c.l.b16 %v9047
    %v9481 = vunpack.c.h.b16 %v9047
    %v9482 = vunpack.c.l.b16 %v9048
    %v9483 = vunpack.c.h.b16 %v9048
    %v9484 = vunpack.c.l.b16 %v9049
    %v9485 = vunpack.c.h.b16 %v9049
    %v9486 = vunpack.c.l.b16 %v9050
    %v9487 = vunpack.c.h.b16 %v9050
    %v9488 = vunpack.c.l.b16 %v9051
    %v9489 = vunpack.c.h.b16 %v9051
    %v9490 = vunpack.c.l.b16 %v9052
    %v9491 = vunpack.c.h.b16 %v9052
    %v9492 = vunpack.c.l.b16 %v9053
    %v9493 = vunpack.c.h.b16 %v9053
    %v9494 = vunpack.c.l.b16 %v9054
    %v9495 = vunpack.c.h.b16 %v9054
    %v9496 = vunpack.c.l.b16 %v9055
    %v9497 = vunpack.c.h.b16 %v9055
    %v9498 = vunpack.c.l.b16 %v9056
    %v9499 = vunpack.c.h.b16 %v9056
    %v9500 = vunpack.c.l.b16 %v9057
    %v9501 = vunpack.c.h.b16 %v9057
    %v9502 = vunpack.c.l.b16 %v9058
    %v9503 = vunpack.c.h.b16 %v9058
    %v9504 = vunpack.c.l.b16 %v9059
    %v9505 = vunpack.c.h.b16 %v9059
    %v9506 = vunpack.c.l.b16 %v9060
    %v9507 = vunpack.c.h.b16 %v9060
    %v9508 = vunpack.c.l.b16 %v9061
    %v9509 = vunpack.c.h.b16 %v9061
    %v9510 = vunpack.c.l.b16 %v9062
    %v9511 = vunpack.c.h.b16 %v9062
    %v9512 = vunpack.c.l.b16 %v9063
    %v9513 = vunpack.c.h.b16 %v9063
    %v9514 = vunpack.c.l.b16 %v9064
    %v9515 = vunpack.c.h.b16 %v9064
    %v9516 = vunpack.c.l.b16 %v9065
    %v9517 = vunpack.c.h.b16 %v9065
    %v9518 = vunpack.c.l.b16 %v9066
    %v9519 = vunpack.c.h.b16 %v9066
    %v9520 = vunpack.c.l.b16 %v9067
    %v9521 = vunpack.c.h.b16 %v9067
    %v9522 = vunpack.c.l.b16 %v9068
    %v9523 = vunpack.c.h.b16 %v9068
    %v9524 = vunpack.c.l.b16 %v9069
    %v9525 = vunpack.c.h.b16 %v9069
    %v9526 = vunpack.c.l.b16 %v9070
    %v9527 = vunpack.c.h.b16 %v9070
    %v9528 = vunpack.c.l.b16 %v9071
    %v9529 = vunpack.c.h.b16 %v9071
    %v9530 = vunpack.c.l.b16 %v9072
    %v9531 = vunpack.c.h.b16 %v9072
    %v9532 = vunpack.c.l.b16 %v9073
    %v9533 = vunpack.c.h.b16 %v9073
    %v9534 = vunpack.c.l.b16 %v9074
    %v9535 = vunpack.c.h.b16 %v9074
    %v9536 = vunpack.c.l.b16 %v9075
    %v9537 = vunpack.c.h.b16 %v9075
    %v9538 = vunpack.c.l.b16 %v9076
    %v9539 = vunpack.c.h.b16 %v9076
    %v9540 = vunpack.c.l.b16 %v9077
    %v9541 = vunpack.c.h.b16 %v9077
    %v9542 = vunpack.c.l.b16 %v9078
    %v9543 = vunpack.c.h.b16 %v9078
    %v9544 = vunpack.c.l.b16 %v9079
    %v9545 = vunpack.c.h.b16 %v9079
    %v9546 = vunpack.c.l.b16 %v9080
    %v9547 = vunpack.c.h.b16 %v9080
    %v9548 = vunpack.c.l.b16 %v9081
    %v9549 = vunpack.c.h.b16 %v9081
    %v9550 = vunpack.c.l.b16 %v9082
    %v9551 = vunpack.c.h.b16 %v9082
    %v9552 = vunpack.c.l.b16 %v9083
    %v9553 = vunpack.c.h.b16 %v9083
    %v9554 = vunpack.c.l.b16 %v9084
    %v9555 = vunpack.c.h.b16 %v9084
    %v9556 = vunpack.c.l.b16 %v9085
    %v9557 = vunpack.c.h.b16 %v9085
    %v9558 = vunpack.c.l.b16 %v9086
    %v9559 = vunpack.c.h.b16 %v9086
    %v9560 = vunpack.c.l.b16 %v9087
    %v9561 = vunpack.c.h.b16 %v9087
    %v9562 = vunpack.c.l.b16 %v9088
    %v9563 = vunpack.c.h.b16 %v9088
    %v9564 = vunpack.c.l.b16 %v9089
    %v9565 = vunpack.c.h.b16 %v9089
    %v9566 = vunpack.c.l.b16 %v9090
    %v9567 = vunpack.c.h.b16 %v9090
    %v9568 = vunpack.c.l.b16 %v9091
    %v9569 = vunpack.c.h.b16 %v9091
    %v9570 = vunpack.c.l.b16 %v9092
    %v9571 = vunpack.c.h.b16 %v9092
    %v9572 = vunpack.c.l.b16 %v9093
    %v9573 = vunpack.c.h.b16 %v9093
    %v9574 = vunpack.c.l.b16 %v9094
    %v9575 = vunpack.c.h.b16 %v9094
    %v9576 = vunpack.c.l.b16 %v9095
    %v9577 = vunpack.c.h.b16 %v9095
    %v9578 = vunpack.c.l.b16 %v9096
    %v9579 = vunpack.c.h.b16 %v9096
    %v9580 = vunpack.c.l.b16 %v9097
    %v9581 = vunpack.c.h.b16 %v9097
    %v9582 = vunpack.c.l.b16 %v9098
    %v9583 = vunpack.c.h.b16 %v9098
    %v9584 = vunpack.c.l.b16 %v9099
    %v9585 = vunpack.c.h.b16 %v9099
    %v9586 = vunpack.c.l.b16 %v9100
    %v9587 = vunpack.c.h.b16 %v9100
    %v9588 = vunpack.c.l.b16 %v9101
    %v9589 = vunpack.c.h.b16 %v9101
    %v9590 = vunpack.c.l.b16 %v9102
    %v9591 = vunpack.c.h.b16 %v9102
    %v9592 = vunpack.c.l.b16 %v9103
    %v9593 = vunpack.c.h.b16 %v9103
    %v9594 = vunpack.c.l.b16 %v9104
    %v9595 = vunpack.c.h.b16 %v9104
    %v9596 = vunpack.c.l.b16 %v9105
    %v9597 = vunpack.c.h.b16 %v9105
    %v9598 = vunpack.c.l.b16 %v9106
    %v9599 = vunpack.c.h.b16 %v9106
    %v9600 = vunpack.c.l.b16 %v9107
    %v9601 = vunpack.c.h.b16 %v9107
    %v9602 = vunpack.c.l.b16 %v9108
    %v9603 = vunpack.c.h.b16 %v9108
    %v9604 = vunpack.c.l.b16 %v9109
    %v9605 = vunpack.c.h.b16 %v9109
    %v9606 = vunpack.c.l.b16 %v9110
    %v9607 = vunpack.c.h.b16 %v9110
    %v9608 = vunpack.c.l.b16 %v9111
    %v9609 = vunpack.c.h.b16 %v9111
    %v9610 = vunpack.c.l.b16 %v9112
    %v9611 = vunpack.c.h.b16 %v9112
    %v9612 = vunpack.c.l.b16 %v9113
    %v9613 = vunpack.c.h.b16 %v9113
    %v9614 = vunpack.c.l.b16 %v9114
    %v9615 = vunpack.c.h.b16 %v9114
    %v9616 = vunpack.c.l.b16 %v9115
    %v9617 = vunpack.c.h.b16 %v9115
    %v9618 = vpack.c.b16 %v9302, %v9298
    %v9619 = vpack.c.b16 %v9303, %v9299
    %v9620 = vpack.c.b16 %v9304, %v9300
    %v9621 = vpack.c.b16 %v9305, %v9301
    %v9622 = vpack.c.b16 %v9310, %v9306
    %v9623 = vpack.c.b16 %v9311, %v9307
    %v9624 = vpack.c.b16 %v9312, %v9308
    %v9625 = vpack.c.b16 %v9313, %v9309
    %v9626 = vpack.c.b16 %v9318, %v9314
    %v9627 = vpack.c.b16 %v9319, %v9315
    %v9628 = vpack.c.b16 %v9320, %v9316
    %v9629 = vpack.c.b16 %v9321, %v9317
    %v9630 = vpack.c.b16 %v9326, %v9322
    %v9631 = vpack.c.b16 %v9327, %v9323
    %v9632 = vpack.c.b16 %v9328, %v9324
    %v9633 = vpack.c.b16 %v9329, %v9325
    %v9634 = vpack.c.b16 %v9334, %v9330
    %v9635 = vpack.c.b16 %v9335, %v9331
    %v9636 = vpack.c.b16 %v9336, %v9332
    %v9637 = vpack.c.b16 %v9337, %v9333
    %v9638 = vpack.c.b16 %v9342, %v9338
    %v9639 = vpack.c.b16 %v9343, %v9339
    %v9640 = vpack.c.b16 %v9344, %v9340
    %v9641 = vpack.c.b16 %v9345, %v9341
    %v9642 = vpack.c.b16 %v9350, %v9346
    %v9643 = vpack.c.b16 %v9351, %v9347
    %v9644 = vpack.c.b16 %v9352, %v9348
    %v9645 = vpack.c.b16 %v9353, %v9349
    %v9646 = vpack.c.b16 %v9358, %v9354
    %v9647 = vpack.c.b16 %v9359, %v9355
    %v9648 = vpack.c.b16 %v9360, %v9356
    %v9649 = vpack.c.b16 %v9361, %v9357
    %v9650 = vpack.c.b16 %v9366, %v9362
    %v9651 = vpack.c.b16 %v9367, %v9363
    %v9652 = vpack.c.b16 %v9368, %v9364
    %v9653 = vpack.c.b16 %v9369, %v9365
    %v9654 = vpack.c.b16 %v9374, %v9370
    %v9655 = vpack.c.b16 %v9375, %v9371
    %v9656 = vpack.c.b16 %v9376, %v9372
    %v9657 = vpack.c.b16 %v9377, %v9373
    %v9658 = vpack.c.b16 %v9382, %v9378
    %v9659 = vpack.c.b16 %v9383, %v9379
    %v9660 = vpack.c.b16 %v9384, %v9380
    %v9661 = vpack.c.b16 %v9385, %v9381
    %v9662 = vpack.c.b16 %v9390, %v9386
    %v9663 = vpack.c.b16 %v9391, %v9387
    %v9664 = vpack.c.b16 %v9392, %v9388
    %v9665 = vpack.c.b16 %v9393, %v9389
    %v9666 = vpack.c.b16 %v9398, %v9394
    %v9667 = vpack.c.b16 %v9399, %v9395
    %v9668 = vpack.c.b16 %v9400, %v9396
    %v9669 = vpack.c.b16 %v9401, %v9397
    %v9670 = vpack.c.b16 %v9406, %v9402
    %v9671 = vpack.c.b16 %v9407, %v9403
    %v9672 = vpack.c.b16 %v9408, %v9404
    %v9673 = vpack.c.b16 %v9409, %v9405
    %v9674 = vpack.c.b16 %v9414, %v9410
    %v9675 = vpack.c.b16 %v9415, %v9411
    %v9676 = vpack.c.b16 %v9416, %v9412
    %v9677 = vpack.c.b16 %v9417, %v9413
    %v9678 = vpack.c.b16 %v9422, %v9418
    %v9679 = vpack.c.b16 %v9423, %v9419
    %v9680 = vpack.c.b16 %v9424, %v9420
    %v9681 = vpack.c.b16 %v9425, %v9421
    %v9682 = vpack.c.b16 %v9430, %v9426
    %v9683 = vpack.c.b16 %v9431, %v9427
    %v9684 = vpack.c.b16 %v9432, %v9428
    %v9685 = vpack.c.b16 %v9433, %v9429
    %v9686 = vpack.c.b16 %v9438, %v9434
    %v9687 = vpack.c.b16 %v9439, %v9435
    %v9688 = vpack.c.b16 %v9440, %v9436
    %v9689 = vpack.c.b16 %v9441, %v9437
    %v9690 = vpack.c.b16 %v9446, %v9442
    %v9691 = vpack.c.b16 %v9447, %v9443
    %v9692 = vpack.c.b16 %v9448, %v9444
    %v9693 = vpack.c.b16 %v9449, %v9445
    %v9694 = vpack.c.b16 %v9454, %v9450
    %v9695 = vpack.c.b16 %v9455, %v9451
    %v9696 = vpack.c.b16 %v9456, %v9452
    %v9697 = vpack.c.b16 %v9457, %v9453
    %v9698 = vpack.c.b16 %v9462, %v9458
    %v9699 = vpack.c.b16 %v9463, %v9459
    %v9700 = vpack.c.b16 %v9464, %v9460
    %v9701 = vpack.c.b16 %v9465, %v9461
    %v9702 = vpack.c.b16 %v9470, %v9466
    %v9703 = vpack.c.b16 %v9471, %v9467
    %v9704 = vpack.c.b16 %v9472, %v9468
    %v9705 = vpack.c.b16 %v9473, %v9469
    %v9706 = vpack.c.b16 %v9478, %v9474
    %v9707 = vpack.c.b16 %v9479, %v9475
    %v9708 = vpack.c.b16 %v9480, %v9476
    %v9709 = vpack.c.b16 %v9481, %v9477
    %v9710 = vpack.c.b16 %v9486, %v9482
    %v9711 = vpack.c.b16 %v9487, %v9483
    %v9712 = vpack.c.b16 %v9488, %v9484
    %v9713 = vpack.c.b16 %v9489, %v9485
    %v9714 = vpack.c.b16 %v9494, %v9490
    %v9715 = vpack.c.b16 %v9495, %v9491
    %v9716 = vpack.c.b16 %v9496, %v9492
    %v9717 = vpack.c.b16 %v9497, %v9493
    %v9718 = vpack.c.b16 %v9502, %v9498
    %v9719 = vpack.c.b16 %v9503, %v9499
    %v9720 = vpack.c.b16 %v9504, %v9500
    %v9721 = vpack.c.b16 %v9505, %v9501
    %v9722 = vpack.c.b16 %v9510, %v9506
    %v9723 = vpack.c.b16 %v9511, %v9507
    %v9724 = vpack.c.b16 %v9512, %v9508
    %v9725 = vpack.c.b16 %v9513, %v9509
    %v9726 = vpack.c.b16 %v9518, %v9514
    %v9727 = vpack.c.b16 %v9519, %v9515
    %v9728 = vpack.c.b16 %v9520, %v9516
    %v9729 = vpack.c.b16 %v9521, %v9517
    %v9730 = vpack.c.b16 %v9526, %v9522
    %v9731 = vpack.c.b16 %v9527, %v9523
    %v9732 = vpack.c.b16 %v9528, %v9524
    %v9733 = vpack.c.b16 %v9529, %v9525
    %v9734 = vpack.c.b16 %v9534, %v9530
    %v9735 = vpack.c.b16 %v9535, %v9531
    %v9736 = vpack.c.b16 %v9536, %v9532
    %v9737 = vpack.c.b16 %v9537, %v9533
    %v9738 = vpack.c.b16 %v9542, %v9538
    %v9739 = vpack.c.b16 %v9543, %v9539
    %v9740 = vpack.c.b16 %v9544, %v9540
    %v9741 = vpack.c.b16 %v9545, %v9541
    %v9742 = vpack.c.b16 %v9550, %v9546
    %v9743 = vpack.c.b16 %v9551, %v9547
    %v9744 = vpack.c.b16 %v9552, %v9548
    %v9745 = vpack.c.b16 %v9553, %v9549
    %v9746 = vpack.c.b16 %v9558, %v9554
    %v9747 = vpack.c.b16 %v9559, %v9555
    %v9748 = vpack.c.b16 %v9560, %v9556
    %v9749 = vpack.c.b16 %v9561, %v9557
    %v9750 = vpack.c.b16 %v9566, %v9562
    %v9751 = vpack.c.b16 %v9567, %v9563
    %v9752 = vpack.c.b16 %v9568, %v9564
    %v9753 = vpack.c.b16 %v9569, %v9565
    %v9754 = vpack.c.b16 %v9574, %v9570
    %v9755 = vpack.c.b16 %v9575, %v9571
    %v9756 = vpack.c.b16 %v9576, %v9572
    %v9757 = vpack.c.b16 %v9577, %v9573
    %v9758 = vpack.c.b16 %v9582, %v9578
    %v9759 = vpack.c.b16 %v9583, %v9579
    %v9760 = vpack.c.b16 %v9584, %v9580
    %v9761 = vpack.c.b16 %v9585, %v9581
    %v9762 = vpack.c.b16 %v9590, %v9586
    %v9763 = vpack.c.b16 %v9591, %v9587
    %v9764 = vpack.c.b16 %v9592, %v9588
    %v9765 = vpack.c.b16 %v9593, %v9589
    %v9766 = vpack.c.b16 %v9598, %v9594
    %v9767 = vpack.c.b16 %v9599, %v9595
    %v9768 = vpack.c.b16 %v9600, %v9596
    %v9769 = vpack.c.b16 %v9601, %v9597
    %v9770 = vpack.c.b16 %v9606, %v9602
    %v9771 = vpack.c.b16 %v9607, %v9603
    %v9772 = vpack.c.b16 %v9608, %v9604
    %v9773 = vpack.c.b16 %v9609, %v9605
    %v9774 = vpack.c.b16 %v9614, %v9610
    %v9775 = vpack.c.b16 %v9615, %v9611
    %v9776 = vpack.c.b16 %v9616, %v9612
    %v9777 = vpack.c.b16 %v9617, %v9613
    %9938 = vmatprep.subr.bf16.mxu0 %v9619
    %9939 = vmatpush1.bf16.msra.mxu0 %v9618
    %9940 = vmatprep.subr.bf16.mxu0 %v9623
    %9941 = vmatpush1.bf16.msra.mxu0 %v9622
    %9942 = vmatprep.subr.bf16.mxu0 %v9627
    %9943 = vmatpush1.bf16.msra.mxu0 %v9626
    %9944 = vmatprep.subr.bf16.mxu0 %v9631
    %9945 = vmatpush1.bf16.msra.mxu0 %v9630
    %9946 = vmatprep.subr.bf16.mxu0 %v9635
    %9947 = vmatpush1.bf16.msra.mxu0 %v9634
    %9948 = vmatprep.subr.bf16.mxu0 %v9639
    %9949 = vmatpush1.bf16.msra.mxu0 %v9638
    %9950 = vmatprep.subr.bf16.mxu0 %v9643
    %9951 = vmatpush1.bf16.msra.mxu0 %v9642
    %9952 = vmatprep.subr.bf16.mxu0 %v9647
    %9953 = vmatpush1.bf16.msra.mxu0 %v9646
    %9954 = vmatprep.subr.bf16.mxu0 %v9651
    %9955 = vmatpush1.bf16.msra.mxu0 %v9650
    %9956 = vmatprep.subr.bf16.mxu0 %v9655
    %9957 = vmatpush1.bf16.msra.mxu0 %v9654
    %9958 = vmatprep.subr.bf16.mxu0 %v9659
    %9959 = vmatpush1.bf16.msra.mxu0 %v9658
    %9960 = vmatprep.subr.bf16.mxu0 %v9663
    %9961 = vmatpush1.bf16.msra.mxu0 %v9662
    %9962 = vmatprep.subr.bf16.mxu0 %v9667
    %9963 = vmatpush1.bf16.msra.mxu0 %v9666
    %9964 = vmatprep.subr.bf16.mxu0 %v9671
    %9965 = vmatpush1.bf16.msra.mxu0 %v9670
    %9966 = vmatprep.subr.bf16.mxu0 %v9675
    %9967 = vmatpush1.bf16.msra.mxu0 %v9674
    %9968 = vmatprep.subr.bf16.mxu0 %v9679
    %9969 = vmatpush1.bf16.msra.mxu0 %v9678
    %9970 = vmatprep.mubr.bf16.mxu0 %v8952
    %9971 = vmatmul.mubr.bf16.gmra.mrb[0].mxu0 %v8951
    %v9972 = vpop.f32.mrb[0].mxu0
    %v9973 = vadd.f32 %v9121, %v9972
    %v9974 = vpop.f32.mrb[0].mxu0
    %v9975 = vadd.f32 %v9125, %v9974
    %v9976 = vpop.f32.mrb[0].mxu0
    %v9977 = vpop.f32.mrb[0].mxu0
    %9978 = vdwg.mxu0
    %9979 = vmatprep.subr.bf16.mxu0 %v9683
    %9980 = vmatpush1.bf16.msra.mxu0 %v9682
    %9981 = vmatprep.subr.bf16.mxu0 %v9687
    %9982 = vmatpush1.bf16.msra.mxu0 %v9686
    %9983 = vmatprep.subr.bf16.mxu0 %v9691
    %9984 = vmatpush1.bf16.msra.mxu0 %v9690
    %9985 = vmatprep.subr.bf16.mxu0 %v9695
    %9986 = vmatpush1.bf16.msra.mxu0 %v9694
    %9987 = vmatprep.subr.bf16.mxu0 %v9699
    %9988 = vmatpush1.bf16.msra.mxu0 %v9698
    %9989 = vmatprep.subr.bf16.mxu0 %v9703
    %9990 = vmatpush1.bf16.msra.mxu0 %v9702
    %9991 = vmatprep.subr.bf16.mxu0 %v9707
    %9992 = vmatpush1.bf16.msra.mxu0 %v9706
    %9993 = vmatprep.subr.bf16.mxu0 %v9711
    %9994 = vmatpush1.bf16.msra.mxu0 %v9710
    %9995 = vmatprep.subr.bf16.mxu0 %v9715
    %9996 = vmatpush1.bf16.msra.mxu0 %v9714
    %9997 = vmatprep.subr.bf16.mxu0 %v9719
    %9998 = vmatpush1.bf16.msra.mxu0 %v9718
    %9999 = vmatprep.subr.bf16.mxu0 %v9723
    %10000 = vmatpush1.bf16.msra.mxu0 %v9722
    %10001 = vmatprep.subr.bf16.mxu0 %v9727
    %10002 = vmatpush1.bf16.msra.mxu0 %v9726
    %10003 = vmatprep.subr.bf16.mxu0 %v9731
    %10004 = vmatpush1.bf16.msra.mxu0 %v9730
    %10005 = vmatprep.subr.bf16.mxu0 %v9735
    %10006 = vmatpush1.bf16.msra.mxu0 %v9734
    %10007 = vmatprep.subr.bf16.mxu0 %v9739
    %10008 = vmatpush1.bf16.msra.mxu0 %v9738
    %10009 = vmatprep.subr.bf16.mxu0 %v9743
    %10010 = vmatpush1.bf16.msra.mxu0 %v9742
    %10011 = vmatprep.mubr.bf16.mxu0 %v8954
    %10012 = vmatmul.mubr.bf16.gmra.mrb[0].mxu0 %v8953
    %v10013 = vpop.f32.mrb[0].mxu0
    %v10014 = vadd.f32 %v9973, %v10013
    %v10015 = vpop.f32.mrb[0].mxu0
    %v10016 = vadd.f32 %v9975, %v10015
    %v10017 = vpop.f32.mrb[0].mxu0
    %v10018 = vpop.f32.mrb[0].mxu0
    %10019 = vdwg.mxu0
    %10020 = vmatprep.subr.bf16.mxu0 %v9747
    %10021 = vmatpush1.bf16.msra.mxu0 %v9746
    %10022 = vmatprep.subr.bf16.mxu0 %v9751
    %10023 = vmatpush1.bf16.msra.mxu0 %v9750
    %10024 = vmatprep.subr.bf16.mxu0 %v9755
    %10025 = vmatpush1.bf16.msra.mxu0 %v9754
    %10026 = vmatprep.subr.bf16.mxu0 %v9759
    %10027 = vmatpush1.bf16.msra.mxu0 %v9758
    %10028 = vmatprep.subr.bf16.mxu0 %v9763
    %10029 = vmatpush1.bf16.msra.mxu0 %v9762
    %10030 = vmatprep.subr.bf16.mxu0 %v9767
    %10031 = vmatpush1.bf16.msra.mxu0 %v9766
    %10032 = vmatprep.subr.bf16.mxu0 %v9771
    %10033 = vmatpush1.bf16.msra.mxu0 %v9770
    %10034 = vmatprep.subr.bf16.mxu0 %v9775
    %10035 = vmatpush1.bf16.msra.mxu0 %v9774
    %10036 = vmatprep.subr.bf16.mxu0 0
    %10037 = vmatpush1.bf16.msra.mxu0 0
    %10038 = vmatprep.subr.bf16.mxu0 0
    %10039 = vmatpush1.bf16.msra.mxu0 0
    %10040 = vmatprep.subr.bf16.mxu0 0
    %10041 = vmatpush1.bf16.msra.mxu0 0
    %10042 = vmatprep.subr.bf16.mxu0 0
    %10043 = vmatpush1.bf16.msra.mxu0 0
    %10044 = vmatprep.subr.bf16.mxu0 0
    %10045 = vmatpush1.bf16.msra.mxu0 0
    %10046 = vmatprep.subr.bf16.mxu0 0
    %10047 = vmatpush1.bf16.msra.mxu0 0
    %10048 = vmatprep.subr.bf16.mxu0 0
    %10049 = vmatpush1.bf16.msra.mxu0 0
    %10050 = vmatprep.subr.bf16.mxu0 0
    %10051 = vmatpush1.bf16.msra.mxu0 0
    %10052 = vmatprep.mubr.bf16.mxu0 0
    %10053 = vmatmul.mubr.bf16.gmra.mrb[0].mxu0 %v8955
    %v10054 = vpop.f32.mrb[0].mxu0
    %v10055 = vadd.f32 %v10014, %v10054
    %v10056 = vpop.f32.mrb[0].mxu0
    %v10057 = vadd.f32 %v10016, %v10056
    %v10058 = vpop.f32.mrb[0].mxu0
    %v10059 = vpop.f32.mrb[0].mxu0
    %10060 = vdwg.mxu0
    %10061 = vmatprep.subr.bf16.mxu0 %v9621
    %10062 = vmatpush1.bf16.msra.mxu0 %v9620
    %10063 = vmatprep.subr.bf16.mxu0 %v9625
    %10064 = vmatpush1.bf16.msra.mxu0 %v9624
    %10065 = vmatprep.subr.bf16.mxu0 %v9629
    %10066 = vmatpush1.bf16.msra.mxu0 %v9628
    %10067 = vmatprep.subr.bf16.mxu0 %v9633
    %10068 = vmatpush1.bf16.msra.mxu0 %v9632
    %10069 = vmatprep.subr.bf16.mxu0 %v9637
    %10070 = vmatpush1.bf16.msra.mxu0 %v9636
    %10071 = vmatprep.subr.bf16.mxu0 %v9641
    %10072 = vmatpush1.bf16.msra.mxu0 %v9640
    %10073 = vmatprep.subr.bf16.mxu0 %v9645
    %10074 = vmatpush1.bf16.msra.mxu0 %v9644
    %10075 = vmatprep.subr.bf16.mxu0 %v9649
    %10076 = vmatpush1.bf16.msra.mxu0 %v9648
    %10077 = vmatprep.subr.bf16.mxu0 %v9653
    %10078 = vmatpush1.bf16.msra.mxu0 %v9652
    %10079 = vmatprep.subr.bf16.mxu0 %v9657
    %10080 = vmatpush1.bf16.msra.mxu0 %v9656
    %10081 = vmatprep.subr.bf16.mxu0 %v9661
    %10082 = vmatpush1.bf16.msra.mxu0 %v9660
    %10083 = vmatprep.subr.bf16.mxu0 %v9665
    %10084 = vmatpush1.bf16.msra.mxu0 %v9664
    %10085 = vmatprep.subr.bf16.mxu0 %v9669
    %10086 = vmatpush1.bf16.msra.mxu0 %v9668
    %10087 = vmatprep.subr.bf16.mxu0 %v9673
    %10088 = vmatpush1.bf16.msra.mxu0 %v9672
    %10089 = vmatprep.subr.bf16.mxu0 %v9677
    %10090 = vmatpush1.bf16.msra.mxu0 %v9676
    %10091 = vmatprep.subr.bf16.mxu0 %v9681
    %10092 = vmatpush1.bf16.msra.mxu0 %v9680
    %10093 = vmatprep.mubr.bf16.mxu0 %v8952
    %10094 = vmatmul.mubr.bf16.gmra.mrb[0].mxu0 %v8951
    %v10095 = vpop.f32.mrb[0].mxu0
    %v10096 = vadd.f32 %v9129, %v10095
    %v10097 = vpop.f32.mrb[0].mxu0
    %v10098 = vadd.f32 %v9133, %v10097
    %v10099 = vpop.f32.mrb[0].mxu0
    %v10100 = vpop.f32.mrb[0].mxu0
    %10101 = vdwg.mxu0
    %10102 = vmatprep.subr.bf16.mxu0 %v9685
    %10103 = vmatpush1.bf16.msra.mxu0 %v9684
    %10104 = vmatprep.subr.bf16.mxu0 %v9689
    %10105 = vmatpush1.bf16.msra.mxu0 %v9688
    %10106 = vmatprep.subr.bf16.mxu0 %v9693
    %10107 = vmatpush1.bf16.msra.mxu0 %v9692
    %10108 = vmatprep.subr.bf16.mxu0 %v9697
    %10109 = vmatpush1.bf16.msra.mxu0 %v9696
    %10110 = vmatprep.subr.bf16.mxu0 %v9701
    %10111 = vmatpush1.bf16.msra.mxu0 %v9700
    %10112 = vmatprep.subr.bf16.mxu0 %v9705
    %10113 = vmatpush1.bf16.msra.mxu0 %v9704
    %10114 = vmatprep.subr.bf16.mxu0 %v9709
    %10115 = vmatpush1.bf16.msra.mxu0 %v9708
    %10116 = vmatprep.subr.bf16.mxu0 %v9713
    %10117 = vmatpush1.bf16.msra.mxu0 %v9712
    %10118 = vmatprep.subr.bf16.mxu0 %v9717
    %10119 = vmatpush1.bf16.msra.mxu0 %v9716
    %10120 = vmatprep.subr.bf16.mxu0 %v9721
    %10121 = vmatpush1.bf16.msra.mxu0 %v9720
    %10122 = vmatprep.subr.bf16.mxu0 %v9725
    %10123 = vmatpush1.bf16.msra.mxu0 %v9724
    %10124 = vmatprep.subr.bf16.mxu0 %v9729
    %10125 = vmatpush1.bf16.msra.mxu0 %v9728
    %10126 = vmatprep.subr.bf16.mxu0 %v9733
    %10127 = vmatpush1.bf16.msra.mxu0 %v9732
    %10128 = vmatprep.subr.bf16.mxu0 %v9737
    %10129 = vmatpush1.bf16.msra.mxu0 %v9736
    %10130 = vmatprep.subr.bf16.mxu0 %v9741
    %10131 = vmatpush1.bf16.msra.mxu0 %v9740
    %10132 = vmatprep.subr.bf16.mxu0 %v9745
    %10133 = vmatpush1.bf16.msra.mxu0 %v9744
    %10134 = vmatprep.mubr.bf16.mxu0 %v8954
    %10135 = vmatmul.mubr.bf16.gmra.mrb[0].mxu0 %v8953
    %v10136 = vpop.f32.mrb[0].mxu0
    %v10137 = vadd.f32 %v10096, %v10136
    %v10138 = vpop.f32.mrb[0].mxu0
    %v10139 = vadd.f32 %v10098, %v10138
    %v10140 = vpop.f32.mrb[0].mxu0
    %v10141 = vpop.f32.mrb[0].mxu0
    %10142 = vdwg.mxu0
    %10143 = vmatprep.subr.bf16.mxu0 %v9749
    %10144 = vmatpush1.bf16.msra.mxu0 %v9748
    %10145 = vmatprep.subr.bf16.mxu0 %v9753
    %10146 = vmatpush1.bf16.msra.mxu0 %v9752
    %10147 = vmatprep.subr.bf16.mxu0 %v9757
    %10148 = vmatpush1.bf16.msra.mxu0 %v9756
    %10149 = vmatprep.subr.bf16.mxu0 %v9761
    %10150 = vmatpush1.bf16.msra.mxu0 %v9760
    %10151 = vmatprep.subr.bf16.mxu0 %v9765
    %10152 = vmatpush1.bf16.msra.mxu0 %v9764
    %10153 = vmatprep.subr.bf16.mxu0 %v9769
    %10154 = vmatpush1.bf16.msra.mxu0 %v9768
    %10155 = vmatprep.subr.bf16.mxu0 %v9773
    %10156 = vmatpush1.bf16.msra.mxu0 %v9772
    %10157 = vmatprep.subr.bf16.mxu0 %v9777
    %10158 = vmatpush1.bf16.msra.mxu0 %v9776
    %10159 = vmatprep.subr.bf16.mxu0 0
    %10160 = vmatpush1.bf16.msra.mxu0 0
    %10161 = vmatprep.subr.bf16.mxu0 0
    %10162 = vmatpush1.bf16.msra.mxu0 0
    %10163 = vmatprep.subr.bf16.mxu0 0
    %10164 = vmatpush1.bf16.msra.mxu0 0
    %10165 = vmatprep.subr.bf16.mxu0 0
    %10166 = vmatpush1.bf16.msra.mxu0 0
    %10167 = vmatprep.subr.bf16.mxu0 0
    %10168 = vmatpush1.bf16.msra.mxu0 0
    %10169 = vmatprep.subr.bf16.mxu0 0
    %10170 = vmatpush1.bf16.msra.mxu0 0
    %10171 = vmatprep.subr.bf16.mxu0 0
    %10172 = vmatpush1.bf16.msra.mxu0 0
    %10173 = vmatprep.subr.bf16.mxu0 0
    %10174 = vmatpush1.bf16.msra.mxu0 0
    %10175 = vmatprep.mubr.bf16.mxu0 0
    %10176 = vmatmul.mubr.bf16.gmra.mrb[0].mxu0 %v8955
    %v10177 = vpop.f32.mrb[0].mxu0
    %v10178 = vadd.f32 %v10137, %v10177
    %v10179 = vpop.f32.mrb[0].mxu0
    %v10180 = vadd.f32 %v10139, %v10179
    %v10181 = vpop.f32.mrb[0].mxu0
    %v10182 = vpop.f32.mrb[0].mxu0
    %10183 = vdwg.mxu0
    %v10184 = vmax.f32 %v10055, 0.0
    %v10185 = vmax.f32 %v10057, 0.0
    %v10186 = vmax.f32 %v10178, 0.0
    %v10187 = vmax.f32 %v10180, 0.0
    %v10188 = vpack.c.bf16 %v10184, %v10184
    %v10189 = vpack.c.bf16 %v10185, %v10185
    %v10190 = vpack.c.bf16 %v10186, %v10186
    %v10191 = vpack.c.bf16 %v10187, %v10187
    %v10192 = vld [vmem:[#allocation15] sm:$0xf]
    %v10193 = vld [vmem:[#allocation15 + $0x4] sm:$0xf]
    %v10194 = vld [vmem:[#allocation15 + $0x8] sm:$0xf]
    %v10195 = vld [vmem:[#allocation15 + $0xc] sm:$0xf]
    %v10196 = vld [vmem:[#allocation15 + $0x10] sm:$0xf]
    %v10197 = vld [vmem:[#allocation15 + $0x14] sm:$0xf]
    %v10198 = vld [vmem:[#allocation15 + $0x18] sm:$0xf]
    %v10199 = vld [vmem:[#allocation15 + $0x1c] sm:$0xf]
    %v10200 = vld [vmem:[#allocation15 + $0x20] sm:$0xf]
    %v10201 = vld [vmem:[#allocation15 + $0x24] sm:$0xf]
    %v10202 = vld [vmem:[#allocation15 + $0x28] sm:$0xf]
    %v10203 = vld [vmem:[#allocation15 + $0x2c] sm:$0xf]
    %v10204 = vld [vmem:[#allocation15 + $0x30] sm:$0xf]
    %v10205 = vld [vmem:[#allocation15 + $0x34] sm:$0xf]
    %v10206 = vld [vmem:[#allocation15 + $0x38] sm:$0xf]
    %v10207 = vld [vmem:[#allocation15 + $0x3c] sm:$0xf]
    %v10208 = vld [vmem:[#allocation15 + $0x40] sm:$0xf]
    %v10209 = vld [vmem:[#allocation15 + $0x44] sm:$0xf]
    %v10210 = vld [vmem:[#allocation15 + $0x48] sm:$0xf]
    %v10211 = vld [vmem:[#allocation15 + $0x4c] sm:$0xf]
    %v10212 = vld [vmem:[#allocation15 + $0x50] sm:$0xf]
    %v10213 = vld [vmem:[#allocation15 + $0x54] sm:$0xf]
    %v10214 = vld [vmem:[#allocation15 + $0x58] sm:$0xf]
    %v10215 = vld [vmem:[#allocation15 + $0x5c] sm:$0xf]
    %v10216 = vld [vmem:[#allocation15 + $0x60] sm:$0xf]
    %v10217 = vld [vmem:[#allocation15 + $0x64] sm:$0xf]
    %v10218 = vld [vmem:[#allocation15 + $0x68] sm:$0xf]
    %v10219 = vld [vmem:[#allocation15 + $0x6c] sm:$0xf]
    %v10220 = vld [vmem:[#allocation15 + $0x70] sm:$0xf]
    %v10221 = vld [vmem:[#allocation15 + $0x74] sm:$0xf]
    %v10222 = vld [vmem:[#allocation15 + $0x78] sm:$0xf]
    %v10223 = vld [vmem:[#allocation15 + $0x7c] sm:$0xf]
    %v10224 = vld [vmem:[#allocation15 + $0x80] sm:$0xf]
    %v10225 = vld [vmem:[#allocation15 + $0x84] sm:$0xf]
    %v10226 = vld [vmem:[#allocation15 + $0x88] sm:$0xf]
    %v10227 = vld [vmem:[#allocation15 + $0x8c] sm:$0xf]
    %v10228 = vld [vmem:[#allocation15 + $0x90] sm:$0xf]
    %v10229 = vld [vmem:[#allocation15 + $0x94] sm:$0xf]
    %v10230 = vld [vmem:[#allocation15 + $0x98] sm:$0xf]
    %v10231 = vld [vmem:[#allocation15 + $0x9c] sm:$0xf]
    %v10232 = vld [vmem:[#allocation15 + $0xa0] sm:$0xf]
    %v10233 = vld [vmem:[#allocation15 + $0xa4] sm:$0xf]
    %v10234 = vld [vmem:[#allocation15 + $0xa8] sm:$0xf]
    %v10235 = vld [vmem:[#allocation15 + $0xac] sm:$0xf]
    %v10236 = vld [vmem:[#allocation15 + $0xb0] sm:$0xf]
    %v10237 = vld [vmem:[#allocation15 + $0xb4] sm:$0xf]
    %v10238 = vld [vmem:[#allocation15 + $0xb8] sm:$0xf]
    %v10239 = vld [vmem:[#allocation15 + $0xbc] sm:$0xf]
    %v10240 = vld [vmem:[#allocation15 + $0xc0] sm:$0xf]
    %v10241 = vld [vmem:[#allocation15 + $0xc4] sm:$0xf]
    %v10242 = vld [vmem:[#allocation15 + $0xc8] sm:$0xf]
    %v10243 = vld [vmem:[#allocation15 + $0xcc] sm:$0xf]
    %v10244 = vld [vmem:[#allocation15 + $0xd0] sm:$0xf]
    %v10245 = vld [vmem:[#allocation15 + $0xd4] sm:$0xf]
    %v10246 = vld [vmem:[#allocation15 + $0xd8] sm:$0xf]
    %v10247 = vld [vmem:[#allocation15 + $0xdc] sm:$0xf]
    %v10248 = vld [vmem:[#allocation15 + $0xe0] sm:$0xf]
    %v10249 = vld [vmem:[#allocation15 + $0xe4] sm:$0xf]
    %v10250 = vld [vmem:[#allocation15 + $0xe8] sm:$0xf]
    %v10251 = vld [vmem:[#allocation15 + $0xec] sm:$0xf]
    %v10252 = vld [vmem:[#allocation15 + $0xf0] sm:$0xf]
    %v10253 = vld [vmem:[#allocation15 + $0xf4] sm:$0xf]
    %v10254 = vld [vmem:[#allocation15 + $0xf8] sm:$0xf]
    %v10255 = vld [vmem:[#allocation15 + $0xfc] sm:$0xf]
    %v10256 = vld [vmem:[#allocation16] sm:$0x1]
    %v10258 = vlaneseq
    %v10259 = vshrl.u32 %v10258, 7
    %v10260 = vsub.s32 0, %v10259
    %v10261 = vrot.slane %v10256, %v10260
    %v10327 = vunpack.c.l.b16 %v10192
    %v10328 = vunpack.c.l.b16 %v10193
    %v10329 = vunpack.c.l.b16 %v10194
    %v10330 = vunpack.c.l.b16 %v10195
    %v10331 = vunpack.c.l.b16 %v10196
    %v10332 = vunpack.c.l.b16 %v10197
    %v10333 = vunpack.c.l.b16 %v10198
    %v10334 = vunpack.c.l.b16 %v10199
    %v10335 = vunpack.c.l.b16 %v10200
    %v10336 = vunpack.c.l.b16 %v10201
    %v10337 = vunpack.c.l.b16 %v10202
    %v10338 = vunpack.c.l.b16 %v10203
    %v10339 = vunpack.c.l.b16 %v10204
    %v10340 = vunpack.c.l.b16 %v10205
    %v10341 = vunpack.c.l.b16 %v10206
    %v10342 = vunpack.c.l.b16 %v10207
    %v10343 = vunpack.c.l.b16 %v10208
    %v10344 = vunpack.c.l.b16 %v10209
    %v10345 = vunpack.c.l.b16 %v10210
    %v10346 = vunpack.c.l.b16 %v10211
    %v10347 = vunpack.c.l.b16 %v10212
    %v10348 = vunpack.c.l.b16 %v10213
    %v10349 = vunpack.c.l.b16 %v10214
    %v10350 = vunpack.c.l.b16 %v10215
    %v10351 = vunpack.c.l.b16 %v10216
    %v10352 = vunpack.c.l.b16 %v10217
    %v10353 = vunpack.c.l.b16 %v10218
    %v10354 = vunpack.c.l.b16 %v10219
    %v10355 = vunpack.c.l.b16 %v10220
    %v10356 = vunpack.c.l.b16 %v10221
    %v10357 = vunpack.c.l.b16 %v10222
    %v10358 = vunpack.c.l.b16 %v10223
    %v10359 = vunpack.c.l.b16 %v10224
    %v10360 = vunpack.c.l.b16 %v10225
    %v10361 = vunpack.c.l.b16 %v10226
    %v10362 = vunpack.c.l.b16 %v10227
    %v10363 = vunpack.c.l.b16 %v10228
    %v10364 = vunpack.c.l.b16 %v10229
    %v10365 = vunpack.c.l.b16 %v10230
    %v10366 = vunpack.c.l.b16 %v10231
    %v10367 = vunpack.c.l.b16 %v10232
    %v10368 = vunpack.c.l.b16 %v10233
    %v10369 = vunpack.c.l.b16 %v10234
    %v10370 = vunpack.c.l.b16 %v10235
    %v10371 = vunpack.c.l.b16 %v10236
    %v10372 = vunpack.c.l.b16 %v10237
    %v10373 = vunpack.c.l.b16 %v10238
    %v10374 = vunpack.c.l.b16 %v10239
    %v10375 = vunpack.c.l.b16 %v10240
    %v10376 = vunpack.c.l.b16 %v10241
    %v10377 = vunpack.c.l.b16 %v10242
    %v10378 = vunpack.c.l.b16 %v10243
    %v10379 = vunpack.c.l.b16 %v10244
    %v10380 = vunpack.c.l.b16 %v10245
    %v10381 = vunpack.c.l.b16 %v10246
    %v10382 = vunpack.c.l.b16 %v10247
    %v10383 = vunpack.c.l.b16 %v10248
    %v10384 = vunpack.c.l.b16 %v10249
    %v10385 = vunpack.c.l.b16 %v10250
    %v10386 = vunpack.c.l.b16 %v10251
    %v10387 = vunpack.c.l.b16 %v10252
    %v10388 = vunpack.c.l.b16 %v10253
    %v10389 = vunpack.c.l.b16 %v10254
    %v10390 = vunpack.c.l.b16 %v10255
    %v10391 = vpack.c.b16 %v10328, %v10327
    %v10392 = vpack.c.b16 %v10330, %v10329
    %v10393 = vpack.c.b16 %v10332, %v10331
    %v10394 = vpack.c.b16 %v10334, %v10333
    %v10395 = vpack.c.b16 %v10336, %v10335
    %v10396 = vpack.c.b16 %v10338, %v10337
    %v10397 = vpack.c.b16 %v10340, %v10339
    %v10398 = vpack.c.b16 %v10342, %v10341
    %v10399 = vpack.c.b16 %v10344, %v10343
    %v10400 = vpack.c.b16 %v10346, %v10345
    %v10401 = vpack.c.b16 %v10348, %v10347
    %v10402 = vpack.c.b16 %v10350, %v10349
    %v10403 = vpack.c.b16 %v10352, %v10351
    %v10404 = vpack.c.b16 %v10354, %v10353
    %v10405 = vpack.c.b16 %v10356, %v10355
    %v10406 = vpack.c.b16 %v10358, %v10357
    %v10407 = vpack.c.b16 %v10360, %v10359
    %v10408 = vpack.c.b16 %v10362, %v10361
    %v10409 = vpack.c.b16 %v10364, %v10363
    %v10410 = vpack.c.b16 %v10366, %v10365
    %v10411 = vpack.c.b16 %v10368, %v10367
    %v10412 = vpack.c.b16 %v10370, %v10369
    %v10413 = vpack.c.b16 %v10372, %v10371
    %v10414 = vpack.c.b16 %v10374, %v10373
    %v10415 = vpack.c.b16 %v10376, %v10375
    %v10416 = vpack.c.b16 %v10378, %v10377
    %v10417 = vpack.c.b16 %v10380, %v10379
    %v10418 = vpack.c.b16 %v10382, %v10381
    %v10419 = vpack.c.b16 %v10384, %v10383
    %v10420 = vpack.c.b16 %v10386, %v10385
    %v10421 = vpack.c.b16 %v10388, %v10387
    %v10422 = vpack.c.b16 %v10390, %v10389
    %10455 = vmatprep.subr.bf16.mxu0 0
    %10456 = vmatpush1.bf16.msra.mxu0 %v10391
    %10457 = vmatprep.subr.bf16.mxu0 0
    %10458 = vmatpush1.bf16.msra.mxu0 %v10392
    %10459 = vmatprep.subr.bf16.mxu0 0
    %10460 = vmatpush1.bf16.msra.mxu0 %v10393
    %10461 = vmatprep.subr.bf16.mxu0 0
    %10462 = vmatpush1.bf16.msra.mxu0 %v10394
    %10463 = vmatprep.subr.bf16.mxu0 0
    %10464 = vmatpush1.bf16.msra.mxu0 %v10395
    %10465 = vmatprep.subr.bf16.mxu0 0
    %10466 = vmatpush1.bf16.msra.mxu0 %v10396
    %10467 = vmatprep.subr.bf16.mxu0 0
    %10468 = vmatpush1.bf16.msra.mxu0 %v10397
    %10469 = vmatprep.subr.bf16.mxu0 0
    %10470 = vmatpush1.bf16.msra.mxu0 %v10398
    %10471 = vmatprep.subr.bf16.mxu0 0
    %10472 = vmatpush1.bf16.msra.mxu0 %v10399
    %10473 = vmatprep.subr.bf16.mxu0 0
    %10474 = vmatpush1.bf16.msra.mxu0 %v10400
    %10475 = vmatprep.subr.bf16.mxu0 0
    %10476 = vmatpush1.bf16.msra.mxu0 %v10401
    %10477 = vmatprep.subr.bf16.mxu0 0
    %10478 = vmatpush1.bf16.msra.mxu0 %v10402
    %10479 = vmatprep.subr.bf16.mxu0 0
    %10480 = vmatpush1.bf16.msra.mxu0 %v10403
    %10481 = vmatprep.subr.bf16.mxu0 0
    %10482 = vmatpush1.bf16.msra.mxu0 %v10404
    %10483 = vmatprep.subr.bf16.mxu0 0
    %10484 = vmatpush1.bf16.msra.mxu0 %v10405
    %10485 = vmatprep.subr.bf16.mxu0 0
    %10486 = vmatpush1.bf16.msra.mxu0 %v10406
    %10487 = vmatprep.mubr.bf16.mxu0 %v10189
    %10488 = vmatmul.mubr.bf16.gmra.mrb[0].mxu0 %v10188
    %v10489 = vpop.f32.mrb[0].mxu0
    %v10490 = vadd.f32 %v10261, %v10489
    %v10491 = vpop.f32.mrb[0].mxu0
    %v10492 = vpop.f32.mrb[0].mxu0
    %v10493 = vpop.f32.mrb[0].mxu0
    %10494 = vdwg.mxu0
    %10495 = vmatprep.subr.bf16.mxu0 0
    %10496 = vmatpush1.bf16.msra.mxu0 %v10407
    %10497 = vmatprep.subr.bf16.mxu0 0
    %10498 = vmatpush1.bf16.msra.mxu0 %v10408
    %10499 = vmatprep.subr.bf16.mxu0 0
    %10500 = vmatpush1.bf16.msra.mxu0 %v10409
    %10501 = vmatprep.subr.bf16.mxu0 0
    %10502 = vmatpush1.bf16.msra.mxu0 %v10410
    %10503 = vmatprep.subr.bf16.mxu0 0
    %10504 = vmatpush1.bf16.msra.mxu0 %v10411
    %10505 = vmatprep.subr.bf16.mxu0 0
    %10506 = vmatpush1.bf16.msra.mxu0 %v10412
    %10507 = vmatprep.subr.bf16.mxu0 0
    %10508 = vmatpush1.bf16.msra.mxu0 %v10413
    %10509 = vmatprep.subr.bf16.mxu0 0
    %10510 = vmatpush1.bf16.msra.mxu0 %v10414
    %10511 = vmatprep.subr.bf16.mxu0 0
    %10512 = vmatpush1.bf16.msra.mxu0 %v10415
    %10513 = vmatprep.subr.bf16.mxu0 0
    %10514 = vmatpush1.bf16.msra.mxu0 %v10416
    %10515 = vmatprep.subr.bf16.mxu0 0
    %10516 = vmatpush1.bf16.msra.mxu0 %v10417
    %10517 = vmatprep.subr.bf16.mxu0 0
    %10518 = vmatpush1.bf16.msra.mxu0 %v10418
    %10519 = vmatprep.subr.bf16.mxu0 0
    %10520 = vmatpush1.bf16.msra.mxu0 %v10419
    %10521 = vmatprep.subr.bf16.mxu0 0
    %10522 = vmatpush1.bf16.msra.mxu0 %v10420
    %10523 = vmatprep.subr.bf16.mxu0 0
    %10524 = vmatpush1.bf16.msra.mxu0 %v10421
    %10525 = vmatprep.subr.bf16.mxu0 0
    %10526 = vmatpush1.bf16.msra.mxu0 %v10422
    %10527 = vmatprep.mubr.bf16.mxu0 %v10191
    %10528 = vmatmul.mubr.bf16.gmra.mrb[0].mxu0 %v10190
    %v10529 = vpop.f32.mrb[0].mxu0
    %v10530 = vadd.f32 %v10490, %v10529
    %v10531 = vpop.f32.mrb[0].mxu0
    %v10532 = vpop.f32.mrb[0].mxu0
    %v10533 = vpop.f32.mrb[0].mxu0
    %10534 = vdwg.mxu0
    %v10535 = vlaneseq
    %v10536 = vand.u32 %v10535, 127
    %vm10537 = vcmp.ge.s32.totalorder %v10536, 1
    %vm10538 = vcmp.le.s32.totalorder %v10536, 9
    %vm10539 = vmand %vm10537, %vm10538
    %v10540 = vsel %vm10539, %v10530, 0.0
    %vm10541 = vcmask 1041408
    %v10542 = vsel %vm10541, %v10540, 0.0
    %10543 = vadd.xlane.f32.xlu0 %v10542
    %v10544 = vpop.xlane.xlu0 %10543
    %v10545 = vrot.slane %v10544, 4
    %v10546 = vadd.f32 %v10544, %v10545
    %v10547 = vrot.slane %v10546, 2
    %v10548 = vadd.f32 %v10546, %v10547
    %v10549 = vrot.slane %v10548, 1
    %v10550 = vadd.f32 %v10548, %v10549
    %s10551 = vtos %v10550
    %v10552 = vrcp.pop 18.0
    %s10553 = vtos %v10552
    %s10554 = smul.f32 %s10551, %s10553
    %vm10555 = vcmp.eq.s32.totalorder %v10536, 0
    %v10556 = vsel %vm10555, %v10530, 0.0
    %v10557 = vsel %vm10541, %v10556, 0.0
    %10558 = vadd.xlane.f32.xlu0 %v10557
    %v10559 = vpop.xlane.xlu0 %10558
    %v10560 = vstv %s10554
    %v10561 = vsub.f32 %v10530, %v10560
    %v10562 = vadd.f32 %v10559, %v10561
    %10563 = vst [vmem:[%s11] sm:$0x3] %v10562
    // Predicated region
    $region86: #{net_forward.1} parent=1 // pred_check
      _
    $region87: #{net_forward.1} parent=1 // pred_check_branch
      %10565 = sbr.rel (0) target = $region89
    $region88: #{net_forward.1} parent=1 // pred_region
      _
    $region89: #{net_forward.1} parent=1 // pred_fallthru
      _
    // Predicated region
    $region90: #{net_forward.1} parent=1 // pred_check
      _
    $region91: #{net_forward.1} parent=1 // pred_check_branch
      %10567 = sbr.rel (0) target = $region93
    $region92: #{net_forward.1} parent=1 // pred_region
      _
    $region93: #{net_forward.1} parent=1 // pred_fallthru
      _
    %10568 = vsyncpa [#allocation3], 1
    %10569 = vsyncpa [#allocation5], 1
    %10570 = vsyncpa [#allocation8], 1
    %10571 = vsyncpa [#allocation11], 1
    %10572 = vsyncpa [#allocation14], 1
    %10573 = vsyncpa [#allocation17], 1

</llo_original>
